<compile_context>
chip_gen: v6e
topology: v6e:2x2x1
jax: 0.10.0
libtpu: 0.0.40
codegen_flags: <defaults>
</compile_context>

<pallas_src>
import functools

import jax
import jax.numpy as jnp
from jax import lax
from jax.experimental import pallas as pl
from jax.experimental.pallas import tpu as pltpu

BOARD = 9
HW = BOARD * BOARD          # 81 board squares
PAD = 16                    # sublane-aligned halo offset in the VMEM pad buffer
PAD_ROWS = 120              # 16 + 81 + 16 = 113 rounded up to a multiple of 8
EPS = 1e-5                  # torch.nn.LayerNorm default eps
NUM_LAYER_BLOCKS = 2        # Encoder always builds ResidualLayer(2, ...)


# ---------------------------------------------------------------------------
# Fused whole-network kernel (one grid step == one sample)
# ---------------------------------------------------------------------------
def _scalar_net_kernel(x_ref, wf_ref, gf_ref, betaf_ref,
                       wb_ref, gb_ref, betab_ref,
                       se0_ref, se1_ref,
                       wp_ref, bp_ref, wv1_ref, bv1_ref, wv2_ref, bv2_ref,
                       policy_ref, value_ref, xpad_ref,
                       *, num_blocks, iter_num):
    """Encoder + heads for one sample, entirely in VMEM.

    x_ref:      (1, 81, C)      input, channels zero-padded to C
    wf_ref:     (9, C, C)       first-conv taps (bf16, Cin zero-padded)
    gf/betaf:   (81, C)         first LayerNorm affine
    wb_ref:     (NB*2*9, C, C)  block conv taps (bf16), base (2b+j)*9
    gb/betab:   (NB*2, 81, C)   block LayerNorm affine
    se0_ref:    (NB, C, C//r)   SE linear0 (no bias)
    se1_ref:    (NB, C//r, C)   SE linear1 (no bias)
    wp/bp:      (C, P), (1, P)  policy 1x1 conv
    wv1/bv1:    (C, C), (1, C)  value hidden linear
    wv2/bv2:    (1, C), (1, 1)  value output linear (scalar)
    policy_ref: (1, 81, P)      output
    value_ref:  (1, 1, 1)       output (tanh'd scalar)
    xpad_ref:   (120, C) f32    VMEM scratch: flat zero-padded board
    """
    # Column-edge masks computed in-kernel (iota + compare on the VPU).
    col = lax.broadcasted_iota(jnp.int32, (HW, 1), 0) % BOARD
    mask_l = (col != 0).astype(jnp.float32)          # zero where board col == 0
    mask_r = (col != BOARD - 1).astype(jnp.float32)  # zero where board col == 8

    # Zero the halo rows once per grid step; only rows [PAD, PAD+81) are ever
    # overwritten below, so the halo stays zero for every conv in this step.
    xpad_ref[...] = jnp.zeros_like(xpad_ref)

    def conv3x3_ln(x, w_ref, w_base, gamma, beta, relu):
        """Bias-free 3x3 SAME conv + per-sample LayerNorm (+ optional ReLU)."""
        cout = w_ref.shape[-1]
        xpad_ref[PAD:PAD + HW, :] = x                 # sublane-aligned store
        acc = jnp.zeros((HW, cout), jnp.float32)
        for dy in range(3):
            for dx in range(3):
                shift = BOARD * (dy - 1) + (dx - 1)
                patch = xpad_ref[PAD + shift:PAD + shift + HW, :]   # (81, C)
                if dx == 0:
                    patch = patch * mask_l
                elif dx == 2:
                    patch = patch * mask_r
                acc = acc + jnp.dot(patch.astype(jnp.bfloat16),
                                    w_ref[w_base + dy * 3 + dx],
                                    preferred_element_type=jnp.float32)
        # LayerNorm over the whole (C, 9, 9) slab of this sample.
        mean = jnp.mean(acc, keepdims=True)
        var = jnp.mean((acc - mean) ** 2, keepdims=True)
        t = (acc - mean) * lax.rsqrt(var + EPS)
        t = t * gamma + beta
        return jnp.maximum(t, 0.0) if relu else t

    # Encoder: first conv + LN + ReLU.
    feat = conv3x3_ln(x_ref[0], wf_ref, 0, gf_ref[...], betaf_ref[...], True)

    # iter_num passes over the shared-weight 2-block residual layer.
    for _ in range(iter_num):
        for b in range(num_blocks):
            t = conv3x3_ln(feat, wb_ref, (2 * b) * 9,
                           gb_ref[2 * b], betab_ref[2 * b], True)
            t = conv3x3_ln(t, wb_ref, (2 * b + 1) * 9,
                           gb_ref[2 * b + 1], betab_ref[2 * b + 1], False)
            # Squeeze-excite gate + residual ReLU (fused epilogue).
            y = jnp.mean(t, axis=0, keepdims=True)                     # (1, C)
            y = jnp.maximum(jnp.dot(y, se0_ref[b],
                                    preferred_element_type=jnp.float32), 0.0)
            y = jnp.dot(y, se1_ref[b], preferred_element_type=jnp.float32)
            y = jax.nn.sigmoid(y)
            feat = jnp.maximum(feat + t * y, 0.0)

    # Heads (fused).
    policy_ref[0] = (jnp.dot(feat, wp_ref[...],
                             preferred_element_type=jnp.float32) + bp_ref[...])
    pooled = jnp.mean(feat, axis=0, keepdims=True)                     # (1, C)
    v = jnp.maximum(jnp.dot(pooled, wv1_ref[...],
                            preferred_element_type=jnp.float32) + bv1_ref[...],
                    0.0)
    # Scalar projection as VPU mul + lane reduce (avoids an M=1,N=1 matmul).
    value = jnp.sum(v * wv2_ref[...], axis=1, keepdims=True) + bv2_ref[...]
    value_ref[0] = jnp.tanh(value)


# ---------------------------------------------------------------------------
# pallas_call wrapper
# ---------------------------------------------------------------------------
def scalar_network_forward(x_nchw, kp, iter_num):
    n, cin = x_nchw.shape[0], x_nchw.shape[1]
    c = kp['wv1'].shape[0]
    p = kp['wp'].shape[-1]
    nb = NUM_LAYER_BLOCKS
    cr = kp['se_w0'].shape[-1]

    x = jnp.transpose(x_nchw, (0, 2, 3, 1)).reshape(n, HW, cin).astype(jnp.float32)
    if cin < c:
        # Zero-pad input channels to C once; padded weight rows are zero.
        x = jnp.pad(x, ((0, 0), (0, 0), (0, c - cin)))

    kernel = functools.partial(_scalar_net_kernel,
                               num_blocks=nb, iter_num=iter_num)

    policy_flat, value = pl.pallas_call(
        kernel,
        out_shape=(jax.ShapeDtypeStruct((n, HW, p), jnp.float32),
                   jax.ShapeDtypeStruct((n, 1, 1), jnp.float32)),
        grid=(n,),
        in_specs=[
            pl.BlockSpec((1, HW, c), lambda i: (i, 0, 0)),            # x
            pl.BlockSpec((9, c, c), lambda i: (0, 0, 0)),             # first conv w
            pl.BlockSpec((HW, c), lambda i: (0, 0)),                  # first gamma
            pl.BlockSpec((HW, c), lambda i: (0, 0)),                  # first beta
            pl.BlockSpec((nb * 2 * 9, c, c), lambda i: (0, 0, 0)),    # block conv w
            pl.BlockSpec((nb * 2, HW, c), lambda i: (0, 0, 0)),       # block gamma
            pl.BlockSpec((nb * 2, HW, c), lambda i: (0, 0, 0)),       # block beta
            pl.BlockSpec((nb, c, cr), lambda i: (0, 0, 0)),           # SE w0
            pl.BlockSpec((nb, cr, c), lambda i: (0, 0, 0)),           # SE w1
            pl.BlockSpec((c, p), lambda i: (0, 0)),                   # policy w
            pl.BlockSpec((1, p), lambda i: (0, 0)),                   # policy b
            pl.BlockSpec((c, c), lambda i: (0, 0)),                   # value w1
            pl.BlockSpec((1, c), lambda i: (0, 0)),                   # value b1
            pl.BlockSpec((1, c), lambda i: (0, 0)),                   # value w2
            pl.BlockSpec((1, 1), lambda i: (0, 0)),                   # value b2
        ],
        out_specs=[pl.BlockSpec((1, HW, p), lambda i: (i, 0, 0)),
                   pl.BlockSpec((1, 1, 1), lambda i: (i, 0, 0))],
        scratch_shapes=[pltpu.VMEM((PAD_ROWS, c), jnp.float32)],
        compiler_params=pltpu.CompilerParams(dimension_semantics=("parallel",)),
    )(x, kp['first_w9'], kp['first_gamma'], kp['first_beta'],
      kp['blocks_w'], kp['blocks_gamma'], kp['blocks_beta'],
      kp['se_w0'], kp['se_w1'],
      kp['wp'], kp['bp'], kp['wv1'], kp['bv1'], kp['wv2'], kp['bv2'])

    policy = jnp.transpose(policy_flat.reshape(n, BOARD, BOARD, p), (0, 3, 1, 2))
    return policy, value[:, 0, :]                                     # (N,P,9,9), (N,1)


# ---------------------------------------------------------------------------
# Parameters (deterministic, synthetic) and layout packing
# ---------------------------------------------------------------------------
def init_params(key, in_ch, channel_num, policy_ch, reduction=8):
    keys = iter(jax.random.split(key, 64))

    def nrm(shape, scale=0.1):
        return scale * jax.random.normal(next(keys), shape, jnp.float32)

    def ln_params():
        return (1.0 + nrm((channel_num, BOARD, BOARD), 0.05),
                nrm((channel_num, BOARD, BOARD), 0.05))

    raw = {
        'first_conv': nrm((channel_num, in_ch, 3, 3)),
        'first_ln': ln_params(),
        'blocks': [],
    }
    for _ in range(NUM_LAYER_BLOCKS):
        raw['blocks'].append({
            'conv0': nrm((channel_num, channel_num, 3, 3)),
            'ln0': ln_params(),
            'conv1': nrm((channel_num, channel_num, 3, 3)),
            'ln1': ln_params(),
            'lin0': nrm((channel_num // reduction, channel_num)),
            'lin1': nrm((channel_num, channel_num // reduction)),
        })
    # TODO(synk): PolicyHead / ValueHead class definitions were not provided;
    # stand-ins: 1x1-conv policy head and a pooled 2-layer scalar value head
    # (ScalarNetwork then applies tanh to the value, which we keep).
    raw['policy_w'] = nrm((policy_ch, channel_num))
    raw['policy_b'] = nrm((policy_ch,))
    raw['value_w1'] = nrm((channel_num, channel_num))
    raw['value_b1'] = nrm((channel_num,))
    raw['value_w2'] = nrm((1, channel_num))
    raw['value_b2'] = nrm((1,))
    return raw


def to_kernel_params(raw):
    channel_num = raw['first_conv'].shape[0]

    def conv_taps(W):                       # (Cout, Cin, 3, 3) -> (9, C, Cout) bf16
        cout, cin = W.shape[0], W.shape[1]
        w = jnp.transpose(W, (2, 3, 1, 0)).reshape(9, cin, cout)
        if cin < channel_num:               # zero-pad the input-channel axis
            w = jnp.pad(w, ((0, 0), (0, channel_num - cin), (0, 0)))
        return w.astype(jnp.bfloat16)

    def ln_flat(pa):                        # (C, 9, 9) -> (81, C)
        return jnp.transpose(pa, (1, 2, 0)).reshape(HW, pa.shape[0])

    blocks_w = jnp.concatenate(
        [conv_taps(blk[k]) for blk in raw['blocks'] for k in ('conv0', 'conv1')],
        axis=0)                                                     # (NB*2*9, C, C)
    blocks_gamma = jnp.stack(
        [ln_flat(blk[k][0]) for blk in raw['blocks'] for k in ('ln0', 'ln1')], axis=0)
    blocks_beta = jnp.stack(
        [ln_flat(blk[k][1]) for blk in raw['blocks'] for k in ('ln0', 'ln1')], axis=0)
    se_w0 = jnp.stack([blk['lin0'].T for blk in raw['blocks']], axis=0)  # (NB, C, C//r)
    se_w1 = jnp.stack([blk['lin1'].T for blk in raw['blocks']], axis=0)  # (NB, C//r, C)

    return {
        'first_w9': conv_taps(raw['first_conv']),
        'first_gamma': ln_flat(raw['first_ln'][0]),
        'first_beta': ln_flat(raw['first_ln'][1]),
        'blocks_w': blocks_w,
        'blocks_gamma': blocks_gamma,
        'blocks_beta': blocks_beta,
        'se_w0': se_w0, 'se_w1': se_w1,
        'wp': raw['policy_w'].T, 'bp': raw['policy_b'][None, :],
        'wv1': raw['value_w1'].T, 'bv1': raw['value_b1'][None, :],
        'wv2': raw['value_w2'], 'bv2': raw['value_b2'][None, :],
    }


# ---------------------------------------------------------------------------
# Pure-JAX reference (torch semantics, HIGHEST precision) used for validation
# ---------------------------------------------------------------------------
def reference_forward(x_nchw, raw, iter_num):
    hp = lax.Precision.HIGHEST
    x = jnp.transpose(x_nchw, (0, 2, 3, 1)).astype(jnp.float32)      # NHWC

    def conv_ln(x, W, g, b, relu):
        w_hwio = jnp.transpose(W, (2, 3, 1, 0))
        y = lax.conv_general_dilated(x, w_hwio, (1, 1), 'SAME',
                                     dimension_numbers=('NHWC', 'HWIO', 'NHWC'),
                                     precision=hp)
        mu = jnp.mean(y, axis=(1, 2, 3), keepdims=True)
        var = jnp.mean((y - mu) ** 2, axis=(1, 2, 3), keepdims=True)
        y = (y - mu) / jnp.sqrt(var + EPS)
        y = y * jnp.transpose(g, (1, 2, 0))[None] + jnp.transpose(b, (1, 2, 0))[None]
        return jnp.maximum(y, 0.0) if relu else y

    h = conv_ln(x, raw['first_conv'], *raw['first_ln'], True)
    for _ in range(iter_num):
        for blk in raw['blocks']:
            t = conv_ln(h, blk['conv0'], *blk['ln0'], True)
            t = conv_ln(t, blk['conv1'], *blk['ln1'], False)
            y = jnp.mean(t, axis=(1, 2))
            y = jnp.maximum(jnp.dot(y, blk['lin0'].T, precision=hp), 0.0)
            y = jax.nn.sigmoid(jnp.dot(y, blk['lin1'].T, precision=hp))
            t = t * y[:, None, None, :]
            h = jnp.maximum(h + t, 0.0)
    n = x.shape[0]
    flat = h.reshape(n, HW, -1)
    policy = jnp.dot(flat, raw['policy_w'].T, precision=hp) + raw['policy_b']
    policy = jnp.transpose(policy.reshape(n, BOARD, BOARD, -1), (0, 3, 1, 2))
    pooled = jnp.mean(flat, axis=1)
    v = jnp.maximum(jnp.dot(pooled, raw['value_w1'].T, precision=hp)
                    + raw['value_b1'], 0.0)
    value = jnp.tanh(jnp.dot(v, raw['value_w2'].T, precision=hp) + raw['value_b2'])
    return policy, value


if __name__ == "__main__":
    key = jax.random.PRNGKey(0)
    k_x, k_p = jax.random.split(key)

    N, IN_CH, CHANNELS, POLICY_CH, BLOCK_NUM = 2, 4, 32, 8, 2
    iter_num = BLOCK_NUM // 2

    x = jax.random.normal(k_x, (N, IN_CH, BOARD, BOARD), jnp.float32)
    raw = init_params(k_p, IN_CH, CHANNELS, POLICY_CH)
    kp = to_kernel_params(raw)

    fwd = jax.jit(functools.partial(scalar_network_forward, iter_num=iter_num))
    policy, value = fwd(x, kp)
    jax.block_until_ready((policy, value))

    ref_policy, ref_value = reference_forward(x, raw, iter_num)
    assert policy.shape == (N, POLICY_CH, BOARD, BOARD) and value.shape == (N, 1)
    # Kernel runs the conv matmuls with bf16 operands (f32 accumulate) on the
    # MXU, so compare against the f32/HIGHEST reference with loose tolerance.
    assert jnp.allclose(policy, ref_policy, rtol=5e-2, atol=5e-2), \
        float(jnp.max(jnp.abs(policy - ref_policy)))
    assert jnp.allclose(value, ref_value, rtol=5e-2, atol=5e-2), \
        float(jnp.max(jnp.abs(value - ref_value)))

    print("KERNEL_OK")
</pallas_src>

<mosaic_0001>
module attributes {stable_mosaic.version = 11 : i64} {
  func.func @_scalar_net_kernel(%arg0: i32, %arg1: memref<1x81x32xf32, #tpu.memory_space<vmem>>, %arg2: memref<9x32x32xbf16, #tpu.memory_space<vmem>>, %arg3: memref<81x32xf32, #tpu.memory_space<vmem>>, %arg4: memref<81x32xf32, #tpu.memory_space<vmem>>, %arg5: memref<36x32x32xbf16, #tpu.memory_space<vmem>>, %arg6: memref<4x81x32xf32, #tpu.memory_space<vmem>>, %arg7: memref<4x81x32xf32, #tpu.memory_space<vmem>>, %arg8: memref<2x32x4xf32, #tpu.memory_space<vmem>>, %arg9: memref<2x4x32xf32, #tpu.memory_space<vmem>>, %arg10: memref<32x8xf32, #tpu.memory_space<vmem>>, %arg11: memref<1x8xf32, #tpu.memory_space<vmem>>, %arg12: memref<32x32xf32, #tpu.memory_space<vmem>>, %arg13: memref<1x32xf32, #tpu.memory_space<vmem>>, %arg14: memref<1x32xf32, #tpu.memory_space<vmem>>, %arg15: memref<1x1xf32, #tpu.memory_space<vmem>>, %arg16: memref<1x81x8xf32, #tpu.memory_space<vmem>>, %arg17: memref<1x1x1xf32, #tpu.memory_space<vmem>>, %arg18: memref<120x32xf32, #tpu.memory_space<vmem>>) attributes {dimension_semantics = [#tpu.dimension_semantics<parallel>], iteration_bounds = array<i64: 2>, scalar_prefetch = 0 : i64, scratch_operands = 1 : i64, tpu.core_type = #tpu.core_type<tc>, window_params = [{transform_indices = @transform_0, window_bounds = array<i64: 1, 81, 32>}, {pipeline_mode = #tpu.pipeline_mode<synchronous>, transform_indices = @transform_1, window_bounds = array<i64: 9, 32, 32>}, {pipeline_mode = #tpu.pipeline_mode<synchronous>, transform_indices = @transform_2, window_bounds = array<i64: 81, 32>}, {pipeline_mode = #tpu.pipeline_mode<synchronous>, transform_indices = @transform_3, window_bounds = array<i64: 81, 32>}, {pipeline_mode = #tpu.pipeline_mode<synchronous>, transform_indices = @transform_4, window_bounds = array<i64: 36, 32, 32>}, {pipeline_mode = #tpu.pipeline_mode<synchronous>, transform_indices = @transform_5, window_bounds = array<i64: 4, 81, 32>}, {pipeline_mode = #tpu.pipeline_mode<synchronous>, transform_indices = @transform_6, window_bounds = array<i64: 4, 81, 32>}, {pipeline_mode = #tpu.pipeline_mode<synchronous>, transform_indices = @transform_7, window_bounds = array<i64: 2, 32, 4>}, {pipeline_mode = #tpu.pipeline_mode<synchronous>, transform_indices = @transform_8, window_bounds = array<i64: 2, 4, 32>}, {pipeline_mode = #tpu.pipeline_mode<synchronous>, transform_indices = @transform_9, window_bounds = array<i64: 32, 8>}, {pipeline_mode = #tpu.pipeline_mode<synchronous>, transform_indices = @transform_10, window_bounds = array<i64: 1, 8>}, {pipeline_mode = #tpu.pipeline_mode<synchronous>, transform_indices = @transform_11, window_bounds = array<i64: 32, 32>}, {pipeline_mode = #tpu.pipeline_mode<synchronous>, transform_indices = @transform_12, window_bounds = array<i64: 1, 32>}, {pipeline_mode = #tpu.pipeline_mode<synchronous>, transform_indices = @transform_13, window_bounds = array<i64: 1, 32>}, {pipeline_mode = #tpu.pipeline_mode<synchronous>, transform_indices = @transform_14, window_bounds = array<i64: 1, 1>}, {transform_indices = @transform_15, window_bounds = array<i64: 1, 81, 8>}, {transform_indices = @transform_16, window_bounds = array<i64: 1, 1, 1>}]} {
    %0 = tpu.iota {dimensions = array<i32: 0>} : vector<81x1xi32>
    %c9_i32 = arith.constant 9 : i32
    %c0_i32 = arith.constant 0 : i32
    %1 = arith.cmpi eq, %c9_i32, %c0_i32 : i32
    %c1_i32 = arith.constant 1 : i32
    %2 = arith.select %1, %c1_i32, %c9_i32 : i32
    %3 = vector.broadcast %2 : i32 to vector<81x1xi32>
    %4 = arith.remsi %0, %3 : vector<81x1xi32>
    %c0_i32_0 = arith.constant 0 : i32
    %5 = vector.broadcast %c0_i32_0 : i32 to vector<81x1xi32>
    %6 = arith.cmpi ne, %4, %5 : vector<81x1xi32>
    %c0_i32_1 = arith.constant 0 : i32
    %7 = vector.broadcast %c0_i32_1 : i32 to vector<81x1xi32>
    %8 = arith.cmpi slt, %4, %7 : vector<81x1xi32>
    %c0_i32_2 = arith.constant 0 : i32
    %9 = arith.cmpi slt, %2, %c0_i32_2 : i32
    %10 = vector.broadcast %9 : i1 to vector<81x1xi1>
    %11 = vector.broadcast %10 : vector<81x1xi1> to vector<81x1xi1>
    %12 = arith.xori %8, %11 : vector<81x1xi1>
    %13 = arith.andi %12, %6 : vector<81x1xi1>
    %14 = vector.broadcast %2 : i32 to vector<81x1xi32>
    %15 = arith.addi %4, %14 : vector<81x1xi32>
    %16 = arith.select %13, %15, %4 : vector<81x1xi1>, vector<81x1xi32>
    %c0_i32_3 = arith.constant 0 : i32
    %17 = vector.broadcast %c0_i32_3 : i32 to vector<81x1xi32>
    %18 = arith.cmpi ne, %16, %17 : vector<81x1xi32>
    %19 = arith.extui %18 : vector<81x1xi1> to vector<81x1xi32>
    %20 = arith.sitofp %19 : vector<81x1xi32> to vector<81x1xf32>
    %c8_i32 = arith.constant 8 : i32
    %21 = vector.broadcast %c8_i32 : i32 to vector<81x1xi32>
    %22 = arith.cmpi ne, %16, %21 : vector<81x1xi32>
    %23 = arith.extui %22 : vector<81x1xi1> to vector<81x1xi32>
    %24 = arith.sitofp %23 : vector<81x1xi32> to vector<81x1xf32>
    %cst = arith.constant 0.000000e+00 : f32
    %25 = vector.broadcast %cst : f32 to vector<120x32xf32>
    %c0 = arith.constant 0 : index
    %c0_4 = arith.constant 0 : index
    %26 = vector.load %arg18[%c0, %c0_4] : memref<120x32xf32, #tpu.memory_space<vmem>>, vector<120x32xf32>
    tpu.vector_store %arg18[%c0, %c0_4], %25 {strides = array<i32>} : memref<120x32xf32, #tpu.memory_space<vmem>>, vector<120x32xf32>,
    %c0_5 = arith.constant 0 : index
    %c0_6 = arith.constant 0 : index
    %c0_7 = arith.constant 0 : index
    %27 = vector.load %arg1[%c0_5, %c0_6, %c0_7] : memref<1x81x32xf32, #tpu.memory_space<vmem>>, vector<1x81x32xf32>
    %28 = vector.shape_cast %27 : vector<1x81x32xf32> to vector<81x32xf32>
    %c0_8 = arith.constant 0 : index
    %c0_9 = arith.constant 0 : index
    %29 = vector.load %arg3[%c0_8, %c0_9] : memref<81x32xf32, #tpu.memory_space<vmem>>, vector<81x32xf32>
    %c0_10 = arith.constant 0 : index
    %c0_11 = arith.constant 0 : index
    %30 = vector.load %arg4[%c0_10, %c0_11] : memref<81x32xf32, #tpu.memory_space<vmem>>, vector<81x32xf32>
    %c16 = arith.constant 16 : index
    %c0_12 = arith.constant 0 : index
    %31 = vector.load %arg18[%c16, %c0_12] : memref<120x32xf32, #tpu.memory_space<vmem>>, vector<81x32xf32>
    tpu.vector_store %arg18[%c16, %c0_12], %28 {strides = array<i32>} : memref<120x32xf32, #tpu.memory_space<vmem>>, vector<81x32xf32>,
    %cst_13 = arith.constant 0.000000e+00 : f32
    %32 = vector.broadcast %cst_13 : f32 to vector<81x32xf32>
    %c6 = arith.constant 6 : index
    %c0_14 = arith.constant 0 : index
    %33 = vector.load %arg18[%c6, %c0_14] : memref<120x32xf32, #tpu.memory_space<vmem>>, vector<81x32xf32>
    %34 = vector.broadcast %20 : vector<81x1xf32> to vector<81x32xf32>
    %35 = arith.mulf %33, %34 : vector<81x32xf32>
    %36 = arith.truncf %35 : vector<81x32xf32> to vector<81x32xbf16>
    %c0_15 = arith.constant 0 : index
    %c0_16 = arith.constant 0 : index
    %c0_17 = arith.constant 0 : index
    %37 = vector.load %arg2[%c0_15, %c0_16, %c0_17] : memref<9x32x32xbf16, #tpu.memory_space<vmem>>, vector<1x32x32xbf16>
    %38 = vector.shape_cast %37 : vector<1x32x32xbf16> to vector<32x32xbf16>
    %cst_18 = arith.constant dense<0.000000e+00> : vector<81x32xf32>
    %39 = tpu.matmul %36, %38, %cst_18 {dimension_numbers = #tpu.dot_dimension_numbers<[1], [0], [0], [1], [0, 0, 1, 1], [], []>} : vector<81x32xbf16>, vector<32x32xbf16>, vector<81x32xf32> -> vector<81x32xf32>
    %40 = arith.addf %32, %39 : vector<81x32xf32>
    %c7 = arith.constant 7 : index
    %c0_19 = arith.constant 0 : index
    %41 = vector.load %arg18[%c7, %c0_19] : memref<120x32xf32, #tpu.memory_space<vmem>>, vector<81x32xf32>
    %42 = arith.truncf %41 : vector<81x32xf32> to vector<81x32xbf16>
    %c1 = arith.constant 1 : index
    %c0_20 = arith.constant 0 : index
    %c0_21 = arith.constant 0 : index
    %43 = vector.load %arg2[%c1, %c0_20, %c0_21] : memref<9x32x32xbf16, #tpu.memory_space<vmem>>, vector<1x32x32xbf16>
    %44 = vector.shape_cast %43 : vector<1x32x32xbf16> to vector<32x32xbf16>
    %cst_22 = arith.constant dense<0.000000e+00> : vector<81x32xf32>
    %45 = tpu.matmul %42, %44, %cst_22 {dimension_numbers = #tpu.dot_dimension_numbers<[1], [0], [0], [1], [0, 0, 1, 1], [], []>} : vector<81x32xbf16>, vector<32x32xbf16>, vector<81x32xf32> -> vector<81x32xf32>
    %46 = arith.addf %40, %45 : vector<81x32xf32>
    %c8 = arith.constant 8 : index
    %c0_23 = arith.constant 0 : index
    %47 = vector.load %arg18[%c8, %c0_23] : memref<120x32xf32, #tpu.memory_space<vmem>>, vector<81x32xf32>
    %48 = vector.broadcast %24 : vector<81x1xf32> to vector<81x32xf32>
    %49 = arith.mulf %47, %48 : vector<81x32xf32>
    %50 = arith.truncf %49 : vector<81x32xf32> to vector<81x32xbf16>
    %c2 = arith.constant 2 : index
    %c0_24 = arith.constant 0 : index
    %c0_25 = arith.constant 0 : index
    %51 = vector.load %arg2[%c2, %c0_24, %c0_25] : memref<9x32x32xbf16, #tpu.memory_space<vmem>>, vector<1x32x32xbf16>
    %52 = vector.shape_cast %51 : vector<1x32x32xbf16> to vector<32x32xbf16>
    %cst_26 = arith.constant dense<0.000000e+00> : vector<81x32xf32>
    %53 = tpu.matmul %50, %52, %cst_26 {dimension_numbers = #tpu.dot_dimension_numbers<[1], [0], [0], [1], [0, 0, 1, 1], [], []>} : vector<81x32xbf16>, vector<32x32xbf16>, vector<81x32xf32> -> vector<81x32xf32>
    %54 = arith.addf %46, %53 : vector<81x32xf32>
    %c15 = arith.constant 15 : index
    %c0_27 = arith.constant 0 : index
    %55 = vector.load %arg18[%c15, %c0_27] : memref<120x32xf32, #tpu.memory_space<vmem>>, vector<81x32xf32>
    %56 = vector.broadcast %20 : vector<81x1xf32> to vector<81x32xf32>
    %57 = arith.mulf %55, %56 : vector<81x32xf32>
    %58 = arith.truncf %57 : vector<81x32xf32> to vector<81x32xbf16>
    %c3 = arith.constant 3 : index
    %c0_28 = arith.constant 0 : index
    %c0_29 = arith.constant 0 : index
    %59 = vector.load %arg2[%c3, %c0_28, %c0_29] : memref<9x32x32xbf16, #tpu.memory_space<vmem>>, vector<1x32x32xbf16>
    %60 = vector.shape_cast %59 : vector<1x32x32xbf16> to vector<32x32xbf16>
    %cst_30 = arith.constant dense<0.000000e+00> : vector<81x32xf32>
    %61 = tpu.matmul %58, %60, %cst_30 {dimension_numbers = #tpu.dot_dimension_numbers<[1], [0], [0], [1], [0, 0, 1, 1], [], []>} : vector<81x32xbf16>, vector<32x32xbf16>, vector<81x32xf32> -> vector<81x32xf32>
    %62 = arith.addf %54, %61 : vector<81x32xf32>
    %c16_31 = arith.constant 16 : index
    %c0_32 = arith.constant 0 : index
    %63 = vector.load %arg18[%c16_31, %c0_32] : memref<120x32xf32, #tpu.memory_space<vmem>>, vector<81x32xf32>
    %64 = arith.truncf %63 : vector<81x32xf32> to vector<81x32xbf16>
    %c4 = arith.constant 4 : index
    %c0_33 = arith.constant 0 : index
    %c0_34 = arith.constant 0 : index
    %65 = vector.load %arg2[%c4, %c0_33, %c0_34] : memref<9x32x32xbf16, #tpu.memory_space<vmem>>, vector<1x32x32xbf16>
    %66 = vector.shape_cast %65 : vector<1x32x32xbf16> to vector<32x32xbf16>
    %cst_35 = arith.constant dense<0.000000e+00> : vector<81x32xf32>
    %67 = tpu.matmul %64, %66, %cst_35 {dimension_numbers = #tpu.dot_dimension_numbers<[1], [0], [0], [1], [0, 0, 1, 1], [], []>} : vector<81x32xbf16>, vector<32x32xbf16>, vector<81x32xf32> -> vector<81x32xf32>
    %68 = arith.addf %62, %67 : vector<81x32xf32>
    %c17 = arith.constant 17 : index
    %c0_36 = arith.constant 0 : index
    %69 = vector.load %arg18[%c17, %c0_36] : memref<120x32xf32, #tpu.memory_space<vmem>>, vector<81x32xf32>
    %70 = vector.broadcast %24 : vector<81x1xf32> to vector<81x32xf32>
    %71 = arith.mulf %69, %70 : vector<81x32xf32>
    %72 = arith.truncf %71 : vector<81x32xf32> to vector<81x32xbf16>
    %c5 = arith.constant 5 : index
    %c0_37 = arith.constant 0 : index
    %c0_38 = arith.constant 0 : index
    %73 = vector.load %arg2[%c5, %c0_37, %c0_38] : memref<9x32x32xbf16, #tpu.memory_space<vmem>>, vector<1x32x32xbf16>
    %74 = vector.shape_cast %73 : vector<1x32x32xbf16> to vector<32x32xbf16>
    %cst_39 = arith.constant dense<0.000000e+00> : vector<81x32xf32>
    %75 = tpu.matmul %72, %74, %cst_39 {dimension_numbers = #tpu.dot_dimension_numbers<[1], [0], [0], [1], [0, 0, 1, 1], [], []>} : vector<81x32xbf16>, vector<32x32xbf16>, vector<81x32xf32> -> vector<81x32xf32>
    %76 = arith.addf %68, %75 : vector<81x32xf32>
    %c24 = arith.constant 24 : index
    %c0_40 = arith.constant 0 : index
    %77 = vector.load %arg18[%c24, %c0_40] : memref<120x32xf32, #tpu.memory_space<vmem>>, vector<81x32xf32>
    %78 = vector.broadcast %20 : vector<81x1xf32> to vector<81x32xf32>
    %79 = arith.mulf %77, %78 : vector<81x32xf32>
    %80 = arith.truncf %79 : vector<81x32xf32> to vector<81x32xbf16>
    %c6_41 = arith.constant 6 : index
    %c0_42 = arith.constant 0 : index
    %c0_43 = arith.constant 0 : index
    %81 = vector.load %arg2[%c6_41, %c0_42, %c0_43] : memref<9x32x32xbf16, #tpu.memory_space<vmem>>, vector<1x32x32xbf16>
    %82 = vector.shape_cast %81 : vector<1x32x32xbf16> to vector<32x32xbf16>
    %cst_44 = arith.constant dense<0.000000e+00> : vector<81x32xf32>
    %83 = tpu.matmul %80, %82, %cst_44 {dimension_numbers = #tpu.dot_dimension_numbers<[1], [0], [0], [1], [0, 0, 1, 1], [], []>} : vector<81x32xbf16>, vector<32x32xbf16>, vector<81x32xf32> -> vector<81x32xf32>
    %84 = arith.addf %76, %83 : vector<81x32xf32>
    %c25 = arith.constant 25 : index
    %c0_45 = arith.constant 0 : index
    %85 = vector.load %arg18[%c25, %c0_45] : memref<120x32xf32, #tpu.memory_space<vmem>>, vector<81x32xf32>
    %86 = arith.truncf %85 : vector<81x32xf32> to vector<81x32xbf16>
    %c7_46 = arith.constant 7 : index
    %c0_47 = arith.constant 0 : index
    %c0_48 = arith.constant 0 : index
    %87 = vector.load %arg2[%c7_46, %c0_47, %c0_48] : memref<9x32x32xbf16, #tpu.memory_space<vmem>>, vector<1x32x32xbf16>
    %88 = vector.shape_cast %87 : vector<1x32x32xbf16> to vector<32x32xbf16>
    %cst_49 = arith.constant dense<0.000000e+00> : vector<81x32xf32>
    %89 = tpu.matmul %86, %88, %cst_49 {dimension_numbers = #tpu.dot_dimension_numbers<[1], [0], [0], [1], [0, 0, 1, 1], [], []>} : vector<81x32xbf16>, vector<32x32xbf16>, vector<81x32xf32> -> vector<81x32xf32>
    %90 = arith.addf %84, %89 : vector<81x32xf32>
    %c26 = arith.constant 26 : index
    %c0_50 = arith.constant 0 : index
    %91 = vector.load %arg18[%c26, %c0_50] : memref<120x32xf32, #tpu.memory_space<vmem>>, vector<81x32xf32>
    %92 = vector.broadcast %24 : vector<81x1xf32> to vector<81x32xf32>
    %93 = arith.mulf %91, %92 : vector<81x32xf32>
    %94 = arith.truncf %93 : vector<81x32xf32> to vector<81x32xbf16>
    %c8_51 = arith.constant 8 : index
    %c0_52 = arith.constant 0 : index
    %c0_53 = arith.constant 0 : index
    %95 = vector.load %arg2[%c8_51, %c0_52, %c0_53] : memref<9x32x32xbf16, #tpu.memory_space<vmem>>, vector<1x32x32xbf16>
    %96 = vector.shape_cast %95 : vector<1x32x32xbf16> to vector<32x32xbf16>
    %cst_54 = arith.constant dense<0.000000e+00> : vector<81x32xf32>
    %97 = tpu.matmul %94, %96, %cst_54 {dimension_numbers = #tpu.dot_dimension_numbers<[1], [0], [0], [1], [0, 0, 1, 1], [], []>} : vector<81x32xbf16>, vector<32x32xbf16>, vector<81x32xf32> -> vector<81x32xf32>
    %98 = arith.addf %90, %97 : vector<81x32xf32>
    %99 = vector.shape_cast %98 : vector<81x32xf32> to vector<1x81x32xf32>
    %cst_55 = arith.constant dense<0.000000e+00> : vector<1xf32>
    %100 = vector.multi_reduction <add>, %99, %cst_55 [1, 2] : vector<1x81x32xf32> to vector<1xf32>
    %101 = vector.shape_cast %100 : vector<1xf32> to vector<1x1x1xf32>
    %102 = vector.extract %101[0, 0, 0] : f32 from vector<1x1x1xf32>
    %103 = vector.broadcast %102 : f32 to vector<1x1xf32>
    %cst_56 = arith.constant 2.592000e+03 : f32
    %104 = vector.broadcast %cst_56 : f32 to vector<1x1xf32>
    %105 = arith.divf %103, %104 : vector<1x1xf32>
    %106 = vector.broadcast %105 : vector<1x1xf32> to vector<81x32xf32>
    %107 = arith.subf %98, %106 : vector<81x32xf32>
    %108 = arith.mulf %107, %107 : vector<81x32xf32>
    %109 = vector.shape_cast %108 : vector<81x32xf32> to vector<1x81x32xf32>
    %cst_57 = arith.constant dense<0.000000e+00> : vector<1xf32>
    %110 = vector.multi_reduction <add>, %109, %cst_57 [1, 2] : vector<1x81x32xf32> to vector<1xf32>
    %111 = vector.shape_cast %110 : vector<1xf32> to vector<1x1x1xf32>
    %112 = vector.extract %111[0, 0, 0] : f32 from vector<1x1x1xf32>
    %113 = vector.broadcast %112 : f32 to vector<1x1xf32>
    %cst_58 = arith.constant 2.592000e+03 : f32
    %114 = vector.broadcast %cst_58 : f32 to vector<1x1xf32>
    %115 = arith.divf %113, %114 : vector<1x1xf32>
    %116 = vector.broadcast %105 : vector<1x1xf32> to vector<81x32xf32>
    %117 = arith.subf %98, %116 : vector<81x32xf32>
    %cst_59 = arith.constant 9.99999974E-6 : f32
    %118 = vector.broadcast %cst_59 : f32 to vector<1x1xf32>
    %119 = arith.addf %115, %118 : vector<1x1xf32>
    %120 = math.rsqrt %119 : vector<1x1xf32>
    %121 = vector.broadcast %120 : vector<1x1xf32> to vector<81x32xf32>
    %122 = arith.mulf %117, %121 : vector<81x32xf32>
    %123 = arith.mulf %122, %29 : vector<81x32xf32>
    %124 = arith.addf %123, %30 : vector<81x32xf32>
    %cst_60 = arith.constant 0.000000e+00 : f32
    %125 = vector.broadcast %cst_60 : f32 to vector<81x32xf32>
    %126 = arith.maximumf %124, %125 : vector<81x32xf32>
    %c0_61 = arith.constant 0 : index
    %c0_62 = arith.constant 0 : index
    %c0_63 = arith.constant 0 : index
    %127 = vector.load %arg6[%c0_61, %c0_62, %c0_63] : memref<4x81x32xf32, #tpu.memory_space<vmem>>, vector<1x81x32xf32>
    %128 = vector.shape_cast %127 : vector<1x81x32xf32> to vector<81x32xf32>
    %c0_64 = arith.constant 0 : index
    %c0_65 = arith.constant 0 : index
    %c0_66 = arith.constant 0 : index
    %129 = vector.load %arg7[%c0_64, %c0_65, %c0_66] : memref<4x81x32xf32, #tpu.memory_space<vmem>>, vector<1x81x32xf32>
    %130 = vector.shape_cast %129 : vector<1x81x32xf32> to vector<81x32xf32>
    %c16_67 = arith.constant 16 : index
    %c0_68 = arith.constant 0 : index
    %131 = vector.load %arg18[%c16_67, %c0_68] : memref<120x32xf32, #tpu.memory_space<vmem>>, vector<81x32xf32>
    tpu.vector_store %arg18[%c16_67, %c0_68], %126 {strides = array<i32>} : memref<120x32xf32, #tpu.memory_space<vmem>>, vector<81x32xf32>,
    %cst_69 = arith.constant 0.000000e+00 : f32
    %132 = vector.broadcast %cst_69 : f32 to vector<81x32xf32>
    %c6_70 = arith.constant 6 : index
    %c0_71 = arith.constant 0 : index
    %133 = vector.load %arg18[%c6_70, %c0_71] : memref<120x32xf32, #tpu.memory_space<vmem>>, vector<81x32xf32>
    %134 = vector.broadcast %20 : vector<81x1xf32> to vector<81x32xf32>
    %135 = arith.mulf %133, %134 : vector<81x32xf32>
    %136 = arith.truncf %135 : vector<81x32xf32> to vector<81x32xbf16>
    %c0_72 = arith.constant 0 : index
    %c0_73 = arith.constant 0 : index
    %c0_74 = arith.constant 0 : index
    %137 = vector.load %arg5[%c0_72, %c0_73, %c0_74] : memref<36x32x32xbf16, #tpu.memory_space<vmem>>, vector<1x32x32xbf16>
    %138 = vector.shape_cast %137 : vector<1x32x32xbf16> to vector<32x32xbf16>
    %cst_75 = arith.constant dense<0.000000e+00> : vector<81x32xf32>
    %139 = tpu.matmul %136, %138, %cst_75 {dimension_numbers = #tpu.dot_dimension_numbers<[1], [0], [0], [1], [0, 0, 1, 1], [], []>} : vector<81x32xbf16>, vector<32x32xbf16>, vector<81x32xf32> -> vector<81x32xf32>
    %140 = arith.addf %132, %139 : vector<81x32xf32>
    %c7_76 = arith.constant 7 : index
    %c0_77 = arith.constant 0 : index
    %141 = vector.load %arg18[%c7_76, %c0_77] : memref<120x32xf32, #tpu.memory_space<vmem>>, vector<81x32xf32>
    %142 = arith.truncf %141 : vector<81x32xf32> to vector<81x32xbf16>
    %c1_78 = arith.constant 1 : index
    %c0_79 = arith.constant 0 : index
    %c0_80 = arith.constant 0 : index
    %143 = vector.load %arg5[%c1_78, %c0_79, %c0_80] : memref<36x32x32xbf16, #tpu.memory_space<vmem>>, vector<1x32x32xbf16>
    %144 = vector.shape_cast %143 : vector<1x32x32xbf16> to vector<32x32xbf16>
    %cst_81 = arith.constant dense<0.000000e+00> : vector<81x32xf32>
    %145 = tpu.matmul %142, %144, %cst_81 {dimension_numbers = #tpu.dot_dimension_numbers<[1], [0], [0], [1], [0, 0, 1, 1], [], []>} : vector<81x32xbf16>, vector<32x32xbf16>, vector<81x32xf32> -> vector<81x32xf32>
    %146 = arith.addf %140, %145 : vector<81x32xf32>
    %c8_82 = arith.constant 8 : index
    %c0_83 = arith.constant 0 : index
    %147 = vector.load %arg18[%c8_82, %c0_83] : memref<120x32xf32, #tpu.memory_space<vmem>>, vector<81x32xf32>
    %148 = vector.broadcast %24 : vector<81x1xf32> to vector<81x32xf32>
    %149 = arith.mulf %147, %148 : vector<81x32xf32>
    %150 = arith.truncf %149 : vector<81x32xf32> to vector<81x32xbf16>
    %c2_84 = arith.constant 2 : index
    %c0_85 = arith.constant 0 : index
    %c0_86 = arith.constant 0 : index
    %151 = vector.load %arg5[%c2_84, %c0_85, %c0_86] : memref<36x32x32xbf16, #tpu.memory_space<vmem>>, vector<1x32x32xbf16>
    %152 = vector.shape_cast %151 : vector<1x32x32xbf16> to vector<32x32xbf16>
    %cst_87 = arith.constant dense<0.000000e+00> : vector<81x32xf32>
    %153 = tpu.matmul %150, %152, %cst_87 {dimension_numbers = #tpu.dot_dimension_numbers<[1], [0], [0], [1], [0, 0, 1, 1], [], []>} : vector<81x32xbf16>, vector<32x32xbf16>, vector<81x32xf32> -> vector<81x32xf32>
    %154 = arith.addf %146, %153 : vector<81x32xf32>
    %c15_88 = arith.constant 15 : index
    %c0_89 = arith.constant 0 : index
    %155 = vector.load %arg18[%c15_88, %c0_89] : memref<120x32xf32, #tpu.memory_space<vmem>>, vector<81x32xf32>
    %156 = vector.broadcast %20 : vector<81x1xf32> to vector<81x32xf32>
    %157 = arith.mulf %155, %156 : vector<81x32xf32>
    %158 = arith.truncf %157 : vector<81x32xf32> to vector<81x32xbf16>
    %c3_90 = arith.constant 3 : index
    %c0_91 = arith.constant 0 : index
    %c0_92 = arith.constant 0 : index
    %159 = vector.load %arg5[%c3_90, %c0_91, %c0_92] : memref<36x32x32xbf16, #tpu.memory_space<vmem>>, vector<1x32x32xbf16>
    %160 = vector.shape_cast %159 : vector<1x32x32xbf16> to vector<32x32xbf16>
    %cst_93 = arith.constant dense<0.000000e+00> : vector<81x32xf32>
    %161 = tpu.matmul %158, %160, %cst_93 {dimension_numbers = #tpu.dot_dimension_numbers<[1], [0], [0], [1], [0, 0, 1, 1], [], []>} : vector<81x32xbf16>, vector<32x32xbf16>, vector<81x32xf32> -> vector<81x32xf32>
    %162 = arith.addf %154, %161 : vector<81x32xf32>
    %c16_94 = arith.constant 16 : index
    %c0_95 = arith.constant 0 : index
    %163 = vector.load %arg18[%c16_94, %c0_95] : memref<120x32xf32, #tpu.memory_space<vmem>>, vector<81x32xf32>
    %164 = arith.truncf %163 : vector<81x32xf32> to vector<81x32xbf16>
    %c4_96 = arith.constant 4 : index
    %c0_97 = arith.constant 0 : index
    %c0_98 = arith.constant 0 : index
    %165 = vector.load %arg5[%c4_96, %c0_97, %c0_98] : memref<36x32x32xbf16, #tpu.memory_space<vmem>>, vector<1x32x32xbf16>
    %166 = vector.shape_cast %165 : vector<1x32x32xbf16> to vector<32x32xbf16>
    %cst_99 = arith.constant dense<0.000000e+00> : vector<81x32xf32>
    %167 = tpu.matmul %164, %166, %cst_99 {dimension_numbers = #tpu.dot_dimension_numbers<[1], [0], [0], [1], [0, 0, 1, 1], [], []>} : vector<81x32xbf16>, vector<32x32xbf16>, vector<81x32xf32> -> vector<81x32xf32>
    %168 = arith.addf %162, %167 : vector<81x32xf32>
    %c17_100 = arith.constant 17 : index
    %c0_101 = arith.constant 0 : index
    %169 = vector.load %arg18[%c17_100, %c0_101] : memref<120x32xf32, #tpu.memory_space<vmem>>, vector<81x32xf32>
    %170 = vector.broadcast %24 : vector<81x1xf32> to vector<81x32xf32>
    %171 = arith.mulf %169, %170 : vector<81x32xf32>
    %172 = arith.truncf %171 : vector<81x32xf32> to vector<81x32xbf16>
    %c5_102 = arith.constant 5 : index
    %c0_103 = arith.constant 0 : index
    %c0_104 = arith.constant 0 : index
    %173 = vector.load %arg5[%c5_102, %c0_103, %c0_104] : memref<36x32x32xbf16, #tpu.memory_space<vmem>>, vector<1x32x32xbf16>
    %174 = vector.shape_cast %173 : vector<1x32x32xbf16> to vector<32x32xbf16>
    %cst_105 = arith.constant dense<0.000000e+00> : vector<81x32xf32>
    %175 = tpu.matmul %172, %174, %cst_105 {dimension_numbers = #tpu.dot_dimension_numbers<[1], [0], [0], [1], [0, 0, 1, 1], [], []>} : vector<81x32xbf16>, vector<32x32xbf16>, vector<81x32xf32> -> vector<81x32xf32>
    %176 = arith.addf %168, %175 : vector<81x32xf32>
    %c24_106 = arith.constant 24 : index
    %c0_107 = arith.constant 0 : index
    %177 = vector.load %arg18[%c24_106, %c0_107] : memref<120x32xf32, #tpu.memory_space<vmem>>, vector<81x32xf32>
    %178 = vector.broadcast %20 : vector<81x1xf32> to vector<81x32xf32>
    %179 = arith.mulf %177, %178 : vector<81x32xf32>
    %180 = arith.truncf %179 : vector<81x32xf32> to vector<81x32xbf16>
    %c6_108 = arith.constant 6 : index
    %c0_109 = arith.constant 0 : index
    %c0_110 = arith.constant 0 : index
    %181 = vector.load %arg5[%c6_108, %c0_109, %c0_110] : memref<36x32x32xbf16, #tpu.memory_space<vmem>>, vector<1x32x32xbf16>
    %182 = vector.shape_cast %181 : vector<1x32x32xbf16> to vector<32x32xbf16>
    %cst_111 = arith.constant dense<0.000000e+00> : vector<81x32xf32>
    %183 = tpu.matmul %180, %182, %cst_111 {dimension_numbers = #tpu.dot_dimension_numbers<[1], [0], [0], [1], [0, 0, 1, 1], [], []>} : vector<81x32xbf16>, vector<32x32xbf16>, vector<81x32xf32> -> vector<81x32xf32>
    %184 = arith.addf %176, %183 : vector<81x32xf32>
    %c25_112 = arith.constant 25 : index
    %c0_113 = arith.constant 0 : index
    %185 = vector.load %arg18[%c25_112, %c0_113] : memref<120x32xf32, #tpu.memory_space<vmem>>, vector<81x32xf32>
    %186 = arith.truncf %185 : vector<81x32xf32> to vector<81x32xbf16>
    %c7_114 = arith.constant 7 : index
    %c0_115 = arith.constant 0 : index
    %c0_116 = arith.constant 0 : index
    %187 = vector.load %arg5[%c7_114, %c0_115, %c0_116] : memref<36x32x32xbf16, #tpu.memory_space<vmem>>, vector<1x32x32xbf16>
    %188 = vector.shape_cast %187 : vector<1x32x32xbf16> to vector<32x32xbf16>
    %cst_117 = arith.constant dense<0.000000e+00> : vector<81x32xf32>
    %189 = tpu.matmul %186, %188, %cst_117 {dimension_numbers = #tpu.dot_dimension_numbers<[1], [0], [0], [1], [0, 0, 1, 1], [], []>} : vector<81x32xbf16>, vector<32x32xbf16>, vector<81x32xf32> -> vector<81x32xf32>
    %190 = arith.addf %184, %189 : vector<81x32xf32>
    %c26_118 = arith.constant 26 : index
    %c0_119 = arith.constant 0 : index
    %191 = vector.load %arg18[%c26_118, %c0_119] : memref<120x32xf32, #tpu.memory_space<vmem>>, vector<81x32xf32>
    %192 = vector.broadcast %24 : vector<81x1xf32> to vector<81x32xf32>
    %193 = arith.mulf %191, %192 : vector<81x32xf32>
    %194 = arith.truncf %193 : vector<81x32xf32> to vector<81x32xbf16>
    %c8_120 = arith.constant 8 : index
    %c0_121 = arith.constant 0 : index
    %c0_122 = arith.constant 0 : index
    %195 = vector.load %arg5[%c8_120, %c0_121, %c0_122] : memref<36x32x32xbf16, #tpu.memory_space<vmem>>, vector<1x32x32xbf16>
    %196 = vector.shape_cast %195 : vector<1x32x32xbf16> to vector<32x32xbf16>
    %cst_123 = arith.constant dense<0.000000e+00> : vector<81x32xf32>
    %197 = tpu.matmul %194, %196, %cst_123 {dimension_numbers = #tpu.dot_dimension_numbers<[1], [0], [0], [1], [0, 0, 1, 1], [], []>} : vector<81x32xbf16>, vector<32x32xbf16>, vector<81x32xf32> -> vector<81x32xf32>
    %198 = arith.addf %190, %197 : vector<81x32xf32>
    %199 = vector.shape_cast %198 : vector<81x32xf32> to vector<1x81x32xf32>
    %cst_124 = arith.constant dense<0.000000e+00> : vector<1xf32>
    %200 = vector.multi_reduction <add>, %199, %cst_124 [1, 2] : vector<1x81x32xf32> to vector<1xf32>
    %201 = vector.shape_cast %200 : vector<1xf32> to vector<1x1x1xf32>
    %202 = vector.extract %201[0, 0, 0] : f32 from vector<1x1x1xf32>
    %203 = vector.broadcast %202 : f32 to vector<1x1xf32>
    %cst_125 = arith.constant 2.592000e+03 : f32
    %204 = vector.broadcast %cst_125 : f32 to vector<1x1xf32>
    %205 = arith.divf %203, %204 : vector<1x1xf32>
    %206 = vector.broadcast %205 : vector<1x1xf32> to vector<81x32xf32>
    %207 = arith.subf %198, %206 : vector<81x32xf32>
    %208 = arith.mulf %207, %207 : vector<81x32xf32>
    %209 = vector.shape_cast %208 : vector<81x32xf32> to vector<1x81x32xf32>
    %cst_126 = arith.constant dense<0.000000e+00> : vector<1xf32>
    %210 = vector.multi_reduction <add>, %209, %cst_126 [1, 2] : vector<1x81x32xf32> to vector<1xf32>
    %211 = vector.shape_cast %210 : vector<1xf32> to vector<1x1x1xf32>
    %212 = vector.extract %211[0, 0, 0] : f32 from vector<1x1x1xf32>
    %213 = vector.broadcast %212 : f32 to vector<1x1xf32>
    %cst_127 = arith.constant 2.592000e+03 : f32
    %214 = vector.broadcast %cst_127 : f32 to vector<1x1xf32>
    %215 = arith.divf %213, %214 : vector<1x1xf32>
    %216 = vector.broadcast %205 : vector<1x1xf32> to vector<81x32xf32>
    %217 = arith.subf %198, %216 : vector<81x32xf32>
    %cst_128 = arith.constant 9.99999974E-6 : f32
    %218 = vector.broadcast %cst_128 : f32 to vector<1x1xf32>
    %219 = arith.addf %215, %218 : vector<1x1xf32>
    %220 = math.rsqrt %219 : vector<1x1xf32>
    %221 = vector.broadcast %220 : vector<1x1xf32> to vector<81x32xf32>
    %222 = arith.mulf %217, %221 : vector<81x32xf32>
    %223 = arith.mulf %222, %128 : vector<81x32xf32>
    %224 = arith.addf %223, %130 : vector<81x32xf32>
    %cst_129 = arith.constant 0.000000e+00 : f32
    %225 = vector.broadcast %cst_129 : f32 to vector<81x32xf32>
    %226 = arith.maximumf %224, %225 : vector<81x32xf32>
    %c1_130 = arith.constant 1 : index
    %c0_131 = arith.constant 0 : index
    %c0_132 = arith.constant 0 : index
    %227 = vector.load %arg6[%c1_130, %c0_131, %c0_132] : memref<4x81x32xf32, #tpu.memory_space<vmem>>, vector<1x81x32xf32>
    %228 = vector.shape_cast %227 : vector<1x81x32xf32> to vector<81x32xf32>
    %c1_133 = arith.constant 1 : index
    %c0_134 = arith.constant 0 : index
    %c0_135 = arith.constant 0 : index
    %229 = vector.load %arg7[%c1_133, %c0_134, %c0_135] : memref<4x81x32xf32, #tpu.memory_space<vmem>>, vector<1x81x32xf32>
    %230 = vector.shape_cast %229 : vector<1x81x32xf32> to vector<81x32xf32>
    %c16_136 = arith.constant 16 : index
    %c0_137 = arith.constant 0 : index
    %231 = vector.load %arg18[%c16_136, %c0_137] : memref<120x32xf32, #tpu.memory_space<vmem>>, vector<81x32xf32>
    tpu.vector_store %arg18[%c16_136, %c0_137], %226 {strides = array<i32>} : memref<120x32xf32, #tpu.memory_space<vmem>>, vector<81x32xf32>,
    %cst_138 = arith.constant 0.000000e+00 : f32
    %232 = vector.broadcast %cst_138 : f32 to vector<81x32xf32>
    %c6_139 = arith.constant 6 : index
    %c0_140 = arith.constant 0 : index
    %233 = vector.load %arg18[%c6_139, %c0_140] : memref<120x32xf32, #tpu.memory_space<vmem>>, vector<81x32xf32>
    %234 = vector.broadcast %20 : vector<81x1xf32> to vector<81x32xf32>
    %235 = arith.mulf %233, %234 : vector<81x32xf32>
    %236 = arith.truncf %235 : vector<81x32xf32> to vector<81x32xbf16>
    %c9 = arith.constant 9 : index
    %c0_141 = arith.constant 0 : index
    %c0_142 = arith.constant 0 : index
    %237 = vector.load %arg5[%c9, %c0_141, %c0_142] : memref<36x32x32xbf16, #tpu.memory_space<vmem>>, vector<1x32x32xbf16>
    %238 = vector.shape_cast %237 : vector<1x32x32xbf16> to vector<32x32xbf16>
    %cst_143 = arith.constant dense<0.000000e+00> : vector<81x32xf32>
    %239 = tpu.matmul %236, %238, %cst_143 {dimension_numbers = #tpu.dot_dimension_numbers<[1], [0], [0], [1], [0, 0, 1, 1], [], []>} : vector<81x32xbf16>, vector<32x32xbf16>, vector<81x32xf32> -> vector<81x32xf32>
    %240 = arith.addf %232, %239 : vector<81x32xf32>
    %c7_144 = arith.constant 7 : index
    %c0_145 = arith.constant 0 : index
    %241 = vector.load %arg18[%c7_144, %c0_145] : memref<120x32xf32, #tpu.memory_space<vmem>>, vector<81x32xf32>
    %242 = arith.truncf %241 : vector<81x32xf32> to vector<81x32xbf16>
    %c10 = arith.constant 10 : index
    %c0_146 = arith.constant 0 : index
    %c0_147 = arith.constant 0 : index
    %243 = vector.load %arg5[%c10, %c0_146, %c0_147] : memref<36x32x32xbf16, #tpu.memory_space<vmem>>, vector<1x32x32xbf16>
    %244 = vector.shape_cast %243 : vector<1x32x32xbf16> to vector<32x32xbf16>
    %cst_148 = arith.constant dense<0.000000e+00> : vector<81x32xf32>
    %245 = tpu.matmul %242, %244, %cst_148 {dimension_numbers = #tpu.dot_dimension_numbers<[1], [0], [0], [1], [0, 0, 1, 1], [], []>} : vector<81x32xbf16>, vector<32x32xbf16>, vector<81x32xf32> -> vector<81x32xf32>
    %246 = arith.addf %240, %245 : vector<81x32xf32>
    %c8_149 = arith.constant 8 : index
    %c0_150 = arith.constant 0 : index
    %247 = vector.load %arg18[%c8_149, %c0_150] : memref<120x32xf32, #tpu.memory_space<vmem>>, vector<81x32xf32>
    %248 = vector.broadcast %24 : vector<81x1xf32> to vector<81x32xf32>
    %249 = arith.mulf %247, %248 : vector<81x32xf32>
    %250 = arith.truncf %249 : vector<81x32xf32> to vector<81x32xbf16>
    %c11 = arith.constant 11 : index
    %c0_151 = arith.constant 0 : index
    %c0_152 = arith.constant 0 : index
    %251 = vector.load %arg5[%c11, %c0_151, %c0_152] : memref<36x32x32xbf16, #tpu.memory_space<vmem>>, vector<1x32x32xbf16>
    %252 = vector.shape_cast %251 : vector<1x32x32xbf16> to vector<32x32xbf16>
    %cst_153 = arith.constant dense<0.000000e+00> : vector<81x32xf32>
    %253 = tpu.matmul %250, %252, %cst_153 {dimension_numbers = #tpu.dot_dimension_numbers<[1], [0], [0], [1], [0, 0, 1, 1], [], []>} : vector<81x32xbf16>, vector<32x32xbf16>, vector<81x32xf32> -> vector<81x32xf32>
    %254 = arith.addf %246, %253 : vector<81x32xf32>
    %c15_154 = arith.constant 15 : index
    %c0_155 = arith.constant 0 : index
    %255 = vector.load %arg18[%c15_154, %c0_155] : memref<120x32xf32, #tpu.memory_space<vmem>>, vector<81x32xf32>
    %256 = vector.broadcast %20 : vector<81x1xf32> to vector<81x32xf32>
    %257 = arith.mulf %255, %256 : vector<81x32xf32>
    %258 = arith.truncf %257 : vector<81x32xf32> to vector<81x32xbf16>
    %c12 = arith.constant 12 : index
    %c0_156 = arith.constant 0 : index
    %c0_157 = arith.constant 0 : index
    %259 = vector.load %arg5[%c12, %c0_156, %c0_157] : memref<36x32x32xbf16, #tpu.memory_space<vmem>>, vector<1x32x32xbf16>
    %260 = vector.shape_cast %259 : vector<1x32x32xbf16> to vector<32x32xbf16>
    %cst_158 = arith.constant dense<0.000000e+00> : vector<81x32xf32>
    %261 = tpu.matmul %258, %260, %cst_158 {dimension_numbers = #tpu.dot_dimension_numbers<[1], [0], [0], [1], [0, 0, 1, 1], [], []>} : vector<81x32xbf16>, vector<32x32xbf16>, vector<81x32xf32> -> vector<81x32xf32>
    %262 = arith.addf %254, %261 : vector<81x32xf32>
    %c16_159 = arith.constant 16 : index
    %c0_160 = arith.constant 0 : index
    %263 = vector.load %arg18[%c16_159, %c0_160] : memref<120x32xf32, #tpu.memory_space<vmem>>, vector<81x32xf32>
    %264 = arith.truncf %263 : vector<81x32xf32> to vector<81x32xbf16>
    %c13 = arith.constant 13 : index
    %c0_161 = arith.constant 0 : index
    %c0_162 = arith.constant 0 : index
    %265 = vector.load %arg5[%c13, %c0_161, %c0_162] : memref<36x32x32xbf16, #tpu.memory_space<vmem>>, vector<1x32x32xbf16>
    %266 = vector.shape_cast %265 : vector<1x32x32xbf16> to vector<32x32xbf16>
    %cst_163 = arith.constant dense<0.000000e+00> : vector<81x32xf32>
    %267 = tpu.matmul %264, %266, %cst_163 {dimension_numbers = #tpu.dot_dimension_numbers<[1], [0], [0], [1], [0, 0, 1, 1], [], []>} : vector<81x32xbf16>, vector<32x32xbf16>, vector<81x32xf32> -> vector<81x32xf32>
    %268 = arith.addf %262, %267 : vector<81x32xf32>
    %c17_164 = arith.constant 17 : index
    %c0_165 = arith.constant 0 : index
    %269 = vector.load %arg18[%c17_164, %c0_165] : memref<120x32xf32, #tpu.memory_space<vmem>>, vector<81x32xf32>
    %270 = vector.broadcast %24 : vector<81x1xf32> to vector<81x32xf32>
    %271 = arith.mulf %269, %270 : vector<81x32xf32>
    %272 = arith.truncf %271 : vector<81x32xf32> to vector<81x32xbf16>
    %c14 = arith.constant 14 : index
    %c0_166 = arith.constant 0 : index
    %c0_167 = arith.constant 0 : index
    %273 = vector.load %arg5[%c14, %c0_166, %c0_167] : memref<36x32x32xbf16, #tpu.memory_space<vmem>>, vector<1x32x32xbf16>
    %274 = vector.shape_cast %273 : vector<1x32x32xbf16> to vector<32x32xbf16>
    %cst_168 = arith.constant dense<0.000000e+00> : vector<81x32xf32>
    %275 = tpu.matmul %272, %274, %cst_168 {dimension_numbers = #tpu.dot_dimension_numbers<[1], [0], [0], [1], [0, 0, 1, 1], [], []>} : vector<81x32xbf16>, vector<32x32xbf16>, vector<81x32xf32> -> vector<81x32xf32>
    %276 = arith.addf %268, %275 : vector<81x32xf32>
    %c24_169 = arith.constant 24 : index
    %c0_170 = arith.constant 0 : index
    %277 = vector.load %arg18[%c24_169, %c0_170] : memref<120x32xf32, #tpu.memory_space<vmem>>, vector<81x32xf32>
    %278 = vector.broadcast %20 : vector<81x1xf32> to vector<81x32xf32>
    %279 = arith.mulf %277, %278 : vector<81x32xf32>
    %280 = arith.truncf %279 : vector<81x32xf32> to vector<81x32xbf16>
    %c15_171 = arith.constant 15 : index
    %c0_172 = arith.constant 0 : index
    %c0_173 = arith.constant 0 : index
    %281 = vector.load %arg5[%c15_171, %c0_172, %c0_173] : memref<36x32x32xbf16, #tpu.memory_space<vmem>>, vector<1x32x32xbf16>
    %282 = vector.shape_cast %281 : vector<1x32x32xbf16> to vector<32x32xbf16>
    %cst_174 = arith.constant dense<0.000000e+00> : vector<81x32xf32>
    %283 = tpu.matmul %280, %282, %cst_174 {dimension_numbers = #tpu.dot_dimension_numbers<[1], [0], [0], [1], [0, 0, 1, 1], [], []>} : vector<81x32xbf16>, vector<32x32xbf16>, vector<81x32xf32> -> vector<81x32xf32>
    %284 = arith.addf %276, %283 : vector<81x32xf32>
    %c25_175 = arith.constant 25 : index
    %c0_176 = arith.constant 0 : index
    %285 = vector.load %arg18[%c25_175, %c0_176] : memref<120x32xf32, #tpu.memory_space<vmem>>, vector<81x32xf32>
    %286 = arith.truncf %285 : vector<81x32xf32> to vector<81x32xbf16>
    %c16_177 = arith.constant 16 : index
    %c0_178 = arith.constant 0 : index
    %c0_179 = arith.constant 0 : index
    %287 = vector.load %arg5[%c16_177, %c0_178, %c0_179] : memref<36x32x32xbf16, #tpu.memory_space<vmem>>, vector<1x32x32xbf16>
    %288 = vector.shape_cast %287 : vector<1x32x32xbf16> to vector<32x32xbf16>
    %cst_180 = arith.constant dense<0.000000e+00> : vector<81x32xf32>
    %289 = tpu.matmul %286, %288, %cst_180 {dimension_numbers = #tpu.dot_dimension_numbers<[1], [0], [0], [1], [0, 0, 1, 1], [], []>} : vector<81x32xbf16>, vector<32x32xbf16>, vector<81x32xf32> -> vector<81x32xf32>
    %290 = arith.addf %284, %289 : vector<81x32xf32>
    %c26_181 = arith.constant 26 : index
    %c0_182 = arith.constant 0 : index
    %291 = vector.load %arg18[%c26_181, %c0_182] : memref<120x32xf32, #tpu.memory_space<vmem>>, vector<81x32xf32>
    %292 = vector.broadcast %24 : vector<81x1xf32> to vector<81x32xf32>
    %293 = arith.mulf %291, %292 : vector<81x32xf32>
    %294 = arith.truncf %293 : vector<81x32xf32> to vector<81x32xbf16>
    %c17_183 = arith.constant 17 : index
    %c0_184 = arith.constant 0 : index
    %c0_185 = arith.constant 0 : index
    %295 = vector.load %arg5[%c17_183, %c0_184, %c0_185] : memref<36x32x32xbf16, #tpu.memory_space<vmem>>, vector<1x32x32xbf16>
    %296 = vector.shape_cast %295 : vector<1x32x32xbf16> to vector<32x32xbf16>
    %cst_186 = arith.constant dense<0.000000e+00> : vector<81x32xf32>
    %297 = tpu.matmul %294, %296, %cst_186 {dimension_numbers = #tpu.dot_dimension_numbers<[1], [0], [0], [1], [0, 0, 1, 1], [], []>} : vector<81x32xbf16>, vector<32x32xbf16>, vector<81x32xf32> -> vector<81x32xf32>
    %298 = arith.addf %290, %297 : vector<81x32xf32>
    %299 = vector.shape_cast %298 : vector<81x32xf32> to vector<1x81x32xf32>
    %cst_187 = arith.constant dense<0.000000e+00> : vector<1xf32>
    %300 = vector.multi_reduction <add>, %299, %cst_187 [1, 2] : vector<1x81x32xf32> to vector<1xf32>
    %301 = vector.shape_cast %300 : vector<1xf32> to vector<1x1x1xf32>
    %302 = vector.extract %301[0, 0, 0] : f32 from vector<1x1x1xf32>
    %303 = vector.broadcast %302 : f32 to vector<1x1xf32>
    %cst_188 = arith.constant 2.592000e+03 : f32
    %304 = vector.broadcast %cst_188 : f32 to vector<1x1xf32>
    %305 = arith.divf %303, %304 : vector<1x1xf32>
    %306 = vector.broadcast %305 : vector<1x1xf32> to vector<81x32xf32>
    %307 = arith.subf %298, %306 : vector<81x32xf32>
    %308 = arith.mulf %307, %307 : vector<81x32xf32>
    %309 = vector.shape_cast %308 : vector<81x32xf32> to vector<1x81x32xf32>
    %cst_189 = arith.constant dense<0.000000e+00> : vector<1xf32>
    %310 = vector.multi_reduction <add>, %309, %cst_189 [1, 2] : vector<1x81x32xf32> to vector<1xf32>
    %311 = vector.shape_cast %310 : vector<1xf32> to vector<1x1x1xf32>
    %312 = vector.extract %311[0, 0, 0] : f32 from vector<1x1x1xf32>
    %313 = vector.broadcast %312 : f32 to vector<1x1xf32>
    %cst_190 = arith.constant 2.592000e+03 : f32
    %314 = vector.broadcast %cst_190 : f32 to vector<1x1xf32>
    %315 = arith.divf %313, %314 : vector<1x1xf32>
    %316 = vector.broadcast %305 : vector<1x1xf32> to vector<81x32xf32>
    %317 = arith.subf %298, %316 : vector<81x32xf32>
    %cst_191 = arith.constant 9.99999974E-6 : f32
    %318 = vector.broadcast %cst_191 : f32 to vector<1x1xf32>
    %319 = arith.addf %315, %318 : vector<1x1xf32>
    %320 = math.rsqrt %319 : vector<1x1xf32>
    %321 = vector.broadcast %320 : vector<1x1xf32> to vector<81x32xf32>
    %322 = arith.mulf %317, %321 : vector<81x32xf32>
    %323 = arith.mulf %322, %228 : vector<81x32xf32>
    %324 = arith.addf %323, %230 : vector<81x32xf32>
    %cst_192 = arith.constant dense<0.000000e+00> : vector<32xf32>
    %325 = vector.multi_reduction <add>, %324, %cst_192 [0] : vector<81x32xf32> to vector<32xf32>
    %326 = vector.shape_cast %325 : vector<32xf32> to vector<1x32xf32>
    %cst_193 = arith.constant 8.100000e+01 : f32
    %327 = vector.broadcast %cst_193 : f32 to vector<1x32xf32>
    %328 = arith.divf %326, %327 : vector<1x32xf32>
    %c0_194 = arith.constant 0 : index
    %c0_195 = arith.constant 0 : index
    %c0_196 = arith.constant 0 : index
    %329 = vector.load %arg8[%c0_194, %c0_195, %c0_196] : memref<2x32x4xf32, #tpu.memory_space<vmem>>, vector<1x32x4xf32>
    %330 = vector.shape_cast %329 : vector<1x32x4xf32> to vector<32x4xf32>
    %cst_197 = arith.constant dense<0.000000e+00> : vector<1x4xf32>
    %331 = tpu.matmul %328, %330, %cst_197 {dimension_numbers = #tpu.dot_dimension_numbers<[1], [0], [0], [1], [0, 0, 1, 1], [], []>} : vector<1x32xf32>, vector<32x4xf32>, vector<1x4xf32> -> vector<1x4xf32>
    %cst_198 = arith.constant 0.000000e+00 : f32
    %332 = vector.broadcast %cst_198 : f32 to vector<1x4xf32>
    %333 = arith.maximumf %331, %332 : vector<1x4xf32>
    %c0_199 = arith.constant 0 : index
    %c0_200 = arith.constant 0 : index
    %c0_201 = arith.constant 0 : index
    %334 = vector.load %arg9[%c0_199, %c0_200, %c0_201] : memref<2x4x32xf32, #tpu.memory_space<vmem>>, vector<1x4x32xf32>
    %335 = vector.shape_cast %334 : vector<1x4x32xf32> to vector<4x32xf32>
    %cst_202 = arith.constant dense<0.000000e+00> : vector<1x32xf32>
    %336 = tpu.matmul %333, %335, %cst_202 {dimension_numbers = #tpu.dot_dimension_numbers<[1], [0], [0], [1], [0, 0, 1, 1], [], []>} : vector<1x4xf32>, vector<4x32xf32>, vector<1x32xf32> -> vector<1x32xf32>
    %337 = arith.negf %336 : vector<1x32xf32>
    %338 = math.exp %337 : vector<1x32xf32>
    %cst_203 = arith.constant 1.000000e+00 : f32
    %339 = vector.broadcast %cst_203 : f32 to vector<1x32xf32>
    %340 = arith.addf %339, %338 : vector<1x32xf32>
    %341 = arith.divf %339, %340 : vector<1x32xf32>
    %342 = vector.broadcast %341 : vector<1x32xf32> to vector<81x32xf32>
    %343 = arith.mulf %324, %342 : vector<81x32xf32>
    %344 = arith.addf %126, %343 : vector<81x32xf32>
    %cst_204 = arith.constant 0.000000e+00 : f32
    %345 = vector.broadcast %cst_204 : f32 to vector<81x32xf32>
    %346 = arith.maximumf %344, %345 : vector<81x32xf32>
    %c2_205 = arith.constant 2 : index
    %c0_206 = arith.constant 0 : index
    %c0_207 = arith.constant 0 : index
    %347 = vector.load %arg6[%c2_205, %c0_206, %c0_207] : memref<4x81x32xf32, #tpu.memory_space<vmem>>, vector<1x81x32xf32>
    %348 = vector.shape_cast %347 : vector<1x81x32xf32> to vector<81x32xf32>
    %c2_208 = arith.constant 2 : index
    %c0_209 = arith.constant 0 : index
    %c0_210 = arith.constant 0 : index
    %349 = vector.load %arg7[%c2_208, %c0_209, %c0_210] : memref<4x81x32xf32, #tpu.memory_space<vmem>>, vector<1x81x32xf32>
    %350 = vector.shape_cast %349 : vector<1x81x32xf32> to vector<81x32xf32>
    %c16_211 = arith.constant 16 : index
    %c0_212 = arith.constant 0 : index
    %351 = vector.load %arg18[%c16_211, %c0_212] : memref<120x32xf32, #tpu.memory_space<vmem>>, vector<81x32xf32>
    tpu.vector_store %arg18[%c16_211, %c0_212], %346 {strides = array<i32>} : memref<120x32xf32, #tpu.memory_space<vmem>>, vector<81x32xf32>,
    %cst_213 = arith.constant 0.000000e+00 : f32
    %352 = vector.broadcast %cst_213 : f32 to vector<81x32xf32>
    %c6_214 = arith.constant 6 : index
    %c0_215 = arith.constant 0 : index
    %353 = vector.load %arg18[%c6_214, %c0_215] : memref<120x32xf32, #tpu.memory_space<vmem>>, vector<81x32xf32>
    %354 = vector.broadcast %20 : vector<81x1xf32> to vector<81x32xf32>
    %355 = arith.mulf %353, %354 : vector<81x32xf32>
    %356 = arith.truncf %355 : vector<81x32xf32> to vector<81x32xbf16>
    %c18 = arith.constant 18 : index
    %c0_216 = arith.constant 0 : index
    %c0_217 = arith.constant 0 : index
    %357 = vector.load %arg5[%c18, %c0_216, %c0_217] : memref<36x32x32xbf16, #tpu.memory_space<vmem>>, vector<1x32x32xbf16>
    %358 = vector.shape_cast %357 : vector<1x32x32xbf16> to vector<32x32xbf16>
    %cst_218 = arith.constant dense<0.000000e+00> : vector<81x32xf32>
    %359 = tpu.matmul %356, %358, %cst_218 {dimension_numbers = #tpu.dot_dimension_numbers<[1], [0], [0], [1], [0, 0, 1, 1], [], []>} : vector<81x32xbf16>, vector<32x32xbf16>, vector<81x32xf32> -> vector<81x32xf32>
    %360 = arith.addf %352, %359 : vector<81x32xf32>
    %c7_219 = arith.constant 7 : index
    %c0_220 = arith.constant 0 : index
    %361 = vector.load %arg18[%c7_219, %c0_220] : memref<120x32xf32, #tpu.memory_space<vmem>>, vector<81x32xf32>
    %362 = arith.truncf %361 : vector<81x32xf32> to vector<81x32xbf16>
    %c19 = arith.constant 19 : index
    %c0_221 = arith.constant 0 : index
    %c0_222 = arith.constant 0 : index
    %363 = vector.load %arg5[%c19, %c0_221, %c0_222] : memref<36x32x32xbf16, #tpu.memory_space<vmem>>, vector<1x32x32xbf16>
    %364 = vector.shape_cast %363 : vector<1x32x32xbf16> to vector<32x32xbf16>
    %cst_223 = arith.constant dense<0.000000e+00> : vector<81x32xf32>
    %365 = tpu.matmul %362, %364, %cst_223 {dimension_numbers = #tpu.dot_dimension_numbers<[1], [0], [0], [1], [0, 0, 1, 1], [], []>} : vector<81x32xbf16>, vector<32x32xbf16>, vector<81x32xf32> -> vector<81x32xf32>
    %366 = arith.addf %360, %365 : vector<81x32xf32>
    %c8_224 = arith.constant 8 : index
    %c0_225 = arith.constant 0 : index
    %367 = vector.load %arg18[%c8_224, %c0_225] : memref<120x32xf32, #tpu.memory_space<vmem>>, vector<81x32xf32>
    %368 = vector.broadcast %24 : vector<81x1xf32> to vector<81x32xf32>
    %369 = arith.mulf %367, %368 : vector<81x32xf32>
    %370 = arith.truncf %369 : vector<81x32xf32> to vector<81x32xbf16>
    %c20 = arith.constant 20 : index
    %c0_226 = arith.constant 0 : index
    %c0_227 = arith.constant 0 : index
    %371 = vector.load %arg5[%c20, %c0_226, %c0_227] : memref<36x32x32xbf16, #tpu.memory_space<vmem>>, vector<1x32x32xbf16>
    %372 = vector.shape_cast %371 : vector<1x32x32xbf16> to vector<32x32xbf16>
    %cst_228 = arith.constant dense<0.000000e+00> : vector<81x32xf32>
    %373 = tpu.matmul %370, %372, %cst_228 {dimension_numbers = #tpu.dot_dimension_numbers<[1], [0], [0], [1], [0, 0, 1, 1], [], []>} : vector<81x32xbf16>, vector<32x32xbf16>, vector<81x32xf32> -> vector<81x32xf32>
    %374 = arith.addf %366, %373 : vector<81x32xf32>
    %c15_229 = arith.constant 15 : index
    %c0_230 = arith.constant 0 : index
    %375 = vector.load %arg18[%c15_229, %c0_230] : memref<120x32xf32, #tpu.memory_space<vmem>>, vector<81x32xf32>
    %376 = vector.broadcast %20 : vector<81x1xf32> to vector<81x32xf32>
    %377 = arith.mulf %375, %376 : vector<81x32xf32>
    %378 = arith.truncf %377 : vector<81x32xf32> to vector<81x32xbf16>
    %c21 = arith.constant 21 : index
    %c0_231 = arith.constant 0 : index
    %c0_232 = arith.constant 0 : index
    %379 = vector.load %arg5[%c21, %c0_231, %c0_232] : memref<36x32x32xbf16, #tpu.memory_space<vmem>>, vector<1x32x32xbf16>
    %380 = vector.shape_cast %379 : vector<1x32x32xbf16> to vector<32x32xbf16>
    %cst_233 = arith.constant dense<0.000000e+00> : vector<81x32xf32>
    %381 = tpu.matmul %378, %380, %cst_233 {dimension_numbers = #tpu.dot_dimension_numbers<[1], [0], [0], [1], [0, 0, 1, 1], [], []>} : vector<81x32xbf16>, vector<32x32xbf16>, vector<81x32xf32> -> vector<81x32xf32>
    %382 = arith.addf %374, %381 : vector<81x32xf32>
    %c16_234 = arith.constant 16 : index
    %c0_235 = arith.constant 0 : index
    %383 = vector.load %arg18[%c16_234, %c0_235] : memref<120x32xf32, #tpu.memory_space<vmem>>, vector<81x32xf32>
    %384 = arith.truncf %383 : vector<81x32xf32> to vector<81x32xbf16>
    %c22 = arith.constant 22 : index
    %c0_236 = arith.constant 0 : index
    %c0_237 = arith.constant 0 : index
    %385 = vector.load %arg5[%c22, %c0_236, %c0_237] : memref<36x32x32xbf16, #tpu.memory_space<vmem>>, vector<1x32x32xbf16>
    %386 = vector.shape_cast %385 : vector<1x32x32xbf16> to vector<32x32xbf16>
    %cst_238 = arith.constant dense<0.000000e+00> : vector<81x32xf32>
    %387 = tpu.matmul %384, %386, %cst_238 {dimension_numbers = #tpu.dot_dimension_numbers<[1], [0], [0], [1], [0, 0, 1, 1], [], []>} : vector<81x32xbf16>, vector<32x32xbf16>, vector<81x32xf32> -> vector<81x32xf32>
    %388 = arith.addf %382, %387 : vector<81x32xf32>
    %c17_239 = arith.constant 17 : index
    %c0_240 = arith.constant 0 : index
    %389 = vector.load %arg18[%c17_239, %c0_240] : memref<120x32xf32, #tpu.memory_space<vmem>>, vector<81x32xf32>
    %390 = vector.broadcast %24 : vector<81x1xf32> to vector<81x32xf32>
    %391 = arith.mulf %389, %390 : vector<81x32xf32>
    %392 = arith.truncf %391 : vector<81x32xf32> to vector<81x32xbf16>
    %c23 = arith.constant 23 : index
    %c0_241 = arith.constant 0 : index
    %c0_242 = arith.constant 0 : index
    %393 = vector.load %arg5[%c23, %c0_241, %c0_242] : memref<36x32x32xbf16, #tpu.memory_space<vmem>>, vector<1x32x32xbf16>
    %394 = vector.shape_cast %393 : vector<1x32x32xbf16> to vector<32x32xbf16>
    %cst_243 = arith.constant dense<0.000000e+00> : vector<81x32xf32>
    %395 = tpu.matmul %392, %394, %cst_243 {dimension_numbers = #tpu.dot_dimension_numbers<[1], [0], [0], [1], [0, 0, 1, 1], [], []>} : vector<81x32xbf16>, vector<32x32xbf16>, vector<81x32xf32> -> vector<81x32xf32>
    %396 = arith.addf %388, %395 : vector<81x32xf32>
    %c24_244 = arith.constant 24 : index
    %c0_245 = arith.constant 0 : index
    %397 = vector.load %arg18[%c24_244, %c0_245] : memref<120x32xf32, #tpu.memory_space<vmem>>, vector<81x32xf32>
    %398 = vector.broadcast %20 : vector<81x1xf32> to vector<81x32xf32>
    %399 = arith.mulf %397, %398 : vector<81x32xf32>
    %400 = arith.truncf %399 : vector<81x32xf32> to vector<81x32xbf16>
    %c24_246 = arith.constant 24 : index
    %c0_247 = arith.constant 0 : index
    %c0_248 = arith.constant 0 : index
    %401 = vector.load %arg5[%c24_246, %c0_247, %c0_248] : memref<36x32x32xbf16, #tpu.memory_space<vmem>>, vector<1x32x32xbf16>
    %402 = vector.shape_cast %401 : vector<1x32x32xbf16> to vector<32x32xbf16>
    %cst_249 = arith.constant dense<0.000000e+00> : vector<81x32xf32>
    %403 = tpu.matmul %400, %402, %cst_249 {dimension_numbers = #tpu.dot_dimension_numbers<[1], [0], [0], [1], [0, 0, 1, 1], [], []>} : vector<81x32xbf16>, vector<32x32xbf16>, vector<81x32xf32> -> vector<81x32xf32>
    %404 = arith.addf %396, %403 : vector<81x32xf32>
    %c25_250 = arith.constant 25 : index
    %c0_251 = arith.constant 0 : index
    %405 = vector.load %arg18[%c25_250, %c0_251] : memref<120x32xf32, #tpu.memory_space<vmem>>, vector<81x32xf32>
    %406 = arith.truncf %405 : vector<81x32xf32> to vector<81x32xbf16>
    %c25_252 = arith.constant 25 : index
    %c0_253 = arith.constant 0 : index
    %c0_254 = arith.constant 0 : index
    %407 = vector.load %arg5[%c25_252, %c0_253, %c0_254] : memref<36x32x32xbf16, #tpu.memory_space<vmem>>, vector<1x32x32xbf16>
    %408 = vector.shape_cast %407 : vector<1x32x32xbf16> to vector<32x32xbf16>
    %cst_255 = arith.constant dense<0.000000e+00> : vector<81x32xf32>
    %409 = tpu.matmul %406, %408, %cst_255 {dimension_numbers = #tpu.dot_dimension_numbers<[1], [0], [0], [1], [0, 0, 1, 1], [], []>} : vector<81x32xbf16>, vector<32x32xbf16>, vector<81x32xf32> -> vector<81x32xf32>
    %410 = arith.addf %404, %409 : vector<81x32xf32>
    %c26_256 = arith.constant 26 : index
    %c0_257 = arith.constant 0 : index
    %411 = vector.load %arg18[%c26_256, %c0_257] : memref<120x32xf32, #tpu.memory_space<vmem>>, vector<81x32xf32>
    %412 = vector.broadcast %24 : vector<81x1xf32> to vector<81x32xf32>
    %413 = arith.mulf %411, %412 : vector<81x32xf32>
    %414 = arith.truncf %413 : vector<81x32xf32> to vector<81x32xbf16>
    %c26_258 = arith.constant 26 : index
    %c0_259 = arith.constant 0 : index
    %c0_260 = arith.constant 0 : index
    %415 = vector.load %arg5[%c26_258, %c0_259, %c0_260] : memref<36x32x32xbf16, #tpu.memory_space<vmem>>, vector<1x32x32xbf16>
    %416 = vector.shape_cast %415 : vector<1x32x32xbf16> to vector<32x32xbf16>
    %cst_261 = arith.constant dense<0.000000e+00> : vector<81x32xf32>
    %417 = tpu.matmul %414, %416, %cst_261 {dimension_numbers = #tpu.dot_dimension_numbers<[1], [0], [0], [1], [0, 0, 1, 1], [], []>} : vector<81x32xbf16>, vector<32x32xbf16>, vector<81x32xf32> -> vector<81x32xf32>
    %418 = arith.addf %410, %417 : vector<81x32xf32>
    %419 = vector.shape_cast %418 : vector<81x32xf32> to vector<1x81x32xf32>
    %cst_262 = arith.constant dense<0.000000e+00> : vector<1xf32>
    %420 = vector.multi_reduction <add>, %419, %cst_262 [1, 2] : vector<1x81x32xf32> to vector<1xf32>
    %421 = vector.shape_cast %420 : vector<1xf32> to vector<1x1x1xf32>
    %422 = vector.extract %421[0, 0, 0] : f32 from vector<1x1x1xf32>
    %423 = vector.broadcast %422 : f32 to vector<1x1xf32>
    %cst_263 = arith.constant 2.592000e+03 : f32
    %424 = vector.broadcast %cst_263 : f32 to vector<1x1xf32>
    %425 = arith.divf %423, %424 : vector<1x1xf32>
    %426 = vector.broadcast %425 : vector<1x1xf32> to vector<81x32xf32>
    %427 = arith.subf %418, %426 : vector<81x32xf32>
    %428 = arith.mulf %427, %427 : vector<81x32xf32>
    %429 = vector.shape_cast %428 : vector<81x32xf32> to vector<1x81x32xf32>
    %cst_264 = arith.constant dense<0.000000e+00> : vector<1xf32>
    %430 = vector.multi_reduction <add>, %429, %cst_264 [1, 2] : vector<1x81x32xf32> to vector<1xf32>
    %431 = vector.shape_cast %430 : vector<1xf32> to vector<1x1x1xf32>
    %432 = vector.extract %431[0, 0, 0] : f32 from vector<1x1x1xf32>
    %433 = vector.broadcast %432 : f32 to vector<1x1xf32>
    %cst_265 = arith.constant 2.592000e+03 : f32
    %434 = vector.broadcast %cst_265 : f32 to vector<1x1xf32>
    %435 = arith.divf %433, %434 : vector<1x1xf32>
    %436 = vector.broadcast %425 : vector<1x1xf32> to vector<81x32xf32>
    %437 = arith.subf %418, %436 : vector<81x32xf32>
    %cst_266 = arith.constant 9.99999974E-6 : f32
    %438 = vector.broadcast %cst_266 : f32 to vector<1x1xf32>
    %439 = arith.addf %435, %438 : vector<1x1xf32>
    %440 = math.rsqrt %439 : vector<1x1xf32>
    %441 = vector.broadcast %440 : vector<1x1xf32> to vector<81x32xf32>
    %442 = arith.mulf %437, %441 : vector<81x32xf32>
    %443 = arith.mulf %442, %348 : vector<81x32xf32>
    %444 = arith.addf %443, %350 : vector<81x32xf32>
    %cst_267 = arith.constant 0.000000e+00 : f32
    %445 = vector.broadcast %cst_267 : f32 to vector<81x32xf32>
    %446 = arith.maximumf %444, %445 : vector<81x32xf32>
    %c3_268 = arith.constant 3 : index
    %c0_269 = arith.constant 0 : index
    %c0_270 = arith.constant 0 : index
    %447 = vector.load %arg6[%c3_268, %c0_269, %c0_270] : memref<4x81x32xf32, #tpu.memory_space<vmem>>, vector<1x81x32xf32>
    %448 = vector.shape_cast %447 : vector<1x81x32xf32> to vector<81x32xf32>
    %c3_271 = arith.constant 3 : index
    %c0_272 = arith.constant 0 : index
    %c0_273 = arith.constant 0 : index
    %449 = vector.load %arg7[%c3_271, %c0_272, %c0_273] : memref<4x81x32xf32, #tpu.memory_space<vmem>>, vector<1x81x32xf32>
    %450 = vector.shape_cast %449 : vector<1x81x32xf32> to vector<81x32xf32>
    %c16_274 = arith.constant 16 : index
    %c0_275 = arith.constant 0 : index
    %451 = vector.load %arg18[%c16_274, %c0_275] : memref<120x32xf32, #tpu.memory_space<vmem>>, vector<81x32xf32>
    tpu.vector_store %arg18[%c16_274, %c0_275], %446 {strides = array<i32>} : memref<120x32xf32, #tpu.memory_space<vmem>>, vector<81x32xf32>,
    %cst_276 = arith.constant 0.000000e+00 : f32
    %452 = vector.broadcast %cst_276 : f32 to vector<81x32xf32>
    %c6_277 = arith.constant 6 : index
    %c0_278 = arith.constant 0 : index
    %453 = vector.load %arg18[%c6_277, %c0_278] : memref<120x32xf32, #tpu.memory_space<vmem>>, vector<81x32xf32>
    %454 = vector.broadcast %20 : vector<81x1xf32> to vector<81x32xf32>
    %455 = arith.mulf %453, %454 : vector<81x32xf32>
    %456 = arith.truncf %455 : vector<81x32xf32> to vector<81x32xbf16>
    %c27 = arith.constant 27 : index
    %c0_279 = arith.constant 0 : index
    %c0_280 = arith.constant 0 : index
    %457 = vector.load %arg5[%c27, %c0_279, %c0_280] : memref<36x32x32xbf16, #tpu.memory_space<vmem>>, vector<1x32x32xbf16>
    %458 = vector.shape_cast %457 : vector<1x32x32xbf16> to vector<32x32xbf16>
    %cst_281 = arith.constant dense<0.000000e+00> : vector<81x32xf32>
    %459 = tpu.matmul %456, %458, %cst_281 {dimension_numbers = #tpu.dot_dimension_numbers<[1], [0], [0], [1], [0, 0, 1, 1], [], []>} : vector<81x32xbf16>, vector<32x32xbf16>, vector<81x32xf32> -> vector<81x32xf32>
    %460 = arith.addf %452, %459 : vector<81x32xf32>
    %c7_282 = arith.constant 7 : index
    %c0_283 = arith.constant 0 : index
    %461 = vector.load %arg18[%c7_282, %c0_283] : memref<120x32xf32, #tpu.memory_space<vmem>>, vector<81x32xf32>
    %462 = arith.truncf %461 : vector<81x32xf32> to vector<81x32xbf16>
    %c28 = arith.constant 28 : index
    %c0_284 = arith.constant 0 : index
    %c0_285 = arith.constant 0 : index
    %463 = vector.load %arg5[%c28, %c0_284, %c0_285] : memref<36x32x32xbf16, #tpu.memory_space<vmem>>, vector<1x32x32xbf16>
    %464 = vector.shape_cast %463 : vector<1x32x32xbf16> to vector<32x32xbf16>
    %cst_286 = arith.constant dense<0.000000e+00> : vector<81x32xf32>
    %465 = tpu.matmul %462, %464, %cst_286 {dimension_numbers = #tpu.dot_dimension_numbers<[1], [0], [0], [1], [0, 0, 1, 1], [], []>} : vector<81x32xbf16>, vector<32x32xbf16>, vector<81x32xf32> -> vector<81x32xf32>
    %466 = arith.addf %460, %465 : vector<81x32xf32>
    %c8_287 = arith.constant 8 : index
    %c0_288 = arith.constant 0 : index
    %467 = vector.load %arg18[%c8_287, %c0_288] : memref<120x32xf32, #tpu.memory_space<vmem>>, vector<81x32xf32>
    %468 = vector.broadcast %24 : vector<81x1xf32> to vector<81x32xf32>
    %469 = arith.mulf %467, %468 : vector<81x32xf32>
    %470 = arith.truncf %469 : vector<81x32xf32> to vector<81x32xbf16>
    %c29 = arith.constant 29 : index
    %c0_289 = arith.constant 0 : index
    %c0_290 = arith.constant 0 : index
    %471 = vector.load %arg5[%c29, %c0_289, %c0_290] : memref<36x32x32xbf16, #tpu.memory_space<vmem>>, vector<1x32x32xbf16>
    %472 = vector.shape_cast %471 : vector<1x32x32xbf16> to vector<32x32xbf16>
    %cst_291 = arith.constant dense<0.000000e+00> : vector<81x32xf32>
    %473 = tpu.matmul %470, %472, %cst_291 {dimension_numbers = #tpu.dot_dimension_numbers<[1], [0], [0], [1], [0, 0, 1, 1], [], []>} : vector<81x32xbf16>, vector<32x32xbf16>, vector<81x32xf32> -> vector<81x32xf32>
    %474 = arith.addf %466, %473 : vector<81x32xf32>
    %c15_292 = arith.constant 15 : index
    %c0_293 = arith.constant 0 : index
    %475 = vector.load %arg18[%c15_292, %c0_293] : memref<120x32xf32, #tpu.memory_space<vmem>>, vector<81x32xf32>
    %476 = vector.broadcast %20 : vector<81x1xf32> to vector<81x32xf32>
    %477 = arith.mulf %475, %476 : vector<81x32xf32>
    %478 = arith.truncf %477 : vector<81x32xf32> to vector<81x32xbf16>
    %c30 = arith.constant 30 : index
    %c0_294 = arith.constant 0 : index
    %c0_295 = arith.constant 0 : index
    %479 = vector.load %arg5[%c30, %c0_294, %c0_295] : memref<36x32x32xbf16, #tpu.memory_space<vmem>>, vector<1x32x32xbf16>
    %480 = vector.shape_cast %479 : vector<1x32x32xbf16> to vector<32x32xbf16>
    %cst_296 = arith.constant dense<0.000000e+00> : vector<81x32xf32>
    %481 = tpu.matmul %478, %480, %cst_296 {dimension_numbers = #tpu.dot_dimension_numbers<[1], [0], [0], [1], [0, 0, 1, 1], [], []>} : vector<81x32xbf16>, vector<32x32xbf16>, vector<81x32xf32> -> vector<81x32xf32>
    %482 = arith.addf %474, %481 : vector<81x32xf32>
    %c16_297 = arith.constant 16 : index
    %c0_298 = arith.constant 0 : index
    %483 = vector.load %arg18[%c16_297, %c0_298] : memref<120x32xf32, #tpu.memory_space<vmem>>, vector<81x32xf32>
    %484 = arith.truncf %483 : vector<81x32xf32> to vector<81x32xbf16>
    %c31 = arith.constant 31 : index
    %c0_299 = arith.constant 0 : index
    %c0_300 = arith.constant 0 : index
    %485 = vector.load %arg5[%c31, %c0_299, %c0_300] : memref<36x32x32xbf16, #tpu.memory_space<vmem>>, vector<1x32x32xbf16>
    %486 = vector.shape_cast %485 : vector<1x32x32xbf16> to vector<32x32xbf16>
    %cst_301 = arith.constant dense<0.000000e+00> : vector<81x32xf32>
    %487 = tpu.matmul %484, %486, %cst_301 {dimension_numbers = #tpu.dot_dimension_numbers<[1], [0], [0], [1], [0, 0, 1, 1], [], []>} : vector<81x32xbf16>, vector<32x32xbf16>, vector<81x32xf32> -> vector<81x32xf32>
    %488 = arith.addf %482, %487 : vector<81x32xf32>
    %c17_302 = arith.constant 17 : index
    %c0_303 = arith.constant 0 : index
    %489 = vector.load %arg18[%c17_302, %c0_303] : memref<120x32xf32, #tpu.memory_space<vmem>>, vector<81x32xf32>
    %490 = vector.broadcast %24 : vector<81x1xf32> to vector<81x32xf32>
    %491 = arith.mulf %489, %490 : vector<81x32xf32>
    %492 = arith.truncf %491 : vector<81x32xf32> to vector<81x32xbf16>
    %c32 = arith.constant 32 : index
    %c0_304 = arith.constant 0 : index
    %c0_305 = arith.constant 0 : index
    %493 = vector.load %arg5[%c32, %c0_304, %c0_305] : memref<36x32x32xbf16, #tpu.memory_space<vmem>>, vector<1x32x32xbf16>
    %494 = vector.shape_cast %493 : vector<1x32x32xbf16> to vector<32x32xbf16>
    %cst_306 = arith.constant dense<0.000000e+00> : vector<81x32xf32>
    %495 = tpu.matmul %492, %494, %cst_306 {dimension_numbers = #tpu.dot_dimension_numbers<[1], [0], [0], [1], [0, 0, 1, 1], [], []>} : vector<81x32xbf16>, vector<32x32xbf16>, vector<81x32xf32> -> vector<81x32xf32>
    %496 = arith.addf %488, %495 : vector<81x32xf32>
    %c24_307 = arith.constant 24 : index
    %c0_308 = arith.constant 0 : index
    %497 = vector.load %arg18[%c24_307, %c0_308] : memref<120x32xf32, #tpu.memory_space<vmem>>, vector<81x32xf32>
    %498 = vector.broadcast %20 : vector<81x1xf32> to vector<81x32xf32>
    %499 = arith.mulf %497, %498 : vector<81x32xf32>
    %500 = arith.truncf %499 : vector<81x32xf32> to vector<81x32xbf16>
    %c33 = arith.constant 33 : index
    %c0_309 = arith.constant 0 : index
    %c0_310 = arith.constant 0 : index
    %501 = vector.load %arg5[%c33, %c0_309, %c0_310] : memref<36x32x32xbf16, #tpu.memory_space<vmem>>, vector<1x32x32xbf16>
    %502 = vector.shape_cast %501 : vector<1x32x32xbf16> to vector<32x32xbf16>
    %cst_311 = arith.constant dense<0.000000e+00> : vector<81x32xf32>
    %503 = tpu.matmul %500, %502, %cst_311 {dimension_numbers = #tpu.dot_dimension_numbers<[1], [0], [0], [1], [0, 0, 1, 1], [], []>} : vector<81x32xbf16>, vector<32x32xbf16>, vector<81x32xf32> -> vector<81x32xf32>
    %504 = arith.addf %496, %503 : vector<81x32xf32>
    %c25_312 = arith.constant 25 : index
    %c0_313 = arith.constant 0 : index
    %505 = vector.load %arg18[%c25_312, %c0_313] : memref<120x32xf32, #tpu.memory_space<vmem>>, vector<81x32xf32>
    %506 = arith.truncf %505 : vector<81x32xf32> to vector<81x32xbf16>
    %c34 = arith.constant 34 : index
    %c0_314 = arith.constant 0 : index
    %c0_315 = arith.constant 0 : index
    %507 = vector.load %arg5[%c34, %c0_314, %c0_315] : memref<36x32x32xbf16, #tpu.memory_space<vmem>>, vector<1x32x32xbf16>
    %508 = vector.shape_cast %507 : vector<1x32x32xbf16> to vector<32x32xbf16>
    %cst_316 = arith.constant dense<0.000000e+00> : vector<81x32xf32>
    %509 = tpu.matmul %506, %508, %cst_316 {dimension_numbers = #tpu.dot_dimension_numbers<[1], [0], [0], [1], [0, 0, 1, 1], [], []>} : vector<81x32xbf16>, vector<32x32xbf16>, vector<81x32xf32> -> vector<81x32xf32>
    %510 = arith.addf %504, %509 : vector<81x32xf32>
    %c26_317 = arith.constant 26 : index
    %c0_318 = arith.constant 0 : index
    %511 = vector.load %arg18[%c26_317, %c0_318] : memref<120x32xf32, #tpu.memory_space<vmem>>, vector<81x32xf32>
    %512 = vector.broadcast %24 : vector<81x1xf32> to vector<81x32xf32>
    %513 = arith.mulf %511, %512 : vector<81x32xf32>
    %514 = arith.truncf %513 : vector<81x32xf32> to vector<81x32xbf16>
    %c35 = arith.constant 35 : index
    %c0_319 = arith.constant 0 : index
    %c0_320 = arith.constant 0 : index
    %515 = vector.load %arg5[%c35, %c0_319, %c0_320] : memref<36x32x32xbf16, #tpu.memory_space<vmem>>, vector<1x32x32xbf16>
    %516 = vector.shape_cast %515 : vector<1x32x32xbf16> to vector<32x32xbf16>
    %cst_321 = arith.constant dense<0.000000e+00> : vector<81x32xf32>
    %517 = tpu.matmul %514, %516, %cst_321 {dimension_numbers = #tpu.dot_dimension_numbers<[1], [0], [0], [1], [0, 0, 1, 1], [], []>} : vector<81x32xbf16>, vector<32x32xbf16>, vector<81x32xf32> -> vector<81x32xf32>
    %518 = arith.addf %510, %517 : vector<81x32xf32>
    %519 = vector.shape_cast %518 : vector<81x32xf32> to vector<1x81x32xf32>
    %cst_322 = arith.constant dense<0.000000e+00> : vector<1xf32>
    %520 = vector.multi_reduction <add>, %519, %cst_322 [1, 2] : vector<1x81x32xf32> to vector<1xf32>
    %521 = vector.shape_cast %520 : vector<1xf32> to vector<1x1x1xf32>
    %522 = vector.extract %521[0, 0, 0] : f32 from vector<1x1x1xf32>
    %523 = vector.broadcast %522 : f32 to vector<1x1xf32>
    %cst_323 = arith.constant 2.592000e+03 : f32
    %524 = vector.broadcast %cst_323 : f32 to vector<1x1xf32>
    %525 = arith.divf %523, %524 : vector<1x1xf32>
    %526 = vector.broadcast %525 : vector<1x1xf32> to vector<81x32xf32>
    %527 = arith.subf %518, %526 : vector<81x32xf32>
    %528 = arith.mulf %527, %527 : vector<81x32xf32>
    %529 = vector.shape_cast %528 : vector<81x32xf32> to vector<1x81x32xf32>
    %cst_324 = arith.constant dense<0.000000e+00> : vector<1xf32>
    %530 = vector.multi_reduction <add>, %529, %cst_324 [1, 2] : vector<1x81x32xf32> to vector<1xf32>
    %531 = vector.shape_cast %530 : vector<1xf32> to vector<1x1x1xf32>
    %532 = vector.extract %531[0, 0, 0] : f32 from vector<1x1x1xf32>
    %533 = vector.broadcast %532 : f32 to vector<1x1xf32>
    %cst_325 = arith.constant 2.592000e+03 : f32
    %534 = vector.broadcast %cst_325 : f32 to vector<1x1xf32>
    %535 = arith.divf %533, %534 : vector<1x1xf32>
    %536 = vector.broadcast %525 : vector<1x1xf32> to vector<81x32xf32>
    %537 = arith.subf %518, %536 : vector<81x32xf32>
    %cst_326 = arith.constant 9.99999974E-6 : f32
    %538 = vector.broadcast %cst_326 : f32 to vector<1x1xf32>
    %539 = arith.addf %535, %538 : vector<1x1xf32>
    %540 = math.rsqrt %539 : vector<1x1xf32>
    %541 = vector.broadcast %540 : vector<1x1xf32> to vector<81x32xf32>
    %542 = arith.mulf %537, %541 : vector<81x32xf32>
    %543 = arith.mulf %542, %448 : vector<81x32xf32>
    %544 = arith.addf %543, %450 : vector<81x32xf32>
    %cst_327 = arith.constant dense<0.000000e+00> : vector<32xf32>
    %545 = vector.multi_reduction <add>, %544, %cst_327 [0] : vector<81x32xf32> to vector<32xf32>
    %546 = vector.shape_cast %545 : vector<32xf32> to vector<1x32xf32>
    %cst_328 = arith.constant 8.100000e+01 : f32
    %547 = vector.broadcast %cst_328 : f32 to vector<1x32xf32>
    %548 = arith.divf %546, %547 : vector<1x32xf32>
    %c1_329 = arith.constant 1 : index
    %c0_330 = arith.constant 0 : index
    %c0_331 = arith.constant 0 : index
    %549 = vector.load %arg8[%c1_329, %c0_330, %c0_331] : memref<2x32x4xf32, #tpu.memory_space<vmem>>, vector<1x32x4xf32>
    %550 = vector.shape_cast %549 : vector<1x32x4xf32> to vector<32x4xf32>
    %cst_332 = arith.constant dense<0.000000e+00> : vector<1x4xf32>
    %551 = tpu.matmul %548, %550, %cst_332 {dimension_numbers = #tpu.dot_dimension_numbers<[1], [0], [0], [1], [0, 0, 1, 1], [], []>} : vector<1x32xf32>, vector<32x4xf32>, vector<1x4xf32> -> vector<1x4xf32>
    %cst_333 = arith.constant 0.000000e+00 : f32
    %552 = vector.broadcast %cst_333 : f32 to vector<1x4xf32>
    %553 = arith.maximumf %551, %552 : vector<1x4xf32>
    %c1_334 = arith.constant 1 : index
    %c0_335 = arith.constant 0 : index
    %c0_336 = arith.constant 0 : index
    %554 = vector.load %arg9[%c1_334, %c0_335, %c0_336] : memref<2x4x32xf32, #tpu.memory_space<vmem>>, vector<1x4x32xf32>
    %555 = vector.shape_cast %554 : vector<1x4x32xf32> to vector<4x32xf32>
    %cst_337 = arith.constant dense<0.000000e+00> : vector<1x32xf32>
    %556 = tpu.matmul %553, %555, %cst_337 {dimension_numbers = #tpu.dot_dimension_numbers<[1], [0], [0], [1], [0, 0, 1, 1], [], []>} : vector<1x4xf32>, vector<4x32xf32>, vector<1x32xf32> -> vector<1x32xf32>
    %557 = arith.negf %556 : vector<1x32xf32>
    %558 = math.exp %557 : vector<1x32xf32>
    %cst_338 = arith.constant 1.000000e+00 : f32
    %559 = vector.broadcast %cst_338 : f32 to vector<1x32xf32>
    %560 = arith.addf %559, %558 : vector<1x32xf32>
    %561 = arith.divf %559, %560 : vector<1x32xf32>
    %562 = vector.broadcast %561 : vector<1x32xf32> to vector<81x32xf32>
    %563 = arith.mulf %544, %562 : vector<81x32xf32>
    %564 = arith.addf %346, %563 : vector<81x32xf32>
    %cst_339 = arith.constant 0.000000e+00 : f32
    %565 = vector.broadcast %cst_339 : f32 to vector<81x32xf32>
    %566 = arith.maximumf %564, %565 : vector<81x32xf32>
    %c0_340 = arith.constant 0 : index
    %c0_341 = arith.constant 0 : index
    %567 = vector.load %arg10[%c0_340, %c0_341] : memref<32x8xf32, #tpu.memory_space<vmem>>, vector<32x8xf32>
    %cst_342 = arith.constant dense<0.000000e+00> : vector<81x8xf32>
    %568 = tpu.matmul %566, %567, %cst_342 {dimension_numbers = #tpu.dot_dimension_numbers<[1], [0], [0], [1], [0, 0, 1, 1], [], []>} : vector<81x32xf32>, vector<32x8xf32>, vector<81x8xf32> -> vector<81x8xf32>
    %c0_343 = arith.constant 0 : index
    %c0_344 = arith.constant 0 : index
    %569 = vector.load %arg11[%c0_343, %c0_344] : memref<1x8xf32, #tpu.memory_space<vmem>>, vector<1x8xf32>
    %570 = vector.broadcast %569 : vector<1x8xf32> to vector<81x8xf32>
    %571 = arith.addf %568, %570 : vector<81x8xf32>
    %c0_345 = arith.constant 0 : index
    %c0_346 = arith.constant 0 : index
    %c0_347 = arith.constant 0 : index
    %572 = vector.load %arg16[%c0_345, %c0_346, %c0_347] : memref<1x81x8xf32, #tpu.memory_space<vmem>>, vector<1x81x8xf32>
    %573 = vector.shape_cast %572 : vector<1x81x8xf32> to vector<81x8xf32>
    %574 = vector.shape_cast %571 : vector<81x8xf32> to vector<1x81x8xf32>
    tpu.vector_store %arg16[%c0_345, %c0_346, %c0_347], %574 {strides = array<i32>} : memref<1x81x8xf32, #tpu.memory_space<vmem>>, vector<1x81x8xf32>,
    %cst_348 = arith.constant dense<0.000000e+00> : vector<32xf32>
    %575 = vector.multi_reduction <add>, %566, %cst_348 [0] : vector<81x32xf32> to vector<32xf32>
    %576 = vector.shape_cast %575 : vector<32xf32> to vector<1x32xf32>
    %cst_349 = arith.constant 8.100000e+01 : f32
    %577 = vector.broadcast %cst_349 : f32 to vector<1x32xf32>
    %578 = arith.divf %576, %577 : vector<1x32xf32>
    %c0_350 = arith.constant 0 : index
    %c0_351 = arith.constant 0 : index
    %579 = vector.load %arg12[%c0_350, %c0_351] : memref<32x32xf32, #tpu.memory_space<vmem>>, vector<32x32xf32>
    %cst_352 = arith.constant dense<0.000000e+00> : vector<1x32xf32>
    %580 = tpu.matmul %578, %579, %cst_352 {dimension_numbers = #tpu.dot_dimension_numbers<[1], [0], [0], [1], [0, 0, 1, 1], [], []>} : vector<1x32xf32>, vector<32x32xf32>, vector<1x32xf32> -> vector<1x32xf32>
    %c0_353 = arith.constant 0 : index
    %c0_354 = arith.constant 0 : index
    %581 = vector.load %arg13[%c0_353, %c0_354] : memref<1x32xf32, #tpu.memory_space<vmem>>, vector<1x32xf32>
    %582 = arith.addf %580, %581 : vector<1x32xf32>
    %cst_355 = arith.constant 0.000000e+00 : f32
    %583 = vector.broadcast %cst_355 : f32 to vector<1x32xf32>
    %584 = arith.maximumf %582, %583 : vector<1x32xf32>
    %c0_356 = arith.constant 0 : index
    %c0_357 = arith.constant 0 : index
    %585 = vector.load %arg14[%c0_356, %c0_357] : memref<1x32xf32, #tpu.memory_space<vmem>>, vector<1x32xf32>
    %586 = arith.mulf %584, %585 : vector<1x32xf32>
    %cst_358 = arith.constant dense<0.000000e+00> : vector<1xf32>
    %587 = vector.multi_reduction <add>, %586, %cst_358 [1] : vector<1x32xf32> to vector<1xf32>
    %588 = vector.shape_cast %587 : vector<1xf32> to vector<1x1xf32>
    %c0_359 = arith.constant 0 : index
    %c0_360 = arith.constant 0 : index
    %589 = vector.load %arg15[%c0_359, %c0_360] : memref<1x1xf32, #tpu.memory_space<vmem>>, vector<1x1xf32>
    %590 = arith.addf %588, %589 : vector<1x1xf32>
    %591 = math.tanh %590 : vector<1x1xf32>
    %c0_361 = arith.constant 0 : index
    %c0_362 = arith.constant 0 : index
    %c0_363 = arith.constant 0 : index
    %592 = vector.load %arg17[%c0_361, %c0_362, %c0_363] : memref<1x1x1xf32, #tpu.memory_space<vmem>>, vector<1x1x1xf32>
    %593 = vector.shape_cast %592 : vector<1x1x1xf32> to vector<1x1xf32>
    %594 = vector.shape_cast %591 : vector<1x1xf32> to vector<1x1x1xf32>
    tpu.vector_store %arg17[%c0_361, %c0_362, %c0_363], %594 {strides = array<i32>} : memref<1x1x1xf32, #tpu.memory_space<vmem>>, vector<1x1x1xf32>,
    return
  }
  func.func @transform_0(%arg0: i32) -> (i32, i32, i32) {
    %c0_i32 = arith.constant 0 : i32
    %c0_i32_0 = arith.constant 0 : i32
    %c0_i32_1 = arith.constant 0 : i32
    return %arg0, %c0_i32, %c0_i32_0 : i32, i32, i32
  }
  func.func @transform_1(%arg0: i32) -> (i32, i32, i32) {
    %c0_i32 = arith.constant 0 : i32
    %c0_i32_0 = arith.constant 0 : i32
    %c0_i32_1 = arith.constant 0 : i32
    %c0_i32_2 = arith.constant 0 : i32
    return %c0_i32, %c0_i32_0, %c0_i32_1 : i32, i32, i32
  }
  func.func @transform_2(%arg0: i32) -> (i32, i32) {
    %c0_i32 = arith.constant 0 : i32
    %c0_i32_0 = arith.constant 0 : i32
    %c0_i32_1 = arith.constant 0 : i32
    return %c0_i32, %c0_i32_0 : i32, i32
  }
  func.func @transform_3(%arg0: i32) -> (i32, i32) {
    %c0_i32 = arith.constant 0 : i32
    %c0_i32_0 = arith.constant 0 : i32
    %c0_i32_1 = arith.constant 0 : i32
    return %c0_i32, %c0_i32_0 : i32, i32
  }
  func.func @transform_4(%arg0: i32) -> (i32, i32, i32) {
    %c0_i32 = arith.constant 0 : i32
    %c0_i32_0 = arith.constant 0 : i32
    %c0_i32_1 = arith.constant 0 : i32
    %c0_i32_2 = arith.constant 0 : i32
    return %c0_i32, %c0_i32_0, %c0_i32_1 : i32, i32, i32
  }
  func.func @transform_5(%arg0: i32) -> (i32, i32, i32) {
    %c0_i32 = arith.constant 0 : i32
    %c0_i32_0 = arith.constant 0 : i32
    %c0_i32_1 = arith.constant 0 : i32
    %c0_i32_2 = arith.constant 0 : i32
    return %c0_i32, %c0_i32_0, %c0_i32_1 : i32, i32, i32
  }
  func.func @transform_6(%arg0: i32) -> (i32, i32, i32) {
    %c0_i32 = arith.constant 0 : i32
    %c0_i32_0 = arith.constant 0 : i32
    %c0_i32_1 = arith.constant 0 : i32
    %c0_i32_2 = arith.constant 0 : i32
    return %c0_i32, %c0_i32_0, %c0_i32_1 : i32, i32, i32
  }
  func.func @transform_7(%arg0: i32) -> (i32, i32, i32) {
    %c0_i32 = arith.constant 0 : i32
    %c0_i32_0 = arith.constant 0 : i32
    %c0_i32_1 = arith.constant 0 : i32
    %c0_i32_2 = arith.constant 0 : i32
    return %c0_i32, %c0_i32_0, %c0_i32_1 : i32, i32, i32
  }
  func.func @transform_8(%arg0: i32) -> (i32, i32, i32) {
    %c0_i32 = arith.constant 0 : i32
    %c0_i32_0 = arith.constant 0 : i32
    %c0_i32_1 = arith.constant 0 : i32
    %c0_i32_2 = arith.constant 0 : i32
    return %c0_i32, %c0_i32_0, %c0_i32_1 : i32, i32, i32
  }
  func.func @transform_9(%arg0: i32) -> (i32, i32) {
    %c0_i32 = arith.constant 0 : i32
    %c0_i32_0 = arith.constant 0 : i32
    %c0_i32_1 = arith.constant 0 : i32
    return %c0_i32, %c0_i32_0 : i32, i32
  }
  func.func @transform_10(%arg0: i32) -> (i32, i32) {
    %c0_i32 = arith.constant 0 : i32
    %c0_i32_0 = arith.constant 0 : i32
    %c0_i32_1 = arith.constant 0 : i32
    return %c0_i32, %c0_i32_0 : i32, i32
  }
  func.func @transform_11(%arg0: i32) -> (i32, i32) {
    %c0_i32 = arith.constant 0 : i32
    %c0_i32_0 = arith.constant 0 : i32
    %c0_i32_1 = arith.constant 0 : i32
    return %c0_i32, %c0_i32_0 : i32, i32
  }
  func.func @transform_12(%arg0: i32) -> (i32, i32) {
    %c0_i32 = arith.constant 0 : i32
    %c0_i32_0 = arith.constant 0 : i32
    %c0_i32_1 = arith.constant 0 : i32
    return %c0_i32, %c0_i32_0 : i32, i32
  }
  func.func @transform_13(%arg0: i32) -> (i32, i32) {
    %c0_i32 = arith.constant 0 : i32
    %c0_i32_0 = arith.constant 0 : i32
    %c0_i32_1 = arith.constant 0 : i32
    return %c0_i32, %c0_i32_0 : i32, i32
  }
  func.func @transform_14(%arg0: i32) -> (i32, i32) {
    %c0_i32 = arith.constant 0 : i32
    %c0_i32_0 = arith.constant 0 : i32
    %c0_i32_1 = arith.constant 0 : i32
    return %c0_i32, %c0_i32_0 : i32, i32
  }
  func.func @transform_15(%arg0: i32) -> (i32, i32, i32) {
    %c0_i32 = arith.constant 0 : i32
    %c0_i32_0 = arith.constant 0 : i32
    %c0_i32_1 = arith.constant 0 : i32
    return %arg0, %c0_i32, %c0_i32_0 : i32, i32, i32
  }
  func.func @transform_16(%arg0: i32) -> (i32, i32, i32) {
    %c0_i32 = arith.constant 0 : i32
    %c0_i32_0 = arith.constant 0 : i32
    %c0_i32_1 = arith.constant 0 : i32
    return %arg0, %c0_i32, %c0_i32_0 : i32, i32, i32
  }
}

</mosaic_0001>

<llo_original>
// kernel: scalar_network_forward.1
$region0: #{scalar_network_forward.1}
  #allocation0 [shape = 'u32[]', space=smem, size = 0x4, offset = 0x4, fixed_abs, tag = 'smem constant byte address 0x4 - core index']
  #allocation1 [shape = 'u32[144,128]{1,0:T(1,128)}', space=vmem, size = 0x12000, scoped, tag = 'internal scratch']
  #allocation2 [shape = 'f32[120,32]{1,0:T(8,128)}', space=vmem, size = 0xf000, scoped, tag = 'scratch operand']
  #allocation3 [shape = 'f32[1,1]{1,0:T(1,128)S(1)}', space=vmem, size = 0x200, scoped, tag = 'scoped memory for scalar_network_forward.1']
  %s0 = inlined_call_operand.vmem [shape: f32[2,81,32], index: 0, kind: input, shape index: {}]
  %s1 = inlined_call_operand.vmem [shape: bf16[9,32,32], index: 1, kind: input, shape index: {}]
  %s2 = inlined_call_operand.vmem [shape: f32[81,32], index: 2, kind: input, shape index: {}]
  %s3 = inlined_call_operand.vmem [shape: f32[81,32], index: 3, kind: input, shape index: {}]
  %s4 = inlined_call_operand.vmem [shape: bf16[36,32,32], index: 4, kind: input, shape index: {}]
  %s5 = inlined_call_operand.vmem [shape: f32[4,81,32], index: 5, kind: input, shape index: {}]
  %s6 = inlined_call_operand.vmem [shape: f32[4,81,32], index: 6, kind: input, shape index: {}]
  %s7 = inlined_call_operand.vmem [shape: f32[2,32,4], index: 7, kind: input, shape index: {}]
  %s8 = inlined_call_operand.vmem [shape: f32[2,4,32], index: 8, kind: input, shape index: {}]
  %s9 = inlined_call_operand.vmem [shape: f32[32,8], index: 9, kind: input, shape index: {}]
  %s10 = inlined_call_operand.vmem [shape: f32[1,8], index: 10, kind: input, shape index: {}]
  %s11 = inlined_call_operand.vmem [shape: f32[32,32], index: 11, kind: input, shape index: {}]
  %s12 = inlined_call_operand.vmem [shape: f32[1,32], index: 12, kind: input, shape index: {}]
  %s13 = inlined_call_operand.vmem [shape: f32[1,32], index: 13, kind: input, shape index: {}]
  %s14 = inlined_call_operand.<no memory space> [shape: f32[1,1], index: 14, kind: input, shape index: {}]
  %s15 = inlined_call_operand.vmem [shape: f32[2,81,8], index: 15, kind: output, shape index: {0}]
  %s16 = inlined_call_operand.vmem [shape: f32[2,1,1], index: 16, kind: output, shape index: {1}]
  %17 = xla_tuple %s15, %s16
  %s18 = sld [smem:[#allocation0]]
  $region101: #{scalar_network_forward.1} parent=0
    _
  %s20 = ssub.s32 1, %s18
  %s21 = scalar_select 0, %s20, %s18
  %v22 = vstv %s14
  %23 = vst [vmem:[#allocation3] sm:$0x1] %v22
  loop: start=0, step=1, limit=4
  $region2: #{scalar_network_forward.1} parent=0 // loop_pre_header
    _
  $region3: #{scalar_network_forward.1} parent=0 // loop_header
    %s25 = sphi 0, %s29
    %p26 = scmp.ge.s32.totalorder %s25, 4
    %s35 = sphi 0, %s37
    %s38 = sphi 0, %s35
    %s39 = sphi 0, %s38
    %s55 = sphi 0, %s39
    %s59 = sphi 0, %s59
    %s61 = sphi 0, %s59
    %s62 = sphi 0, %s61
    %s76 = sphi 0, %s62
    %s80 = sphi 0, %s80
    %s82 = sphi 0, %s80
    %s83 = sphi 0, %s82
    %s97 = sphi 0, %s83
    %s101 = sphi 0, %s101
    %s103 = sphi 0, %s101
    %s104 = sphi 0, %s103
    %s118 = sphi 0, %s104
    %s122 = sphi 0, %s122
    %s124 = sphi 0, %s122
    %s125 = sphi 0, %s124
    %s139 = sphi 0, %s125
    %s143 = sphi 0, %s143
    %s145 = sphi 0, %s143
    %s146 = sphi 0, %s145
    %s160 = sphi 0, %s146
    %s164 = sphi 0, %s164
    %s166 = sphi 0, %s164
    %s167 = sphi 0, %s166
    %s181 = sphi 0, %s167
    %s185 = sphi 0, %s185
    %s187 = sphi 0, %s185
    %s188 = sphi 0, %s187
    %s202 = sphi 0, %s188
    %s206 = sphi 0, %s206
    %s208 = sphi 0, %s206
    %s209 = sphi 0, %s208
    %s223 = sphi 0, %s209
    %s227 = sphi 0, %s227
    %s229 = sphi 0, %s227
    %s230 = sphi 0, %s229
    %s244 = sphi 0, %s230
    %s248 = sphi 0, %s248
    %s250 = sphi 0, %s248
    %s251 = sphi 0, %s250
    %s265 = sphi 0, %s251
    %s269 = sphi 0, %s269
    %s271 = sphi 0, %s269
    %s272 = sphi 0, %s271
    %s286 = sphi 0, %s272
    %s290 = sphi 0, %s290
    %s292 = sphi 0, %s290
    %s293 = sphi 0, %s292
    %s307 = sphi 0, %s293
    %s311 = sphi 0, %s311
    %s313 = sphi 0, %s311
    %s314 = sphi 0, %s313
    %s328 = sphi 0, %s314
    %s332 = sphi 0, %s332
    %s334 = sphi 0, %s332
    %s335 = sphi 0, %s334
    %s349 = sphi 0, %s335
    %s355 = sphi 0, %s357
    %s358 = sphi 0, %s355
    %s359 = sphi 0, %s358
    %s375 = sphi 0, %s359
    %s381 = sphi 0, %s383
    %s384 = sphi 0, %s381
    %s385 = sphi 0, %s384
    %s401 = sphi 0, %s385
  $region4: #{scalar_network_forward.1} parent=0 // loop_header_branch
    %28 = sbr.rel (%p26) target = $region8
  $region5: #{scalar_network_forward.1} parent=0 // loop_body
    %s30 = ssub.s32 %s25, 1
    %s31 = ssub.s32 %s25, 2
    %s32 = sadd.s32 %s25, 1
    %s33 = ssub.s32 %s25, %s32
    %p34 = scmp.eq.s32.totalorder %s33, 0
    %s36 = sadd.s32 %s35, 1
    %s37 = scalar_select %p34, %s35, %s36
    %p40 = pneg %p34
    %p41 = scmp.eq.s32.totalorder %s25, 1
    %p42 = por %p40, %p41
    %p43 = scmp.ne.s32.totalorder %s35, %s38
    %p44 = scmp.eq.s32.totalorder %s25, 0
    %p45 = por %p43, %p44
    %p46 = scmp.ne.s32.totalorder %s35, %s38
    %p47 = scmp.eq.s32.totalorder %s30, 1
    %p48 = por %p46, %p47
    %p49 = scmp.ne.s32.totalorder %s38, %s39
    %p50 = scmp.eq.s32.totalorder %s30, 0
    %p51 = por %p49, %p50
    %p52 = scmp.ne.s32.totalorder %s38, %s39
    %p53 = scmp.eq.s32.totalorder %s31, 1
    %p54 = por %p52, %p53
    %p56 = scmp.ne.s32.totalorder %s39, %s55
    %p57 = scmp.eq.s32.totalorder %s31, 0
    %p58 = por %p56, %p57
    %s60 = sadd.s32 %s59, 1
    %p63 = scmp.eq.s32.totalorder %s25, 1
    %p64 = scmp.ne.s32.totalorder %s59, %s61
    %p65 = scmp.eq.s32.totalorder %s25, 0
    %p66 = por %p64, %p65
    %p67 = scmp.ne.s32.totalorder %s59, %s61
    %p68 = scmp.eq.s32.totalorder %s30, 1
    %p69 = por %p67, %p68
    %p70 = scmp.ne.s32.totalorder %s61, %s62
    %p71 = scmp.eq.s32.totalorder %s30, 0
    %p72 = por %p70, %p71
    %p73 = scmp.ne.s32.totalorder %s61, %s62
    %p74 = scmp.eq.s32.totalorder %s31, 1
    %p75 = por %p73, %p74
    %p77 = scmp.ne.s32.totalorder %s62, %s76
    %p78 = scmp.eq.s32.totalorder %s31, 0
    %p79 = por %p77, %p78
    %s81 = sadd.s32 %s80, 1
    %p84 = scmp.eq.s32.totalorder %s25, 1
    %p85 = scmp.ne.s32.totalorder %s80, %s82
    %p86 = scmp.eq.s32.totalorder %s25, 0
    %p87 = por %p85, %p86
    %p88 = scmp.ne.s32.totalorder %s80, %s82
    %p89 = scmp.eq.s32.totalorder %s30, 1
    %p90 = por %p88, %p89
    %p91 = scmp.ne.s32.totalorder %s82, %s83
    %p92 = scmp.eq.s32.totalorder %s30, 0
    %p93 = por %p91, %p92
    %p94 = scmp.ne.s32.totalorder %s82, %s83
    %p95 = scmp.eq.s32.totalorder %s31, 1
    %p96 = por %p94, %p95
    %p98 = scmp.ne.s32.totalorder %s83, %s97
    %p99 = scmp.eq.s32.totalorder %s31, 0
    %p100 = por %p98, %p99
    %s102 = sadd.s32 %s101, 1
    %p105 = scmp.eq.s32.totalorder %s25, 1
    %p106 = scmp.ne.s32.totalorder %s101, %s103
    %p107 = scmp.eq.s32.totalorder %s25, 0
    %p108 = por %p106, %p107
    %p109 = scmp.ne.s32.totalorder %s101, %s103
    %p110 = scmp.eq.s32.totalorder %s30, 1
    %p111 = por %p109, %p110
    %p112 = scmp.ne.s32.totalorder %s103, %s104
    %p113 = scmp.eq.s32.totalorder %s30, 0
    %p114 = por %p112, %p113
    %p115 = scmp.ne.s32.totalorder %s103, %s104
    %p116 = scmp.eq.s32.totalorder %s31, 1
    %p117 = por %p115, %p116
    %p119 = scmp.ne.s32.totalorder %s104, %s118
    %p120 = scmp.eq.s32.totalorder %s31, 0
    %p121 = por %p119, %p120
    %s123 = sadd.s32 %s122, 1
    %p126 = scmp.eq.s32.totalorder %s25, 1
    %p127 = scmp.ne.s32.totalorder %s122, %s124
    %p128 = scmp.eq.s32.totalorder %s25, 0
    %p129 = por %p127, %p128
    %p130 = scmp.ne.s32.totalorder %s122, %s124
    %p131 = scmp.eq.s32.totalorder %s30, 1
    %p132 = por %p130, %p131
    %p133 = scmp.ne.s32.totalorder %s124, %s125
    %p134 = scmp.eq.s32.totalorder %s30, 0
    %p135 = por %p133, %p134
    %p136 = scmp.ne.s32.totalorder %s124, %s125
    %p137 = scmp.eq.s32.totalorder %s31, 1
    %p138 = por %p136, %p137
    %p140 = scmp.ne.s32.totalorder %s125, %s139
    %p141 = scmp.eq.s32.totalorder %s31, 0
    %p142 = por %p140, %p141
    %s144 = sadd.s32 %s143, 1
    %p147 = scmp.eq.s32.totalorder %s25, 1
    %p148 = scmp.ne.s32.totalorder %s143, %s145
    %p149 = scmp.eq.s32.totalorder %s25, 0
    %p150 = por %p148, %p149
    %p151 = scmp.ne.s32.totalorder %s143, %s145
    %p152 = scmp.eq.s32.totalorder %s30, 1
    %p153 = por %p151, %p152
    %p154 = scmp.ne.s32.totalorder %s145, %s146
    %p155 = scmp.eq.s32.totalorder %s30, 0
    %p156 = por %p154, %p155
    %p157 = scmp.ne.s32.totalorder %s145, %s146
    %p158 = scmp.eq.s32.totalorder %s31, 1
    %p159 = por %p157, %p158
    %p161 = scmp.ne.s32.totalorder %s146, %s160
    %p162 = scmp.eq.s32.totalorder %s31, 0
    %p163 = por %p161, %p162
    %s165 = sadd.s32 %s164, 1
    %p168 = scmp.eq.s32.totalorder %s25, 1
    %p169 = scmp.ne.s32.totalorder %s164, %s166
    %p170 = scmp.eq.s32.totalorder %s25, 0
    %p171 = por %p169, %p170
    %p172 = scmp.ne.s32.totalorder %s164, %s166
    %p173 = scmp.eq.s32.totalorder %s30, 1
    %p174 = por %p172, %p173
    %p175 = scmp.ne.s32.totalorder %s166, %s167
    %p176 = scmp.eq.s32.totalorder %s30, 0
    %p177 = por %p175, %p176
    %p178 = scmp.ne.s32.totalorder %s166, %s167
    %p179 = scmp.eq.s32.totalorder %s31, 1
    %p180 = por %p178, %p179
    %p182 = scmp.ne.s32.totalorder %s167, %s181
    %p183 = scmp.eq.s32.totalorder %s31, 0
    %p184 = por %p182, %p183
    %s186 = sadd.s32 %s185, 1
    %p189 = scmp.eq.s32.totalorder %s25, 1
    %p190 = scmp.ne.s32.totalorder %s185, %s187
    %p191 = scmp.eq.s32.totalorder %s25, 0
    %p192 = por %p190, %p191
    %p193 = scmp.ne.s32.totalorder %s185, %s187
    %p194 = scmp.eq.s32.totalorder %s30, 1
    %p195 = por %p193, %p194
    %p196 = scmp.ne.s32.totalorder %s187, %s188
    %p197 = scmp.eq.s32.totalorder %s30, 0
    %p198 = por %p196, %p197
    %p199 = scmp.ne.s32.totalorder %s187, %s188
    %p200 = scmp.eq.s32.totalorder %s31, 1
    %p201 = por %p199, %p200
    %p203 = scmp.ne.s32.totalorder %s188, %s202
    %p204 = scmp.eq.s32.totalorder %s31, 0
    %p205 = por %p203, %p204
    %s207 = sadd.s32 %s206, 1
    %p210 = scmp.eq.s32.totalorder %s25, 1
    %p211 = scmp.ne.s32.totalorder %s206, %s208
    %p212 = scmp.eq.s32.totalorder %s25, 0
    %p213 = por %p211, %p212
    %p214 = scmp.ne.s32.totalorder %s206, %s208
    %p215 = scmp.eq.s32.totalorder %s30, 1
    %p216 = por %p214, %p215
    %p217 = scmp.ne.s32.totalorder %s208, %s209
    %p218 = scmp.eq.s32.totalorder %s30, 0
    %p219 = por %p217, %p218
    %p220 = scmp.ne.s32.totalorder %s208, %s209
    %p221 = scmp.eq.s32.totalorder %s31, 1
    %p222 = por %p220, %p221
    %p224 = scmp.ne.s32.totalorder %s209, %s223
    %p225 = scmp.eq.s32.totalorder %s31, 0
    %p226 = por %p224, %p225
    %s228 = sadd.s32 %s227, 1
    %p231 = scmp.eq.s32.totalorder %s25, 1
    %p232 = scmp.ne.s32.totalorder %s227, %s229
    %p233 = scmp.eq.s32.totalorder %s25, 0
    %p234 = por %p232, %p233
    %p235 = scmp.ne.s32.totalorder %s227, %s229
    %p236 = scmp.eq.s32.totalorder %s30, 1
    %p237 = por %p235, %p236
    %p238 = scmp.ne.s32.totalorder %s229, %s230
    %p239 = scmp.eq.s32.totalorder %s30, 0
    %p240 = por %p238, %p239
    %p241 = scmp.ne.s32.totalorder %s229, %s230
    %p242 = scmp.eq.s32.totalorder %s31, 1
    %p243 = por %p241, %p242
    %p245 = scmp.ne.s32.totalorder %s230, %s244
    %p246 = scmp.eq.s32.totalorder %s31, 0
    %p247 = por %p245, %p246
    %s249 = sadd.s32 %s248, 1
    %p252 = scmp.eq.s32.totalorder %s25, 1
    %p253 = scmp.ne.s32.totalorder %s248, %s250
    %p254 = scmp.eq.s32.totalorder %s25, 0
    %p255 = por %p253, %p254
    %p256 = scmp.ne.s32.totalorder %s248, %s250
    %p257 = scmp.eq.s32.totalorder %s30, 1
    %p258 = por %p256, %p257
    %p259 = scmp.ne.s32.totalorder %s250, %s251
    %p260 = scmp.eq.s32.totalorder %s30, 0
    %p261 = por %p259, %p260
    %p262 = scmp.ne.s32.totalorder %s250, %s251
    %p263 = scmp.eq.s32.totalorder %s31, 1
    %p264 = por %p262, %p263
    %p266 = scmp.ne.s32.totalorder %s251, %s265
    %p267 = scmp.eq.s32.totalorder %s31, 0
    %p268 = por %p266, %p267
    %s270 = sadd.s32 %s269, 1
    %p273 = scmp.eq.s32.totalorder %s25, 1
    %p274 = scmp.ne.s32.totalorder %s269, %s271
    %p275 = scmp.eq.s32.totalorder %s25, 0
    %p276 = por %p274, %p275
    %p277 = scmp.ne.s32.totalorder %s269, %s271
    %p278 = scmp.eq.s32.totalorder %s30, 1
    %p279 = por %p277, %p278
    %p280 = scmp.ne.s32.totalorder %s271, %s272
    %p281 = scmp.eq.s32.totalorder %s30, 0
    %p282 = por %p280, %p281
    %p283 = scmp.ne.s32.totalorder %s271, %s272
    %p284 = scmp.eq.s32.totalorder %s31, 1
    %p285 = por %p283, %p284
    %p287 = scmp.ne.s32.totalorder %s272, %s286
    %p288 = scmp.eq.s32.totalorder %s31, 0
    %p289 = por %p287, %p288
    %s291 = sadd.s32 %s290, 1
    %p294 = scmp.eq.s32.totalorder %s25, 1
    %p295 = scmp.ne.s32.totalorder %s290, %s292
    %p296 = scmp.eq.s32.totalorder %s25, 0
    %p297 = por %p295, %p296
    %p298 = scmp.ne.s32.totalorder %s290, %s292
    %p299 = scmp.eq.s32.totalorder %s30, 1
    %p300 = por %p298, %p299
    %p301 = scmp.ne.s32.totalorder %s292, %s293
    %p302 = scmp.eq.s32.totalorder %s30, 0
    %p303 = por %p301, %p302
    %p304 = scmp.ne.s32.totalorder %s292, %s293
    %p305 = scmp.eq.s32.totalorder %s31, 1
    %p306 = por %p304, %p305
    %p308 = scmp.ne.s32.totalorder %s293, %s307
    %p309 = scmp.eq.s32.totalorder %s31, 0
    %p310 = por %p308, %p309
    %s312 = sadd.s32 %s311, 1
    %p315 = scmp.eq.s32.totalorder %s25, 1
    %p316 = scmp.ne.s32.totalorder %s311, %s313
    %p317 = scmp.eq.s32.totalorder %s25, 0
    %p318 = por %p316, %p317
    %p319 = scmp.ne.s32.totalorder %s311, %s313
    %p320 = scmp.eq.s32.totalorder %s30, 1
    %p321 = por %p319, %p320
    %p322 = scmp.ne.s32.totalorder %s313, %s314
    %p323 = scmp.eq.s32.totalorder %s30, 0
    %p324 = por %p322, %p323
    %p325 = scmp.ne.s32.totalorder %s313, %s314
    %p326 = scmp.eq.s32.totalorder %s31, 1
    %p327 = por %p325, %p326
    %p329 = scmp.ne.s32.totalorder %s314, %s328
    %p330 = scmp.eq.s32.totalorder %s31, 0
    %p331 = por %p329, %p330
    %s333 = sadd.s32 %s332, 1
    %p336 = scmp.eq.s32.totalorder %s25, 1
    %p337 = scmp.ne.s32.totalorder %s332, %s334
    %p338 = scmp.eq.s32.totalorder %s25, 0
    %p339 = por %p337, %p338
    %p340 = scmp.ne.s32.totalorder %s332, %s334
    %p341 = scmp.eq.s32.totalorder %s30, 1
    %p342 = por %p340, %p341
    %p343 = scmp.ne.s32.totalorder %s334, %s335
    %p344 = scmp.eq.s32.totalorder %s30, 0
    %p345 = por %p343, %p344
    %p346 = scmp.ne.s32.totalorder %s334, %s335
    %p347 = scmp.eq.s32.totalorder %s31, 1
    %p348 = por %p346, %p347
    %p350 = scmp.ne.s32.totalorder %s335, %s349
    %p351 = scmp.eq.s32.totalorder %s31, 0
    %p352 = por %p350, %p351
    %s353 = ssub.s32 %s25, %s32
    %p354 = scmp.eq.s32.totalorder %s353, 0
    %s356 = sadd.s32 %s355, 1
    %s357 = scalar_select %p354, %s355, %s356
    %p360 = pneg %p354
    %p361 = scmp.eq.s32.totalorder %s25, 1
    %p362 = por %p360, %p361
    %p363 = scmp.ne.s32.totalorder %s355, %s358
    %p364 = scmp.eq.s32.totalorder %s25, 0
    %p365 = por %p363, %p364
    %p366 = scmp.ne.s32.totalorder %s355, %s358
    %p367 = scmp.eq.s32.totalorder %s30, 1
    %p368 = por %p366, %p367
    %p369 = scmp.ne.s32.totalorder %s358, %s359
    %p370 = scmp.eq.s32.totalorder %s30, 0
    %p371 = por %p369, %p370
    %p372 = scmp.ne.s32.totalorder %s358, %s359
    %p373 = scmp.eq.s32.totalorder %s31, 1
    %p374 = por %p372, %p373
    %p376 = scmp.ne.s32.totalorder %s359, %s375
    %p377 = scmp.eq.s32.totalorder %s31, 0
    %p378 = por %p376, %p377
    %s379 = ssub.s32 %s25, %s32
    %p380 = scmp.eq.s32.totalorder %s379, 0
    %s382 = sadd.s32 %s381, 1
    %s383 = scalar_select %p380, %s381, %s382
    %p386 = pneg %p380
    %p387 = scmp.eq.s32.totalorder %s25, 1
    %p388 = por %p386, %p387
    %p389 = scmp.ne.s32.totalorder %s381, %s384
    %p390 = scmp.eq.s32.totalorder %s25, 0
    %p391 = por %p389, %p390
    %p392 = scmp.ne.s32.totalorder %s381, %s384
    %p393 = scmp.eq.s32.totalorder %s30, 1
    %p394 = por %p392, %p393
    %p395 = scmp.ne.s32.totalorder %s384, %s385
    %p396 = scmp.eq.s32.totalorder %s30, 0
    %p397 = por %p395, %p396
    %p398 = scmp.ne.s32.totalorder %s384, %s385
    %p399 = scmp.eq.s32.totalorder %s31, 1
    %p400 = por %p398, %p399
    %p402 = scmp.ne.s32.totalorder %s385, %s401
    %p403 = scmp.eq.s32.totalorder %s31, 0
    %p404 = por %p402, %p403
    %p405 = scmp.le.s32.totalorder 1, %s25
    %p406 = scmp.lt.s32.totalorder %s25, 3
    %p407 = pnand %p405, %p406
    %p408 = pneg %p407
    // Predicated region
    $region9: #{scalar_network_forward.1} parent=5 // pred_check
      _
    $region10: #{scalar_network_forward.1} parent=5 // pred_check_branch
      %410 = sbr.rel (%p407) target = $region12
    $region11: #{scalar_network_forward.1} parent=5 // pred_region
      %s411 = ssub.s32 %s25, 1
      // Predicated region
      $region13: #{scalar_network_forward.1} parent=11 // pred_check
        %p412 = pneg %p72
      $region14: #{scalar_network_forward.1} parent=11 // pred_check_branch
        %414 = sbr.rel (%p412) target = $region16
      $region15: #{scalar_network_forward.1} parent=11 // pred_region
        _
      $region16: #{scalar_network_forward.1} parent=11 // pred_fallthru
        _
      // Predicated region
      $region17: #{scalar_network_forward.1} parent=11 // pred_check
        %p415 = pneg %p93
      $region18: #{scalar_network_forward.1} parent=11 // pred_check_branch
        %417 = sbr.rel (%p415) target = $region20
      $region19: #{scalar_network_forward.1} parent=11 // pred_region
        _
      $region20: #{scalar_network_forward.1} parent=11 // pred_fallthru
        _
      // Predicated region
      $region21: #{scalar_network_forward.1} parent=11 // pred_check
        %p418 = pneg %p114
      $region22: #{scalar_network_forward.1} parent=11 // pred_check_branch
        %420 = sbr.rel (%p418) target = $region24
      $region23: #{scalar_network_forward.1} parent=11 // pred_region
        _
      $region24: #{scalar_network_forward.1} parent=11 // pred_fallthru
        _
      // Predicated region
      $region25: #{scalar_network_forward.1} parent=11 // pred_check
        %p421 = pneg %p135
      $region26: #{scalar_network_forward.1} parent=11 // pred_check_branch
        %423 = sbr.rel (%p421) target = $region28
      $region27: #{scalar_network_forward.1} parent=11 // pred_region
        _
      $region28: #{scalar_network_forward.1} parent=11 // pred_fallthru
        _
      // Predicated region
      $region29: #{scalar_network_forward.1} parent=11 // pred_check
        %p424 = pneg %p156
      $region30: #{scalar_network_forward.1} parent=11 // pred_check_branch
        %426 = sbr.rel (%p424) target = $region32
      $region31: #{scalar_network_forward.1} parent=11 // pred_region
        _
      $region32: #{scalar_network_forward.1} parent=11 // pred_fallthru
        _
      // Predicated region
      $region33: #{scalar_network_forward.1} parent=11 // pred_check
        %p427 = pneg %p177
      $region34: #{scalar_network_forward.1} parent=11 // pred_check_branch
        %429 = sbr.rel (%p427) target = $region36
      $region35: #{scalar_network_forward.1} parent=11 // pred_region
        _
      $region36: #{scalar_network_forward.1} parent=11 // pred_fallthru
        _
      // Predicated region
      $region37: #{scalar_network_forward.1} parent=11 // pred_check
        %p430 = pneg %p198
      $region38: #{scalar_network_forward.1} parent=11 // pred_check_branch
        %432 = sbr.rel (%p430) target = $region40
      $region39: #{scalar_network_forward.1} parent=11 // pred_region
        _
      $region40: #{scalar_network_forward.1} parent=11 // pred_fallthru
        _
      // Predicated region
      $region41: #{scalar_network_forward.1} parent=11 // pred_check
        %p433 = pneg %p219
      $region42: #{scalar_network_forward.1} parent=11 // pred_check_branch
        %435 = sbr.rel (%p433) target = $region44
      $region43: #{scalar_network_forward.1} parent=11 // pred_region
        _
      $region44: #{scalar_network_forward.1} parent=11 // pred_fallthru
        _
      // Predicated region
      $region45: #{scalar_network_forward.1} parent=11 // pred_check
        %p436 = pneg %p240
      $region46: #{scalar_network_forward.1} parent=11 // pred_check_branch
        %438 = sbr.rel (%p436) target = $region48
      $region47: #{scalar_network_forward.1} parent=11 // pred_region
        _
      $region48: #{scalar_network_forward.1} parent=11 // pred_fallthru
        _
      // Predicated region
      $region49: #{scalar_network_forward.1} parent=11 // pred_check
        %p439 = pneg %p261
      $region50: #{scalar_network_forward.1} parent=11 // pred_check_branch
        %441 = sbr.rel (%p439) target = $region52
      $region51: #{scalar_network_forward.1} parent=11 // pred_region
        _
      $region52: #{scalar_network_forward.1} parent=11 // pred_fallthru
        _
      // Predicated region
      $region53: #{scalar_network_forward.1} parent=11 // pred_check
        %p442 = pneg %p282
      $region54: #{scalar_network_forward.1} parent=11 // pred_check_branch
        %444 = sbr.rel (%p442) target = $region56
      $region55: #{scalar_network_forward.1} parent=11 // pred_region
        _
      $region56: #{scalar_network_forward.1} parent=11 // pred_fallthru
        _
      // Predicated region
      $region57: #{scalar_network_forward.1} parent=11 // pred_check
        %p445 = pneg %p303
      $region58: #{scalar_network_forward.1} parent=11 // pred_check_branch
        %447 = sbr.rel (%p445) target = $region60
      $region59: #{scalar_network_forward.1} parent=11 // pred_region
        _
      $region60: #{scalar_network_forward.1} parent=11 // pred_fallthru
        _
      // Predicated region
      $region61: #{scalar_network_forward.1} parent=11 // pred_check
        %p448 = pneg %p324
      $region62: #{scalar_network_forward.1} parent=11 // pred_check_branch
        %450 = sbr.rel (%p448) target = $region64
      $region63: #{scalar_network_forward.1} parent=11 // pred_region
        _
      $region64: #{scalar_network_forward.1} parent=11 // pred_fallthru
        _
      // Predicated region
      $region65: #{scalar_network_forward.1} parent=11 // pred_check
        %p451 = pneg %p345
      $region66: #{scalar_network_forward.1} parent=11 // pred_check_branch
        %453 = sbr.rel (%p451) target = $region68
      $region67: #{scalar_network_forward.1} parent=11 // pred_region
        _
      $region68: #{scalar_network_forward.1} parent=11 // pred_fallthru
        _
    $region12: #{scalar_network_forward.1} parent=5 // pred_fallthru
      _
    %p454 = scmp.lt.s32.totalorder %s25, 2
    // Predicated region
    $region69: #{scalar_network_forward.1} parent=5 // pred_check
      %p455 = pneg %p454
    $region70: #{scalar_network_forward.1} parent=5 // pred_check_branch
      %457 = sbr.rel (%p455) target = $region72
    $region71: #{scalar_network_forward.1} parent=5 // pred_region
      // Predicated region
      $region73: #{scalar_network_forward.1} parent=71 // pred_check
        %p458 = pneg %p45
      $region74: #{scalar_network_forward.1} parent=71 // pred_check_branch
        %460 = sbr.rel (%p458) target = $region76
      $region75: #{scalar_network_forward.1} parent=71 // pred_region
        %p461 = scmp.lt.s32.totalorder %s25, 1
        %s462 = scalar_select %p461, %s25, 1
        %s463 = smul.addr %s462, 11
        %s464 = smul.addr %s463, 8
        %s465 = scalar_lea.vmem %s0, %s464
      $region76: #{scalar_network_forward.1} parent=71 // pred_fallthru
        _
    $region72: #{scalar_network_forward.1} parent=5 // pred_fallthru
      _
    %p466 = scmp.le.s32.totalorder 1, %s25
    %p467 = scmp.lt.s32.totalorder %s25, 3
    %p468 = pnand %p466, %p467
    %p469 = pneg %p468
    // Predicated region
    $region77: #{scalar_network_forward.1} parent=5 // pred_check
      _
    $region78: #{scalar_network_forward.1} parent=5 // pred_check_branch
      %471 = sbr.rel (%p468) target = $region80
    $region79: #{scalar_network_forward.1} parent=5 // pred_region
      %s472 = ssub.s32 %s25, 1
      %p473 = scmp.lt.s32.totalorder %s30, 1
      %s474 = scalar_select %p473, %s30, 1
      %s475 = smul.addr %s474, 11
      %s476 = smul.addr %s475, 8
      %s477 = scalar_lea.vmem %s0, %s476
      %p478 = pneg %p51
      %p479 = pneg %p48
      %p480 = pneg %p72
      %p481 = pneg %p69
      %p482 = pneg %p93
      %p483 = pneg %p90
      %p484 = pneg %p114
      %p485 = pneg %p111
      %p486 = pneg %p135
      %p487 = pneg %p132
      %p488 = pneg %p156
      %p489 = pneg %p153
      %p490 = pneg %p177
      %p491 = pneg %p174
      %p492 = pneg %p198
      %p493 = pneg %p195
      %p494 = pneg %p219
      %p495 = pneg %p216
      %p496 = pneg %p240
      %p497 = pneg %p237
      %p498 = pneg %p261
      %p499 = pneg %p258
      %p500 = pneg %p282
      %p501 = pneg %p279
      %p502 = pneg %p303
      %p503 = pneg %p300
      %p504 = pneg %p324
      %p505 = pneg %p321
      %p506 = pneg %p345
      %p507 = pneg %p342
      %p508 = pneg %p371
      %p509 = pneg %p368
      %p510 = scmp.lt.s32.totalorder %s30, 1
      %s511 = scalar_select %p510, %s30, 1
      %s512 = smul.addr %s511, 11
      %s513 = smul.addr %s512, 8
      %s514 = scalar_lea.vmem %s15, %s513
      %p515 = pneg %p397
      %p516 = pneg %p394
      %p517 = scmp.lt.s32.totalorder %s30, 1
      %s518 = scalar_select %p517, %s30, 1
      %s519 = scalar_lea.vmem %s16, %s518
      %p520 = scmp.lt.s32.totalorder %s30, 1
      %s521 = scalar_select %p520, %s30, 1
      %s522 = smul.addr %s521, 11
      %s523 = smul.addr %s522, 8
      %s524 = scalar_lea.vmem %s0, %s523
      %p525 = scmp.lt.s32.totalorder %s30, 1
      %s526 = scalar_select %p525, %s30, 1
      %s527 = smul.addr %s526, 11
      %s528 = smul.addr %s527, 8
      %s529 = scalar_lea.vmem %s15, %s528
      %p530 = scmp.lt.s32.totalorder %s30, 1
      %s531 = scalar_select %p530, %s30, 1
      %s532 = scalar_lea.vmem %s16, %s531
      %v534 = vlaneseq
      %v535 = vshrl.u32 %v534, 7
      %v536 = vadd.s32 %v535, 8
      %v537 = vadd.s32 %v535, 16
      %v538 = vadd.s32 %v535, 24
      %v539 = vadd.s32 %v535, 32
      %v540 = vadd.s32 %v535, 40
      %v541 = vadd.s32 %v535, 48
      %v542 = vadd.s32 %v535, 56
      %v543 = vadd.s32 %v535, 64
      %v544 = vadd.s32 %v535, 72
      %v545 = vadd.s32 %v535, 80
      %vm546 = vcmp.lt.s32.totalorder %v535, 0
      %v547 = vsub.s32 0, %v535
      %v548 = vsel %vm546, %v547, %v535
      %v549 = vmul.u32.u64.compose %v548, 3817748708
      %v550 = vextract.low.u32 %v549
      %v551 = vextract.high.u32 %v549
      %v552 = vshrl.u32 %v551, 3
      %v553 = vmul.u32 %v552, 9
      %v554 = vsub.s32 %v548, %v553
      %v555 = vsub.s32 0, %v554
      %v556 = vsel %vm546, %v555, %v554
      %vm557 = vcmp.lt.s32.totalorder %v536, 0
      %v558 = vsub.s32 0, %v536
      %v559 = vsel %vm557, %v558, %v536
      %v560 = vmul.u32.u64.compose %v559, 3817748708
      %v561 = vextract.low.u32 %v560
      %v562 = vextract.high.u32 %v560
      %v563 = vshrl.u32 %v562, 3
      %v564 = vmul.u32 %v563, 9
      %v565 = vsub.s32 %v559, %v564
      %v566 = vsub.s32 0, %v565
      %v567 = vsel %vm557, %v566, %v565
      %vm568 = vcmp.lt.s32.totalorder %v537, 0
      %v569 = vsub.s32 0, %v537
      %v570 = vsel %vm568, %v569, %v537
      %v571 = vmul.u32.u64.compose %v570, 3817748708
      %v572 = vextract.low.u32 %v571
      %v573 = vextract.high.u32 %v571
      %v574 = vshrl.u32 %v573, 3
      %v575 = vmul.u32 %v574, 9
      %v576 = vsub.s32 %v570, %v575
      %v577 = vsub.s32 0, %v576
      %v578 = vsel %vm568, %v577, %v576
      %vm579 = vcmp.lt.s32.totalorder %v538, 0
      %v580 = vsub.s32 0, %v538
      %v581 = vsel %vm579, %v580, %v538
      %v582 = vmul.u32.u64.compose %v581, 3817748708
      %v583 = vextract.low.u32 %v582
      %v584 = vextract.high.u32 %v582
      %v585 = vshrl.u32 %v584, 3
      %v586 = vmul.u32 %v585, 9
      %v587 = vsub.s32 %v581, %v586
      %v588 = vsub.s32 0, %v587
      %v589 = vsel %vm579, %v588, %v587
      %vm590 = vcmp.lt.s32.totalorder %v539, 0
      %v591 = vsub.s32 0, %v539
      %v592 = vsel %vm590, %v591, %v539
      %v593 = vmul.u32.u64.compose %v592, 3817748708
      %v594 = vextract.low.u32 %v593
      %v595 = vextract.high.u32 %v593
      %v596 = vshrl.u32 %v595, 3
      %v597 = vmul.u32 %v596, 9
      %v598 = vsub.s32 %v592, %v597
      %v599 = vsub.s32 0, %v598
      %v600 = vsel %vm590, %v599, %v598
      %vm601 = vcmp.lt.s32.totalorder %v540, 0
      %v602 = vsub.s32 0, %v540
      %v603 = vsel %vm601, %v602, %v540
      %v604 = vmul.u32.u64.compose %v603, 3817748708
      %v605 = vextract.low.u32 %v604
      %v606 = vextract.high.u32 %v604
      %v607 = vshrl.u32 %v606, 3
      %v608 = vmul.u32 %v607, 9
      %v609 = vsub.s32 %v603, %v608
      %v610 = vsub.s32 0, %v609
      %v611 = vsel %vm601, %v610, %v609
      %vm612 = vcmp.lt.s32.totalorder %v541, 0
      %v613 = vsub.s32 0, %v541
      %v614 = vsel %vm612, %v613, %v541
      %v615 = vmul.u32.u64.compose %v614, 3817748708
      %v616 = vextract.low.u32 %v615
      %v617 = vextract.high.u32 %v615
      %v618 = vshrl.u32 %v617, 3
      %v619 = vmul.u32 %v618, 9
      %v620 = vsub.s32 %v614, %v619
      %v621 = vsub.s32 0, %v620
      %v622 = vsel %vm612, %v621, %v620
      %vm623 = vcmp.lt.s32.totalorder %v542, 0
      %v624 = vsub.s32 0, %v542
      %v625 = vsel %vm623, %v624, %v542
      %v626 = vmul.u32.u64.compose %v625, 3817748708
      %v627 = vextract.low.u32 %v626
      %v628 = vextract.high.u32 %v626
      %v629 = vshrl.u32 %v628, 3
      %v630 = vmul.u32 %v629, 9
      %v631 = vsub.s32 %v625, %v630
      %v632 = vsub.s32 0, %v631
      %v633 = vsel %vm623, %v632, %v631
      %vm634 = vcmp.lt.s32.totalorder %v543, 0
      %v635 = vsub.s32 0, %v543
      %v636 = vsel %vm634, %v635, %v543
      %v637 = vmul.u32.u64.compose %v636, 3817748708
      %v638 = vextract.low.u32 %v637
      %v639 = vextract.high.u32 %v637
      %v640 = vshrl.u32 %v639, 3
      %v641 = vmul.u32 %v640, 9
      %v642 = vsub.s32 %v636, %v641
      %v643 = vsub.s32 0, %v642
      %v644 = vsel %vm634, %v643, %v642
      %vm645 = vcmp.lt.s32.totalorder %v544, 0
      %v646 = vsub.s32 0, %v544
      %v647 = vsel %vm645, %v646, %v544
      %v648 = vmul.u32.u64.compose %v647, 3817748708
      %v649 = vextract.low.u32 %v648
      %v650 = vextract.high.u32 %v648
      %v651 = vshrl.u32 %v650, 3
      %v652 = vmul.u32 %v651, 9
      %v653 = vsub.s32 %v647, %v652
      %v654 = vsub.s32 0, %v653
      %v655 = vsel %vm645, %v654, %v653
      %vm656 = vcmp.lt.s32.totalorder %v545, 0
      %v657 = vsub.s32 0, %v545
      %v658 = vsel %vm656, %v657, %v545
      %v659 = vmul.u32.u64.compose %v658, 3817748708
      %v660 = vextract.low.u32 %v659
      %v661 = vextract.high.u32 %v659
      %v662 = vshrl.u32 %v661, 3
      %v663 = vmul.u32 %v662, 9
      %v664 = vsub.s32 %v658, %v663
      %v665 = vsub.s32 0, %v664
      %v666 = vsel %vm656, %v665, %v664
      %vm667 = vcmp.ne.s32.totalorder %v556, 0
      %vm668 = vcmp.ne.s32.totalorder %v567, 0
      %vm669 = vcmp.ne.s32.totalorder %v578, 0
      %vm670 = vcmp.ne.s32.totalorder %v589, 0
      %vm671 = vcmp.ne.s32.totalorder %v600, 0
      %vm672 = vcmp.ne.s32.totalorder %v611, 0
      %vm673 = vcmp.ne.s32.totalorder %v622, 0
      %vm674 = vcmp.ne.s32.totalorder %v633, 0
      %vm675 = vcmp.ne.s32.totalorder %v644, 0
      %vm676 = vcmp.ne.s32.totalorder %v655, 0
      %vm677 = vcmp.ne.s32.totalorder %v666, 0
      %vm678 = vcmp.lt.s32.totalorder %v556, 0
      %vm679 = vcmp.lt.s32.totalorder %v567, 0
      %vm680 = vcmp.lt.s32.totalorder %v578, 0
      %vm681 = vcmp.lt.s32.totalorder %v589, 0
      %vm682 = vcmp.lt.s32.totalorder %v600, 0
      %vm683 = vcmp.lt.s32.totalorder %v611, 0
      %vm684 = vcmp.lt.s32.totalorder %v622, 0
      %vm685 = vcmp.lt.s32.totalorder %v633, 0
      %vm686 = vcmp.lt.s32.totalorder %v644, 0
      %vm687 = vcmp.lt.s32.totalorder %v655, 0
      %vm688 = vcmp.lt.s32.totalorder %v666, 0
      %vm689 = vmand %vm678, %vm667
      %vm690 = vmand %vm679, %vm668
      %vm691 = vmand %vm680, %vm669
      %vm692 = vmand %vm681, %vm670
      %vm693 = vmand %vm682, %vm671
      %vm694 = vmand %vm683, %vm672
      %vm695 = vmand %vm684, %vm673
      %vm696 = vmand %vm685, %vm674
      %vm697 = vmand %vm686, %vm675
      %vm698 = vmand %vm687, %vm676
      %vm699 = vmand %vm688, %vm677
      %v700 = vadd.s32 %v556, 9
      %v701 = vadd.s32 %v567, 9
      %v702 = vadd.s32 %v578, 9
      %v703 = vadd.s32 %v589, 9
      %v704 = vadd.s32 %v600, 9
      %v705 = vadd.s32 %v611, 9
      %v706 = vadd.s32 %v622, 9
      %v707 = vadd.s32 %v633, 9
      %v708 = vadd.s32 %v644, 9
      %v709 = vadd.s32 %v655, 9
      %v710 = vadd.s32 %v666, 9
      %v711 = vsel %vm689, %v700, %v556
      %v712 = vsel %vm690, %v701, %v567
      %v713 = vsel %vm691, %v702, %v578
      %v714 = vsel %vm692, %v703, %v589
      %v715 = vsel %vm693, %v704, %v600
      %v716 = vsel %vm694, %v705, %v611
      %v717 = vsel %vm695, %v706, %v622
      %v718 = vsel %vm696, %v707, %v633
      %v719 = vsel %vm697, %v708, %v644
      %v720 = vsel %vm698, %v709, %v655
      %v721 = vsel %vm699, %v710, %v666
      %vm722 = vcmp.ne.s32.totalorder %v711, 0
      %vm723 = vcmp.ne.s32.totalorder %v712, 0
      %vm724 = vcmp.ne.s32.totalorder %v713, 0
      %vm725 = vcmp.ne.s32.totalorder %v714, 0
      %vm726 = vcmp.ne.s32.totalorder %v715, 0
      %vm727 = vcmp.ne.s32.totalorder %v716, 0
      %vm728 = vcmp.ne.s32.totalorder %v717, 0
      %vm729 = vcmp.ne.s32.totalorder %v718, 0
      %vm730 = vcmp.ne.s32.totalorder %v719, 0
      %vm731 = vcmp.ne.s32.totalorder %v720, 0
      %vm732 = vcmp.ne.s32.totalorder %v721, 0
      %v733 = vsel %vm722, 1, 0
      %v734 = vsel %vm723, 1, 0
      %v735 = vsel %vm724, 1, 0
      %v736 = vsel %vm725, 1, 0
      %v737 = vsel %vm726, 1, 0
      %v738 = vsel %vm727, 1, 0
      %v739 = vsel %vm728, 1, 0
      %v740 = vsel %vm729, 1, 0
      %v741 = vsel %vm730, 1, 0
      %v742 = vsel %vm731, 1, 0
      %v743 = vsel %vm732, 1, 0
      %v744 = vcvt.s32.f32 %v733
      %v745 = vcvt.s32.f32 %v734
      %v746 = vcvt.s32.f32 %v735
      %v747 = vcvt.s32.f32 %v736
      %v748 = vcvt.s32.f32 %v737
      %v749 = vcvt.s32.f32 %v738
      %v750 = vcvt.s32.f32 %v739
      %v751 = vcvt.s32.f32 %v740
      %v752 = vcvt.s32.f32 %v741
      %v753 = vcvt.s32.f32 %v742
      %v754 = vcvt.s32.f32 %v743
      %vm755 = vcmp.ne.s32.totalorder %v711, 8
      %vm756 = vcmp.ne.s32.totalorder %v712, 8
      %vm757 = vcmp.ne.s32.totalorder %v713, 8
      %vm758 = vcmp.ne.s32.totalorder %v714, 8
      %vm759 = vcmp.ne.s32.totalorder %v715, 8
      %vm760 = vcmp.ne.s32.totalorder %v716, 8
      %vm761 = vcmp.ne.s32.totalorder %v717, 8
      %vm762 = vcmp.ne.s32.totalorder %v718, 8
      %vm763 = vcmp.ne.s32.totalorder %v719, 8
      %vm764 = vcmp.ne.s32.totalorder %v720, 8
      %vm765 = vcmp.ne.s32.totalorder %v721, 8
      %v766 = vsel %vm755, 1, 0
      %v767 = vsel %vm756, 1, 0
      %v768 = vsel %vm757, 1, 0
      %v769 = vsel %vm758, 1, 0
      %v770 = vsel %vm759, 1, 0
      %v771 = vsel %vm760, 1, 0
      %v772 = vsel %vm761, 1, 0
      %v773 = vsel %vm762, 1, 0
      %v774 = vsel %vm763, 1, 0
      %v775 = vsel %vm764, 1, 0
      %v776 = vsel %vm765, 1, 0
      %v777 = vcvt.s32.f32 %v766
      %v778 = vcvt.s32.f32 %v767
      %v779 = vcvt.s32.f32 %v768
      %v780 = vcvt.s32.f32 %v769
      %v781 = vcvt.s32.f32 %v770
      %v782 = vcvt.s32.f32 %v771
      %v783 = vcvt.s32.f32 %v772
      %v784 = vcvt.s32.f32 %v773
      %v785 = vcvt.s32.f32 %v774
      %v786 = vcvt.s32.f32 %v775
      %v787 = vcvt.s32.f32 %v776
      %vm788 = vcmask 261120
      %789 = vst.msk [vmem:[#allocation2] sm:$0xff] %vm788, 0.0
      %790 = vst.msk [vmem:[#allocation2 + $0x8] sm:$0xff] %vm788, 0.0
      %791 = vst.msk [vmem:[#allocation2 + $0x10] sm:$0xff] %vm788, 0.0
      %792 = vst.msk [vmem:[#allocation2 + $0x18] sm:$0xff] %vm788, 0.0
      %793 = vst.msk [vmem:[#allocation2 + $0x20] sm:$0xff] %vm788, 0.0
      %794 = vst.msk [vmem:[#allocation2 + $0x28] sm:$0xff] %vm788, 0.0
      %795 = vst.msk [vmem:[#allocation2 + $0x30] sm:$0xff] %vm788, 0.0
      %796 = vst.msk [vmem:[#allocation2 + $0x38] sm:$0xff] %vm788, 0.0
      %797 = vst.msk [vmem:[#allocation2 + $0x40] sm:$0xff] %vm788, 0.0
      %798 = vst.msk [vmem:[#allocation2 + $0x48] sm:$0xff] %vm788, 0.0
      %799 = vst.msk [vmem:[#allocation2 + $0x50] sm:$0xff] %vm788, 0.0
      %800 = vst.msk [vmem:[#allocation2 + $0x58] sm:$0xff] %vm788, 0.0
      %801 = vst.msk [vmem:[#allocation2 + $0x60] sm:$0xff] %vm788, 0.0
      %802 = vst.msk [vmem:[#allocation2 + $0x68] sm:$0xff] %vm788, 0.0
      %803 = vst.msk [vmem:[#allocation2 + $0x70] sm:$0xff] %vm788, 0.0
      %v804 = vld [vmem:[%s524] sm:$0xff]
      %v805 = vld [vmem:[%s524 + $0x8] sm:$0xff]
      %v806 = vld [vmem:[%s524 + $0x10] sm:$0xff]
      %v807 = vld [vmem:[%s524 + $0x18] sm:$0xff]
      %v808 = vld [vmem:[%s524 + $0x20] sm:$0xff]
      %v809 = vld [vmem:[%s524 + $0x28] sm:$0xff]
      %v810 = vld [vmem:[%s524 + $0x30] sm:$0xff]
      %v811 = vld [vmem:[%s524 + $0x38] sm:$0xff]
      %v812 = vld [vmem:[%s524 + $0x40] sm:$0xff]
      %v813 = vld [vmem:[%s524 + $0x48] sm:$0xff]
      %v814 = vld [vmem:[%s524 + $0x50] sm:$0x1]
      %v815 = vld [vmem:[%s2] sm:$0xff]
      %v816 = vld [vmem:[%s2 + $0x8] sm:$0xff]
      %v817 = vld [vmem:[%s2 + $0x10] sm:$0xff]
      %v818 = vld [vmem:[%s2 + $0x18] sm:$0xff]
      %v819 = vld [vmem:[%s2 + $0x20] sm:$0xff]
      %v820 = vld [vmem:[%s2 + $0x28] sm:$0xff]
      %v821 = vld [vmem:[%s2 + $0x30] sm:$0xff]
      %v822 = vld [vmem:[%s2 + $0x38] sm:$0xff]
      %v823 = vld [vmem:[%s2 + $0x40] sm:$0xff]
      %v824 = vld [vmem:[%s2 + $0x48] sm:$0xff]
      %v825 = vld [vmem:[%s2 + $0x50] sm:$0x1]
      %v826 = vld [vmem:[%s3] sm:$0xff]
      %v827 = vld [vmem:[%s3 + $0x8] sm:$0xff]
      %v828 = vld [vmem:[%s3 + $0x10] sm:$0xff]
      %v829 = vld [vmem:[%s3 + $0x18] sm:$0xff]
      %v830 = vld [vmem:[%s3 + $0x20] sm:$0xff]
      %v831 = vld [vmem:[%s3 + $0x28] sm:$0xff]
      %v832 = vld [vmem:[%s3 + $0x30] sm:$0xff]
      %v833 = vld [vmem:[%s3 + $0x38] sm:$0xff]
      %v834 = vld [vmem:[%s3 + $0x40] sm:$0xff]
      %v835 = vld [vmem:[%s3 + $0x48] sm:$0xff]
      %v836 = vld [vmem:[%s3 + $0x50] sm:$0x1]
      %837 = vst.msk [vmem:[#allocation2 + $0x10] sm:$0xff] %vm788, %v804
      %838 = vst.msk [vmem:[#allocation2 + $0x18] sm:$0xff] %vm788, %v805
      %839 = vst.msk [vmem:[#allocation2 + $0x20] sm:$0xff] %vm788, %v806
      %840 = vst.msk [vmem:[#allocation2 + $0x28] sm:$0xff] %vm788, %v807
      %841 = vst.msk [vmem:[#allocation2 + $0x30] sm:$0xff] %vm788, %v808
      %842 = vst.msk [vmem:[#allocation2 + $0x38] sm:$0xff] %vm788, %v809
      %843 = vst.msk [vmem:[#allocation2 + $0x40] sm:$0xff] %vm788, %v810
      %844 = vst.msk [vmem:[#allocation2 + $0x48] sm:$0xff] %vm788, %v811
      %845 = vst.msk [vmem:[#allocation2 + $0x50] sm:$0xff] %vm788, %v812
      %846 = vst.msk [vmem:[#allocation2 + $0x58] sm:$0xff] %vm788, %v813
      %vm847 = vcmask 253952
      %848 = vst.msk [vmem:[#allocation2 + $0x60] sm:$0x1] %vm847, %v814
      %v849 = vld [vmem:[#allocation2 + $0x6] sm:$0xff]
      %v850 = vld [vmem:[#allocation2 + $0xe] sm:$0xff]
      %v851 = vld [vmem:[#allocation2 + $0x16] sm:$0xff]
      %v852 = vld [vmem:[#allocation2 + $0x1e] sm:$0xff]
      %v853 = vld [vmem:[#allocation2 + $0x26] sm:$0xff]
      %v854 = vld [vmem:[#allocation2 + $0x2e] sm:$0xff]
      %v855 = vld [vmem:[#allocation2 + $0x36] sm:$0xff]
      %v856 = vld [vmem:[#allocation2 + $0x3e] sm:$0xff]
      %v857 = vld [vmem:[#allocation2 + $0x46] sm:$0xff]
      %v858 = vld [vmem:[#allocation2 + $0x4e] sm:$0xff]
      %v859 = vld [vmem:[#allocation2 + $0x56] sm:$0x1]
      %v860 = vmul.f32 %v849, %v744
      %v861 = vmul.f32 %v850, %v745
      %v862 = vmul.f32 %v851, %v746
      %v863 = vmul.f32 %v852, %v747
      %v864 = vmul.f32 %v853, %v748
      %v865 = vmul.f32 %v854, %v749
      %v866 = vmul.f32 %v855, %v750
      %v867 = vmul.f32 %v856, %v751
      %v868 = vmul.f32 %v857, %v752
      %v869 = vmul.f32 %v858, %v753
      %v870 = vmul.f32 %v859, %v754
      %v871 = vpack.c.bf16 %v861, %v860
      %v872 = vpack.c.bf16 %v863, %v862
      %v873 = vpack.c.bf16 %v865, %v864
      %v874 = vpack.c.bf16 %v867, %v866
      %v875 = vpack.c.bf16 %v869, %v868
      %v876 = vpack.c.bf16 %v870, %v870
      %v877 = vld [vmem:[%s1] sm:$0xf]
      %v878 = vld [vmem:[%s1 + $0x4] sm:$0xf]
      %v879 = vld [vmem:[%s1 + $0x8] sm:$0xf]
      %v880 = vld [vmem:[%s1 + $0xc] sm:$0xf]
      %v881 = vld [vmem:[#allocation2 + $0x7] sm:$0xff]
      %v882 = vld [vmem:[#allocation2 + $0xf] sm:$0xff]
      %v883 = vld [vmem:[#allocation2 + $0x17] sm:$0xff]
      %v884 = vld [vmem:[#allocation2 + $0x1f] sm:$0xff]
      %v885 = vld [vmem:[#allocation2 + $0x27] sm:$0xff]
      %v886 = vld [vmem:[#allocation2 + $0x2f] sm:$0xff]
      %v887 = vld [vmem:[#allocation2 + $0x37] sm:$0xff]
      %v888 = vld [vmem:[#allocation2 + $0x3f] sm:$0xff]
      %v889 = vld [vmem:[#allocation2 + $0x47] sm:$0xff]
      %v890 = vld [vmem:[#allocation2 + $0x4f] sm:$0xff]
      %v891 = vld [vmem:[#allocation2 + $0x57] sm:$0x1]
      %v892 = vpack.c.bf16 %v882, %v881
      %v893 = vpack.c.bf16 %v884, %v883
      %v894 = vpack.c.bf16 %v886, %v885
      %v895 = vpack.c.bf16 %v888, %v887
      %v896 = vpack.c.bf16 %v890, %v889
      %v897 = vpack.c.bf16 %v891, %v891
      %s898 = scalar_lea.vmem %s1, 16
      %v899 = vld [vmem:[%s898] sm:$0xf]
      %v900 = vld [vmem:[%s898 + $0x4] sm:$0xf]
      %v901 = vld [vmem:[%s898 + $0x8] sm:$0xf]
      %v902 = vld [vmem:[%s898 + $0xc] sm:$0xf]
      %v907 = vunpack.c.l.b16 %v899
      %v908 = vunpack.c.l.b16 %v900
      %v909 = vunpack.c.l.b16 %v901
      %v910 = vunpack.c.l.b16 %v902
      %v911 = vpack.c.b16 %v908, %v907
      %v912 = vpack.c.b16 %v910, %v909
      %v916 = vsel %vm788, %v892, 0
      %v919 = vsel %vm788, %v893, 0
      %v922 = vsel %vm788, %v894, 0
      %v925 = vsel %vm788, %v895, 0
      %v928 = vsel %vm788, %v896, 0
      %v931 = vsel %vm788, %v897, 0
      %933 = vmatprep.subr.bf16.mxu0 0
      %934 = vmatpush1.bf16.msra.mxu0 0
      %935 = vmatprep.subr.bf16.mxu0 0
      %936 = vmatpush1.bf16.msra.mxu0 0
      %937 = vmatprep.subr.bf16.mxu0 0
      %938 = vmatpush1.bf16.msra.mxu0 0
      %939 = vmatprep.subr.bf16.mxu0 0
      %940 = vmatpush1.bf16.msra.mxu0 0
      %941 = vmatprep.subr.bf16.mxu0 0
      %942 = vmatpush1.bf16.msra.mxu0 0
      %943 = vmatprep.subr.bf16.mxu0 0
      %944 = vmatpush1.bf16.msra.mxu0 0
      %945 = vmatprep.subr.bf16.mxu0 0
      %946 = vmatpush1.bf16.msra.mxu0 %v912
      %947 = vmatprep.subr.bf16.mxu0 0
      %948 = vmatpush1.bf16.msra.mxu0 %v911
      %949 = vmatprep.subr.bf16.mxu0 0
      %950 = vmatpush2.bf16.msra.mxu0 0
      %951 = vmatprep.subr.bf16.mxu0 0
      %952 = vmatpush2.bf16.msra.mxu0 0
      %953 = vmatprep.subr.bf16.mxu0 0
      %954 = vmatpush2.bf16.msra.mxu0 0
      %955 = vmatprep.subr.bf16.mxu0 0
      %956 = vmatpush2.bf16.msra.mxu0 0
      %957 = vmatprep.subr.bf16.mxu0 0
      %958 = vmatpush2.bf16.msra.mxu0 0
      %959 = vmatprep.subr.bf16.mxu0 0
      %960 = vmatpush2.bf16.msra.mxu0 0
      %961 = vmatprep.subr.bf16.mxu0 0
      %962 = vmatpush2.bf16.msra.mxu0 0
      %963 = vmatprep.subr.bf16.mxu0 0
      %964 = vmatpush2.bf16.msra.mxu0 0
      %965 = vmatprep.mubr.bf16.mxu0 0
      %966 = vmatmul.mubr.bf16.gmra.mxu0 %v916
      %v967 = vpop.f32.mrf.mxu0
      %v968 = vadd.f32 0.0, %v967
      %v969 = vpop.f32.mrf.mxu0
      %v970 = vpop.f32.mrf.mxu0
      %v971 = vadd.f32 0.0, %v970
      %v972 = vpop.f32.mrf.mxu0
      %973 = vmatprep.mubr.bf16.mxu0 0
      %974 = vmatmul.mubr.bf16.gmra.mxu0 %v919
      %v975 = vpop.f32.mrf.mxu0
      %v976 = vadd.f32 0.0, %v975
      %v977 = vpop.f32.mrf.mxu0
      %v978 = vpop.f32.mrf.mxu0
      %v979 = vadd.f32 0.0, %v978
      %v980 = vpop.f32.mrf.mxu0
      %981 = vmatprep.mubr.bf16.mxu0 0
      %982 = vmatmul.mubr.bf16.gmra.mxu0 %v922
      %v983 = vpop.f32.mrf.mxu0
      %v984 = vadd.f32 0.0, %v983
      %v985 = vpop.f32.mrf.mxu0
      %v986 = vpop.f32.mrf.mxu0
      %v987 = vadd.f32 0.0, %v986
      %v988 = vpop.f32.mrf.mxu0
      %989 = vmatprep.mubr.bf16.mxu0 0
      %990 = vmatmul.mubr.bf16.gmra.mxu0 %v925
      %v991 = vpop.f32.mrf.mxu0
      %v992 = vadd.f32 0.0, %v991
      %v993 = vpop.f32.mrf.mxu0
      %v994 = vpop.f32.mrf.mxu0
      %v995 = vadd.f32 0.0, %v994
      %v996 = vpop.f32.mrf.mxu0
      %997 = vmatprep.mubr.bf16.mxu0 0
      %998 = vmatmul.mubr.bf16.gmra.mxu0 %v928
      %v999 = vpop.f32.mrf.mxu0
      %v1000 = vadd.f32 0.0, %v999
      %v1001 = vpop.f32.mrf.mxu0
      %v1002 = vpop.f32.mrf.mxu0
      %v1003 = vadd.f32 0.0, %v1002
      %v1004 = vpop.f32.mrf.mxu0
      %1005 = vmatprep.mubr.bf16.mxu0 0
      %1006 = vmatmul.mubr.bf16.gmra.mxu0 %v931
      %v1007 = vpop.f32.mrf.mxu0
      %v1008 = vadd.f32 0.0, %v1007
      %v1009 = vpop.f32.mrf.mxu0
      %v1010 = vpop.f32.mrf.mxu0
      %v1011 = vpop.f32.mrf.mxu0
      %1012 = vdwg.mxu0
      %v1017 = vunpack.c.l.b16 %v877
      %v1018 = vunpack.c.l.b16 %v878
      %v1019 = vunpack.c.l.b16 %v879
      %v1020 = vunpack.c.l.b16 %v880
      %v1021 = vpack.c.b16 %v1018, %v1017
      %v1022 = vpack.c.b16 %v1020, %v1019
      %v1026 = vsel %vm788, %v871, 0
      %v1029 = vsel %vm788, %v872, 0
      %v1032 = vsel %vm788, %v873, 0
      %v1035 = vsel %vm788, %v874, 0
      %v1038 = vsel %vm788, %v875, 0
      %v1041 = vsel %vm788, %v876, 0
      %1043 = vmatprep.subr.bf16.mxu0 0
      %1044 = vmatpush1.bf16.msra.mxu0 0
      %1045 = vmatprep.subr.bf16.mxu0 0
      %1046 = vmatpush1.bf16.msra.mxu0 0
      %1047 = vmatprep.subr.bf16.mxu0 0
      %1048 = vmatpush1.bf16.msra.mxu0 0
      %1049 = vmatprep.subr.bf16.mxu0 0
      %1050 = vmatpush1.bf16.msra.mxu0 0
      %1051 = vmatprep.subr.bf16.mxu0 0
      %1052 = vmatpush1.bf16.msra.mxu0 0
      %1053 = vmatprep.subr.bf16.mxu0 0
      %1054 = vmatpush1.bf16.msra.mxu0 0
      %1055 = vmatprep.subr.bf16.mxu0 0
      %1056 = vmatpush1.bf16.msra.mxu0 %v1022
      %1057 = vmatprep.subr.bf16.mxu0 0
      %1058 = vmatpush1.bf16.msra.mxu0 %v1021
      %1059 = vmatprep.subr.bf16.mxu0 0
      %1060 = vmatpush2.bf16.msra.mxu0 0
      %1061 = vmatprep.subr.bf16.mxu0 0
      %1062 = vmatpush2.bf16.msra.mxu0 0
      %1063 = vmatprep.subr.bf16.mxu0 0
      %1064 = vmatpush2.bf16.msra.mxu0 0
      %1065 = vmatprep.subr.bf16.mxu0 0
      %1066 = vmatpush2.bf16.msra.mxu0 0
      %1067 = vmatprep.subr.bf16.mxu0 0
      %1068 = vmatpush2.bf16.msra.mxu0 0
      %1069 = vmatprep.subr.bf16.mxu0 0
      %1070 = vmatpush2.bf16.msra.mxu0 0
      %1071 = vmatprep.subr.bf16.mxu0 0
      %1072 = vmatpush2.bf16.msra.mxu0 0
      %1073 = vmatprep.subr.bf16.mxu0 0
      %1074 = vmatpush2.bf16.msra.mxu0 0
      %1075 = vmatprep.mubr.bf16.mxu0 0
      %1076 = vmatmul.mubr.bf16.gmra.mxu0 %v1026
      %v1077 = vpop.f32.mrf.mxu0
      %v1078 = vadd.f32 %v968, %v1077
      %v1079 = vpop.f32.mrf.mxu0
      %v1080 = vpop.f32.mrf.mxu0
      %v1081 = vadd.f32 %v971, %v1080
      %v1082 = vpop.f32.mrf.mxu0
      %1083 = vmatprep.mubr.bf16.mxu0 0
      %1084 = vmatmul.mubr.bf16.gmra.mxu0 %v1029
      %v1085 = vpop.f32.mrf.mxu0
      %v1086 = vadd.f32 %v976, %v1085
      %v1087 = vpop.f32.mrf.mxu0
      %v1088 = vpop.f32.mrf.mxu0
      %v1089 = vadd.f32 %v979, %v1088
      %v1090 = vpop.f32.mrf.mxu0
      %1091 = vmatprep.mubr.bf16.mxu0 0
      %1092 = vmatmul.mubr.bf16.gmra.mxu0 %v1032
      %v1093 = vpop.f32.mrf.mxu0
      %v1094 = vadd.f32 %v984, %v1093
      %v1095 = vpop.f32.mrf.mxu0
      %v1096 = vpop.f32.mrf.mxu0
      %v1097 = vadd.f32 %v987, %v1096
      %v1098 = vpop.f32.mrf.mxu0
      %1099 = vmatprep.mubr.bf16.mxu0 0
      %1100 = vmatmul.mubr.bf16.gmra.mxu0 %v1035
      %v1101 = vpop.f32.mrf.mxu0
      %v1102 = vadd.f32 %v992, %v1101
      %v1103 = vpop.f32.mrf.mxu0
      %v1104 = vpop.f32.mrf.mxu0
      %v1105 = vadd.f32 %v995, %v1104
      %v1106 = vpop.f32.mrf.mxu0
      %1107 = vmatprep.mubr.bf16.mxu0 0
      %1108 = vmatmul.mubr.bf16.gmra.mxu0 %v1038
      %v1109 = vpop.f32.mrf.mxu0
      %v1110 = vadd.f32 %v1000, %v1109
      %v1111 = vpop.f32.mrf.mxu0
      %v1112 = vpop.f32.mrf.mxu0
      %v1113 = vadd.f32 %v1003, %v1112
      %v1114 = vpop.f32.mrf.mxu0
      %1115 = vmatprep.mubr.bf16.mxu0 0
      %1116 = vmatmul.mubr.bf16.gmra.mxu0 %v1041
      %v1117 = vpop.f32.mrf.mxu0
      %v1118 = vadd.f32 %v1008, %v1117
      %v1119 = vpop.f32.mrf.mxu0
      %v1120 = vpop.f32.mrf.mxu0
      %v1121 = vpop.f32.mrf.mxu0
      %1122 = vdwg.mxu0
      %v1123 = vld [vmem:[#allocation2 + $0x8] sm:$0xff]
      %v1124 = vld [vmem:[#allocation2 + $0x10] sm:$0xff]
      %v1125 = vld [vmem:[#allocation2 + $0x18] sm:$0xff]
      %v1126 = vld [vmem:[#allocation2 + $0x20] sm:$0xff]
      %v1127 = vld [vmem:[#allocation2 + $0x28] sm:$0xff]
      %v1128 = vld [vmem:[#allocation2 + $0x30] sm:$0xff]
      %v1129 = vld [vmem:[#allocation2 + $0x38] sm:$0xff]
      %v1130 = vld [vmem:[#allocation2 + $0x40] sm:$0xff]
      %v1131 = vld [vmem:[#allocation2 + $0x48] sm:$0xff]
      %v1132 = vld [vmem:[#allocation2 + $0x50] sm:$0xff]
      %v1133 = vld [vmem:[#allocation2 + $0x58] sm:$0x1]
      %v1134 = vmul.f32 %v1123, %v777
      %v1135 = vmul.f32 %v1124, %v778
      %v1136 = vmul.f32 %v1125, %v779
      %v1137 = vmul.f32 %v1126, %v780
      %v1138 = vmul.f32 %v1127, %v781
      %v1139 = vmul.f32 %v1128, %v782
      %v1140 = vmul.f32 %v1129, %v783
      %v1141 = vmul.f32 %v1130, %v784
      %v1142 = vmul.f32 %v1131, %v785
      %v1143 = vmul.f32 %v1132, %v786
      %v1144 = vmul.f32 %v1133, %v787
      %v1145 = vpack.c.bf16 %v1135, %v1134
      %v1146 = vpack.c.bf16 %v1137, %v1136
      %v1147 = vpack.c.bf16 %v1139, %v1138
      %v1148 = vpack.c.bf16 %v1141, %v1140
      %v1149 = vpack.c.bf16 %v1143, %v1142
      %v1150 = vpack.c.bf16 %v1144, %v1144
      %s1151 = scalar_lea.vmem %s1, 32
      %v1152 = vld [vmem:[%s1151] sm:$0xf]
      %v1153 = vld [vmem:[%s1151 + $0x4] sm:$0xf]
      %v1154 = vld [vmem:[%s1151 + $0x8] sm:$0xf]
      %v1155 = vld [vmem:[%s1151 + $0xc] sm:$0xf]
      %v1160 = vunpack.c.l.b16 %v1152
      %v1161 = vunpack.c.l.b16 %v1153
      %v1162 = vunpack.c.l.b16 %v1154
      %v1163 = vunpack.c.l.b16 %v1155
      %v1164 = vpack.c.b16 %v1161, %v1160
      %v1165 = vpack.c.b16 %v1163, %v1162
      %v1169 = vsel %vm788, %v1145, 0
      %v1172 = vsel %vm788, %v1146, 0
      %v1175 = vsel %vm788, %v1147, 0
      %v1178 = vsel %vm788, %v1148, 0
      %v1181 = vsel %vm788, %v1149, 0
      %v1184 = vsel %vm788, %v1150, 0
      %1186 = vmatprep.subr.bf16.mxu0 0
      %1187 = vmatpush1.bf16.msra.mxu0 0
      %1188 = vmatprep.subr.bf16.mxu0 0
      %1189 = vmatpush1.bf16.msra.mxu0 0
      %1190 = vmatprep.subr.bf16.mxu0 0
      %1191 = vmatpush1.bf16.msra.mxu0 0
      %1192 = vmatprep.subr.bf16.mxu0 0
      %1193 = vmatpush1.bf16.msra.mxu0 0
      %1194 = vmatprep.subr.bf16.mxu0 0
      %1195 = vmatpush1.bf16.msra.mxu0 0
      %1196 = vmatprep.subr.bf16.mxu0 0
      %1197 = vmatpush1.bf16.msra.mxu0 0
      %1198 = vmatprep.subr.bf16.mxu0 0
      %1199 = vmatpush1.bf16.msra.mxu0 %v1165
      %1200 = vmatprep.subr.bf16.mxu0 0
      %1201 = vmatpush1.bf16.msra.mxu0 %v1164
      %1202 = vmatprep.subr.bf16.mxu0 0
      %1203 = vmatpush2.bf16.msra.mxu0 0
      %1204 = vmatprep.subr.bf16.mxu0 0
      %1205 = vmatpush2.bf16.msra.mxu0 0
      %1206 = vmatprep.subr.bf16.mxu0 0
      %1207 = vmatpush2.bf16.msra.mxu0 0
      %1208 = vmatprep.subr.bf16.mxu0 0
      %1209 = vmatpush2.bf16.msra.mxu0 0
      %1210 = vmatprep.subr.bf16.mxu0 0
      %1211 = vmatpush2.bf16.msra.mxu0 0
      %1212 = vmatprep.subr.bf16.mxu0 0
      %1213 = vmatpush2.bf16.msra.mxu0 0
      %1214 = vmatprep.subr.bf16.mxu0 0
      %1215 = vmatpush2.bf16.msra.mxu0 0
      %1216 = vmatprep.subr.bf16.mxu0 0
      %1217 = vmatpush2.bf16.msra.mxu0 0
      %1218 = vmatprep.mubr.bf16.mxu0 0
      %1219 = vmatmul.mubr.bf16.gmra.mxu0 %v1169
      %v1220 = vpop.f32.mrf.mxu0
      %v1221 = vadd.f32 0.0, %v1220
      %v1222 = vpop.f32.mrf.mxu0
      %v1223 = vpop.f32.mrf.mxu0
      %v1224 = vadd.f32 0.0, %v1223
      %v1225 = vpop.f32.mrf.mxu0
      %1226 = vmatprep.mubr.bf16.mxu0 0
      %1227 = vmatmul.mubr.bf16.gmra.mxu0 %v1172
      %v1228 = vpop.f32.mrf.mxu0
      %v1229 = vadd.f32 0.0, %v1228
      %v1230 = vpop.f32.mrf.mxu0
      %v1231 = vpop.f32.mrf.mxu0
      %v1232 = vadd.f32 0.0, %v1231
      %v1233 = vpop.f32.mrf.mxu0
      %1234 = vmatprep.mubr.bf16.mxu0 0
      %1235 = vmatmul.mubr.bf16.gmra.mxu0 %v1175
      %v1236 = vpop.f32.mrf.mxu0
      %v1237 = vadd.f32 0.0, %v1236
      %v1238 = vpop.f32.mrf.mxu0
      %v1239 = vpop.f32.mrf.mxu0
      %v1240 = vadd.f32 0.0, %v1239
      %v1241 = vpop.f32.mrf.mxu0
      %1242 = vmatprep.mubr.bf16.mxu0 0
      %1243 = vmatmul.mubr.bf16.gmra.mxu0 %v1178
      %v1244 = vpop.f32.mrf.mxu0
      %v1245 = vadd.f32 0.0, %v1244
      %v1246 = vpop.f32.mrf.mxu0
      %v1247 = vpop.f32.mrf.mxu0
      %v1248 = vadd.f32 0.0, %v1247
      %v1249 = vpop.f32.mrf.mxu0
      %1250 = vmatprep.mubr.bf16.mxu0 0
      %1251 = vmatmul.mubr.bf16.gmra.mxu0 %v1181
      %v1252 = vpop.f32.mrf.mxu0
      %v1253 = vadd.f32 0.0, %v1252
      %v1254 = vpop.f32.mrf.mxu0
      %v1255 = vpop.f32.mrf.mxu0
      %v1256 = vadd.f32 0.0, %v1255
      %v1257 = vpop.f32.mrf.mxu0
      %1258 = vmatprep.mubr.bf16.mxu0 0
      %1259 = vmatmul.mubr.bf16.gmra.mxu0 %v1184
      %v1260 = vpop.f32.mrf.mxu0
      %v1261 = vadd.f32 0.0, %v1260
      %v1262 = vpop.f32.mrf.mxu0
      %v1263 = vpop.f32.mrf.mxu0
      %v1264 = vpop.f32.mrf.mxu0
      %1265 = vdwg.mxu0
      %v1266 = vadd.f32 %v1078, %v1221
      %v1267 = vadd.f32 %v1081, %v1224
      %v1268 = vadd.f32 %v1086, %v1229
      %v1269 = vadd.f32 %v1089, %v1232
      %v1270 = vadd.f32 %v1094, %v1237
      %v1271 = vadd.f32 %v1097, %v1240
      %v1272 = vadd.f32 %v1102, %v1245
      %v1273 = vadd.f32 %v1105, %v1248
      %v1274 = vadd.f32 %v1110, %v1253
      %v1275 = vadd.f32 %v1113, %v1256
      %v1276 = vadd.f32 %v1118, %v1261
      %v1277 = vld [vmem:[#allocation2 + $0xf] sm:$0xff]
      %v1278 = vld [vmem:[#allocation2 + $0x17] sm:$0xff]
      %v1279 = vld [vmem:[#allocation2 + $0x1f] sm:$0xff]
      %v1280 = vld [vmem:[#allocation2 + $0x27] sm:$0xff]
      %v1281 = vld [vmem:[#allocation2 + $0x2f] sm:$0xff]
      %v1282 = vld [vmem:[#allocation2 + $0x37] sm:$0xff]
      %v1283 = vld [vmem:[#allocation2 + $0x3f] sm:$0xff]
      %v1284 = vld [vmem:[#allocation2 + $0x47] sm:$0xff]
      %v1285 = vld [vmem:[#allocation2 + $0x4f] sm:$0xff]
      %v1286 = vld [vmem:[#allocation2 + $0x57] sm:$0xff]
      %v1287 = vld [vmem:[#allocation2 + $0x5f] sm:$0x1]
      %v1288 = vmul.f32 %v1277, %v744
      %v1289 = vmul.f32 %v1278, %v745
      %v1290 = vmul.f32 %v1279, %v746
      %v1291 = vmul.f32 %v1280, %v747
      %v1292 = vmul.f32 %v1281, %v748
      %v1293 = vmul.f32 %v1282, %v749
      %v1294 = vmul.f32 %v1283, %v750
      %v1295 = vmul.f32 %v1284, %v751
      %v1296 = vmul.f32 %v1285, %v752
      %v1297 = vmul.f32 %v1286, %v753
      %v1298 = vmul.f32 %v1287, %v754
      %v1299 = vpack.c.bf16 %v1289, %v1288
      %v1300 = vpack.c.bf16 %v1291, %v1290
      %v1301 = vpack.c.bf16 %v1293, %v1292
      %v1302 = vpack.c.bf16 %v1295, %v1294
      %v1303 = vpack.c.bf16 %v1297, %v1296
      %v1304 = vpack.c.bf16 %v1298, %v1298
      %s1305 = scalar_lea.vmem %s1, 48
      %v1306 = vld [vmem:[%s1305] sm:$0xf]
      %v1307 = vld [vmem:[%s1305 + $0x4] sm:$0xf]
      %v1308 = vld [vmem:[%s1305 + $0x8] sm:$0xf]
      %v1309 = vld [vmem:[%s1305 + $0xc] sm:$0xf]
      %v1314 = vunpack.c.l.b16 %v1306
      %v1315 = vunpack.c.l.b16 %v1307
      %v1316 = vunpack.c.l.b16 %v1308
      %v1317 = vunpack.c.l.b16 %v1309
      %v1318 = vpack.c.b16 %v1315, %v1314
      %v1319 = vpack.c.b16 %v1317, %v1316
      %v1323 = vsel %vm788, %v1299, 0
      %v1326 = vsel %vm788, %v1300, 0
      %v1329 = vsel %vm788, %v1301, 0
      %v1332 = vsel %vm788, %v1302, 0
      %v1335 = vsel %vm788, %v1303, 0
      %v1338 = vsel %vm788, %v1304, 0
      %1340 = vmatprep.subr.bf16.mxu0 0
      %1341 = vmatpush1.bf16.msra.mxu0 0
      %1342 = vmatprep.subr.bf16.mxu0 0
      %1343 = vmatpush1.bf16.msra.mxu0 0
      %1344 = vmatprep.subr.bf16.mxu0 0
      %1345 = vmatpush1.bf16.msra.mxu0 0
      %1346 = vmatprep.subr.bf16.mxu0 0
      %1347 = vmatpush1.bf16.msra.mxu0 0
      %1348 = vmatprep.subr.bf16.mxu0 0
      %1349 = vmatpush1.bf16.msra.mxu0 0
      %1350 = vmatprep.subr.bf16.mxu0 0
      %1351 = vmatpush1.bf16.msra.mxu0 0
      %1352 = vmatprep.subr.bf16.mxu0 0
      %1353 = vmatpush1.bf16.msra.mxu0 %v1319
      %1354 = vmatprep.subr.bf16.mxu0 0
      %1355 = vmatpush1.bf16.msra.mxu0 %v1318
      %1356 = vmatprep.subr.bf16.mxu0 0
      %1357 = vmatpush2.bf16.msra.mxu0 0
      %1358 = vmatprep.subr.bf16.mxu0 0
      %1359 = vmatpush2.bf16.msra.mxu0 0
      %1360 = vmatprep.subr.bf16.mxu0 0
      %1361 = vmatpush2.bf16.msra.mxu0 0
      %1362 = vmatprep.subr.bf16.mxu0 0
      %1363 = vmatpush2.bf16.msra.mxu0 0
      %1364 = vmatprep.subr.bf16.mxu0 0
      %1365 = vmatpush2.bf16.msra.mxu0 0
      %1366 = vmatprep.subr.bf16.mxu0 0
      %1367 = vmatpush2.bf16.msra.mxu0 0
      %1368 = vmatprep.subr.bf16.mxu0 0
      %1369 = vmatpush2.bf16.msra.mxu0 0
      %1370 = vmatprep.subr.bf16.mxu0 0
      %1371 = vmatpush2.bf16.msra.mxu0 0
      %1372 = vmatprep.mubr.bf16.mxu0 0
      %1373 = vmatmul.mubr.bf16.gmra.mxu0 %v1323
      %v1374 = vpop.f32.mrf.mxu0
      %v1375 = vadd.f32 0.0, %v1374
      %v1376 = vpop.f32.mrf.mxu0
      %v1377 = vpop.f32.mrf.mxu0
      %v1378 = vadd.f32 0.0, %v1377
      %v1379 = vpop.f32.mrf.mxu0
      %1380 = vmatprep.mubr.bf16.mxu0 0
      %1381 = vmatmul.mubr.bf16.gmra.mxu0 %v1326
      %v1382 = vpop.f32.mrf.mxu0
      %v1383 = vadd.f32 0.0, %v1382
      %v1384 = vpop.f32.mrf.mxu0
      %v1385 = vpop.f32.mrf.mxu0
      %v1386 = vadd.f32 0.0, %v1385
      %v1387 = vpop.f32.mrf.mxu0
      %1388 = vmatprep.mubr.bf16.mxu0 0
      %1389 = vmatmul.mubr.bf16.gmra.mxu0 %v1329
      %v1390 = vpop.f32.mrf.mxu0
      %v1391 = vadd.f32 0.0, %v1390
      %v1392 = vpop.f32.mrf.mxu0
      %v1393 = vpop.f32.mrf.mxu0
      %v1394 = vadd.f32 0.0, %v1393
      %v1395 = vpop.f32.mrf.mxu0
      %1396 = vmatprep.mubr.bf16.mxu0 0
      %1397 = vmatmul.mubr.bf16.gmra.mxu0 %v1332
      %v1398 = vpop.f32.mrf.mxu0
      %v1399 = vadd.f32 0.0, %v1398
      %v1400 = vpop.f32.mrf.mxu0
      %v1401 = vpop.f32.mrf.mxu0
      %v1402 = vadd.f32 0.0, %v1401
      %v1403 = vpop.f32.mrf.mxu0
      %1404 = vmatprep.mubr.bf16.mxu0 0
      %1405 = vmatmul.mubr.bf16.gmra.mxu0 %v1335
      %v1406 = vpop.f32.mrf.mxu0
      %v1407 = vadd.f32 0.0, %v1406
      %v1408 = vpop.f32.mrf.mxu0
      %v1409 = vpop.f32.mrf.mxu0
      %v1410 = vadd.f32 0.0, %v1409
      %v1411 = vpop.f32.mrf.mxu0
      %1412 = vmatprep.mubr.bf16.mxu0 0
      %1413 = vmatmul.mubr.bf16.gmra.mxu0 %v1338
      %v1414 = vpop.f32.mrf.mxu0
      %v1415 = vadd.f32 0.0, %v1414
      %v1416 = vpop.f32.mrf.mxu0
      %v1417 = vpop.f32.mrf.mxu0
      %v1418 = vpop.f32.mrf.mxu0
      %1419 = vdwg.mxu0
      %v1420 = vadd.f32 %v1266, %v1375
      %v1421 = vadd.f32 %v1267, %v1378
      %v1422 = vadd.f32 %v1268, %v1383
      %v1423 = vadd.f32 %v1269, %v1386
      %v1424 = vadd.f32 %v1270, %v1391
      %v1425 = vadd.f32 %v1271, %v1394
      %v1426 = vadd.f32 %v1272, %v1399
      %v1427 = vadd.f32 %v1273, %v1402
      %v1428 = vadd.f32 %v1274, %v1407
      %v1429 = vadd.f32 %v1275, %v1410
      %v1430 = vadd.f32 %v1276, %v1415
      %v1431 = vld [vmem:[#allocation2 + $0x10] sm:$0xff]
      %v1432 = vld [vmem:[#allocation2 + $0x18] sm:$0xff]
      %v1433 = vld [vmem:[#allocation2 + $0x20] sm:$0xff]
      %v1434 = vld [vmem:[#allocation2 + $0x28] sm:$0xff]
      %v1435 = vld [vmem:[#allocation2 + $0x30] sm:$0xff]
      %v1436 = vld [vmem:[#allocation2 + $0x38] sm:$0xff]
      %v1437 = vld [vmem:[#allocation2 + $0x40] sm:$0xff]
      %v1438 = vld [vmem:[#allocation2 + $0x48] sm:$0xff]
      %v1439 = vld [vmem:[#allocation2 + $0x50] sm:$0xff]
      %v1440 = vld [vmem:[#allocation2 + $0x58] sm:$0xff]
      %v1441 = vld [vmem:[#allocation2 + $0x60] sm:$0x1]
      %v1442 = vpack.c.bf16 %v1432, %v1431
      %v1443 = vpack.c.bf16 %v1434, %v1433
      %v1444 = vpack.c.bf16 %v1436, %v1435
      %v1445 = vpack.c.bf16 %v1438, %v1437
      %v1446 = vpack.c.bf16 %v1440, %v1439
      %v1447 = vpack.c.bf16 %v1441, %v1441
      %s1448 = scalar_lea.vmem %s1, 64
      %v1449 = vld [vmem:[%s1448] sm:$0xf]
      %v1450 = vld [vmem:[%s1448 + $0x4] sm:$0xf]
      %v1451 = vld [vmem:[%s1448 + $0x8] sm:$0xf]
      %v1452 = vld [vmem:[%s1448 + $0xc] sm:$0xf]
      %v1457 = vunpack.c.l.b16 %v1449
      %v1458 = vunpack.c.l.b16 %v1450
      %v1459 = vunpack.c.l.b16 %v1451
      %v1460 = vunpack.c.l.b16 %v1452
      %v1461 = vpack.c.b16 %v1458, %v1457
      %v1462 = vpack.c.b16 %v1460, %v1459
      %v1466 = vsel %vm788, %v1442, 0
      %v1469 = vsel %vm788, %v1443, 0
      %v1472 = vsel %vm788, %v1444, 0
      %v1475 = vsel %vm788, %v1445, 0
      %v1478 = vsel %vm788, %v1446, 0
      %v1481 = vsel %vm788, %v1447, 0
      %1483 = vmatprep.subr.bf16.mxu0 0
      %1484 = vmatpush1.bf16.msra.mxu0 0
      %1485 = vmatprep.subr.bf16.mxu0 0
      %1486 = vmatpush1.bf16.msra.mxu0 0
      %1487 = vmatprep.subr.bf16.mxu0 0
      %1488 = vmatpush1.bf16.msra.mxu0 0
      %1489 = vmatprep.subr.bf16.mxu0 0
      %1490 = vmatpush1.bf16.msra.mxu0 0
      %1491 = vmatprep.subr.bf16.mxu0 0
      %1492 = vmatpush1.bf16.msra.mxu0 0
      %1493 = vmatprep.subr.bf16.mxu0 0
      %1494 = vmatpush1.bf16.msra.mxu0 0
      %1495 = vmatprep.subr.bf16.mxu0 0
      %1496 = vmatpush1.bf16.msra.mxu0 %v1462
      %1497 = vmatprep.subr.bf16.mxu0 0
      %1498 = vmatpush1.bf16.msra.mxu0 %v1461
      %1499 = vmatprep.subr.bf16.mxu0 0
      %1500 = vmatpush2.bf16.msra.mxu0 0
      %1501 = vmatprep.subr.bf16.mxu0 0
      %1502 = vmatpush2.bf16.msra.mxu0 0
      %1503 = vmatprep.subr.bf16.mxu0 0
      %1504 = vmatpush2.bf16.msra.mxu0 0
      %1505 = vmatprep.subr.bf16.mxu0 0
      %1506 = vmatpush2.bf16.msra.mxu0 0
      %1507 = vmatprep.subr.bf16.mxu0 0
      %1508 = vmatpush2.bf16.msra.mxu0 0
      %1509 = vmatprep.subr.bf16.mxu0 0
      %1510 = vmatpush2.bf16.msra.mxu0 0
      %1511 = vmatprep.subr.bf16.mxu0 0
      %1512 = vmatpush2.bf16.msra.mxu0 0
      %1513 = vmatprep.subr.bf16.mxu0 0
      %1514 = vmatpush2.bf16.msra.mxu0 0
      %1515 = vmatprep.mubr.bf16.mxu0 0
      %1516 = vmatmul.mubr.bf16.gmra.mxu0 %v1466
      %v1517 = vpop.f32.mrf.mxu0
      %v1518 = vadd.f32 0.0, %v1517
      %v1519 = vpop.f32.mrf.mxu0
      %v1520 = vpop.f32.mrf.mxu0
      %v1521 = vadd.f32 0.0, %v1520
      %v1522 = vpop.f32.mrf.mxu0
      %1523 = vmatprep.mubr.bf16.mxu0 0
      %1524 = vmatmul.mubr.bf16.gmra.mxu0 %v1469
      %v1525 = vpop.f32.mrf.mxu0
      %v1526 = vadd.f32 0.0, %v1525
      %v1527 = vpop.f32.mrf.mxu0
      %v1528 = vpop.f32.mrf.mxu0
      %v1529 = vadd.f32 0.0, %v1528
      %v1530 = vpop.f32.mrf.mxu0
      %1531 = vmatprep.mubr.bf16.mxu0 0
      %1532 = vmatmul.mubr.bf16.gmra.mxu0 %v1472
      %v1533 = vpop.f32.mrf.mxu0
      %v1534 = vadd.f32 0.0, %v1533
      %v1535 = vpop.f32.mrf.mxu0
      %v1536 = vpop.f32.mrf.mxu0
      %v1537 = vadd.f32 0.0, %v1536
      %v1538 = vpop.f32.mrf.mxu0
      %1539 = vmatprep.mubr.bf16.mxu0 0
      %1540 = vmatmul.mubr.bf16.gmra.mxu0 %v1475
      %v1541 = vpop.f32.mrf.mxu0
      %v1542 = vadd.f32 0.0, %v1541
      %v1543 = vpop.f32.mrf.mxu0
      %v1544 = vpop.f32.mrf.mxu0
      %v1545 = vadd.f32 0.0, %v1544
      %v1546 = vpop.f32.mrf.mxu0
      %1547 = vmatprep.mubr.bf16.mxu0 0
      %1548 = vmatmul.mubr.bf16.gmra.mxu0 %v1478
      %v1549 = vpop.f32.mrf.mxu0
      %v1550 = vadd.f32 0.0, %v1549
      %v1551 = vpop.f32.mrf.mxu0
      %v1552 = vpop.f32.mrf.mxu0
      %v1553 = vadd.f32 0.0, %v1552
      %v1554 = vpop.f32.mrf.mxu0
      %1555 = vmatprep.mubr.bf16.mxu0 0
      %1556 = vmatmul.mubr.bf16.gmra.mxu0 %v1481
      %v1557 = vpop.f32.mrf.mxu0
      %v1558 = vadd.f32 0.0, %v1557
      %v1559 = vpop.f32.mrf.mxu0
      %v1560 = vpop.f32.mrf.mxu0
      %v1561 = vpop.f32.mrf.mxu0
      %1562 = vdwg.mxu0
      %v1563 = vadd.f32 %v1420, %v1518
      %v1564 = vadd.f32 %v1421, %v1521
      %v1565 = vadd.f32 %v1422, %v1526
      %v1566 = vadd.f32 %v1423, %v1529
      %v1567 = vadd.f32 %v1424, %v1534
      %v1568 = vadd.f32 %v1425, %v1537
      %v1569 = vadd.f32 %v1426, %v1542
      %v1570 = vadd.f32 %v1427, %v1545
      %v1571 = vadd.f32 %v1428, %v1550
      %v1572 = vadd.f32 %v1429, %v1553
      %v1573 = vadd.f32 %v1430, %v1558
      %v1574 = vld [vmem:[#allocation2 + $0x11] sm:$0xff]
      %v1575 = vld [vmem:[#allocation2 + $0x19] sm:$0xff]
      %v1576 = vld [vmem:[#allocation2 + $0x21] sm:$0xff]
      %v1577 = vld [vmem:[#allocation2 + $0x29] sm:$0xff]
      %v1578 = vld [vmem:[#allocation2 + $0x31] sm:$0xff]
      %v1579 = vld [vmem:[#allocation2 + $0x39] sm:$0xff]
      %v1580 = vld [vmem:[#allocation2 + $0x41] sm:$0xff]
      %v1581 = vld [vmem:[#allocation2 + $0x49] sm:$0xff]
      %v1582 = vld [vmem:[#allocation2 + $0x51] sm:$0xff]
      %v1583 = vld [vmem:[#allocation2 + $0x59] sm:$0xff]
      %v1584 = vld [vmem:[#allocation2 + $0x61] sm:$0x1]
      %v1585 = vmul.f32 %v1574, %v777
      %v1586 = vmul.f32 %v1575, %v778
      %v1587 = vmul.f32 %v1576, %v779
      %v1588 = vmul.f32 %v1577, %v780
      %v1589 = vmul.f32 %v1578, %v781
      %v1590 = vmul.f32 %v1579, %v782
      %v1591 = vmul.f32 %v1580, %v783
      %v1592 = vmul.f32 %v1581, %v784
      %v1593 = vmul.f32 %v1582, %v785
      %v1594 = vmul.f32 %v1583, %v786
      %v1595 = vmul.f32 %v1584, %v787
      %v1596 = vpack.c.bf16 %v1586, %v1585
      %v1597 = vpack.c.bf16 %v1588, %v1587
      %v1598 = vpack.c.bf16 %v1590, %v1589
      %v1599 = vpack.c.bf16 %v1592, %v1591
      %v1600 = vpack.c.bf16 %v1594, %v1593
      %v1601 = vpack.c.bf16 %v1595, %v1595
      %s1602 = scalar_lea.vmem %s1, 80
      %v1603 = vld [vmem:[%s1602] sm:$0xf]
      %v1604 = vld [vmem:[%s1602 + $0x4] sm:$0xf]
      %v1605 = vld [vmem:[%s1602 + $0x8] sm:$0xf]
      %v1606 = vld [vmem:[%s1602 + $0xc] sm:$0xf]
      %v1611 = vunpack.c.l.b16 %v1603
      %v1612 = vunpack.c.l.b16 %v1604
      %v1613 = vunpack.c.l.b16 %v1605
      %v1614 = vunpack.c.l.b16 %v1606
      %v1615 = vpack.c.b16 %v1612, %v1611
      %v1616 = vpack.c.b16 %v1614, %v1613
      %v1620 = vsel %vm788, %v1596, 0
      %v1623 = vsel %vm788, %v1597, 0
      %v1626 = vsel %vm788, %v1598, 0
      %v1629 = vsel %vm788, %v1599, 0
      %v1632 = vsel %vm788, %v1600, 0
      %v1635 = vsel %vm788, %v1601, 0
      %1637 = vmatprep.subr.bf16.mxu0 0
      %1638 = vmatpush1.bf16.msra.mxu0 0
      %1639 = vmatprep.subr.bf16.mxu0 0
      %1640 = vmatpush1.bf16.msra.mxu0 0
      %1641 = vmatprep.subr.bf16.mxu0 0
      %1642 = vmatpush1.bf16.msra.mxu0 0
      %1643 = vmatprep.subr.bf16.mxu0 0
      %1644 = vmatpush1.bf16.msra.mxu0 0
      %1645 = vmatprep.subr.bf16.mxu0 0
      %1646 = vmatpush1.bf16.msra.mxu0 0
      %1647 = vmatprep.subr.bf16.mxu0 0
      %1648 = vmatpush1.bf16.msra.mxu0 0
      %1649 = vmatprep.subr.bf16.mxu0 0
      %1650 = vmatpush1.bf16.msra.mxu0 %v1616
      %1651 = vmatprep.subr.bf16.mxu0 0
      %1652 = vmatpush1.bf16.msra.mxu0 %v1615
      %1653 = vmatprep.subr.bf16.mxu0 0
      %1654 = vmatpush2.bf16.msra.mxu0 0
      %1655 = vmatprep.subr.bf16.mxu0 0
      %1656 = vmatpush2.bf16.msra.mxu0 0
      %1657 = vmatprep.subr.bf16.mxu0 0
      %1658 = vmatpush2.bf16.msra.mxu0 0
      %1659 = vmatprep.subr.bf16.mxu0 0
      %1660 = vmatpush2.bf16.msra.mxu0 0
      %1661 = vmatprep.subr.bf16.mxu0 0
      %1662 = vmatpush2.bf16.msra.mxu0 0
      %1663 = vmatprep.subr.bf16.mxu0 0
      %1664 = vmatpush2.bf16.msra.mxu0 0
      %1665 = vmatprep.subr.bf16.mxu0 0
      %1666 = vmatpush2.bf16.msra.mxu0 0
      %1667 = vmatprep.subr.bf16.mxu0 0
      %1668 = vmatpush2.bf16.msra.mxu0 0
      %1669 = vmatprep.mubr.bf16.mxu0 0
      %1670 = vmatmul.mubr.bf16.gmra.mxu0 %v1620
      %v1671 = vpop.f32.mrf.mxu0
      %v1672 = vadd.f32 0.0, %v1671
      %v1673 = vpop.f32.mrf.mxu0
      %v1674 = vpop.f32.mrf.mxu0
      %v1675 = vadd.f32 0.0, %v1674
      %v1676 = vpop.f32.mrf.mxu0
      %1677 = vmatprep.mubr.bf16.mxu0 0
      %1678 = vmatmul.mubr.bf16.gmra.mxu0 %v1623
      %v1679 = vpop.f32.mrf.mxu0
      %v1680 = vadd.f32 0.0, %v1679
      %v1681 = vpop.f32.mrf.mxu0
      %v1682 = vpop.f32.mrf.mxu0
      %v1683 = vadd.f32 0.0, %v1682
      %v1684 = vpop.f32.mrf.mxu0
      %1685 = vmatprep.mubr.bf16.mxu0 0
      %1686 = vmatmul.mubr.bf16.gmra.mxu0 %v1626
      %v1687 = vpop.f32.mrf.mxu0
      %v1688 = vadd.f32 0.0, %v1687
      %v1689 = vpop.f32.mrf.mxu0
      %v1690 = vpop.f32.mrf.mxu0
      %v1691 = vadd.f32 0.0, %v1690
      %v1692 = vpop.f32.mrf.mxu0
      %1693 = vmatprep.mubr.bf16.mxu0 0
      %1694 = vmatmul.mubr.bf16.gmra.mxu0 %v1629
      %v1695 = vpop.f32.mrf.mxu0
      %v1696 = vadd.f32 0.0, %v1695
      %v1697 = vpop.f32.mrf.mxu0
      %v1698 = vpop.f32.mrf.mxu0
      %v1699 = vadd.f32 0.0, %v1698
      %v1700 = vpop.f32.mrf.mxu0
      %1701 = vmatprep.mubr.bf16.mxu0 0
      %1702 = vmatmul.mubr.bf16.gmra.mxu0 %v1632
      %v1703 = vpop.f32.mrf.mxu0
      %v1704 = vadd.f32 0.0, %v1703
      %v1705 = vpop.f32.mrf.mxu0
      %v1706 = vpop.f32.mrf.mxu0
      %v1707 = vadd.f32 0.0, %v1706
      %v1708 = vpop.f32.mrf.mxu0
      %1709 = vmatprep.mubr.bf16.mxu0 0
      %1710 = vmatmul.mubr.bf16.gmra.mxu0 %v1635
      %v1711 = vpop.f32.mrf.mxu0
      %v1712 = vadd.f32 0.0, %v1711
      %v1713 = vpop.f32.mrf.mxu0
      %v1714 = vpop.f32.mrf.mxu0
      %v1715 = vpop.f32.mrf.mxu0
      %1716 = vdwg.mxu0
      %v1717 = vadd.f32 %v1563, %v1672
      %v1718 = vadd.f32 %v1564, %v1675
      %v1719 = vadd.f32 %v1565, %v1680
      %v1720 = vadd.f32 %v1566, %v1683
      %v1721 = vadd.f32 %v1567, %v1688
      %v1722 = vadd.f32 %v1568, %v1691
      %v1723 = vadd.f32 %v1569, %v1696
      %v1724 = vadd.f32 %v1570, %v1699
      %v1725 = vadd.f32 %v1571, %v1704
      %v1726 = vadd.f32 %v1572, %v1707
      %v1727 = vadd.f32 %v1573, %v1712
      %v1728 = vld [vmem:[#allocation2 + $0x18] sm:$0xff]
      %v1729 = vld [vmem:[#allocation2 + $0x20] sm:$0xff]
      %v1730 = vld [vmem:[#allocation2 + $0x28] sm:$0xff]
      %v1731 = vld [vmem:[#allocation2 + $0x30] sm:$0xff]
      %v1732 = vld [vmem:[#allocation2 + $0x38] sm:$0xff]
      %v1733 = vld [vmem:[#allocation2 + $0x40] sm:$0xff]
      %v1734 = vld [vmem:[#allocation2 + $0x48] sm:$0xff]
      %v1735 = vld [vmem:[#allocation2 + $0x50] sm:$0xff]
      %v1736 = vld [vmem:[#allocation2 + $0x58] sm:$0xff]
      %v1737 = vld [vmem:[#allocation2 + $0x60] sm:$0xff]
      %v1738 = vld [vmem:[#allocation2 + $0x68] sm:$0x1]
      %v1739 = vmul.f32 %v1728, %v744
      %v1740 = vmul.f32 %v1729, %v745
      %v1741 = vmul.f32 %v1730, %v746
      %v1742 = vmul.f32 %v1731, %v747
      %v1743 = vmul.f32 %v1732, %v748
      %v1744 = vmul.f32 %v1733, %v749
      %v1745 = vmul.f32 %v1734, %v750
      %v1746 = vmul.f32 %v1735, %v751
      %v1747 = vmul.f32 %v1736, %v752
      %v1748 = vmul.f32 %v1737, %v753
      %v1749 = vmul.f32 %v1738, %v754
      %v1750 = vpack.c.bf16 %v1740, %v1739
      %v1751 = vpack.c.bf16 %v1742, %v1741
      %v1752 = vpack.c.bf16 %v1744, %v1743
      %v1753 = vpack.c.bf16 %v1746, %v1745
      %v1754 = vpack.c.bf16 %v1748, %v1747
      %v1755 = vpack.c.bf16 %v1749, %v1749
      %s1756 = scalar_lea.vmem %s1, 96
      %v1757 = vld [vmem:[%s1756] sm:$0xf]
      %v1758 = vld [vmem:[%s1756 + $0x4] sm:$0xf]
      %v1759 = vld [vmem:[%s1756 + $0x8] sm:$0xf]
      %v1760 = vld [vmem:[%s1756 + $0xc] sm:$0xf]
      %v1765 = vunpack.c.l.b16 %v1757
      %v1766 = vunpack.c.l.b16 %v1758
      %v1767 = vunpack.c.l.b16 %v1759
      %v1768 = vunpack.c.l.b16 %v1760
      %v1769 = vpack.c.b16 %v1766, %v1765
      %v1770 = vpack.c.b16 %v1768, %v1767
      %v1774 = vsel %vm788, %v1750, 0
      %v1777 = vsel %vm788, %v1751, 0
      %v1780 = vsel %vm788, %v1752, 0
      %v1783 = vsel %vm788, %v1753, 0
      %v1786 = vsel %vm788, %v1754, 0
      %v1789 = vsel %vm788, %v1755, 0
      %1791 = vmatprep.subr.bf16.mxu0 0
      %1792 = vmatpush1.bf16.msra.mxu0 0
      %1793 = vmatprep.subr.bf16.mxu0 0
      %1794 = vmatpush1.bf16.msra.mxu0 0
      %1795 = vmatprep.subr.bf16.mxu0 0
      %1796 = vmatpush1.bf16.msra.mxu0 0
      %1797 = vmatprep.subr.bf16.mxu0 0
      %1798 = vmatpush1.bf16.msra.mxu0 0
      %1799 = vmatprep.subr.bf16.mxu0 0
      %1800 = vmatpush1.bf16.msra.mxu0 0
      %1801 = vmatprep.subr.bf16.mxu0 0
      %1802 = vmatpush1.bf16.msra.mxu0 0
      %1803 = vmatprep.subr.bf16.mxu0 0
      %1804 = vmatpush1.bf16.msra.mxu0 %v1770
      %1805 = vmatprep.subr.bf16.mxu0 0
      %1806 = vmatpush1.bf16.msra.mxu0 %v1769
      %1807 = vmatprep.subr.bf16.mxu0 0
      %1808 = vmatpush2.bf16.msra.mxu0 0
      %1809 = vmatprep.subr.bf16.mxu0 0
      %1810 = vmatpush2.bf16.msra.mxu0 0
      %1811 = vmatprep.subr.bf16.mxu0 0
      %1812 = vmatpush2.bf16.msra.mxu0 0
      %1813 = vmatprep.subr.bf16.mxu0 0
      %1814 = vmatpush2.bf16.msra.mxu0 0
      %1815 = vmatprep.subr.bf16.mxu0 0
      %1816 = vmatpush2.bf16.msra.mxu0 0
      %1817 = vmatprep.subr.bf16.mxu0 0
      %1818 = vmatpush2.bf16.msra.mxu0 0
      %1819 = vmatprep.subr.bf16.mxu0 0
      %1820 = vmatpush2.bf16.msra.mxu0 0
      %1821 = vmatprep.subr.bf16.mxu0 0
      %1822 = vmatpush2.bf16.msra.mxu0 0
      %1823 = vmatprep.mubr.bf16.mxu0 0
      %1824 = vmatmul.mubr.bf16.gmra.mxu0 %v1774
      %v1825 = vpop.f32.mrf.mxu0
      %v1826 = vadd.f32 0.0, %v1825
      %v1827 = vpop.f32.mrf.mxu0
      %v1828 = vpop.f32.mrf.mxu0
      %v1829 = vadd.f32 0.0, %v1828
      %v1830 = vpop.f32.mrf.mxu0
      %1831 = vmatprep.mubr.bf16.mxu0 0
      %1832 = vmatmul.mubr.bf16.gmra.mxu0 %v1777
      %v1833 = vpop.f32.mrf.mxu0
      %v1834 = vadd.f32 0.0, %v1833
      %v1835 = vpop.f32.mrf.mxu0
      %v1836 = vpop.f32.mrf.mxu0
      %v1837 = vadd.f32 0.0, %v1836
      %v1838 = vpop.f32.mrf.mxu0
      %1839 = vmatprep.mubr.bf16.mxu0 0
      %1840 = vmatmul.mubr.bf16.gmra.mxu0 %v1780
      %v1841 = vpop.f32.mrf.mxu0
      %v1842 = vadd.f32 0.0, %v1841
      %v1843 = vpop.f32.mrf.mxu0
      %v1844 = vpop.f32.mrf.mxu0
      %v1845 = vadd.f32 0.0, %v1844
      %v1846 = vpop.f32.mrf.mxu0
      %1847 = vmatprep.mubr.bf16.mxu0 0
      %1848 = vmatmul.mubr.bf16.gmra.mxu0 %v1783
      %v1849 = vpop.f32.mrf.mxu0
      %v1850 = vadd.f32 0.0, %v1849
      %v1851 = vpop.f32.mrf.mxu0
      %v1852 = vpop.f32.mrf.mxu0
      %v1853 = vadd.f32 0.0, %v1852
      %v1854 = vpop.f32.mrf.mxu0
      %1855 = vmatprep.mubr.bf16.mxu0 0
      %1856 = vmatmul.mubr.bf16.gmra.mxu0 %v1786
      %v1857 = vpop.f32.mrf.mxu0
      %v1858 = vadd.f32 0.0, %v1857
      %v1859 = vpop.f32.mrf.mxu0
      %v1860 = vpop.f32.mrf.mxu0
      %v1861 = vadd.f32 0.0, %v1860
      %v1862 = vpop.f32.mrf.mxu0
      %1863 = vmatprep.mubr.bf16.mxu0 0
      %1864 = vmatmul.mubr.bf16.gmra.mxu0 %v1789
      %v1865 = vpop.f32.mrf.mxu0
      %v1866 = vadd.f32 0.0, %v1865
      %v1867 = vpop.f32.mrf.mxu0
      %v1868 = vpop.f32.mrf.mxu0
      %v1869 = vpop.f32.mrf.mxu0
      %1870 = vdwg.mxu0
      %v1871 = vadd.f32 %v1717, %v1826
      %v1872 = vadd.f32 %v1718, %v1829
      %v1873 = vadd.f32 %v1719, %v1834
      %v1874 = vadd.f32 %v1720, %v1837
      %v1875 = vadd.f32 %v1721, %v1842
      %v1876 = vadd.f32 %v1722, %v1845
      %v1877 = vadd.f32 %v1723, %v1850
      %v1878 = vadd.f32 %v1724, %v1853
      %v1879 = vadd.f32 %v1725, %v1858
      %v1880 = vadd.f32 %v1726, %v1861
      %v1881 = vadd.f32 %v1727, %v1866
      %v1882 = vld [vmem:[#allocation2 + $0x19] sm:$0xff]
      %v1883 = vld [vmem:[#allocation2 + $0x21] sm:$0xff]
      %v1884 = vld [vmem:[#allocation2 + $0x29] sm:$0xff]
      %v1885 = vld [vmem:[#allocation2 + $0x31] sm:$0xff]
      %v1886 = vld [vmem:[#allocation2 + $0x39] sm:$0xff]
      %v1887 = vld [vmem:[#allocation2 + $0x41] sm:$0xff]
      %v1888 = vld [vmem:[#allocation2 + $0x49] sm:$0xff]
      %v1889 = vld [vmem:[#allocation2 + $0x51] sm:$0xff]
      %v1890 = vld [vmem:[#allocation2 + $0x59] sm:$0xff]
      %v1891 = vld [vmem:[#allocation2 + $0x61] sm:$0xff]
      %v1892 = vld [vmem:[#allocation2 + $0x69] sm:$0x1]
      %v1893 = vpack.c.bf16 %v1883, %v1882
      %v1894 = vpack.c.bf16 %v1885, %v1884
      %v1895 = vpack.c.bf16 %v1887, %v1886
      %v1896 = vpack.c.bf16 %v1889, %v1888
      %v1897 = vpack.c.bf16 %v1891, %v1890
      %v1898 = vpack.c.bf16 %v1892, %v1892
      %s1899 = scalar_lea.vmem %s1, 112
      %v1900 = vld [vmem:[%s1899] sm:$0xf]
      %v1901 = vld [vmem:[%s1899 + $0x4] sm:$0xf]
      %v1902 = vld [vmem:[%s1899 + $0x8] sm:$0xf]
      %v1903 = vld [vmem:[%s1899 + $0xc] sm:$0xf]
      %v1908 = vunpack.c.l.b16 %v1900
      %v1909 = vunpack.c.l.b16 %v1901
      %v1910 = vunpack.c.l.b16 %v1902
      %v1911 = vunpack.c.l.b16 %v1903
      %v1912 = vpack.c.b16 %v1909, %v1908
      %v1913 = vpack.c.b16 %v1911, %v1910
      %v1917 = vsel %vm788, %v1893, 0
      %v1920 = vsel %vm788, %v1894, 0
      %v1923 = vsel %vm788, %v1895, 0
      %v1926 = vsel %vm788, %v1896, 0
      %v1929 = vsel %vm788, %v1897, 0
      %v1932 = vsel %vm788, %v1898, 0
      %1934 = vmatprep.subr.bf16.mxu0 0
      %1935 = vmatpush1.bf16.msra.mxu0 0
      %1936 = vmatprep.subr.bf16.mxu0 0
      %1937 = vmatpush1.bf16.msra.mxu0 0
      %1938 = vmatprep.subr.bf16.mxu0 0
      %1939 = vmatpush1.bf16.msra.mxu0 0
      %1940 = vmatprep.subr.bf16.mxu0 0
      %1941 = vmatpush1.bf16.msra.mxu0 0
      %1942 = vmatprep.subr.bf16.mxu0 0
      %1943 = vmatpush1.bf16.msra.mxu0 0
      %1944 = vmatprep.subr.bf16.mxu0 0
      %1945 = vmatpush1.bf16.msra.mxu0 0
      %1946 = vmatprep.subr.bf16.mxu0 0
      %1947 = vmatpush1.bf16.msra.mxu0 %v1913
      %1948 = vmatprep.subr.bf16.mxu0 0
      %1949 = vmatpush1.bf16.msra.mxu0 %v1912
      %1950 = vmatprep.subr.bf16.mxu0 0
      %1951 = vmatpush2.bf16.msra.mxu0 0
      %1952 = vmatprep.subr.bf16.mxu0 0
      %1953 = vmatpush2.bf16.msra.mxu0 0
      %1954 = vmatprep.subr.bf16.mxu0 0
      %1955 = vmatpush2.bf16.msra.mxu0 0
      %1956 = vmatprep.subr.bf16.mxu0 0
      %1957 = vmatpush2.bf16.msra.mxu0 0
      %1958 = vmatprep.subr.bf16.mxu0 0
      %1959 = vmatpush2.bf16.msra.mxu0 0
      %1960 = vmatprep.subr.bf16.mxu0 0
      %1961 = vmatpush2.bf16.msra.mxu0 0
      %1962 = vmatprep.subr.bf16.mxu0 0
      %1963 = vmatpush2.bf16.msra.mxu0 0
      %1964 = vmatprep.subr.bf16.mxu0 0
      %1965 = vmatpush2.bf16.msra.mxu0 0
      %1966 = vmatprep.mubr.bf16.mxu0 0
      %1967 = vmatmul.mubr.bf16.gmra.mxu0 %v1917
      %v1968 = vpop.f32.mrf.mxu0
      %v1969 = vadd.f32 0.0, %v1968
      %v1970 = vpop.f32.mrf.mxu0
      %v1971 = vpop.f32.mrf.mxu0
      %v1972 = vadd.f32 0.0, %v1971
      %v1973 = vpop.f32.mrf.mxu0
      %1974 = vmatprep.mubr.bf16.mxu0 0
      %1975 = vmatmul.mubr.bf16.gmra.mxu0 %v1920
      %v1976 = vpop.f32.mrf.mxu0
      %v1977 = vadd.f32 0.0, %v1976
      %v1978 = vpop.f32.mrf.mxu0
      %v1979 = vpop.f32.mrf.mxu0
      %v1980 = vadd.f32 0.0, %v1979
      %v1981 = vpop.f32.mrf.mxu0
      %1982 = vmatprep.mubr.bf16.mxu0 0
      %1983 = vmatmul.mubr.bf16.gmra.mxu0 %v1923
      %v1984 = vpop.f32.mrf.mxu0
      %v1985 = vadd.f32 0.0, %v1984
      %v1986 = vpop.f32.mrf.mxu0
      %v1987 = vpop.f32.mrf.mxu0
      %v1988 = vadd.f32 0.0, %v1987
      %v1989 = vpop.f32.mrf.mxu0
      %1990 = vmatprep.mubr.bf16.mxu0 0
      %1991 = vmatmul.mubr.bf16.gmra.mxu0 %v1926
      %v1992 = vpop.f32.mrf.mxu0
      %v1993 = vadd.f32 0.0, %v1992
      %v1994 = vpop.f32.mrf.mxu0
      %v1995 = vpop.f32.mrf.mxu0
      %v1996 = vadd.f32 0.0, %v1995
      %v1997 = vpop.f32.mrf.mxu0
      %1998 = vmatprep.mubr.bf16.mxu0 0
      %1999 = vmatmul.mubr.bf16.gmra.mxu0 %v1929
      %v2000 = vpop.f32.mrf.mxu0
      %v2001 = vadd.f32 0.0, %v2000
      %v2002 = vpop.f32.mrf.mxu0
      %v2003 = vpop.f32.mrf.mxu0
      %v2004 = vadd.f32 0.0, %v2003
      %v2005 = vpop.f32.mrf.mxu0
      %2006 = vmatprep.mubr.bf16.mxu0 0
      %2007 = vmatmul.mubr.bf16.gmra.mxu0 %v1932
      %v2008 = vpop.f32.mrf.mxu0
      %v2009 = vadd.f32 0.0, %v2008
      %v2010 = vpop.f32.mrf.mxu0
      %v2011 = vpop.f32.mrf.mxu0
      %v2012 = vpop.f32.mrf.mxu0
      %2013 = vdwg.mxu0
      %v2014 = vadd.f32 %v1871, %v1969
      %v2015 = vadd.f32 %v1872, %v1972
      %v2016 = vadd.f32 %v1873, %v1977
      %v2017 = vadd.f32 %v1874, %v1980
      %v2018 = vadd.f32 %v1875, %v1985
      %v2019 = vadd.f32 %v1876, %v1988
      %v2020 = vadd.f32 %v1877, %v1993
      %v2021 = vadd.f32 %v1878, %v1996
      %v2022 = vadd.f32 %v1879, %v2001
      %v2023 = vadd.f32 %v1880, %v2004
      %v2024 = vadd.f32 %v1881, %v2009
      %v2025 = vld [vmem:[#allocation2 + $0x1a] sm:$0xff]
      %v2026 = vld [vmem:[#allocation2 + $0x22] sm:$0xff]
      %v2027 = vld [vmem:[#allocation2 + $0x2a] sm:$0xff]
      %v2028 = vld [vmem:[#allocation2 + $0x32] sm:$0xff]
      %v2029 = vld [vmem:[#allocation2 + $0x3a] sm:$0xff]
      %v2030 = vld [vmem:[#allocation2 + $0x42] sm:$0xff]
      %v2031 = vld [vmem:[#allocation2 + $0x4a] sm:$0xff]
      %v2032 = vld [vmem:[#allocation2 + $0x52] sm:$0xff]
      %v2033 = vld [vmem:[#allocation2 + $0x5a] sm:$0xff]
      %v2034 = vld [vmem:[#allocation2 + $0x62] sm:$0xff]
      %v2035 = vld [vmem:[#allocation2 + $0x6a] sm:$0x1]
      %v2036 = vmul.f32 %v2025, %v777
      %v2037 = vmul.f32 %v2026, %v778
      %v2038 = vmul.f32 %v2027, %v779
      %v2039 = vmul.f32 %v2028, %v780
      %v2040 = vmul.f32 %v2029, %v781
      %v2041 = vmul.f32 %v2030, %v782
      %v2042 = vmul.f32 %v2031, %v783
      %v2043 = vmul.f32 %v2032, %v784
      %v2044 = vmul.f32 %v2033, %v785
      %v2045 = vmul.f32 %v2034, %v786
      %v2046 = vmul.f32 %v2035, %v787
      %v2047 = vpack.c.bf16 %v2037, %v2036
      %v2048 = vpack.c.bf16 %v2039, %v2038
      %v2049 = vpack.c.bf16 %v2041, %v2040
      %v2050 = vpack.c.bf16 %v2043, %v2042
      %v2051 = vpack.c.bf16 %v2045, %v2044
      %v2052 = vpack.c.bf16 %v2046, %v2046
      %s2053 = scalar_lea.vmem %s1, 128
      %v2054 = vld [vmem:[%s2053] sm:$0xf]
      %v2055 = vld [vmem:[%s2053 + $0x4] sm:$0xf]
      %v2056 = vld [vmem:[%s2053 + $0x8] sm:$0xf]
      %v2057 = vld [vmem:[%s2053 + $0xc] sm:$0xf]
      %v2062 = vunpack.c.l.b16 %v2054
      %v2063 = vunpack.c.l.b16 %v2055
      %v2064 = vunpack.c.l.b16 %v2056
      %v2065 = vunpack.c.l.b16 %v2057
      %v2066 = vpack.c.b16 %v2063, %v2062
      %v2067 = vpack.c.b16 %v2065, %v2064
      %v2071 = vsel %vm788, %v2047, 0
      %v2074 = vsel %vm788, %v2048, 0
      %v2077 = vsel %vm788, %v2049, 0
      %v2080 = vsel %vm788, %v2050, 0
      %v2083 = vsel %vm788, %v2051, 0
      %v2086 = vsel %vm788, %v2052, 0
      %2088 = vmatprep.subr.bf16.mxu0 0
      %2089 = vmatpush1.bf16.msra.mxu0 0
      %2090 = vmatprep.subr.bf16.mxu0 0
      %2091 = vmatpush1.bf16.msra.mxu0 0
      %2092 = vmatprep.subr.bf16.mxu0 0
      %2093 = vmatpush1.bf16.msra.mxu0 0
      %2094 = vmatprep.subr.bf16.mxu0 0
      %2095 = vmatpush1.bf16.msra.mxu0 0
      %2096 = vmatprep.subr.bf16.mxu0 0
      %2097 = vmatpush1.bf16.msra.mxu0 0
      %2098 = vmatprep.subr.bf16.mxu0 0
      %2099 = vmatpush1.bf16.msra.mxu0 0
      %2100 = vmatprep.subr.bf16.mxu0 0
      %2101 = vmatpush1.bf16.msra.mxu0 %v2067
      %2102 = vmatprep.subr.bf16.mxu0 0
      %2103 = vmatpush1.bf16.msra.mxu0 %v2066
      %2104 = vmatprep.subr.bf16.mxu0 0
      %2105 = vmatpush2.bf16.msra.mxu0 0
      %2106 = vmatprep.subr.bf16.mxu0 0
      %2107 = vmatpush2.bf16.msra.mxu0 0
      %2108 = vmatprep.subr.bf16.mxu0 0
      %2109 = vmatpush2.bf16.msra.mxu0 0
      %2110 = vmatprep.subr.bf16.mxu0 0
      %2111 = vmatpush2.bf16.msra.mxu0 0
      %2112 = vmatprep.subr.bf16.mxu0 0
      %2113 = vmatpush2.bf16.msra.mxu0 0
      %2114 = vmatprep.subr.bf16.mxu0 0
      %2115 = vmatpush2.bf16.msra.mxu0 0
      %2116 = vmatprep.subr.bf16.mxu0 0
      %2117 = vmatpush2.bf16.msra.mxu0 0
      %2118 = vmatprep.subr.bf16.mxu0 0
      %2119 = vmatpush2.bf16.msra.mxu0 0
      %2120 = vmatprep.mubr.bf16.mxu0 0
      %2121 = vmatmul.mubr.bf16.gmra.mxu0 %v2071
      %v2122 = vpop.f32.mrf.mxu0
      %v2123 = vadd.f32 0.0, %v2122
      %v2124 = vpop.f32.mrf.mxu0
      %v2125 = vpop.f32.mrf.mxu0
      %v2126 = vadd.f32 0.0, %v2125
      %v2127 = vpop.f32.mrf.mxu0
      %2128 = vmatprep.mubr.bf16.mxu0 0
      %2129 = vmatmul.mubr.bf16.gmra.mxu0 %v2074
      %v2130 = vpop.f32.mrf.mxu0
      %v2131 = vadd.f32 0.0, %v2130
      %v2132 = vpop.f32.mrf.mxu0
      %v2133 = vpop.f32.mrf.mxu0
      %v2134 = vadd.f32 0.0, %v2133
      %v2135 = vpop.f32.mrf.mxu0
      %2136 = vmatprep.mubr.bf16.mxu0 0
      %2137 = vmatmul.mubr.bf16.gmra.mxu0 %v2077
      %v2138 = vpop.f32.mrf.mxu0
      %v2139 = vadd.f32 0.0, %v2138
      %v2140 = vpop.f32.mrf.mxu0
      %v2141 = vpop.f32.mrf.mxu0
      %v2142 = vadd.f32 0.0, %v2141
      %v2143 = vpop.f32.mrf.mxu0
      %2144 = vmatprep.mubr.bf16.mxu0 0
      %2145 = vmatmul.mubr.bf16.gmra.mxu0 %v2080
      %v2146 = vpop.f32.mrf.mxu0
      %v2147 = vadd.f32 0.0, %v2146
      %v2148 = vpop.f32.mrf.mxu0
      %v2149 = vpop.f32.mrf.mxu0
      %v2150 = vadd.f32 0.0, %v2149
      %v2151 = vpop.f32.mrf.mxu0
      %2152 = vmatprep.mubr.bf16.mxu0 0
      %2153 = vmatmul.mubr.bf16.gmra.mxu0 %v2083
      %v2154 = vpop.f32.mrf.mxu0
      %v2155 = vadd.f32 0.0, %v2154
      %v2156 = vpop.f32.mrf.mxu0
      %v2157 = vpop.f32.mrf.mxu0
      %v2158 = vadd.f32 0.0, %v2157
      %v2159 = vpop.f32.mrf.mxu0
      %2160 = vmatprep.mubr.bf16.mxu0 0
      %2161 = vmatmul.mubr.bf16.gmra.mxu0 %v2086
      %v2162 = vpop.f32.mrf.mxu0
      %v2163 = vadd.f32 0.0, %v2162
      %v2164 = vpop.f32.mrf.mxu0
      %v2165 = vpop.f32.mrf.mxu0
      %v2166 = vpop.f32.mrf.mxu0
      %2167 = vdwg.mxu0
      %v2168 = vadd.f32 %v2014, %v2123
      %v2169 = vadd.f32 %v2015, %v2126
      %v2170 = vadd.f32 %v2016, %v2131
      %v2171 = vadd.f32 %v2017, %v2134
      %v2172 = vadd.f32 %v2018, %v2139
      %v2173 = vadd.f32 %v2019, %v2142
      %v2174 = vadd.f32 %v2020, %v2147
      %v2175 = vadd.f32 %v2021, %v2150
      %v2176 = vadd.f32 %v2022, %v2155
      %v2177 = vadd.f32 %v2023, %v2158
      %v2178 = vadd.f32 %v2024, %v2163
      %v2179 = vsel %vm788, %v2168, 0.0
      %v2180 = vsel %vm788, %v2169, 0.0
      %v2181 = vadd.f32 %v2179, %v2180
      %v2182 = vsel %vm788, %v2170, 0.0
      %v2183 = vadd.f32 %v2181, %v2182
      %v2184 = vsel %vm788, %v2171, 0.0
      %v2185 = vadd.f32 %v2183, %v2184
      %v2186 = vsel %vm788, %v2172, 0.0
      %v2187 = vadd.f32 %v2185, %v2186
      %v2188 = vsel %vm788, %v2173, 0.0
      %v2189 = vadd.f32 %v2187, %v2188
      %v2190 = vsel %vm788, %v2174, 0.0
      %v2191 = vadd.f32 %v2189, %v2190
      %v2192 = vsel %vm788, %v2175, 0.0
      %v2193 = vadd.f32 %v2191, %v2192
      %v2194 = vsel %vm788, %v2176, 0.0
      %v2195 = vadd.f32 %v2193, %v2194
      %v2196 = vsel %vm788, %v2177, 0.0
      %v2197 = vadd.f32 %v2195, %v2196
      %v2198 = vsel %vm847, %v2178, 0.0
      %v2199 = vadd.f32 %v2197, %v2198
      %2200 = vadd.xlane.f32.xlu0 %v2199
      %v2201 = vpop.xlane.xlu0 %2200
      %v2202 = vrot.slane %v2201, 4
      %v2203 = vadd.f32 %v2201, %v2202
      %v2204 = vrot.slane %v2203, 2
      %v2205 = vadd.f32 %v2203, %v2204
      %v2206 = vrot.slane %v2205, 1
      %v2207 = vadd.f32 %v2205, %v2206
      %s2208 = vtos %v2207
      %v2209 = vstv %s2208
      %v2210 = vrcp.pop 2592.0
      %v2211 = vmul.f32 %v2209, %v2210
      %v2212 = vsub.f32 %v2168, %v2211
      %v2213 = vsub.f32 %v2169, %v2211
      %v2214 = vsub.f32 %v2170, %v2211
      %v2215 = vsub.f32 %v2171, %v2211
      %v2216 = vsub.f32 %v2172, %v2211
      %v2217 = vsub.f32 %v2173, %v2211
      %v2218 = vsub.f32 %v2174, %v2211
      %v2219 = vsub.f32 %v2175, %v2211
      %v2220 = vsub.f32 %v2176, %v2211
      %v2221 = vsub.f32 %v2177, %v2211
      %v2222 = vsub.f32 %v2178, %v2211
      %v2223 = vmul.f32 %v2212, %v2212
      %v2224 = vmul.f32 %v2213, %v2213
      %v2225 = vmul.f32 %v2214, %v2214
      %v2226 = vmul.f32 %v2215, %v2215
      %v2227 = vmul.f32 %v2216, %v2216
      %v2228 = vmul.f32 %v2217, %v2217
      %v2229 = vmul.f32 %v2218, %v2218
      %v2230 = vmul.f32 %v2219, %v2219
      %v2231 = vmul.f32 %v2220, %v2220
      %v2232 = vmul.f32 %v2221, %v2221
      %v2233 = vmul.f32 %v2222, %v2222
      %v2234 = vsel %vm788, %v2223, 0.0
      %v2235 = vsel %vm788, %v2224, 0.0
      %v2236 = vadd.f32 %v2234, %v2235
      %v2237 = vsel %vm788, %v2225, 0.0
      %v2238 = vadd.f32 %v2236, %v2237
      %v2239 = vsel %vm788, %v2226, 0.0
      %v2240 = vadd.f32 %v2238, %v2239
      %v2241 = vsel %vm788, %v2227, 0.0
      %v2242 = vadd.f32 %v2240, %v2241
      %v2243 = vsel %vm788, %v2228, 0.0
      %v2244 = vadd.f32 %v2242, %v2243
      %v2245 = vsel %vm788, %v2229, 0.0
      %v2246 = vadd.f32 %v2244, %v2245
      %v2247 = vsel %vm788, %v2230, 0.0
      %v2248 = vadd.f32 %v2246, %v2247
      %v2249 = vsel %vm788, %v2231, 0.0
      %v2250 = vadd.f32 %v2248, %v2249
      %v2251 = vsel %vm788, %v2232, 0.0
      %v2252 = vadd.f32 %v2250, %v2251
      %v2253 = vsel %vm847, %v2233, 0.0
      %v2254 = vadd.f32 %v2252, %v2253
      %2255 = vadd.xlane.f32.xlu0 %v2254
      %v2256 = vpop.xlane.xlu0 %2255
      %v2257 = vrot.slane %v2256, 4
      %v2258 = vadd.f32 %v2256, %v2257
      %v2259 = vrot.slane %v2258, 2
      %v2260 = vadd.f32 %v2258, %v2259
      %v2261 = vrot.slane %v2260, 1
      %v2262 = vadd.f32 %v2260, %v2261
      %s2263 = vtos %v2262
      %v2264 = vstv %s2263
      %v2265 = vmul.f32 %v2264, %v2210
      %v2266 = vadd.f32 %v2265, 1e-05
      %v2267 = vrsqrt.pop %v2266
      %v2268 = vmul.f32 %v2212, %v2267
      %v2269 = vmul.f32 %v2213, %v2267
      %v2270 = vmul.f32 %v2214, %v2267
      %v2271 = vmul.f32 %v2215, %v2267
      %v2272 = vmul.f32 %v2216, %v2267
      %v2273 = vmul.f32 %v2217, %v2267
      %v2274 = vmul.f32 %v2218, %v2267
      %v2275 = vmul.f32 %v2219, %v2267
      %v2276 = vmul.f32 %v2220, %v2267
      %v2277 = vmul.f32 %v2221, %v2267
      %v2278 = vmul.f32 %v2222, %v2267
      %v2279 = vmul.f32 %v2268, %v815
      %v2280 = vmul.f32 %v2269, %v816
      %v2281 = vmul.f32 %v2270, %v817
      %v2282 = vmul.f32 %v2271, %v818
      %v2283 = vmul.f32 %v2272, %v819
      %v2284 = vmul.f32 %v2273, %v820
      %v2285 = vmul.f32 %v2274, %v821
      %v2286 = vmul.f32 %v2275, %v822
      %v2287 = vmul.f32 %v2276, %v823
      %v2288 = vmul.f32 %v2277, %v824
      %v2289 = vmul.f32 %v2278, %v825
      %v2290 = vadd.f32 %v2279, %v826
      %v2291 = vadd.f32 %v2280, %v827
      %v2292 = vadd.f32 %v2281, %v828
      %v2293 = vadd.f32 %v2282, %v829
      %v2294 = vadd.f32 %v2283, %v830
      %v2295 = vadd.f32 %v2284, %v831
      %v2296 = vadd.f32 %v2285, %v832
      %v2297 = vadd.f32 %v2286, %v833
      %v2298 = vadd.f32 %v2287, %v834
      %v2299 = vadd.f32 %v2288, %v835
      %v2300 = vadd.f32 %v2289, %v836
      %v2301 = vmax.f32 %v2290, 0.0
      %v2302 = vmax.f32 %v2291, 0.0
      %v2303 = vmax.f32 %v2292, 0.0
      %v2304 = vmax.f32 %v2293, 0.0
      %v2305 = vmax.f32 %v2294, 0.0
      %v2306 = vmax.f32 %v2295, 0.0
      %v2307 = vmax.f32 %v2296, 0.0
      %v2308 = vmax.f32 %v2297, 0.0
      %v2309 = vmax.f32 %v2298, 0.0
      %v2310 = vmax.f32 %v2299, 0.0
      %v2311 = vmax.f32 %v2300, 0.0
      %v2312 = vld [vmem:[%s5] sm:$0xff]
      %v2313 = vld [vmem:[%s5 + $0x8] sm:$0xff]
      %v2314 = vld [vmem:[%s5 + $0x10] sm:$0xff]
      %v2315 = vld [vmem:[%s5 + $0x18] sm:$0xff]
      %v2316 = vld [vmem:[%s5 + $0x20] sm:$0xff]
      %v2317 = vld [vmem:[%s5 + $0x28] sm:$0xff]
      %v2318 = vld [vmem:[%s5 + $0x30] sm:$0xff]
      %v2319 = vld [vmem:[%s5 + $0x38] sm:$0xff]
      %v2320 = vld [vmem:[%s5 + $0x40] sm:$0xff]
      %v2321 = vld [vmem:[%s5 + $0x48] sm:$0xff]
      %v2322 = vld [vmem:[%s5 + $0x50] sm:$0x1]
      %v2323 = vld [vmem:[%s6] sm:$0xff]
      %v2324 = vld [vmem:[%s6 + $0x8] sm:$0xff]
      %v2325 = vld [vmem:[%s6 + $0x10] sm:$0xff]
      %v2326 = vld [vmem:[%s6 + $0x18] sm:$0xff]
      %v2327 = vld [vmem:[%s6 + $0x20] sm:$0xff]
      %v2328 = vld [vmem:[%s6 + $0x28] sm:$0xff]
      %v2329 = vld [vmem:[%s6 + $0x30] sm:$0xff]
      %v2330 = vld [vmem:[%s6 + $0x38] sm:$0xff]
      %v2331 = vld [vmem:[%s6 + $0x40] sm:$0xff]
      %v2332 = vld [vmem:[%s6 + $0x48] sm:$0xff]
      %v2333 = vld [vmem:[%s6 + $0x50] sm:$0x1]
      %2334 = vst.msk [vmem:[#allocation2 + $0x10] sm:$0xff] %vm788, %v2301
      %2335 = vst.msk [vmem:[#allocation2 + $0x18] sm:$0xff] %vm788, %v2302
      %2336 = vst.msk [vmem:[#allocation2 + $0x20] sm:$0xff] %vm788, %v2303
      %2337 = vst.msk [vmem:[#allocation2 + $0x28] sm:$0xff] %vm788, %v2304
      %2338 = vst.msk [vmem:[#allocation2 + $0x30] sm:$0xff] %vm788, %v2305
      %2339 = vst.msk [vmem:[#allocation2 + $0x38] sm:$0xff] %vm788, %v2306
      %2340 = vst.msk [vmem:[#allocation2 + $0x40] sm:$0xff] %vm788, %v2307
      %2341 = vst.msk [vmem:[#allocation2 + $0x48] sm:$0xff] %vm788, %v2308
      %2342 = vst.msk [vmem:[#allocation2 + $0x50] sm:$0xff] %vm788, %v2309
      %2343 = vst.msk [vmem:[#allocation2 + $0x58] sm:$0xff] %vm788, %v2310
      %2344 = vst.msk [vmem:[#allocation2 + $0x60] sm:$0x1] %vm847, %v2311
      %v2345 = vld [vmem:[#allocation2 + $0x6] sm:$0xff]
      %v2346 = vld [vmem:[#allocation2 + $0xe] sm:$0xff]
      %v2347 = vld [vmem:[#allocation2 + $0x16] sm:$0xff]
      %v2348 = vld [vmem:[#allocation2 + $0x1e] sm:$0xff]
      %v2349 = vld [vmem:[#allocation2 + $0x26] sm:$0xff]
      %v2350 = vld [vmem:[#allocation2 + $0x2e] sm:$0xff]
      %v2351 = vld [vmem:[#allocation2 + $0x36] sm:$0xff]
      %v2352 = vld [vmem:[#allocation2 + $0x3e] sm:$0xff]
      %v2353 = vld [vmem:[#allocation2 + $0x46] sm:$0xff]
      %v2354 = vld [vmem:[#allocation2 + $0x4e] sm:$0xff]
      %v2355 = vld [vmem:[#allocation2 + $0x56] sm:$0x1]
      %v2356 = vmul.f32 %v2345, %v744
      %v2357 = vmul.f32 %v2346, %v745
      %v2358 = vmul.f32 %v2347, %v746
      %v2359 = vmul.f32 %v2348, %v747
      %v2360 = vmul.f32 %v2349, %v748
      %v2361 = vmul.f32 %v2350, %v749
      %v2362 = vmul.f32 %v2351, %v750
      %v2363 = vmul.f32 %v2352, %v751
      %v2364 = vmul.f32 %v2353, %v752
      %v2365 = vmul.f32 %v2354, %v753
      %v2366 = vmul.f32 %v2355, %v754
      %v2367 = vpack.c.bf16 %v2357, %v2356
      %v2368 = vpack.c.bf16 %v2359, %v2358
      %v2369 = vpack.c.bf16 %v2361, %v2360
      %v2370 = vpack.c.bf16 %v2363, %v2362
      %v2371 = vpack.c.bf16 %v2365, %v2364
      %v2372 = vpack.c.bf16 %v2366, %v2366
      %v2373 = vld [vmem:[%s4] sm:$0xf]
      %v2374 = vld [vmem:[%s4 + $0x4] sm:$0xf]
      %v2375 = vld [vmem:[%s4 + $0x8] sm:$0xf]
      %v2376 = vld [vmem:[%s4 + $0xc] sm:$0xf]
      %v2377 = vld [vmem:[#allocation2 + $0x7] sm:$0xff]
      %v2378 = vld [vmem:[#allocation2 + $0xf] sm:$0xff]
      %v2379 = vld [vmem:[#allocation2 + $0x17] sm:$0xff]
      %v2380 = vld [vmem:[#allocation2 + $0x1f] sm:$0xff]
      %v2381 = vld [vmem:[#allocation2 + $0x27] sm:$0xff]
      %v2382 = vld [vmem:[#allocation2 + $0x2f] sm:$0xff]
      %v2383 = vld [vmem:[#allocation2 + $0x37] sm:$0xff]
      %v2384 = vld [vmem:[#allocation2 + $0x3f] sm:$0xff]
      %v2385 = vld [vmem:[#allocation2 + $0x47] sm:$0xff]
      %v2386 = vld [vmem:[#allocation2 + $0x4f] sm:$0xff]
      %v2387 = vld [vmem:[#allocation2 + $0x57] sm:$0x1]
      %v2388 = vpack.c.bf16 %v2378, %v2377
      %v2389 = vpack.c.bf16 %v2380, %v2379
      %v2390 = vpack.c.bf16 %v2382, %v2381
      %v2391 = vpack.c.bf16 %v2384, %v2383
      %v2392 = vpack.c.bf16 %v2386, %v2385
      %v2393 = vpack.c.bf16 %v2387, %v2387
      %s2394 = scalar_lea.vmem %s4, 16
      %v2395 = vld [vmem:[%s2394] sm:$0xf]
      %v2396 = vld [vmem:[%s2394 + $0x4] sm:$0xf]
      %v2397 = vld [vmem:[%s2394 + $0x8] sm:$0xf]
      %v2398 = vld [vmem:[%s2394 + $0xc] sm:$0xf]
      %v2403 = vunpack.c.l.b16 %v2395
      %v2404 = vunpack.c.l.b16 %v2396
      %v2405 = vunpack.c.l.b16 %v2397
      %v2406 = vunpack.c.l.b16 %v2398
      %v2407 = vpack.c.b16 %v2404, %v2403
      %v2408 = vpack.c.b16 %v2406, %v2405
      %v2412 = vsel %vm788, %v2388, 0
      %v2415 = vsel %vm788, %v2389, 0
      %v2418 = vsel %vm788, %v2390, 0
      %v2421 = vsel %vm788, %v2391, 0
      %v2424 = vsel %vm788, %v2392, 0
      %v2427 = vsel %vm788, %v2393, 0
      %2429 = vmatprep.subr.bf16.mxu0 0
      %2430 = vmatpush1.bf16.msra.mxu0 0
      %2431 = vmatprep.subr.bf16.mxu0 0
      %2432 = vmatpush1.bf16.msra.mxu0 0
      %2433 = vmatprep.subr.bf16.mxu0 0
      %2434 = vmatpush1.bf16.msra.mxu0 0
      %2435 = vmatprep.subr.bf16.mxu0 0
      %2436 = vmatpush1.bf16.msra.mxu0 0
      %2437 = vmatprep.subr.bf16.mxu0 0
      %2438 = vmatpush1.bf16.msra.mxu0 0
      %2439 = vmatprep.subr.bf16.mxu0 0
      %2440 = vmatpush1.bf16.msra.mxu0 0
      %2441 = vmatprep.subr.bf16.mxu0 0
      %2442 = vmatpush1.bf16.msra.mxu0 %v2408
      %2443 = vmatprep.subr.bf16.mxu0 0
      %2444 = vmatpush1.bf16.msra.mxu0 %v2407
      %2445 = vmatprep.subr.bf16.mxu0 0
      %2446 = vmatpush2.bf16.msra.mxu0 0
      %2447 = vmatprep.subr.bf16.mxu0 0
      %2448 = vmatpush2.bf16.msra.mxu0 0
      %2449 = vmatprep.subr.bf16.mxu0 0
      %2450 = vmatpush2.bf16.msra.mxu0 0
      %2451 = vmatprep.subr.bf16.mxu0 0
      %2452 = vmatpush2.bf16.msra.mxu0 0
      %2453 = vmatprep.subr.bf16.mxu0 0
      %2454 = vmatpush2.bf16.msra.mxu0 0
      %2455 = vmatprep.subr.bf16.mxu0 0
      %2456 = vmatpush2.bf16.msra.mxu0 0
      %2457 = vmatprep.subr.bf16.mxu0 0
      %2458 = vmatpush2.bf16.msra.mxu0 0
      %2459 = vmatprep.subr.bf16.mxu0 0
      %2460 = vmatpush2.bf16.msra.mxu0 0
      %2461 = vmatprep.mubr.bf16.mxu0 0
      %2462 = vmatmul.mubr.bf16.gmra.mxu0 %v2412
      %v2463 = vpop.f32.mrf.mxu0
      %v2464 = vadd.f32 0.0, %v2463
      %v2465 = vpop.f32.mrf.mxu0
      %v2466 = vpop.f32.mrf.mxu0
      %v2467 = vadd.f32 0.0, %v2466
      %v2468 = vpop.f32.mrf.mxu0
      %2469 = vmatprep.mubr.bf16.mxu0 0
      %2470 = vmatmul.mubr.bf16.gmra.mxu0 %v2415
      %v2471 = vpop.f32.mrf.mxu0
      %v2472 = vadd.f32 0.0, %v2471
      %v2473 = vpop.f32.mrf.mxu0
      %v2474 = vpop.f32.mrf.mxu0
      %v2475 = vadd.f32 0.0, %v2474
      %v2476 = vpop.f32.mrf.mxu0
      %2477 = vmatprep.mubr.bf16.mxu0 0
      %2478 = vmatmul.mubr.bf16.gmra.mxu0 %v2418
      %v2479 = vpop.f32.mrf.mxu0
      %v2480 = vadd.f32 0.0, %v2479
      %v2481 = vpop.f32.mrf.mxu0
      %v2482 = vpop.f32.mrf.mxu0
      %v2483 = vadd.f32 0.0, %v2482
      %v2484 = vpop.f32.mrf.mxu0
      %2485 = vmatprep.mubr.bf16.mxu0 0
      %2486 = vmatmul.mubr.bf16.gmra.mxu0 %v2421
      %v2487 = vpop.f32.mrf.mxu0
      %v2488 = vadd.f32 0.0, %v2487
      %v2489 = vpop.f32.mrf.mxu0
      %v2490 = vpop.f32.mrf.mxu0
      %v2491 = vadd.f32 0.0, %v2490
      %v2492 = vpop.f32.mrf.mxu0
      %2493 = vmatprep.mubr.bf16.mxu0 0
      %2494 = vmatmul.mubr.bf16.gmra.mxu0 %v2424
      %v2495 = vpop.f32.mrf.mxu0
      %v2496 = vadd.f32 0.0, %v2495
      %v2497 = vpop.f32.mrf.mxu0
      %v2498 = vpop.f32.mrf.mxu0
      %v2499 = vadd.f32 0.0, %v2498
      %v2500 = vpop.f32.mrf.mxu0
      %2501 = vmatprep.mubr.bf16.mxu0 0
      %2502 = vmatmul.mubr.bf16.gmra.mxu0 %v2427
      %v2503 = vpop.f32.mrf.mxu0
      %v2504 = vadd.f32 0.0, %v2503
      %v2505 = vpop.f32.mrf.mxu0
      %v2506 = vpop.f32.mrf.mxu0
      %v2507 = vpop.f32.mrf.mxu0
      %2508 = vdwg.mxu0
      %v2513 = vunpack.c.l.b16 %v2373
      %v2514 = vunpack.c.l.b16 %v2374
      %v2515 = vunpack.c.l.b16 %v2375
      %v2516 = vunpack.c.l.b16 %v2376
      %v2517 = vpack.c.b16 %v2514, %v2513
      %v2518 = vpack.c.b16 %v2516, %v2515
      %v2522 = vsel %vm788, %v2367, 0
      %v2525 = vsel %vm788, %v2368, 0
      %v2528 = vsel %vm788, %v2369, 0
      %v2531 = vsel %vm788, %v2370, 0
      %v2534 = vsel %vm788, %v2371, 0
      %v2537 = vsel %vm788, %v2372, 0
      %2539 = vmatprep.subr.bf16.mxu0 0
      %2540 = vmatpush1.bf16.msra.mxu0 0
      %2541 = vmatprep.subr.bf16.mxu0 0
      %2542 = vmatpush1.bf16.msra.mxu0 0
      %2543 = vmatprep.subr.bf16.mxu0 0
      %2544 = vmatpush1.bf16.msra.mxu0 0
      %2545 = vmatprep.subr.bf16.mxu0 0
      %2546 = vmatpush1.bf16.msra.mxu0 0
      %2547 = vmatprep.subr.bf16.mxu0 0
      %2548 = vmatpush1.bf16.msra.mxu0 0
      %2549 = vmatprep.subr.bf16.mxu0 0
      %2550 = vmatpush1.bf16.msra.mxu0 0
      %2551 = vmatprep.subr.bf16.mxu0 0
      %2552 = vmatpush1.bf16.msra.mxu0 %v2518
      %2553 = vmatprep.subr.bf16.mxu0 0
      %2554 = vmatpush1.bf16.msra.mxu0 %v2517
      %2555 = vmatprep.subr.bf16.mxu0 0
      %2556 = vmatpush2.bf16.msra.mxu0 0
      %2557 = vmatprep.subr.bf16.mxu0 0
      %2558 = vmatpush2.bf16.msra.mxu0 0
      %2559 = vmatprep.subr.bf16.mxu0 0
      %2560 = vmatpush2.bf16.msra.mxu0 0
      %2561 = vmatprep.subr.bf16.mxu0 0
      %2562 = vmatpush2.bf16.msra.mxu0 0
      %2563 = vmatprep.subr.bf16.mxu0 0
      %2564 = vmatpush2.bf16.msra.mxu0 0
      %2565 = vmatprep.subr.bf16.mxu0 0
      %2566 = vmatpush2.bf16.msra.mxu0 0
      %2567 = vmatprep.subr.bf16.mxu0 0
      %2568 = vmatpush2.bf16.msra.mxu0 0
      %2569 = vmatprep.subr.bf16.mxu0 0
      %2570 = vmatpush2.bf16.msra.mxu0 0
      %2571 = vmatprep.mubr.bf16.mxu0 0
      %2572 = vmatmul.mubr.bf16.gmra.mxu0 %v2522
      %v2573 = vpop.f32.mrf.mxu0
      %v2574 = vadd.f32 %v2464, %v2573
      %v2575 = vpop.f32.mrf.mxu0
      %v2576 = vpop.f32.mrf.mxu0
      %v2577 = vadd.f32 %v2467, %v2576
      %v2578 = vpop.f32.mrf.mxu0
      %2579 = vmatprep.mubr.bf16.mxu0 0
      %2580 = vmatmul.mubr.bf16.gmra.mxu0 %v2525
      %v2581 = vpop.f32.mrf.mxu0
      %v2582 = vadd.f32 %v2472, %v2581
      %v2583 = vpop.f32.mrf.mxu0
      %v2584 = vpop.f32.mrf.mxu0
      %v2585 = vadd.f32 %v2475, %v2584
      %v2586 = vpop.f32.mrf.mxu0
      %2587 = vmatprep.mubr.bf16.mxu0 0
      %2588 = vmatmul.mubr.bf16.gmra.mxu0 %v2528
      %v2589 = vpop.f32.mrf.mxu0
      %v2590 = vadd.f32 %v2480, %v2589
      %v2591 = vpop.f32.mrf.mxu0
      %v2592 = vpop.f32.mrf.mxu0
      %v2593 = vadd.f32 %v2483, %v2592
      %v2594 = vpop.f32.mrf.mxu0
      %2595 = vmatprep.mubr.bf16.mxu0 0
      %2596 = vmatmul.mubr.bf16.gmra.mxu0 %v2531
      %v2597 = vpop.f32.mrf.mxu0
      %v2598 = vadd.f32 %v2488, %v2597
      %v2599 = vpop.f32.mrf.mxu0
      %v2600 = vpop.f32.mrf.mxu0
      %v2601 = vadd.f32 %v2491, %v2600
      %v2602 = vpop.f32.mrf.mxu0
      %2603 = vmatprep.mubr.bf16.mxu0 0
      %2604 = vmatmul.mubr.bf16.gmra.mxu0 %v2534
      %v2605 = vpop.f32.mrf.mxu0
      %v2606 = vadd.f32 %v2496, %v2605
      %v2607 = vpop.f32.mrf.mxu0
      %v2608 = vpop.f32.mrf.mxu0
      %v2609 = vadd.f32 %v2499, %v2608
      %v2610 = vpop.f32.mrf.mxu0
      %2611 = vmatprep.mubr.bf16.mxu0 0
      %2612 = vmatmul.mubr.bf16.gmra.mxu0 %v2537
      %v2613 = vpop.f32.mrf.mxu0
      %v2614 = vadd.f32 %v2504, %v2613
      %v2615 = vpop.f32.mrf.mxu0
      %v2616 = vpop.f32.mrf.mxu0
      %v2617 = vpop.f32.mrf.mxu0
      %2618 = vdwg.mxu0
      %v2619 = vld [vmem:[#allocation2 + $0x8] sm:$0xff]
      %v2620 = vld [vmem:[#allocation2 + $0x10] sm:$0xff]
      %v2621 = vld [vmem:[#allocation2 + $0x18] sm:$0xff]
      %v2622 = vld [vmem:[#allocation2 + $0x20] sm:$0xff]
      %v2623 = vld [vmem:[#allocation2 + $0x28] sm:$0xff]
      %v2624 = vld [vmem:[#allocation2 + $0x30] sm:$0xff]
      %v2625 = vld [vmem:[#allocation2 + $0x38] sm:$0xff]
      %v2626 = vld [vmem:[#allocation2 + $0x40] sm:$0xff]
      %v2627 = vld [vmem:[#allocation2 + $0x48] sm:$0xff]
      %v2628 = vld [vmem:[#allocation2 + $0x50] sm:$0xff]
      %v2629 = vld [vmem:[#allocation2 + $0x58] sm:$0x1]
      %v2630 = vmul.f32 %v2619, %v777
      %v2631 = vmul.f32 %v2620, %v778
      %v2632 = vmul.f32 %v2621, %v779
      %v2633 = vmul.f32 %v2622, %v780
      %v2634 = vmul.f32 %v2623, %v781
      %v2635 = vmul.f32 %v2624, %v782
      %v2636 = vmul.f32 %v2625, %v783
      %v2637 = vmul.f32 %v2626, %v784
      %v2638 = vmul.f32 %v2627, %v785
      %v2639 = vmul.f32 %v2628, %v786
      %v2640 = vmul.f32 %v2629, %v787
      %v2641 = vpack.c.bf16 %v2631, %v2630
      %v2642 = vpack.c.bf16 %v2633, %v2632
      %v2643 = vpack.c.bf16 %v2635, %v2634
      %v2644 = vpack.c.bf16 %v2637, %v2636
      %v2645 = vpack.c.bf16 %v2639, %v2638
      %v2646 = vpack.c.bf16 %v2640, %v2640
      %s2647 = scalar_lea.vmem %s4, 32
      %v2648 = vld [vmem:[%s2647] sm:$0xf]
      %v2649 = vld [vmem:[%s2647 + $0x4] sm:$0xf]
      %v2650 = vld [vmem:[%s2647 + $0x8] sm:$0xf]
      %v2651 = vld [vmem:[%s2647 + $0xc] sm:$0xf]
      %v2656 = vunpack.c.l.b16 %v2648
      %v2657 = vunpack.c.l.b16 %v2649
      %v2658 = vunpack.c.l.b16 %v2650
      %v2659 = vunpack.c.l.b16 %v2651
      %v2660 = vpack.c.b16 %v2657, %v2656
      %v2661 = vpack.c.b16 %v2659, %v2658
      %v2665 = vsel %vm788, %v2641, 0
      %v2668 = vsel %vm788, %v2642, 0
      %v2671 = vsel %vm788, %v2643, 0
      %v2674 = vsel %vm788, %v2644, 0
      %v2677 = vsel %vm788, %v2645, 0
      %v2680 = vsel %vm788, %v2646, 0
      %2682 = vmatprep.subr.bf16.mxu0 0
      %2683 = vmatpush1.bf16.msra.mxu0 0
      %2684 = vmatprep.subr.bf16.mxu0 0
      %2685 = vmatpush1.bf16.msra.mxu0 0
      %2686 = vmatprep.subr.bf16.mxu0 0
      %2687 = vmatpush1.bf16.msra.mxu0 0
      %2688 = vmatprep.subr.bf16.mxu0 0
      %2689 = vmatpush1.bf16.msra.mxu0 0
      %2690 = vmatprep.subr.bf16.mxu0 0
      %2691 = vmatpush1.bf16.msra.mxu0 0
      %2692 = vmatprep.subr.bf16.mxu0 0
      %2693 = vmatpush1.bf16.msra.mxu0 0
      %2694 = vmatprep.subr.bf16.mxu0 0
      %2695 = vmatpush1.bf16.msra.mxu0 %v2661
      %2696 = vmatprep.subr.bf16.mxu0 0
      %2697 = vmatpush1.bf16.msra.mxu0 %v2660
      %2698 = vmatprep.subr.bf16.mxu0 0
      %2699 = vmatpush2.bf16.msra.mxu0 0
      %2700 = vmatprep.subr.bf16.mxu0 0
      %2701 = vmatpush2.bf16.msra.mxu0 0
      %2702 = vmatprep.subr.bf16.mxu0 0
      %2703 = vmatpush2.bf16.msra.mxu0 0
      %2704 = vmatprep.subr.bf16.mxu0 0
      %2705 = vmatpush2.bf16.msra.mxu0 0
      %2706 = vmatprep.subr.bf16.mxu0 0
      %2707 = vmatpush2.bf16.msra.mxu0 0
      %2708 = vmatprep.subr.bf16.mxu0 0
      %2709 = vmatpush2.bf16.msra.mxu0 0
      %2710 = vmatprep.subr.bf16.mxu0 0
      %2711 = vmatpush2.bf16.msra.mxu0 0
      %2712 = vmatprep.subr.bf16.mxu0 0
      %2713 = vmatpush2.bf16.msra.mxu0 0
      %2714 = vmatprep.mubr.bf16.mxu0 0
      %2715 = vmatmul.mubr.bf16.gmra.mxu0 %v2665
      %v2716 = vpop.f32.mrf.mxu0
      %v2717 = vadd.f32 0.0, %v2716
      %v2718 = vpop.f32.mrf.mxu0
      %v2719 = vpop.f32.mrf.mxu0
      %v2720 = vadd.f32 0.0, %v2719
      %v2721 = vpop.f32.mrf.mxu0
      %2722 = vmatprep.mubr.bf16.mxu0 0
      %2723 = vmatmul.mubr.bf16.gmra.mxu0 %v2668
      %v2724 = vpop.f32.mrf.mxu0
      %v2725 = vadd.f32 0.0, %v2724
      %v2726 = vpop.f32.mrf.mxu0
      %v2727 = vpop.f32.mrf.mxu0
      %v2728 = vadd.f32 0.0, %v2727
      %v2729 = vpop.f32.mrf.mxu0
      %2730 = vmatprep.mubr.bf16.mxu0 0
      %2731 = vmatmul.mubr.bf16.gmra.mxu0 %v2671
      %v2732 = vpop.f32.mrf.mxu0
      %v2733 = vadd.f32 0.0, %v2732
      %v2734 = vpop.f32.mrf.mxu0
      %v2735 = vpop.f32.mrf.mxu0
      %v2736 = vadd.f32 0.0, %v2735
      %v2737 = vpop.f32.mrf.mxu0
      %2738 = vmatprep.mubr.bf16.mxu0 0
      %2739 = vmatmul.mubr.bf16.gmra.mxu0 %v2674
      %v2740 = vpop.f32.mrf.mxu0
      %v2741 = vadd.f32 0.0, %v2740
      %v2742 = vpop.f32.mrf.mxu0
      %v2743 = vpop.f32.mrf.mxu0
      %v2744 = vadd.f32 0.0, %v2743
      %v2745 = vpop.f32.mrf.mxu0
      %2746 = vmatprep.mubr.bf16.mxu0 0
      %2747 = vmatmul.mubr.bf16.gmra.mxu0 %v2677
      %v2748 = vpop.f32.mrf.mxu0
      %v2749 = vadd.f32 0.0, %v2748
      %v2750 = vpop.f32.mrf.mxu0
      %v2751 = vpop.f32.mrf.mxu0
      %v2752 = vadd.f32 0.0, %v2751
      %v2753 = vpop.f32.mrf.mxu0
      %2754 = vmatprep.mubr.bf16.mxu0 0
      %2755 = vmatmul.mubr.bf16.gmra.mxu0 %v2680
      %v2756 = vpop.f32.mrf.mxu0
      %v2757 = vadd.f32 0.0, %v2756
      %v2758 = vpop.f32.mrf.mxu0
      %v2759 = vpop.f32.mrf.mxu0
      %v2760 = vpop.f32.mrf.mxu0
      %2761 = vdwg.mxu0
      %v2762 = vadd.f32 %v2574, %v2717
      %v2763 = vadd.f32 %v2577, %v2720
      %v2764 = vadd.f32 %v2582, %v2725
      %v2765 = vadd.f32 %v2585, %v2728
      %v2766 = vadd.f32 %v2590, %v2733
      %v2767 = vadd.f32 %v2593, %v2736
      %v2768 = vadd.f32 %v2598, %v2741
      %v2769 = vadd.f32 %v2601, %v2744
      %v2770 = vadd.f32 %v2606, %v2749
      %v2771 = vadd.f32 %v2609, %v2752
      %v2772 = vadd.f32 %v2614, %v2757
      %v2773 = vld [vmem:[#allocation2 + $0xf] sm:$0xff]
      %v2774 = vld [vmem:[#allocation2 + $0x17] sm:$0xff]
      %v2775 = vld [vmem:[#allocation2 + $0x1f] sm:$0xff]
      %v2776 = vld [vmem:[#allocation2 + $0x27] sm:$0xff]
      %v2777 = vld [vmem:[#allocation2 + $0x2f] sm:$0xff]
      %v2778 = vld [vmem:[#allocation2 + $0x37] sm:$0xff]
      %v2779 = vld [vmem:[#allocation2 + $0x3f] sm:$0xff]
      %v2780 = vld [vmem:[#allocation2 + $0x47] sm:$0xff]
      %v2781 = vld [vmem:[#allocation2 + $0x4f] sm:$0xff]
      %v2782 = vld [vmem:[#allocation2 + $0x57] sm:$0xff]
      %v2783 = vld [vmem:[#allocation2 + $0x5f] sm:$0x1]
      %v2784 = vmul.f32 %v2773, %v744
      %v2785 = vmul.f32 %v2774, %v745
      %v2786 = vmul.f32 %v2775, %v746
      %v2787 = vmul.f32 %v2776, %v747
      %v2788 = vmul.f32 %v2777, %v748
      %v2789 = vmul.f32 %v2778, %v749
      %v2790 = vmul.f32 %v2779, %v750
      %v2791 = vmul.f32 %v2780, %v751
      %v2792 = vmul.f32 %v2781, %v752
      %v2793 = vmul.f32 %v2782, %v753
      %v2794 = vmul.f32 %v2783, %v754
      %v2795 = vpack.c.bf16 %v2785, %v2784
      %v2796 = vpack.c.bf16 %v2787, %v2786
      %v2797 = vpack.c.bf16 %v2789, %v2788
      %v2798 = vpack.c.bf16 %v2791, %v2790
      %v2799 = vpack.c.bf16 %v2793, %v2792
      %v2800 = vpack.c.bf16 %v2794, %v2794
      %s2801 = scalar_lea.vmem %s4, 48
      %v2802 = vld [vmem:[%s2801] sm:$0xf]
      %v2803 = vld [vmem:[%s2801 + $0x4] sm:$0xf]
      %v2804 = vld [vmem:[%s2801 + $0x8] sm:$0xf]
      %v2805 = vld [vmem:[%s2801 + $0xc] sm:$0xf]
      %v2810 = vunpack.c.l.b16 %v2802
      %v2811 = vunpack.c.l.b16 %v2803
      %v2812 = vunpack.c.l.b16 %v2804
      %v2813 = vunpack.c.l.b16 %v2805
      %v2814 = vpack.c.b16 %v2811, %v2810
      %v2815 = vpack.c.b16 %v2813, %v2812
      %v2819 = vsel %vm788, %v2795, 0
      %v2822 = vsel %vm788, %v2796, 0
      %v2825 = vsel %vm788, %v2797, 0
      %v2828 = vsel %vm788, %v2798, 0
      %v2831 = vsel %vm788, %v2799, 0
      %v2834 = vsel %vm788, %v2800, 0
      %2836 = vmatprep.subr.bf16.mxu0 0
      %2837 = vmatpush1.bf16.msra.mxu0 0
      %2838 = vmatprep.subr.bf16.mxu0 0
      %2839 = vmatpush1.bf16.msra.mxu0 0
      %2840 = vmatprep.subr.bf16.mxu0 0
      %2841 = vmatpush1.bf16.msra.mxu0 0
      %2842 = vmatprep.subr.bf16.mxu0 0
      %2843 = vmatpush1.bf16.msra.mxu0 0
      %2844 = vmatprep.subr.bf16.mxu0 0
      %2845 = vmatpush1.bf16.msra.mxu0 0
      %2846 = vmatprep.subr.bf16.mxu0 0
      %2847 = vmatpush1.bf16.msra.mxu0 0
      %2848 = vmatprep.subr.bf16.mxu0 0
      %2849 = vmatpush1.bf16.msra.mxu0 %v2815
      %2850 = vmatprep.subr.bf16.mxu0 0
      %2851 = vmatpush1.bf16.msra.mxu0 %v2814
      %2852 = vmatprep.subr.bf16.mxu0 0
      %2853 = vmatpush2.bf16.msra.mxu0 0
      %2854 = vmatprep.subr.bf16.mxu0 0
      %2855 = vmatpush2.bf16.msra.mxu0 0
      %2856 = vmatprep.subr.bf16.mxu0 0
      %2857 = vmatpush2.bf16.msra.mxu0 0
      %2858 = vmatprep.subr.bf16.mxu0 0
      %2859 = vmatpush2.bf16.msra.mxu0 0
      %2860 = vmatprep.subr.bf16.mxu0 0
      %2861 = vmatpush2.bf16.msra.mxu0 0
      %2862 = vmatprep.subr.bf16.mxu0 0
      %2863 = vmatpush2.bf16.msra.mxu0 0
      %2864 = vmatprep.subr.bf16.mxu0 0
      %2865 = vmatpush2.bf16.msra.mxu0 0
      %2866 = vmatprep.subr.bf16.mxu0 0
      %2867 = vmatpush2.bf16.msra.mxu0 0
      %2868 = vmatprep.mubr.bf16.mxu0 0
      %2869 = vmatmul.mubr.bf16.gmra.mxu0 %v2819
      %v2870 = vpop.f32.mrf.mxu0
      %v2871 = vadd.f32 0.0, %v2870
      %v2872 = vpop.f32.mrf.mxu0
      %v2873 = vpop.f32.mrf.mxu0
      %v2874 = vadd.f32 0.0, %v2873
      %v2875 = vpop.f32.mrf.mxu0
      %2876 = vmatprep.mubr.bf16.mxu0 0
      %2877 = vmatmul.mubr.bf16.gmra.mxu0 %v2822
      %v2878 = vpop.f32.mrf.mxu0
      %v2879 = vadd.f32 0.0, %v2878
      %v2880 = vpop.f32.mrf.mxu0
      %v2881 = vpop.f32.mrf.mxu0
      %v2882 = vadd.f32 0.0, %v2881
      %v2883 = vpop.f32.mrf.mxu0
      %2884 = vmatprep.mubr.bf16.mxu0 0
      %2885 = vmatmul.mubr.bf16.gmra.mxu0 %v2825
      %v2886 = vpop.f32.mrf.mxu0
      %v2887 = vadd.f32 0.0, %v2886
      %v2888 = vpop.f32.mrf.mxu0
      %v2889 = vpop.f32.mrf.mxu0
      %v2890 = vadd.f32 0.0, %v2889
      %v2891 = vpop.f32.mrf.mxu0
      %2892 = vmatprep.mubr.bf16.mxu0 0
      %2893 = vmatmul.mubr.bf16.gmra.mxu0 %v2828
      %v2894 = vpop.f32.mrf.mxu0
      %v2895 = vadd.f32 0.0, %v2894
      %v2896 = vpop.f32.mrf.mxu0
      %v2897 = vpop.f32.mrf.mxu0
      %v2898 = vadd.f32 0.0, %v2897
      %v2899 = vpop.f32.mrf.mxu0
      %2900 = vmatprep.mubr.bf16.mxu0 0
      %2901 = vmatmul.mubr.bf16.gmra.mxu0 %v2831
      %v2902 = vpop.f32.mrf.mxu0
      %v2903 = vadd.f32 0.0, %v2902
      %v2904 = vpop.f32.mrf.mxu0
      %v2905 = vpop.f32.mrf.mxu0
      %v2906 = vadd.f32 0.0, %v2905
      %v2907 = vpop.f32.mrf.mxu0
      %2908 = vmatprep.mubr.bf16.mxu0 0
      %2909 = vmatmul.mubr.bf16.gmra.mxu0 %v2834
      %v2910 = vpop.f32.mrf.mxu0
      %v2911 = vadd.f32 0.0, %v2910
      %v2912 = vpop.f32.mrf.mxu0
      %v2913 = vpop.f32.mrf.mxu0
      %v2914 = vpop.f32.mrf.mxu0
      %2915 = vdwg.mxu0
      %v2916 = vadd.f32 %v2762, %v2871
      %v2917 = vadd.f32 %v2763, %v2874
      %v2918 = vadd.f32 %v2764, %v2879
      %v2919 = vadd.f32 %v2765, %v2882
      %v2920 = vadd.f32 %v2766, %v2887
      %v2921 = vadd.f32 %v2767, %v2890
      %v2922 = vadd.f32 %v2768, %v2895
      %v2923 = vadd.f32 %v2769, %v2898
      %v2924 = vadd.f32 %v2770, %v2903
      %v2925 = vadd.f32 %v2771, %v2906
      %v2926 = vadd.f32 %v2772, %v2911
      %v2927 = vld [vmem:[#allocation2 + $0x10] sm:$0xff]
      %v2928 = vld [vmem:[#allocation2 + $0x18] sm:$0xff]
      %v2929 = vld [vmem:[#allocation2 + $0x20] sm:$0xff]
      %v2930 = vld [vmem:[#allocation2 + $0x28] sm:$0xff]
      %v2931 = vld [vmem:[#allocation2 + $0x30] sm:$0xff]
      %v2932 = vld [vmem:[#allocation2 + $0x38] sm:$0xff]
      %v2933 = vld [vmem:[#allocation2 + $0x40] sm:$0xff]
      %v2934 = vld [vmem:[#allocation2 + $0x48] sm:$0xff]
      %v2935 = vld [vmem:[#allocation2 + $0x50] sm:$0xff]
      %v2936 = vld [vmem:[#allocation2 + $0x58] sm:$0xff]
      %v2937 = vld [vmem:[#allocation2 + $0x60] sm:$0x1]
      %v2938 = vpack.c.bf16 %v2928, %v2927
      %v2939 = vpack.c.bf16 %v2930, %v2929
      %v2940 = vpack.c.bf16 %v2932, %v2931
      %v2941 = vpack.c.bf16 %v2934, %v2933
      %v2942 = vpack.c.bf16 %v2936, %v2935
      %v2943 = vpack.c.bf16 %v2937, %v2937
      %s2944 = scalar_lea.vmem %s4, 64
      %v2945 = vld [vmem:[%s2944] sm:$0xf]
      %v2946 = vld [vmem:[%s2944 + $0x4] sm:$0xf]
      %v2947 = vld [vmem:[%s2944 + $0x8] sm:$0xf]
      %v2948 = vld [vmem:[%s2944 + $0xc] sm:$0xf]
      %v2953 = vunpack.c.l.b16 %v2945
      %v2954 = vunpack.c.l.b16 %v2946
      %v2955 = vunpack.c.l.b16 %v2947
      %v2956 = vunpack.c.l.b16 %v2948
      %v2957 = vpack.c.b16 %v2954, %v2953
      %v2958 = vpack.c.b16 %v2956, %v2955
      %v2962 = vsel %vm788, %v2938, 0
      %v2965 = vsel %vm788, %v2939, 0
      %v2968 = vsel %vm788, %v2940, 0
      %v2971 = vsel %vm788, %v2941, 0
      %v2974 = vsel %vm788, %v2942, 0
      %v2977 = vsel %vm788, %v2943, 0
      %2979 = vmatprep.subr.bf16.mxu0 0
      %2980 = vmatpush1.bf16.msra.mxu0 0
      %2981 = vmatprep.subr.bf16.mxu0 0
      %2982 = vmatpush1.bf16.msra.mxu0 0
      %2983 = vmatprep.subr.bf16.mxu0 0
      %2984 = vmatpush1.bf16.msra.mxu0 0
      %2985 = vmatprep.subr.bf16.mxu0 0
      %2986 = vmatpush1.bf16.msra.mxu0 0
      %2987 = vmatprep.subr.bf16.mxu0 0
      %2988 = vmatpush1.bf16.msra.mxu0 0
      %2989 = vmatprep.subr.bf16.mxu0 0
      %2990 = vmatpush1.bf16.msra.mxu0 0
      %2991 = vmatprep.subr.bf16.mxu0 0
      %2992 = vmatpush1.bf16.msra.mxu0 %v2958
      %2993 = vmatprep.subr.bf16.mxu0 0
      %2994 = vmatpush1.bf16.msra.mxu0 %v2957
      %2995 = vmatprep.subr.bf16.mxu0 0
      %2996 = vmatpush2.bf16.msra.mxu0 0
      %2997 = vmatprep.subr.bf16.mxu0 0
      %2998 = vmatpush2.bf16.msra.mxu0 0
      %2999 = vmatprep.subr.bf16.mxu0 0
      %3000 = vmatpush2.bf16.msra.mxu0 0
      %3001 = vmatprep.subr.bf16.mxu0 0
      %3002 = vmatpush2.bf16.msra.mxu0 0
      %3003 = vmatprep.subr.bf16.mxu0 0
      %3004 = vmatpush2.bf16.msra.mxu0 0
      %3005 = vmatprep.subr.bf16.mxu0 0
      %3006 = vmatpush2.bf16.msra.mxu0 0
      %3007 = vmatprep.subr.bf16.mxu0 0
      %3008 = vmatpush2.bf16.msra.mxu0 0
      %3009 = vmatprep.subr.bf16.mxu0 0
      %3010 = vmatpush2.bf16.msra.mxu0 0
      %3011 = vmatprep.mubr.bf16.mxu0 0
      %3012 = vmatmul.mubr.bf16.gmra.mxu0 %v2962
      %v3013 = vpop.f32.mrf.mxu0
      %v3014 = vadd.f32 0.0, %v3013
      %v3015 = vpop.f32.mrf.mxu0
      %v3016 = vpop.f32.mrf.mxu0
      %v3017 = vadd.f32 0.0, %v3016
      %v3018 = vpop.f32.mrf.mxu0
      %3019 = vmatprep.mubr.bf16.mxu0 0
      %3020 = vmatmul.mubr.bf16.gmra.mxu0 %v2965
      %v3021 = vpop.f32.mrf.mxu0
      %v3022 = vadd.f32 0.0, %v3021
      %v3023 = vpop.f32.mrf.mxu0
      %v3024 = vpop.f32.mrf.mxu0
      %v3025 = vadd.f32 0.0, %v3024
      %v3026 = vpop.f32.mrf.mxu0
      %3027 = vmatprep.mubr.bf16.mxu0 0
      %3028 = vmatmul.mubr.bf16.gmra.mxu0 %v2968
      %v3029 = vpop.f32.mrf.mxu0
      %v3030 = vadd.f32 0.0, %v3029
      %v3031 = vpop.f32.mrf.mxu0
      %v3032 = vpop.f32.mrf.mxu0
      %v3033 = vadd.f32 0.0, %v3032
      %v3034 = vpop.f32.mrf.mxu0
      %3035 = vmatprep.mubr.bf16.mxu0 0
      %3036 = vmatmul.mubr.bf16.gmra.mxu0 %v2971
      %v3037 = vpop.f32.mrf.mxu0
      %v3038 = vadd.f32 0.0, %v3037
      %v3039 = vpop.f32.mrf.mxu0
      %v3040 = vpop.f32.mrf.mxu0
      %v3041 = vadd.f32 0.0, %v3040
      %v3042 = vpop.f32.mrf.mxu0
      %3043 = vmatprep.mubr.bf16.mxu0 0
      %3044 = vmatmul.mubr.bf16.gmra.mxu0 %v2974
      %v3045 = vpop.f32.mrf.mxu0
      %v3046 = vadd.f32 0.0, %v3045
      %v3047 = vpop.f32.mrf.mxu0
      %v3048 = vpop.f32.mrf.mxu0
      %v3049 = vadd.f32 0.0, %v3048
      %v3050 = vpop.f32.mrf.mxu0
      %3051 = vmatprep.mubr.bf16.mxu0 0
      %3052 = vmatmul.mubr.bf16.gmra.mxu0 %v2977
      %v3053 = vpop.f32.mrf.mxu0
      %v3054 = vadd.f32 0.0, %v3053
      %v3055 = vpop.f32.mrf.mxu0
      %v3056 = vpop.f32.mrf.mxu0
      %v3057 = vpop.f32.mrf.mxu0
      %3058 = vdwg.mxu0
      %v3059 = vadd.f32 %v2916, %v3014
      %v3060 = vadd.f32 %v2917, %v3017
      %v3061 = vadd.f32 %v2918, %v3022
      %v3062 = vadd.f32 %v2919, %v3025
      %v3063 = vadd.f32 %v2920, %v3030
      %v3064 = vadd.f32 %v2921, %v3033
      %v3065 = vadd.f32 %v2922, %v3038
      %v3066 = vadd.f32 %v2923, %v3041
      %v3067 = vadd.f32 %v2924, %v3046
      %v3068 = vadd.f32 %v2925, %v3049
      %v3069 = vadd.f32 %v2926, %v3054
      %v3070 = vld [vmem:[#allocation2 + $0x11] sm:$0xff]
      %v3071 = vld [vmem:[#allocation2 + $0x19] sm:$0xff]
      %v3072 = vld [vmem:[#allocation2 + $0x21] sm:$0xff]
      %v3073 = vld [vmem:[#allocation2 + $0x29] sm:$0xff]
      %v3074 = vld [vmem:[#allocation2 + $0x31] sm:$0xff]
      %v3075 = vld [vmem:[#allocation2 + $0x39] sm:$0xff]
      %v3076 = vld [vmem:[#allocation2 + $0x41] sm:$0xff]
      %v3077 = vld [vmem:[#allocation2 + $0x49] sm:$0xff]
      %v3078 = vld [vmem:[#allocation2 + $0x51] sm:$0xff]
      %v3079 = vld [vmem:[#allocation2 + $0x59] sm:$0xff]
      %v3080 = vld [vmem:[#allocation2 + $0x61] sm:$0x1]
      %v3081 = vmul.f32 %v3070, %v777
      %v3082 = vmul.f32 %v3071, %v778
      %v3083 = vmul.f32 %v3072, %v779
      %v3084 = vmul.f32 %v3073, %v780
      %v3085 = vmul.f32 %v3074, %v781
      %v3086 = vmul.f32 %v3075, %v782
      %v3087 = vmul.f32 %v3076, %v783
      %v3088 = vmul.f32 %v3077, %v784
      %v3089 = vmul.f32 %v3078, %v785
      %v3090 = vmul.f32 %v3079, %v786
      %v3091 = vmul.f32 %v3080, %v787
      %v3092 = vpack.c.bf16 %v3082, %v3081
      %v3093 = vpack.c.bf16 %v3084, %v3083
      %v3094 = vpack.c.bf16 %v3086, %v3085
      %v3095 = vpack.c.bf16 %v3088, %v3087
      %v3096 = vpack.c.bf16 %v3090, %v3089
      %v3097 = vpack.c.bf16 %v3091, %v3091
      %s3098 = scalar_lea.vmem %s4, 80
      %v3099 = vld [vmem:[%s3098] sm:$0xf]
      %v3100 = vld [vmem:[%s3098 + $0x4] sm:$0xf]
      %v3101 = vld [vmem:[%s3098 + $0x8] sm:$0xf]
      %v3102 = vld [vmem:[%s3098 + $0xc] sm:$0xf]
      %v3107 = vunpack.c.l.b16 %v3099
      %v3108 = vunpack.c.l.b16 %v3100
      %v3109 = vunpack.c.l.b16 %v3101
      %v3110 = vunpack.c.l.b16 %v3102
      %v3111 = vpack.c.b16 %v3108, %v3107
      %v3112 = vpack.c.b16 %v3110, %v3109
      %v3116 = vsel %vm788, %v3092, 0
      %v3119 = vsel %vm788, %v3093, 0
      %v3122 = vsel %vm788, %v3094, 0
      %v3125 = vsel %vm788, %v3095, 0
      %v3128 = vsel %vm788, %v3096, 0
      %v3131 = vsel %vm788, %v3097, 0
      %3133 = vmatprep.subr.bf16.mxu0 0
      %3134 = vmatpush1.bf16.msra.mxu0 0
      %3135 = vmatprep.subr.bf16.mxu0 0
      %3136 = vmatpush1.bf16.msra.mxu0 0
      %3137 = vmatprep.subr.bf16.mxu0 0
      %3138 = vmatpush1.bf16.msra.mxu0 0
      %3139 = vmatprep.subr.bf16.mxu0 0
      %3140 = vmatpush1.bf16.msra.mxu0 0
      %3141 = vmatprep.subr.bf16.mxu0 0
      %3142 = vmatpush1.bf16.msra.mxu0 0
      %3143 = vmatprep.subr.bf16.mxu0 0
      %3144 = vmatpush1.bf16.msra.mxu0 0
      %3145 = vmatprep.subr.bf16.mxu0 0
      %3146 = vmatpush1.bf16.msra.mxu0 %v3112
      %3147 = vmatprep.subr.bf16.mxu0 0
      %3148 = vmatpush1.bf16.msra.mxu0 %v3111
      %3149 = vmatprep.subr.bf16.mxu0 0
      %3150 = vmatpush2.bf16.msra.mxu0 0
      %3151 = vmatprep.subr.bf16.mxu0 0
      %3152 = vmatpush2.bf16.msra.mxu0 0
      %3153 = vmatprep.subr.bf16.mxu0 0
      %3154 = vmatpush2.bf16.msra.mxu0 0
      %3155 = vmatprep.subr.bf16.mxu0 0
      %3156 = vmatpush2.bf16.msra.mxu0 0
      %3157 = vmatprep.subr.bf16.mxu0 0
      %3158 = vmatpush2.bf16.msra.mxu0 0
      %3159 = vmatprep.subr.bf16.mxu0 0
      %3160 = vmatpush2.bf16.msra.mxu0 0
      %3161 = vmatprep.subr.bf16.mxu0 0
      %3162 = vmatpush2.bf16.msra.mxu0 0
      %3163 = vmatprep.subr.bf16.mxu0 0
      %3164 = vmatpush2.bf16.msra.mxu0 0
      %3165 = vmatprep.mubr.bf16.mxu0 0
      %3166 = vmatmul.mubr.bf16.gmra.mxu0 %v3116
      %v3167 = vpop.f32.mrf.mxu0
      %v3168 = vadd.f32 0.0, %v3167
      %v3169 = vpop.f32.mrf.mxu0
      %v3170 = vpop.f32.mrf.mxu0
      %v3171 = vadd.f32 0.0, %v3170
      %v3172 = vpop.f32.mrf.mxu0
      %3173 = vmatprep.mubr.bf16.mxu0 0
      %3174 = vmatmul.mubr.bf16.gmra.mxu0 %v3119
      %v3175 = vpop.f32.mrf.mxu0
      %v3176 = vadd.f32 0.0, %v3175
      %v3177 = vpop.f32.mrf.mxu0
      %v3178 = vpop.f32.mrf.mxu0
      %v3179 = vadd.f32 0.0, %v3178
      %v3180 = vpop.f32.mrf.mxu0
      %3181 = vmatprep.mubr.bf16.mxu0 0
      %3182 = vmatmul.mubr.bf16.gmra.mxu0 %v3122
      %v3183 = vpop.f32.mrf.mxu0
      %v3184 = vadd.f32 0.0, %v3183
      %v3185 = vpop.f32.mrf.mxu0
      %v3186 = vpop.f32.mrf.mxu0
      %v3187 = vadd.f32 0.0, %v3186
      %v3188 = vpop.f32.mrf.mxu0
      %3189 = vmatprep.mubr.bf16.mxu0 0
      %3190 = vmatmul.mubr.bf16.gmra.mxu0 %v3125
      %v3191 = vpop.f32.mrf.mxu0
      %v3192 = vadd.f32 0.0, %v3191
      %v3193 = vpop.f32.mrf.mxu0
      %v3194 = vpop.f32.mrf.mxu0
      %v3195 = vadd.f32 0.0, %v3194
      %v3196 = vpop.f32.mrf.mxu0
      %3197 = vmatprep.mubr.bf16.mxu0 0
      %3198 = vmatmul.mubr.bf16.gmra.mxu0 %v3128
      %v3199 = vpop.f32.mrf.mxu0
      %v3200 = vadd.f32 0.0, %v3199
      %v3201 = vpop.f32.mrf.mxu0
      %v3202 = vpop.f32.mrf.mxu0
      %v3203 = vadd.f32 0.0, %v3202
      %v3204 = vpop.f32.mrf.mxu0
      %3205 = vmatprep.mubr.bf16.mxu0 0
      %3206 = vmatmul.mubr.bf16.gmra.mxu0 %v3131
      %v3207 = vpop.f32.mrf.mxu0
      %v3208 = vadd.f32 0.0, %v3207
      %v3209 = vpop.f32.mrf.mxu0
      %v3210 = vpop.f32.mrf.mxu0
      %v3211 = vpop.f32.mrf.mxu0
      %3212 = vdwg.mxu0
      %v3213 = vadd.f32 %v3059, %v3168
      %v3214 = vadd.f32 %v3060, %v3171
      %v3215 = vadd.f32 %v3061, %v3176
      %v3216 = vadd.f32 %v3062, %v3179
      %v3217 = vadd.f32 %v3063, %v3184
      %v3218 = vadd.f32 %v3064, %v3187
      %v3219 = vadd.f32 %v3065, %v3192
      %v3220 = vadd.f32 %v3066, %v3195
      %v3221 = vadd.f32 %v3067, %v3200
      %v3222 = vadd.f32 %v3068, %v3203
      %v3223 = vadd.f32 %v3069, %v3208
      %v3224 = vld [vmem:[#allocation2 + $0x18] sm:$0xff]
      %v3225 = vld [vmem:[#allocation2 + $0x20] sm:$0xff]
      %v3226 = vld [vmem:[#allocation2 + $0x28] sm:$0xff]
      %v3227 = vld [vmem:[#allocation2 + $0x30] sm:$0xff]
      %v3228 = vld [vmem:[#allocation2 + $0x38] sm:$0xff]
      %v3229 = vld [vmem:[#allocation2 + $0x40] sm:$0xff]
      %v3230 = vld [vmem:[#allocation2 + $0x48] sm:$0xff]
      %v3231 = vld [vmem:[#allocation2 + $0x50] sm:$0xff]
      %v3232 = vld [vmem:[#allocation2 + $0x58] sm:$0xff]
      %v3233 = vld [vmem:[#allocation2 + $0x60] sm:$0xff]
      %v3234 = vld [vmem:[#allocation2 + $0x68] sm:$0x1]
      %v3235 = vmul.f32 %v3224, %v744
      %v3236 = vmul.f32 %v3225, %v745
      %v3237 = vmul.f32 %v3226, %v746
      %v3238 = vmul.f32 %v3227, %v747
      %v3239 = vmul.f32 %v3228, %v748
      %v3240 = vmul.f32 %v3229, %v749
      %v3241 = vmul.f32 %v3230, %v750
      %v3242 = vmul.f32 %v3231, %v751
      %v3243 = vmul.f32 %v3232, %v752
      %v3244 = vmul.f32 %v3233, %v753
      %v3245 = vmul.f32 %v3234, %v754
      %v3246 = vpack.c.bf16 %v3236, %v3235
      %v3247 = vpack.c.bf16 %v3238, %v3237
      %v3248 = vpack.c.bf16 %v3240, %v3239
      %v3249 = vpack.c.bf16 %v3242, %v3241
      %v3250 = vpack.c.bf16 %v3244, %v3243
      %v3251 = vpack.c.bf16 %v3245, %v3245
      %s3252 = scalar_lea.vmem %s4, 96
      %v3253 = vld [vmem:[%s3252] sm:$0xf]
      %v3254 = vld [vmem:[%s3252 + $0x4] sm:$0xf]
      %v3255 = vld [vmem:[%s3252 + $0x8] sm:$0xf]
      %v3256 = vld [vmem:[%s3252 + $0xc] sm:$0xf]
      %v3261 = vunpack.c.l.b16 %v3253
      %v3262 = vunpack.c.l.b16 %v3254
      %v3263 = vunpack.c.l.b16 %v3255
      %v3264 = vunpack.c.l.b16 %v3256
      %v3265 = vpack.c.b16 %v3262, %v3261
      %v3266 = vpack.c.b16 %v3264, %v3263
      %v3270 = vsel %vm788, %v3246, 0
      %v3273 = vsel %vm788, %v3247, 0
      %v3276 = vsel %vm788, %v3248, 0
      %v3279 = vsel %vm788, %v3249, 0
      %v3282 = vsel %vm788, %v3250, 0
      %v3285 = vsel %vm788, %v3251, 0
      %3287 = vmatprep.subr.bf16.mxu0 0
      %3288 = vmatpush1.bf16.msra.mxu0 0
      %3289 = vmatprep.subr.bf16.mxu0 0
      %3290 = vmatpush1.bf16.msra.mxu0 0
      %3291 = vmatprep.subr.bf16.mxu0 0
      %3292 = vmatpush1.bf16.msra.mxu0 0
      %3293 = vmatprep.subr.bf16.mxu0 0
      %3294 = vmatpush1.bf16.msra.mxu0 0
      %3295 = vmatprep.subr.bf16.mxu0 0
      %3296 = vmatpush1.bf16.msra.mxu0 0
      %3297 = vmatprep.subr.bf16.mxu0 0
      %3298 = vmatpush1.bf16.msra.mxu0 0
      %3299 = vmatprep.subr.bf16.mxu0 0
      %3300 = vmatpush1.bf16.msra.mxu0 %v3266
      %3301 = vmatprep.subr.bf16.mxu0 0
      %3302 = vmatpush1.bf16.msra.mxu0 %v3265
      %3303 = vmatprep.subr.bf16.mxu0 0
      %3304 = vmatpush2.bf16.msra.mxu0 0
      %3305 = vmatprep.subr.bf16.mxu0 0
      %3306 = vmatpush2.bf16.msra.mxu0 0
      %3307 = vmatprep.subr.bf16.mxu0 0
      %3308 = vmatpush2.bf16.msra.mxu0 0
      %3309 = vmatprep.subr.bf16.mxu0 0
      %3310 = vmatpush2.bf16.msra.mxu0 0
      %3311 = vmatprep.subr.bf16.mxu0 0
      %3312 = vmatpush2.bf16.msra.mxu0 0
      %3313 = vmatprep.subr.bf16.mxu0 0
      %3314 = vmatpush2.bf16.msra.mxu0 0
      %3315 = vmatprep.subr.bf16.mxu0 0
      %3316 = vmatpush2.bf16.msra.mxu0 0
      %3317 = vmatprep.subr.bf16.mxu0 0
      %3318 = vmatpush2.bf16.msra.mxu0 0
      %3319 = vmatprep.mubr.bf16.mxu0 0
      %3320 = vmatmul.mubr.bf16.gmra.mxu0 %v3270
      %v3321 = vpop.f32.mrf.mxu0
      %v3322 = vadd.f32 0.0, %v3321
      %v3323 = vpop.f32.mrf.mxu0
      %v3324 = vpop.f32.mrf.mxu0
      %v3325 = vadd.f32 0.0, %v3324
      %v3326 = vpop.f32.mrf.mxu0
      %3327 = vmatprep.mubr.bf16.mxu0 0
      %3328 = vmatmul.mubr.bf16.gmra.mxu0 %v3273
      %v3329 = vpop.f32.mrf.mxu0
      %v3330 = vadd.f32 0.0, %v3329
      %v3331 = vpop.f32.mrf.mxu0
      %v3332 = vpop.f32.mrf.mxu0
      %v3333 = vadd.f32 0.0, %v3332
      %v3334 = vpop.f32.mrf.mxu0
      %3335 = vmatprep.mubr.bf16.mxu0 0
      %3336 = vmatmul.mubr.bf16.gmra.mxu0 %v3276
      %v3337 = vpop.f32.mrf.mxu0
      %v3338 = vadd.f32 0.0, %v3337
      %v3339 = vpop.f32.mrf.mxu0
      %v3340 = vpop.f32.mrf.mxu0
      %v3341 = vadd.f32 0.0, %v3340
      %v3342 = vpop.f32.mrf.mxu0
      %3343 = vmatprep.mubr.bf16.mxu0 0
      %3344 = vmatmul.mubr.bf16.gmra.mxu0 %v3279
      %v3345 = vpop.f32.mrf.mxu0
      %v3346 = vadd.f32 0.0, %v3345
      %v3347 = vpop.f32.mrf.mxu0
      %v3348 = vpop.f32.mrf.mxu0
      %v3349 = vadd.f32 0.0, %v3348
      %v3350 = vpop.f32.mrf.mxu0
      %3351 = vmatprep.mubr.bf16.mxu0 0
      %3352 = vmatmul.mubr.bf16.gmra.mxu0 %v3282
      %v3353 = vpop.f32.mrf.mxu0
      %v3354 = vadd.f32 0.0, %v3353
      %v3355 = vpop.f32.mrf.mxu0
      %v3356 = vpop.f32.mrf.mxu0
      %v3357 = vadd.f32 0.0, %v3356
      %v3358 = vpop.f32.mrf.mxu0
      %3359 = vmatprep.mubr.bf16.mxu0 0
      %3360 = vmatmul.mubr.bf16.gmra.mxu0 %v3285
      %v3361 = vpop.f32.mrf.mxu0
      %v3362 = vadd.f32 0.0, %v3361
      %v3363 = vpop.f32.mrf.mxu0
      %v3364 = vpop.f32.mrf.mxu0
      %v3365 = vpop.f32.mrf.mxu0
      %3366 = vdwg.mxu0
      %v3367 = vadd.f32 %v3213, %v3322
      %v3368 = vadd.f32 %v3214, %v3325
      %v3369 = vadd.f32 %v3215, %v3330
      %v3370 = vadd.f32 %v3216, %v3333
      %v3371 = vadd.f32 %v3217, %v3338
      %v3372 = vadd.f32 %v3218, %v3341
      %v3373 = vadd.f32 %v3219, %v3346
      %v3374 = vadd.f32 %v3220, %v3349
      %v3375 = vadd.f32 %v3221, %v3354
      %v3376 = vadd.f32 %v3222, %v3357
      %v3377 = vadd.f32 %v3223, %v3362
      %v3378 = vld [vmem:[#allocation2 + $0x19] sm:$0xff]
      %v3379 = vld [vmem:[#allocation2 + $0x21] sm:$0xff]
      %v3380 = vld [vmem:[#allocation2 + $0x29] sm:$0xff]
      %v3381 = vld [vmem:[#allocation2 + $0x31] sm:$0xff]
      %v3382 = vld [vmem:[#allocation2 + $0x39] sm:$0xff]
      %v3383 = vld [vmem:[#allocation2 + $0x41] sm:$0xff]
      %v3384 = vld [vmem:[#allocation2 + $0x49] sm:$0xff]
      %v3385 = vld [vmem:[#allocation2 + $0x51] sm:$0xff]
      %v3386 = vld [vmem:[#allocation2 + $0x59] sm:$0xff]
      %v3387 = vld [vmem:[#allocation2 + $0x61] sm:$0xff]
      %v3388 = vld [vmem:[#allocation2 + $0x69] sm:$0x1]
      %v3389 = vpack.c.bf16 %v3379, %v3378
      %v3390 = vpack.c.bf16 %v3381, %v3380
      %v3391 = vpack.c.bf16 %v3383, %v3382
      %v3392 = vpack.c.bf16 %v3385, %v3384
      %v3393 = vpack.c.bf16 %v3387, %v3386
      %v3394 = vpack.c.bf16 %v3388, %v3388
      %s3395 = scalar_lea.vmem %s4, 112
      %v3396 = vld [vmem:[%s3395] sm:$0xf]
      %v3397 = vld [vmem:[%s3395 + $0x4] sm:$0xf]
      %v3398 = vld [vmem:[%s3395 + $0x8] sm:$0xf]
      %v3399 = vld [vmem:[%s3395 + $0xc] sm:$0xf]
      %v3404 = vunpack.c.l.b16 %v3396
      %v3405 = vunpack.c.l.b16 %v3397
      %v3406 = vunpack.c.l.b16 %v3398
      %v3407 = vunpack.c.l.b16 %v3399
      %v3408 = vpack.c.b16 %v3405, %v3404
      %v3409 = vpack.c.b16 %v3407, %v3406
      %v3413 = vsel %vm788, %v3389, 0
      %v3416 = vsel %vm788, %v3390, 0
      %v3419 = vsel %vm788, %v3391, 0
      %v3422 = vsel %vm788, %v3392, 0
      %v3425 = vsel %vm788, %v3393, 0
      %v3428 = vsel %vm788, %v3394, 0
      %3430 = vmatprep.subr.bf16.mxu0 0
      %3431 = vmatpush1.bf16.msra.mxu0 0
      %3432 = vmatprep.subr.bf16.mxu0 0
      %3433 = vmatpush1.bf16.msra.mxu0 0
      %3434 = vmatprep.subr.bf16.mxu0 0
      %3435 = vmatpush1.bf16.msra.mxu0 0
      %3436 = vmatprep.subr.bf16.mxu0 0
      %3437 = vmatpush1.bf16.msra.mxu0 0
      %3438 = vmatprep.subr.bf16.mxu0 0
      %3439 = vmatpush1.bf16.msra.mxu0 0
      %3440 = vmatprep.subr.bf16.mxu0 0
      %3441 = vmatpush1.bf16.msra.mxu0 0
      %3442 = vmatprep.subr.bf16.mxu0 0
      %3443 = vmatpush1.bf16.msra.mxu0 %v3409
      %3444 = vmatprep.subr.bf16.mxu0 0
      %3445 = vmatpush1.bf16.msra.mxu0 %v3408
      %3446 = vmatprep.subr.bf16.mxu0 0
      %3447 = vmatpush2.bf16.msra.mxu0 0
      %3448 = vmatprep.subr.bf16.mxu0 0
      %3449 = vmatpush2.bf16.msra.mxu0 0
      %3450 = vmatprep.subr.bf16.mxu0 0
      %3451 = vmatpush2.bf16.msra.mxu0 0
      %3452 = vmatprep.subr.bf16.mxu0 0
      %3453 = vmatpush2.bf16.msra.mxu0 0
      %3454 = vmatprep.subr.bf16.mxu0 0
      %3455 = vmatpush2.bf16.msra.mxu0 0
      %3456 = vmatprep.subr.bf16.mxu0 0
      %3457 = vmatpush2.bf16.msra.mxu0 0
      %3458 = vmatprep.subr.bf16.mxu0 0
      %3459 = vmatpush2.bf16.msra.mxu0 0
      %3460 = vmatprep.subr.bf16.mxu0 0
      %3461 = vmatpush2.bf16.msra.mxu0 0
      %3462 = vmatprep.mubr.bf16.mxu0 0
      %3463 = vmatmul.mubr.bf16.gmra.mxu0 %v3413
      %v3464 = vpop.f32.mrf.mxu0
      %v3465 = vadd.f32 0.0, %v3464
      %v3466 = vpop.f32.mrf.mxu0
      %v3467 = vpop.f32.mrf.mxu0
      %v3468 = vadd.f32 0.0, %v3467
      %v3469 = vpop.f32.mrf.mxu0
      %3470 = vmatprep.mubr.bf16.mxu0 0
      %3471 = vmatmul.mubr.bf16.gmra.mxu0 %v3416
      %v3472 = vpop.f32.mrf.mxu0
      %v3473 = vadd.f32 0.0, %v3472
      %v3474 = vpop.f32.mrf.mxu0
      %v3475 = vpop.f32.mrf.mxu0
      %v3476 = vadd.f32 0.0, %v3475
      %v3477 = vpop.f32.mrf.mxu0
      %3478 = vmatprep.mubr.bf16.mxu0 0
      %3479 = vmatmul.mubr.bf16.gmra.mxu0 %v3419
      %v3480 = vpop.f32.mrf.mxu0
      %v3481 = vadd.f32 0.0, %v3480
      %v3482 = vpop.f32.mrf.mxu0
      %v3483 = vpop.f32.mrf.mxu0
      %v3484 = vadd.f32 0.0, %v3483
      %v3485 = vpop.f32.mrf.mxu0
      %3486 = vmatprep.mubr.bf16.mxu0 0
      %3487 = vmatmul.mubr.bf16.gmra.mxu0 %v3422
      %v3488 = vpop.f32.mrf.mxu0
      %v3489 = vadd.f32 0.0, %v3488
      %v3490 = vpop.f32.mrf.mxu0
      %v3491 = vpop.f32.mrf.mxu0
      %v3492 = vadd.f32 0.0, %v3491
      %v3493 = vpop.f32.mrf.mxu0
      %3494 = vmatprep.mubr.bf16.mxu0 0
      %3495 = vmatmul.mubr.bf16.gmra.mxu0 %v3425
      %v3496 = vpop.f32.mrf.mxu0
      %v3497 = vadd.f32 0.0, %v3496
      %v3498 = vpop.f32.mrf.mxu0
      %v3499 = vpop.f32.mrf.mxu0
      %v3500 = vadd.f32 0.0, %v3499
      %v3501 = vpop.f32.mrf.mxu0
      %3502 = vmatprep.mubr.bf16.mxu0 0
      %3503 = vmatmul.mubr.bf16.gmra.mxu0 %v3428
      %v3504 = vpop.f32.mrf.mxu0
      %v3505 = vadd.f32 0.0, %v3504
      %v3506 = vpop.f32.mrf.mxu0
      %v3507 = vpop.f32.mrf.mxu0
      %v3508 = vpop.f32.mrf.mxu0
      %3509 = vdwg.mxu0
      %v3510 = vadd.f32 %v3367, %v3465
      %v3511 = vadd.f32 %v3368, %v3468
      %v3512 = vadd.f32 %v3369, %v3473
      %v3513 = vadd.f32 %v3370, %v3476
      %v3514 = vadd.f32 %v3371, %v3481
      %v3515 = vadd.f32 %v3372, %v3484
      %v3516 = vadd.f32 %v3373, %v3489
      %v3517 = vadd.f32 %v3374, %v3492
      %v3518 = vadd.f32 %v3375, %v3497
      %v3519 = vadd.f32 %v3376, %v3500
      %v3520 = vadd.f32 %v3377, %v3505
      %v3521 = vld [vmem:[#allocation2 + $0x1a] sm:$0xff]
      %v3522 = vld [vmem:[#allocation2 + $0x22] sm:$0xff]
      %v3523 = vld [vmem:[#allocation2 + $0x2a] sm:$0xff]
      %v3524 = vld [vmem:[#allocation2 + $0x32] sm:$0xff]
      %v3525 = vld [vmem:[#allocation2 + $0x3a] sm:$0xff]
      %v3526 = vld [vmem:[#allocation2 + $0x42] sm:$0xff]
      %v3527 = vld [vmem:[#allocation2 + $0x4a] sm:$0xff]
      %v3528 = vld [vmem:[#allocation2 + $0x52] sm:$0xff]
      %v3529 = vld [vmem:[#allocation2 + $0x5a] sm:$0xff]
      %v3530 = vld [vmem:[#allocation2 + $0x62] sm:$0xff]
      %v3531 = vld [vmem:[#allocation2 + $0x6a] sm:$0x1]
      %v3532 = vmul.f32 %v3521, %v777
      %v3533 = vmul.f32 %v3522, %v778
      %v3534 = vmul.f32 %v3523, %v779
      %v3535 = vmul.f32 %v3524, %v780
      %v3536 = vmul.f32 %v3525, %v781
      %v3537 = vmul.f32 %v3526, %v782
      %v3538 = vmul.f32 %v3527, %v783
      %v3539 = vmul.f32 %v3528, %v784
      %v3540 = vmul.f32 %v3529, %v785
      %v3541 = vmul.f32 %v3530, %v786
      %v3542 = vmul.f32 %v3531, %v787
      %v3543 = vpack.c.bf16 %v3533, %v3532
      %v3544 = vpack.c.bf16 %v3535, %v3534
      %v3545 = vpack.c.bf16 %v3537, %v3536
      %v3546 = vpack.c.bf16 %v3539, %v3538
      %v3547 = vpack.c.bf16 %v3541, %v3540
      %v3548 = vpack.c.bf16 %v3542, %v3542
      %s3549 = scalar_lea.vmem %s4, 128
      %v3550 = vld [vmem:[%s3549] sm:$0xf]
      %v3551 = vld [vmem:[%s3549 + $0x4] sm:$0xf]
      %v3552 = vld [vmem:[%s3549 + $0x8] sm:$0xf]
      %v3553 = vld [vmem:[%s3549 + $0xc] sm:$0xf]
      %v3558 = vunpack.c.l.b16 %v3550
      %v3559 = vunpack.c.l.b16 %v3551
      %v3560 = vunpack.c.l.b16 %v3552
      %v3561 = vunpack.c.l.b16 %v3553
      %v3562 = vpack.c.b16 %v3559, %v3558
      %v3563 = vpack.c.b16 %v3561, %v3560
      %v3567 = vsel %vm788, %v3543, 0
      %v3570 = vsel %vm788, %v3544, 0
      %v3573 = vsel %vm788, %v3545, 0
      %v3576 = vsel %vm788, %v3546, 0
      %v3579 = vsel %vm788, %v3547, 0
      %v3582 = vsel %vm788, %v3548, 0
      %3584 = vmatprep.subr.bf16.mxu0 0
      %3585 = vmatpush1.bf16.msra.mxu0 0
      %3586 = vmatprep.subr.bf16.mxu0 0
      %3587 = vmatpush1.bf16.msra.mxu0 0
      %3588 = vmatprep.subr.bf16.mxu0 0
      %3589 = vmatpush1.bf16.msra.mxu0 0
      %3590 = vmatprep.subr.bf16.mxu0 0
      %3591 = vmatpush1.bf16.msra.mxu0 0
      %3592 = vmatprep.subr.bf16.mxu0 0
      %3593 = vmatpush1.bf16.msra.mxu0 0
      %3594 = vmatprep.subr.bf16.mxu0 0
      %3595 = vmatpush1.bf16.msra.mxu0 0
      %3596 = vmatprep.subr.bf16.mxu0 0
      %3597 = vmatpush1.bf16.msra.mxu0 %v3563
      %3598 = vmatprep.subr.bf16.mxu0 0
      %3599 = vmatpush1.bf16.msra.mxu0 %v3562
      %3600 = vmatprep.subr.bf16.mxu0 0
      %3601 = vmatpush2.bf16.msra.mxu0 0
      %3602 = vmatprep.subr.bf16.mxu0 0
      %3603 = vmatpush2.bf16.msra.mxu0 0
      %3604 = vmatprep.subr.bf16.mxu0 0
      %3605 = vmatpush2.bf16.msra.mxu0 0
      %3606 = vmatprep.subr.bf16.mxu0 0
      %3607 = vmatpush2.bf16.msra.mxu0 0
      %3608 = vmatprep.subr.bf16.mxu0 0
      %3609 = vmatpush2.bf16.msra.mxu0 0
      %3610 = vmatprep.subr.bf16.mxu0 0
      %3611 = vmatpush2.bf16.msra.mxu0 0
      %3612 = vmatprep.subr.bf16.mxu0 0
      %3613 = vmatpush2.bf16.msra.mxu0 0
      %3614 = vmatprep.subr.bf16.mxu0 0
      %3615 = vmatpush2.bf16.msra.mxu0 0
      %3616 = vmatprep.mubr.bf16.mxu0 0
      %3617 = vmatmul.mubr.bf16.gmra.mxu0 %v3567
      %v3618 = vpop.f32.mrf.mxu0
      %v3619 = vadd.f32 0.0, %v3618
      %v3620 = vpop.f32.mrf.mxu0
      %v3621 = vpop.f32.mrf.mxu0
      %v3622 = vadd.f32 0.0, %v3621
      %v3623 = vpop.f32.mrf.mxu0
      %3624 = vmatprep.mubr.bf16.mxu0 0
      %3625 = vmatmul.mubr.bf16.gmra.mxu0 %v3570
      %v3626 = vpop.f32.mrf.mxu0
      %v3627 = vadd.f32 0.0, %v3626
      %v3628 = vpop.f32.mrf.mxu0
      %v3629 = vpop.f32.mrf.mxu0
      %v3630 = vadd.f32 0.0, %v3629
      %v3631 = vpop.f32.mrf.mxu0
      %3632 = vmatprep.mubr.bf16.mxu0 0
      %3633 = vmatmul.mubr.bf16.gmra.mxu0 %v3573
      %v3634 = vpop.f32.mrf.mxu0
      %v3635 = vadd.f32 0.0, %v3634
      %v3636 = vpop.f32.mrf.mxu0
      %v3637 = vpop.f32.mrf.mxu0
      %v3638 = vadd.f32 0.0, %v3637
      %v3639 = vpop.f32.mrf.mxu0
      %3640 = vmatprep.mubr.bf16.mxu0 0
      %3641 = vmatmul.mubr.bf16.gmra.mxu0 %v3576
      %v3642 = vpop.f32.mrf.mxu0
      %v3643 = vadd.f32 0.0, %v3642
      %v3644 = vpop.f32.mrf.mxu0
      %v3645 = vpop.f32.mrf.mxu0
      %v3646 = vadd.f32 0.0, %v3645
      %v3647 = vpop.f32.mrf.mxu0
      %3648 = vmatprep.mubr.bf16.mxu0 0
      %3649 = vmatmul.mubr.bf16.gmra.mxu0 %v3579
      %v3650 = vpop.f32.mrf.mxu0
      %v3651 = vadd.f32 0.0, %v3650
      %v3652 = vpop.f32.mrf.mxu0
      %v3653 = vpop.f32.mrf.mxu0
      %v3654 = vadd.f32 0.0, %v3653
      %v3655 = vpop.f32.mrf.mxu0
      %3656 = vmatprep.mubr.bf16.mxu0 0
      %3657 = vmatmul.mubr.bf16.gmra.mxu0 %v3582
      %v3658 = vpop.f32.mrf.mxu0
      %v3659 = vadd.f32 0.0, %v3658
      %v3660 = vpop.f32.mrf.mxu0
      %v3661 = vpop.f32.mrf.mxu0
      %v3662 = vpop.f32.mrf.mxu0
      %3663 = vdwg.mxu0
      %v3664 = vadd.f32 %v3510, %v3619
      %v3665 = vadd.f32 %v3511, %v3622
      %v3666 = vadd.f32 %v3512, %v3627
      %v3667 = vadd.f32 %v3513, %v3630
      %v3668 = vadd.f32 %v3514, %v3635
      %v3669 = vadd.f32 %v3515, %v3638
      %v3670 = vadd.f32 %v3516, %v3643
      %v3671 = vadd.f32 %v3517, %v3646
      %v3672 = vadd.f32 %v3518, %v3651
      %v3673 = vadd.f32 %v3519, %v3654
      %v3674 = vadd.f32 %v3520, %v3659
      %v3675 = vsel %vm788, %v3664, 0.0
      %v3676 = vsel %vm788, %v3665, 0.0
      %v3677 = vadd.f32 %v3675, %v3676
      %v3678 = vsel %vm788, %v3666, 0.0
      %v3679 = vadd.f32 %v3677, %v3678
      %v3680 = vsel %vm788, %v3667, 0.0
      %v3681 = vadd.f32 %v3679, %v3680
      %v3682 = vsel %vm788, %v3668, 0.0
      %v3683 = vadd.f32 %v3681, %v3682
      %v3684 = vsel %vm788, %v3669, 0.0
      %v3685 = vadd.f32 %v3683, %v3684
      %v3686 = vsel %vm788, %v3670, 0.0
      %v3687 = vadd.f32 %v3685, %v3686
      %v3688 = vsel %vm788, %v3671, 0.0
      %v3689 = vadd.f32 %v3687, %v3688
      %v3690 = vsel %vm788, %v3672, 0.0
      %v3691 = vadd.f32 %v3689, %v3690
      %v3692 = vsel %vm788, %v3673, 0.0
      %v3693 = vadd.f32 %v3691, %v3692
      %v3694 = vsel %vm847, %v3674, 0.0
      %v3695 = vadd.f32 %v3693, %v3694
      %3696 = vadd.xlane.f32.xlu0 %v3695
      %v3697 = vpop.xlane.xlu0 %3696
      %v3698 = vrot.slane %v3697, 4
      %v3699 = vadd.f32 %v3697, %v3698
      %v3700 = vrot.slane %v3699, 2
      %v3701 = vadd.f32 %v3699, %v3700
      %v3702 = vrot.slane %v3701, 1
      %v3703 = vadd.f32 %v3701, %v3702
      %s3704 = vtos %v3703
      %v3705 = vstv %s3704
      %v3706 = vmul.f32 %v3705, %v2210
      %v3707 = vsub.f32 %v3664, %v3706
      %v3708 = vsub.f32 %v3665, %v3706
      %v3709 = vsub.f32 %v3666, %v3706
      %v3710 = vsub.f32 %v3667, %v3706
      %v3711 = vsub.f32 %v3668, %v3706
      %v3712 = vsub.f32 %v3669, %v3706
      %v3713 = vsub.f32 %v3670, %v3706
      %v3714 = vsub.f32 %v3671, %v3706
      %v3715 = vsub.f32 %v3672, %v3706
      %v3716 = vsub.f32 %v3673, %v3706
      %v3717 = vsub.f32 %v3674, %v3706
      %v3718 = vmul.f32 %v3707, %v3707
      %v3719 = vmul.f32 %v3708, %v3708
      %v3720 = vmul.f32 %v3709, %v3709
      %v3721 = vmul.f32 %v3710, %v3710
      %v3722 = vmul.f32 %v3711, %v3711
      %v3723 = vmul.f32 %v3712, %v3712
      %v3724 = vmul.f32 %v3713, %v3713
      %v3725 = vmul.f32 %v3714, %v3714
      %v3726 = vmul.f32 %v3715, %v3715
      %v3727 = vmul.f32 %v3716, %v3716
      %v3728 = vmul.f32 %v3717, %v3717
      %v3729 = vsel %vm788, %v3718, 0.0
      %v3730 = vsel %vm788, %v3719, 0.0
      %v3731 = vadd.f32 %v3729, %v3730
      %v3732 = vsel %vm788, %v3720, 0.0
      %v3733 = vadd.f32 %v3731, %v3732
      %v3734 = vsel %vm788, %v3721, 0.0
      %v3735 = vadd.f32 %v3733, %v3734
      %v3736 = vsel %vm788, %v3722, 0.0
      %v3737 = vadd.f32 %v3735, %v3736
      %v3738 = vsel %vm788, %v3723, 0.0
      %v3739 = vadd.f32 %v3737, %v3738
      %v3740 = vsel %vm788, %v3724, 0.0
      %v3741 = vadd.f32 %v3739, %v3740
      %v3742 = vsel %vm788, %v3725, 0.0
      %v3743 = vadd.f32 %v3741, %v3742
      %v3744 = vsel %vm788, %v3726, 0.0
      %v3745 = vadd.f32 %v3743, %v3744
      %v3746 = vsel %vm788, %v3727, 0.0
      %v3747 = vadd.f32 %v3745, %v3746
      %v3748 = vsel %vm847, %v3728, 0.0
      %v3749 = vadd.f32 %v3747, %v3748
      %3750 = vadd.xlane.f32.xlu0 %v3749
      %v3751 = vpop.xlane.xlu0 %3750
      %v3752 = vrot.slane %v3751, 4
      %v3753 = vadd.f32 %v3751, %v3752
      %v3754 = vrot.slane %v3753, 2
      %v3755 = vadd.f32 %v3753, %v3754
      %v3756 = vrot.slane %v3755, 1
      %v3757 = vadd.f32 %v3755, %v3756
      %s3758 = vtos %v3757
      %v3759 = vstv %s3758
      %v3760 = vmul.f32 %v3759, %v2210
      %v3761 = vadd.f32 %v3760, 1e-05
      %v3762 = vrsqrt.pop %v3761
      %v3763 = vmul.f32 %v3707, %v3762
      %v3764 = vmul.f32 %v3708, %v3762
      %v3765 = vmul.f32 %v3709, %v3762
      %v3766 = vmul.f32 %v3710, %v3762
      %v3767 = vmul.f32 %v3711, %v3762
      %v3768 = vmul.f32 %v3712, %v3762
      %v3769 = vmul.f32 %v3713, %v3762
      %v3770 = vmul.f32 %v3714, %v3762
      %v3771 = vmul.f32 %v3715, %v3762
      %v3772 = vmul.f32 %v3716, %v3762
      %v3773 = vmul.f32 %v3717, %v3762
      %v3774 = vmul.f32 %v3763, %v2312
      %v3775 = vmul.f32 %v3764, %v2313
      %v3776 = vmul.f32 %v3765, %v2314
      %v3777 = vmul.f32 %v3766, %v2315
      %v3778 = vmul.f32 %v3767, %v2316
      %v3779 = vmul.f32 %v3768, %v2317
      %v3780 = vmul.f32 %v3769, %v2318
      %v3781 = vmul.f32 %v3770, %v2319
      %v3782 = vmul.f32 %v3771, %v2320
      %v3783 = vmul.f32 %v3772, %v2321
      %v3784 = vmul.f32 %v3773, %v2322
      %v3785 = vadd.f32 %v3774, %v2323
      %v3786 = vadd.f32 %v3775, %v2324
      %v3787 = vadd.f32 %v3776, %v2325
      %v3788 = vadd.f32 %v3777, %v2326
      %v3789 = vadd.f32 %v3778, %v2327
      %v3790 = vadd.f32 %v3779, %v2328
      %v3791 = vadd.f32 %v3780, %v2329
      %v3792 = vadd.f32 %v3781, %v2330
      %v3793 = vadd.f32 %v3782, %v2331
      %v3794 = vadd.f32 %v3783, %v2332
      %v3795 = vadd.f32 %v3784, %v2333
      %v3796 = vmax.f32 %v3785, 0.0
      %v3797 = vmax.f32 %v3786, 0.0
      %v3798 = vmax.f32 %v3787, 0.0
      %v3799 = vmax.f32 %v3788, 0.0
      %v3800 = vmax.f32 %v3789, 0.0
      %v3801 = vmax.f32 %v3790, 0.0
      %v3802 = vmax.f32 %v3791, 0.0
      %v3803 = vmax.f32 %v3792, 0.0
      %v3804 = vmax.f32 %v3793, 0.0
      %v3805 = vmax.f32 %v3794, 0.0
      %v3806 = vmax.f32 %v3795, 0.0
      %s3807 = scalar_lea.vmem %s5, 88
      %v3808 = vld [vmem:[%s3807] sm:$0xff]
      %v3809 = vld [vmem:[%s3807 + $0x8] sm:$0xff]
      %v3810 = vld [vmem:[%s3807 + $0x10] sm:$0xff]
      %v3811 = vld [vmem:[%s3807 + $0x18] sm:$0xff]
      %v3812 = vld [vmem:[%s3807 + $0x20] sm:$0xff]
      %v3813 = vld [vmem:[%s3807 + $0x28] sm:$0xff]
      %v3814 = vld [vmem:[%s3807 + $0x30] sm:$0xff]
      %v3815 = vld [vmem:[%s3807 + $0x38] sm:$0xff]
      %v3816 = vld [vmem:[%s3807 + $0x40] sm:$0xff]
      %v3817 = vld [vmem:[%s3807 + $0x48] sm:$0xff]
      %v3818 = vld [vmem:[%s3807 + $0x50] sm:$0x1]
      %s3819 = scalar_lea.vmem %s6, 88
      %v3820 = vld [vmem:[%s3819] sm:$0xff]
      %v3821 = vld [vmem:[%s3819 + $0x8] sm:$0xff]
      %v3822 = vld [vmem:[%s3819 + $0x10] sm:$0xff]
      %v3823 = vld [vmem:[%s3819 + $0x18] sm:$0xff]
      %v3824 = vld [vmem:[%s3819 + $0x20] sm:$0xff]
      %v3825 = vld [vmem:[%s3819 + $0x28] sm:$0xff]
      %v3826 = vld [vmem:[%s3819 + $0x30] sm:$0xff]
      %v3827 = vld [vmem:[%s3819 + $0x38] sm:$0xff]
      %v3828 = vld [vmem:[%s3819 + $0x40] sm:$0xff]
      %v3829 = vld [vmem:[%s3819 + $0x48] sm:$0xff]
      %v3830 = vld [vmem:[%s3819 + $0x50] sm:$0x1]
      %3831 = vst.msk [vmem:[#allocation2 + $0x10] sm:$0xff] %vm788, %v3796
      %3832 = vst.msk [vmem:[#allocation2 + $0x18] sm:$0xff] %vm788, %v3797
      %3833 = vst.msk [vmem:[#allocation2 + $0x20] sm:$0xff] %vm788, %v3798
      %3834 = vst.msk [vmem:[#allocation2 + $0x28] sm:$0xff] %vm788, %v3799
      %3835 = vst.msk [vmem:[#allocation2 + $0x30] sm:$0xff] %vm788, %v3800
      %3836 = vst.msk [vmem:[#allocation2 + $0x38] sm:$0xff] %vm788, %v3801
      %3837 = vst.msk [vmem:[#allocation2 + $0x40] sm:$0xff] %vm788, %v3802
      %3838 = vst.msk [vmem:[#allocation2 + $0x48] sm:$0xff] %vm788, %v3803
      %3839 = vst.msk [vmem:[#allocation2 + $0x50] sm:$0xff] %vm788, %v3804
      %3840 = vst.msk [vmem:[#allocation2 + $0x58] sm:$0xff] %vm788, %v3805
      %3841 = vst.msk [vmem:[#allocation2 + $0x60] sm:$0x1] %vm847, %v3806
      %v3842 = vld [vmem:[#allocation2 + $0x6] sm:$0xff]
      %v3843 = vld [vmem:[#allocation2 + $0xe] sm:$0xff]
      %v3844 = vld [vmem:[#allocation2 + $0x16] sm:$0xff]
      %v3845 = vld [vmem:[#allocation2 + $0x1e] sm:$0xff]
      %v3846 = vld [vmem:[#allocation2 + $0x26] sm:$0xff]
      %v3847 = vld [vmem:[#allocation2 + $0x2e] sm:$0xff]
      %v3848 = vld [vmem:[#allocation2 + $0x36] sm:$0xff]
      %v3849 = vld [vmem:[#allocation2 + $0x3e] sm:$0xff]
      %v3850 = vld [vmem:[#allocation2 + $0x46] sm:$0xff]
      %v3851 = vld [vmem:[#allocation2 + $0x4e] sm:$0xff]
      %v3852 = vld [vmem:[#allocation2 + $0x56] sm:$0x1]
      %v3853 = vmul.f32 %v3842, %v744
      %v3854 = vmul.f32 %v3843, %v745
      %v3855 = vmul.f32 %v3844, %v746
      %v3856 = vmul.f32 %v3845, %v747
      %v3857 = vmul.f32 %v3846, %v748
      %v3858 = vmul.f32 %v3847, %v749
      %v3859 = vmul.f32 %v3848, %v750
      %v3860 = vmul.f32 %v3849, %v751
      %v3861 = vmul.f32 %v3850, %v752
      %v3862 = vmul.f32 %v3851, %v753
      %v3863 = vmul.f32 %v3852, %v754
      %v3864 = vpack.c.bf16 %v3854, %v3853
      %v3865 = vpack.c.bf16 %v3856, %v3855
      %v3866 = vpack.c.bf16 %v3858, %v3857
      %v3867 = vpack.c.bf16 %v3860, %v3859
      %v3868 = vpack.c.bf16 %v3862, %v3861
      %v3869 = vpack.c.bf16 %v3863, %v3863
      %s3870 = scalar_lea.vmem %s4, 144
      %v3871 = vld [vmem:[%s3870] sm:$0xf]
      %v3872 = vld [vmem:[%s3870 + $0x4] sm:$0xf]
      %v3873 = vld [vmem:[%s3870 + $0x8] sm:$0xf]
      %v3874 = vld [vmem:[%s3870 + $0xc] sm:$0xf]
      %v3875 = vld [vmem:[#allocation2 + $0x7] sm:$0xff]
      %v3876 = vld [vmem:[#allocation2 + $0xf] sm:$0xff]
      %v3877 = vld [vmem:[#allocation2 + $0x17] sm:$0xff]
      %v3878 = vld [vmem:[#allocation2 + $0x1f] sm:$0xff]
      %v3879 = vld [vmem:[#allocation2 + $0x27] sm:$0xff]
      %v3880 = vld [vmem:[#allocation2 + $0x2f] sm:$0xff]
      %v3881 = vld [vmem:[#allocation2 + $0x37] sm:$0xff]
      %v3882 = vld [vmem:[#allocation2 + $0x3f] sm:$0xff]
      %v3883 = vld [vmem:[#allocation2 + $0x47] sm:$0xff]
      %v3884 = vld [vmem:[#allocation2 + $0x4f] sm:$0xff]
      %v3885 = vld [vmem:[#allocation2 + $0x57] sm:$0x1]
      %v3886 = vpack.c.bf16 %v3876, %v3875
      %v3887 = vpack.c.bf16 %v3878, %v3877
      %v3888 = vpack.c.bf16 %v3880, %v3879
      %v3889 = vpack.c.bf16 %v3882, %v3881
      %v3890 = vpack.c.bf16 %v3884, %v3883
      %v3891 = vpack.c.bf16 %v3885, %v3885
      %s3892 = scalar_lea.vmem %s4, 160
      %v3893 = vld [vmem:[%s3892] sm:$0xf]
      %v3894 = vld [vmem:[%s3892 + $0x4] sm:$0xf]
      %v3895 = vld [vmem:[%s3892 + $0x8] sm:$0xf]
      %v3896 = vld [vmem:[%s3892 + $0xc] sm:$0xf]
      %v3901 = vunpack.c.l.b16 %v3893
      %v3902 = vunpack.c.l.b16 %v3894
      %v3903 = vunpack.c.l.b16 %v3895
      %v3904 = vunpack.c.l.b16 %v3896
      %v3905 = vpack.c.b16 %v3902, %v3901
      %v3906 = vpack.c.b16 %v3904, %v3903
      %v3910 = vsel %vm788, %v3886, 0
      %v3913 = vsel %vm788, %v3887, 0
      %v3916 = vsel %vm788, %v3888, 0
      %v3919 = vsel %vm788, %v3889, 0
      %v3922 = vsel %vm788, %v3890, 0
      %v3925 = vsel %vm788, %v3891, 0
      %3927 = vmatprep.subr.bf16.mxu0 0
      %3928 = vmatpush1.bf16.msra.mxu0 0
      %3929 = vmatprep.subr.bf16.mxu0 0
      %3930 = vmatpush1.bf16.msra.mxu0 0
      %3931 = vmatprep.subr.bf16.mxu0 0
      %3932 = vmatpush1.bf16.msra.mxu0 0
      %3933 = vmatprep.subr.bf16.mxu0 0
      %3934 = vmatpush1.bf16.msra.mxu0 0
      %3935 = vmatprep.subr.bf16.mxu0 0
      %3936 = vmatpush1.bf16.msra.mxu0 0
      %3937 = vmatprep.subr.bf16.mxu0 0
      %3938 = vmatpush1.bf16.msra.mxu0 0
      %3939 = vmatprep.subr.bf16.mxu0 0
      %3940 = vmatpush1.bf16.msra.mxu0 %v3906
      %3941 = vmatprep.subr.bf16.mxu0 0
      %3942 = vmatpush1.bf16.msra.mxu0 %v3905
      %3943 = vmatprep.subr.bf16.mxu0 0
      %3944 = vmatpush2.bf16.msra.mxu0 0
      %3945 = vmatprep.subr.bf16.mxu0 0
      %3946 = vmatpush2.bf16.msra.mxu0 0
      %3947 = vmatprep.subr.bf16.mxu0 0
      %3948 = vmatpush2.bf16.msra.mxu0 0
      %3949 = vmatprep.subr.bf16.mxu0 0
      %3950 = vmatpush2.bf16.msra.mxu0 0
      %3951 = vmatprep.subr.bf16.mxu0 0
      %3952 = vmatpush2.bf16.msra.mxu0 0
      %3953 = vmatprep.subr.bf16.mxu0 0
      %3954 = vmatpush2.bf16.msra.mxu0 0
      %3955 = vmatprep.subr.bf16.mxu0 0
      %3956 = vmatpush2.bf16.msra.mxu0 0
      %3957 = vmatprep.subr.bf16.mxu0 0
      %3958 = vmatpush2.bf16.msra.mxu0 0
      %3959 = vmatprep.mubr.bf16.mxu0 0
      %3960 = vmatmul.mubr.bf16.gmra.mxu0 %v3910
      %v3961 = vpop.f32.mrf.mxu0
      %v3962 = vadd.f32 0.0, %v3961
      %v3963 = vpop.f32.mrf.mxu0
      %v3964 = vpop.f32.mrf.mxu0
      %v3965 = vadd.f32 0.0, %v3964
      %v3966 = vpop.f32.mrf.mxu0
      %3967 = vmatprep.mubr.bf16.mxu0 0
      %3968 = vmatmul.mubr.bf16.gmra.mxu0 %v3913
      %v3969 = vpop.f32.mrf.mxu0
      %v3970 = vadd.f32 0.0, %v3969
      %v3971 = vpop.f32.mrf.mxu0
      %v3972 = vpop.f32.mrf.mxu0
      %v3973 = vadd.f32 0.0, %v3972
      %v3974 = vpop.f32.mrf.mxu0
      %3975 = vmatprep.mubr.bf16.mxu0 0
      %3976 = vmatmul.mubr.bf16.gmra.mxu0 %v3916
      %v3977 = vpop.f32.mrf.mxu0
      %v3978 = vadd.f32 0.0, %v3977
      %v3979 = vpop.f32.mrf.mxu0
      %v3980 = vpop.f32.mrf.mxu0
      %v3981 = vadd.f32 0.0, %v3980
      %v3982 = vpop.f32.mrf.mxu0
      %3983 = vmatprep.mubr.bf16.mxu0 0
      %3984 = vmatmul.mubr.bf16.gmra.mxu0 %v3919
      %v3985 = vpop.f32.mrf.mxu0
      %v3986 = vadd.f32 0.0, %v3985
      %v3987 = vpop.f32.mrf.mxu0
      %v3988 = vpop.f32.mrf.mxu0
      %v3989 = vadd.f32 0.0, %v3988
      %v3990 = vpop.f32.mrf.mxu0
      %3991 = vmatprep.mubr.bf16.mxu0 0
      %3992 = vmatmul.mubr.bf16.gmra.mxu0 %v3922
      %v3993 = vpop.f32.mrf.mxu0
      %v3994 = vadd.f32 0.0, %v3993
      %v3995 = vpop.f32.mrf.mxu0
      %v3996 = vpop.f32.mrf.mxu0
      %v3997 = vadd.f32 0.0, %v3996
      %v3998 = vpop.f32.mrf.mxu0
      %3999 = vmatprep.mubr.bf16.mxu0 0
      %4000 = vmatmul.mubr.bf16.gmra.mxu0 %v3925
      %v4001 = vpop.f32.mrf.mxu0
      %v4002 = vadd.f32 0.0, %v4001
      %v4003 = vpop.f32.mrf.mxu0
      %v4004 = vpop.f32.mrf.mxu0
      %v4005 = vpop.f32.mrf.mxu0
      %4006 = vdwg.mxu0
      %v4011 = vunpack.c.l.b16 %v3871
      %v4012 = vunpack.c.l.b16 %v3872
      %v4013 = vunpack.c.l.b16 %v3873
      %v4014 = vunpack.c.l.b16 %v3874
      %v4015 = vpack.c.b16 %v4012, %v4011
      %v4016 = vpack.c.b16 %v4014, %v4013
      %v4020 = vsel %vm788, %v3864, 0
      %v4023 = vsel %vm788, %v3865, 0
      %v4026 = vsel %vm788, %v3866, 0
      %v4029 = vsel %vm788, %v3867, 0
      %v4032 = vsel %vm788, %v3868, 0
      %v4035 = vsel %vm788, %v3869, 0
      %4037 = vmatprep.subr.bf16.mxu0 0
      %4038 = vmatpush1.bf16.msra.mxu0 0
      %4039 = vmatprep.subr.bf16.mxu0 0
      %4040 = vmatpush1.bf16.msra.mxu0 0
      %4041 = vmatprep.subr.bf16.mxu0 0
      %4042 = vmatpush1.bf16.msra.mxu0 0
      %4043 = vmatprep.subr.bf16.mxu0 0
      %4044 = vmatpush1.bf16.msra.mxu0 0
      %4045 = vmatprep.subr.bf16.mxu0 0
      %4046 = vmatpush1.bf16.msra.mxu0 0
      %4047 = vmatprep.subr.bf16.mxu0 0
      %4048 = vmatpush1.bf16.msra.mxu0 0
      %4049 = vmatprep.subr.bf16.mxu0 0
      %4050 = vmatpush1.bf16.msra.mxu0 %v4016
      %4051 = vmatprep.subr.bf16.mxu0 0
      %4052 = vmatpush1.bf16.msra.mxu0 %v4015
      %4053 = vmatprep.subr.bf16.mxu0 0
      %4054 = vmatpush2.bf16.msra.mxu0 0
      %4055 = vmatprep.subr.bf16.mxu0 0
      %4056 = vmatpush2.bf16.msra.mxu0 0
      %4057 = vmatprep.subr.bf16.mxu0 0
      %4058 = vmatpush2.bf16.msra.mxu0 0
      %4059 = vmatprep.subr.bf16.mxu0 0
      %4060 = vmatpush2.bf16.msra.mxu0 0
      %4061 = vmatprep.subr.bf16.mxu0 0
      %4062 = vmatpush2.bf16.msra.mxu0 0
      %4063 = vmatprep.subr.bf16.mxu0 0
      %4064 = vmatpush2.bf16.msra.mxu0 0
      %4065 = vmatprep.subr.bf16.mxu0 0
      %4066 = vmatpush2.bf16.msra.mxu0 0
      %4067 = vmatprep.subr.bf16.mxu0 0
      %4068 = vmatpush2.bf16.msra.mxu0 0
      %4069 = vmatprep.mubr.bf16.mxu0 0
      %4070 = vmatmul.mubr.bf16.gmra.mxu0 %v4020
      %v4071 = vpop.f32.mrf.mxu0
      %v4072 = vadd.f32 %v3962, %v4071
      %v4073 = vpop.f32.mrf.mxu0
      %v4074 = vpop.f32.mrf.mxu0
      %v4075 = vadd.f32 %v3965, %v4074
      %v4076 = vpop.f32.mrf.mxu0
      %4077 = vmatprep.mubr.bf16.mxu0 0
      %4078 = vmatmul.mubr.bf16.gmra.mxu0 %v4023
      %v4079 = vpop.f32.mrf.mxu0
      %v4080 = vadd.f32 %v3970, %v4079
      %v4081 = vpop.f32.mrf.mxu0
      %v4082 = vpop.f32.mrf.mxu0
      %v4083 = vadd.f32 %v3973, %v4082
      %v4084 = vpop.f32.mrf.mxu0
      %4085 = vmatprep.mubr.bf16.mxu0 0
      %4086 = vmatmul.mubr.bf16.gmra.mxu0 %v4026
      %v4087 = vpop.f32.mrf.mxu0
      %v4088 = vadd.f32 %v3978, %v4087
      %v4089 = vpop.f32.mrf.mxu0
      %v4090 = vpop.f32.mrf.mxu0
      %v4091 = vadd.f32 %v3981, %v4090
      %v4092 = vpop.f32.mrf.mxu0
      %4093 = vmatprep.mubr.bf16.mxu0 0
      %4094 = vmatmul.mubr.bf16.gmra.mxu0 %v4029
      %v4095 = vpop.f32.mrf.mxu0
      %v4096 = vadd.f32 %v3986, %v4095
      %v4097 = vpop.f32.mrf.mxu0
      %v4098 = vpop.f32.mrf.mxu0
      %v4099 = vadd.f32 %v3989, %v4098
      %v4100 = vpop.f32.mrf.mxu0
      %4101 = vmatprep.mubr.bf16.mxu0 0
      %4102 = vmatmul.mubr.bf16.gmra.mxu0 %v4032
      %v4103 = vpop.f32.mrf.mxu0
      %v4104 = vadd.f32 %v3994, %v4103
      %v4105 = vpop.f32.mrf.mxu0
      %v4106 = vpop.f32.mrf.mxu0
      %v4107 = vadd.f32 %v3997, %v4106
      %v4108 = vpop.f32.mrf.mxu0
      %4109 = vmatprep.mubr.bf16.mxu0 0
      %4110 = vmatmul.mubr.bf16.gmra.mxu0 %v4035
      %v4111 = vpop.f32.mrf.mxu0
      %v4112 = vadd.f32 %v4002, %v4111
      %v4113 = vpop.f32.mrf.mxu0
      %v4114 = vpop.f32.mrf.mxu0
      %v4115 = vpop.f32.mrf.mxu0
      %4116 = vdwg.mxu0
      %v4117 = vld [vmem:[#allocation2 + $0x8] sm:$0xff]
      %v4118 = vld [vmem:[#allocation2 + $0x10] sm:$0xff]
      %v4119 = vld [vmem:[#allocation2 + $0x18] sm:$0xff]
      %v4120 = vld [vmem:[#allocation2 + $0x20] sm:$0xff]
      %v4121 = vld [vmem:[#allocation2 + $0x28] sm:$0xff]
      %v4122 = vld [vmem:[#allocation2 + $0x30] sm:$0xff]
      %v4123 = vld [vmem:[#allocation2 + $0x38] sm:$0xff]
      %v4124 = vld [vmem:[#allocation2 + $0x40] sm:$0xff]
      %v4125 = vld [vmem:[#allocation2 + $0x48] sm:$0xff]
      %v4126 = vld [vmem:[#allocation2 + $0x50] sm:$0xff]
      %v4127 = vld [vmem:[#allocation2 + $0x58] sm:$0x1]
      %v4128 = vmul.f32 %v4117, %v777
      %v4129 = vmul.f32 %v4118, %v778
      %v4130 = vmul.f32 %v4119, %v779
      %v4131 = vmul.f32 %v4120, %v780
      %v4132 = vmul.f32 %v4121, %v781
      %v4133 = vmul.f32 %v4122, %v782
      %v4134 = vmul.f32 %v4123, %v783
      %v4135 = vmul.f32 %v4124, %v784
      %v4136 = vmul.f32 %v4125, %v785
      %v4137 = vmul.f32 %v4126, %v786
      %v4138 = vmul.f32 %v4127, %v787
      %v4139 = vpack.c.bf16 %v4129, %v4128
      %v4140 = vpack.c.bf16 %v4131, %v4130
      %v4141 = vpack.c.bf16 %v4133, %v4132
      %v4142 = vpack.c.bf16 %v4135, %v4134
      %v4143 = vpack.c.bf16 %v4137, %v4136
      %v4144 = vpack.c.bf16 %v4138, %v4138
      %s4145 = scalar_lea.vmem %s4, 176
      %v4146 = vld [vmem:[%s4145] sm:$0xf]
      %v4147 = vld [vmem:[%s4145 + $0x4] sm:$0xf]
      %v4148 = vld [vmem:[%s4145 + $0x8] sm:$0xf]
      %v4149 = vld [vmem:[%s4145 + $0xc] sm:$0xf]
      %v4154 = vunpack.c.l.b16 %v4146
      %v4155 = vunpack.c.l.b16 %v4147
      %v4156 = vunpack.c.l.b16 %v4148
      %v4157 = vunpack.c.l.b16 %v4149
      %v4158 = vpack.c.b16 %v4155, %v4154
      %v4159 = vpack.c.b16 %v4157, %v4156
      %v4163 = vsel %vm788, %v4139, 0
      %v4166 = vsel %vm788, %v4140, 0
      %v4169 = vsel %vm788, %v4141, 0
      %v4172 = vsel %vm788, %v4142, 0
      %v4175 = vsel %vm788, %v4143, 0
      %v4178 = vsel %vm788, %v4144, 0
      %4180 = vmatprep.subr.bf16.mxu0 0
      %4181 = vmatpush1.bf16.msra.mxu0 0
      %4182 = vmatprep.subr.bf16.mxu0 0
      %4183 = vmatpush1.bf16.msra.mxu0 0
      %4184 = vmatprep.subr.bf16.mxu0 0
      %4185 = vmatpush1.bf16.msra.mxu0 0
      %4186 = vmatprep.subr.bf16.mxu0 0
      %4187 = vmatpush1.bf16.msra.mxu0 0
      %4188 = vmatprep.subr.bf16.mxu0 0
      %4189 = vmatpush1.bf16.msra.mxu0 0
      %4190 = vmatprep.subr.bf16.mxu0 0
      %4191 = vmatpush1.bf16.msra.mxu0 0
      %4192 = vmatprep.subr.bf16.mxu0 0
      %4193 = vmatpush1.bf16.msra.mxu0 %v4159
      %4194 = vmatprep.subr.bf16.mxu0 0
      %4195 = vmatpush1.bf16.msra.mxu0 %v4158
      %4196 = vmatprep.subr.bf16.mxu0 0
      %4197 = vmatpush2.bf16.msra.mxu0 0
      %4198 = vmatprep.subr.bf16.mxu0 0
      %4199 = vmatpush2.bf16.msra.mxu0 0
      %4200 = vmatprep.subr.bf16.mxu0 0
      %4201 = vmatpush2.bf16.msra.mxu0 0
      %4202 = vmatprep.subr.bf16.mxu0 0
      %4203 = vmatpush2.bf16.msra.mxu0 0
      %4204 = vmatprep.subr.bf16.mxu0 0
      %4205 = vmatpush2.bf16.msra.mxu0 0
      %4206 = vmatprep.subr.bf16.mxu0 0
      %4207 = vmatpush2.bf16.msra.mxu0 0
      %4208 = vmatprep.subr.bf16.mxu0 0
      %4209 = vmatpush2.bf16.msra.mxu0 0
      %4210 = vmatprep.subr.bf16.mxu0 0
      %4211 = vmatpush2.bf16.msra.mxu0 0
      %4212 = vmatprep.mubr.bf16.mxu0 0
      %4213 = vmatmul.mubr.bf16.gmra.mxu0 %v4163
      %v4214 = vpop.f32.mrf.mxu0
      %v4215 = vadd.f32 0.0, %v4214
      %v4216 = vpop.f32.mrf.mxu0
      %v4217 = vpop.f32.mrf.mxu0
      %v4218 = vadd.f32 0.0, %v4217
      %v4219 = vpop.f32.mrf.mxu0
      %4220 = vmatprep.mubr.bf16.mxu0 0
      %4221 = vmatmul.mubr.bf16.gmra.mxu0 %v4166
      %v4222 = vpop.f32.mrf.mxu0
      %v4223 = vadd.f32 0.0, %v4222
      %v4224 = vpop.f32.mrf.mxu0
      %v4225 = vpop.f32.mrf.mxu0
      %v4226 = vadd.f32 0.0, %v4225
      %v4227 = vpop.f32.mrf.mxu0
      %4228 = vmatprep.mubr.bf16.mxu0 0
      %4229 = vmatmul.mubr.bf16.gmra.mxu0 %v4169
      %v4230 = vpop.f32.mrf.mxu0
      %v4231 = vadd.f32 0.0, %v4230
      %v4232 = vpop.f32.mrf.mxu0
      %v4233 = vpop.f32.mrf.mxu0
      %v4234 = vadd.f32 0.0, %v4233
      %v4235 = vpop.f32.mrf.mxu0
      %4236 = vmatprep.mubr.bf16.mxu0 0
      %4237 = vmatmul.mubr.bf16.gmra.mxu0 %v4172
      %v4238 = vpop.f32.mrf.mxu0
      %v4239 = vadd.f32 0.0, %v4238
      %v4240 = vpop.f32.mrf.mxu0
      %v4241 = vpop.f32.mrf.mxu0
      %v4242 = vadd.f32 0.0, %v4241
      %v4243 = vpop.f32.mrf.mxu0
      %4244 = vmatprep.mubr.bf16.mxu0 0
      %4245 = vmatmul.mubr.bf16.gmra.mxu0 %v4175
      %v4246 = vpop.f32.mrf.mxu0
      %v4247 = vadd.f32 0.0, %v4246
      %v4248 = vpop.f32.mrf.mxu0
      %v4249 = vpop.f32.mrf.mxu0
      %v4250 = vadd.f32 0.0, %v4249
      %v4251 = vpop.f32.mrf.mxu0
      %4252 = vmatprep.mubr.bf16.mxu0 0
      %4253 = vmatmul.mubr.bf16.gmra.mxu0 %v4178
      %v4254 = vpop.f32.mrf.mxu0
      %v4255 = vadd.f32 0.0, %v4254
      %v4256 = vpop.f32.mrf.mxu0
      %v4257 = vpop.f32.mrf.mxu0
      %v4258 = vpop.f32.mrf.mxu0
      %4259 = vdwg.mxu0
      %v4260 = vadd.f32 %v4072, %v4215
      %v4261 = vadd.f32 %v4075, %v4218
      %v4262 = vadd.f32 %v4080, %v4223
      %v4263 = vadd.f32 %v4083, %v4226
      %v4264 = vadd.f32 %v4088, %v4231
      %v4265 = vadd.f32 %v4091, %v4234
      %v4266 = vadd.f32 %v4096, %v4239
      %v4267 = vadd.f32 %v4099, %v4242
      %v4268 = vadd.f32 %v4104, %v4247
      %v4269 = vadd.f32 %v4107, %v4250
      %v4270 = vadd.f32 %v4112, %v4255
      %v4271 = vld [vmem:[#allocation2 + $0xf] sm:$0xff]
      %v4272 = vld [vmem:[#allocation2 + $0x17] sm:$0xff]
      %v4273 = vld [vmem:[#allocation2 + $0x1f] sm:$0xff]
      %v4274 = vld [vmem:[#allocation2 + $0x27] sm:$0xff]
      %v4275 = vld [vmem:[#allocation2 + $0x2f] sm:$0xff]
      %v4276 = vld [vmem:[#allocation2 + $0x37] sm:$0xff]
      %v4277 = vld [vmem:[#allocation2 + $0x3f] sm:$0xff]
      %v4278 = vld [vmem:[#allocation2 + $0x47] sm:$0xff]
      %v4279 = vld [vmem:[#allocation2 + $0x4f] sm:$0xff]
      %v4280 = vld [vmem:[#allocation2 + $0x57] sm:$0xff]
      %v4281 = vld [vmem:[#allocation2 + $0x5f] sm:$0x1]
      %v4282 = vmul.f32 %v4271, %v744
      %v4283 = vmul.f32 %v4272, %v745
      %v4284 = vmul.f32 %v4273, %v746
      %v4285 = vmul.f32 %v4274, %v747
      %v4286 = vmul.f32 %v4275, %v748
      %v4287 = vmul.f32 %v4276, %v749
      %v4288 = vmul.f32 %v4277, %v750
      %v4289 = vmul.f32 %v4278, %v751
      %v4290 = vmul.f32 %v4279, %v752
      %v4291 = vmul.f32 %v4280, %v753
      %v4292 = vmul.f32 %v4281, %v754
      %v4293 = vpack.c.bf16 %v4283, %v4282
      %v4294 = vpack.c.bf16 %v4285, %v4284
      %v4295 = vpack.c.bf16 %v4287, %v4286
      %v4296 = vpack.c.bf16 %v4289, %v4288
      %v4297 = vpack.c.bf16 %v4291, %v4290
      %v4298 = vpack.c.bf16 %v4292, %v4292
      %s4299 = scalar_lea.vmem %s4, 192
      %v4300 = vld [vmem:[%s4299] sm:$0xf]
      %v4301 = vld [vmem:[%s4299 + $0x4] sm:$0xf]
      %v4302 = vld [vmem:[%s4299 + $0x8] sm:$0xf]
      %v4303 = vld [vmem:[%s4299 + $0xc] sm:$0xf]
      %v4308 = vunpack.c.l.b16 %v4300
      %v4309 = vunpack.c.l.b16 %v4301
      %v4310 = vunpack.c.l.b16 %v4302
      %v4311 = vunpack.c.l.b16 %v4303
      %v4312 = vpack.c.b16 %v4309, %v4308
      %v4313 = vpack.c.b16 %v4311, %v4310
      %v4317 = vsel %vm788, %v4293, 0
      %v4320 = vsel %vm788, %v4294, 0
      %v4323 = vsel %vm788, %v4295, 0
      %v4326 = vsel %vm788, %v4296, 0
      %v4329 = vsel %vm788, %v4297, 0
      %v4332 = vsel %vm788, %v4298, 0
      %4334 = vmatprep.subr.bf16.mxu0 0
      %4335 = vmatpush1.bf16.msra.mxu0 0
      %4336 = vmatprep.subr.bf16.mxu0 0
      %4337 = vmatpush1.bf16.msra.mxu0 0
      %4338 = vmatprep.subr.bf16.mxu0 0
      %4339 = vmatpush1.bf16.msra.mxu0 0
      %4340 = vmatprep.subr.bf16.mxu0 0
      %4341 = vmatpush1.bf16.msra.mxu0 0
      %4342 = vmatprep.subr.bf16.mxu0 0
      %4343 = vmatpush1.bf16.msra.mxu0 0
      %4344 = vmatprep.subr.bf16.mxu0 0
      %4345 = vmatpush1.bf16.msra.mxu0 0
      %4346 = vmatprep.subr.bf16.mxu0 0
      %4347 = vmatpush1.bf16.msra.mxu0 %v4313
      %4348 = vmatprep.subr.bf16.mxu0 0
      %4349 = vmatpush1.bf16.msra.mxu0 %v4312
      %4350 = vmatprep.subr.bf16.mxu0 0
      %4351 = vmatpush2.bf16.msra.mxu0 0
      %4352 = vmatprep.subr.bf16.mxu0 0
      %4353 = vmatpush2.bf16.msra.mxu0 0
      %4354 = vmatprep.subr.bf16.mxu0 0
      %4355 = vmatpush2.bf16.msra.mxu0 0
      %4356 = vmatprep.subr.bf16.mxu0 0
      %4357 = vmatpush2.bf16.msra.mxu0 0
      %4358 = vmatprep.subr.bf16.mxu0 0
      %4359 = vmatpush2.bf16.msra.mxu0 0
      %4360 = vmatprep.subr.bf16.mxu0 0
      %4361 = vmatpush2.bf16.msra.mxu0 0
      %4362 = vmatprep.subr.bf16.mxu0 0
      %4363 = vmatpush2.bf16.msra.mxu0 0
      %4364 = vmatprep.subr.bf16.mxu0 0
      %4365 = vmatpush2.bf16.msra.mxu0 0
      %4366 = vmatprep.mubr.bf16.mxu0 0
      %4367 = vmatmul.mubr.bf16.gmra.mxu0 %v4317
      %v4368 = vpop.f32.mrf.mxu0
      %v4369 = vadd.f32 0.0, %v4368
      %v4370 = vpop.f32.mrf.mxu0
      %v4371 = vpop.f32.mrf.mxu0
      %v4372 = vadd.f32 0.0, %v4371
      %v4373 = vpop.f32.mrf.mxu0
      %4374 = vmatprep.mubr.bf16.mxu0 0
      %4375 = vmatmul.mubr.bf16.gmra.mxu0 %v4320
      %v4376 = vpop.f32.mrf.mxu0
      %v4377 = vadd.f32 0.0, %v4376
      %v4378 = vpop.f32.mrf.mxu0
      %v4379 = vpop.f32.mrf.mxu0
      %v4380 = vadd.f32 0.0, %v4379
      %v4381 = vpop.f32.mrf.mxu0
      %4382 = vmatprep.mubr.bf16.mxu0 0
      %4383 = vmatmul.mubr.bf16.gmra.mxu0 %v4323
      %v4384 = vpop.f32.mrf.mxu0
      %v4385 = vadd.f32 0.0, %v4384
      %v4386 = vpop.f32.mrf.mxu0
      %v4387 = vpop.f32.mrf.mxu0
      %v4388 = vadd.f32 0.0, %v4387
      %v4389 = vpop.f32.mrf.mxu0
      %4390 = vmatprep.mubr.bf16.mxu0 0
      %4391 = vmatmul.mubr.bf16.gmra.mxu0 %v4326
      %v4392 = vpop.f32.mrf.mxu0
      %v4393 = vadd.f32 0.0, %v4392
      %v4394 = vpop.f32.mrf.mxu0
      %v4395 = vpop.f32.mrf.mxu0
      %v4396 = vadd.f32 0.0, %v4395
      %v4397 = vpop.f32.mrf.mxu0
      %4398 = vmatprep.mubr.bf16.mxu0 0
      %4399 = vmatmul.mubr.bf16.gmra.mxu0 %v4329
      %v4400 = vpop.f32.mrf.mxu0
      %v4401 = vadd.f32 0.0, %v4400
      %v4402 = vpop.f32.mrf.mxu0
      %v4403 = vpop.f32.mrf.mxu0
      %v4404 = vadd.f32 0.0, %v4403
      %v4405 = vpop.f32.mrf.mxu0
      %4406 = vmatprep.mubr.bf16.mxu0 0
      %4407 = vmatmul.mubr.bf16.gmra.mxu0 %v4332
      %v4408 = vpop.f32.mrf.mxu0
      %v4409 = vadd.f32 0.0, %v4408
      %v4410 = vpop.f32.mrf.mxu0
      %v4411 = vpop.f32.mrf.mxu0
      %v4412 = vpop.f32.mrf.mxu0
      %4413 = vdwg.mxu0
      %v4414 = vadd.f32 %v4260, %v4369
      %v4415 = vadd.f32 %v4261, %v4372
      %v4416 = vadd.f32 %v4262, %v4377
      %v4417 = vadd.f32 %v4263, %v4380
      %v4418 = vadd.f32 %v4264, %v4385
      %v4419 = vadd.f32 %v4265, %v4388
      %v4420 = vadd.f32 %v4266, %v4393
      %v4421 = vadd.f32 %v4267, %v4396
      %v4422 = vadd.f32 %v4268, %v4401
      %v4423 = vadd.f32 %v4269, %v4404
      %v4424 = vadd.f32 %v4270, %v4409
      %v4425 = vld [vmem:[#allocation2 + $0x10] sm:$0xff]
      %v4426 = vld [vmem:[#allocation2 + $0x18] sm:$0xff]
      %v4427 = vld [vmem:[#allocation2 + $0x20] sm:$0xff]
      %v4428 = vld [vmem:[#allocation2 + $0x28] sm:$0xff]
      %v4429 = vld [vmem:[#allocation2 + $0x30] sm:$0xff]
      %v4430 = vld [vmem:[#allocation2 + $0x38] sm:$0xff]
      %v4431 = vld [vmem:[#allocation2 + $0x40] sm:$0xff]
      %v4432 = vld [vmem:[#allocation2 + $0x48] sm:$0xff]
      %v4433 = vld [vmem:[#allocation2 + $0x50] sm:$0xff]
      %v4434 = vld [vmem:[#allocation2 + $0x58] sm:$0xff]
      %v4435 = vld [vmem:[#allocation2 + $0x60] sm:$0x1]
      %v4436 = vpack.c.bf16 %v4426, %v4425
      %v4437 = vpack.c.bf16 %v4428, %v4427
      %v4438 = vpack.c.bf16 %v4430, %v4429
      %v4439 = vpack.c.bf16 %v4432, %v4431
      %v4440 = vpack.c.bf16 %v4434, %v4433
      %v4441 = vpack.c.bf16 %v4435, %v4435
      %s4442 = scalar_lea.vmem %s4, 208
      %v4443 = vld [vmem:[%s4442] sm:$0xf]
      %v4444 = vld [vmem:[%s4442 + $0x4] sm:$0xf]
      %v4445 = vld [vmem:[%s4442 + $0x8] sm:$0xf]
      %v4446 = vld [vmem:[%s4442 + $0xc] sm:$0xf]
      %v4451 = vunpack.c.l.b16 %v4443
      %v4452 = vunpack.c.l.b16 %v4444
      %v4453 = vunpack.c.l.b16 %v4445
      %v4454 = vunpack.c.l.b16 %v4446
      %v4455 = vpack.c.b16 %v4452, %v4451
      %v4456 = vpack.c.b16 %v4454, %v4453
      %v4460 = vsel %vm788, %v4436, 0
      %v4463 = vsel %vm788, %v4437, 0
      %v4466 = vsel %vm788, %v4438, 0
      %v4469 = vsel %vm788, %v4439, 0
      %v4472 = vsel %vm788, %v4440, 0
      %v4475 = vsel %vm788, %v4441, 0
      %4477 = vmatprep.subr.bf16.mxu0 0
      %4478 = vmatpush1.bf16.msra.mxu0 0
      %4479 = vmatprep.subr.bf16.mxu0 0
      %4480 = vmatpush1.bf16.msra.mxu0 0
      %4481 = vmatprep.subr.bf16.mxu0 0
      %4482 = vmatpush1.bf16.msra.mxu0 0
      %4483 = vmatprep.subr.bf16.mxu0 0
      %4484 = vmatpush1.bf16.msra.mxu0 0
      %4485 = vmatprep.subr.bf16.mxu0 0
      %4486 = vmatpush1.bf16.msra.mxu0 0
      %4487 = vmatprep.subr.bf16.mxu0 0
      %4488 = vmatpush1.bf16.msra.mxu0 0
      %4489 = vmatprep.subr.bf16.mxu0 0
      %4490 = vmatpush1.bf16.msra.mxu0 %v4456
      %4491 = vmatprep.subr.bf16.mxu0 0
      %4492 = vmatpush1.bf16.msra.mxu0 %v4455
      %4493 = vmatprep.subr.bf16.mxu0 0
      %4494 = vmatpush2.bf16.msra.mxu0 0
      %4495 = vmatprep.subr.bf16.mxu0 0
      %4496 = vmatpush2.bf16.msra.mxu0 0
      %4497 = vmatprep.subr.bf16.mxu0 0
      %4498 = vmatpush2.bf16.msra.mxu0 0
      %4499 = vmatprep.subr.bf16.mxu0 0
      %4500 = vmatpush2.bf16.msra.mxu0 0
      %4501 = vmatprep.subr.bf16.mxu0 0
      %4502 = vmatpush2.bf16.msra.mxu0 0
      %4503 = vmatprep.subr.bf16.mxu0 0
      %4504 = vmatpush2.bf16.msra.mxu0 0
      %4505 = vmatprep.subr.bf16.mxu0 0
      %4506 = vmatpush2.bf16.msra.mxu0 0
      %4507 = vmatprep.subr.bf16.mxu0 0
      %4508 = vmatpush2.bf16.msra.mxu0 0
      %4509 = vmatprep.mubr.bf16.mxu0 0
      %4510 = vmatmul.mubr.bf16.gmra.mxu0 %v4460
      %v4511 = vpop.f32.mrf.mxu0
      %v4512 = vadd.f32 0.0, %v4511
      %v4513 = vpop.f32.mrf.mxu0
      %v4514 = vpop.f32.mrf.mxu0
      %v4515 = vadd.f32 0.0, %v4514
      %v4516 = vpop.f32.mrf.mxu0
      %4517 = vmatprep.mubr.bf16.mxu0 0
      %4518 = vmatmul.mubr.bf16.gmra.mxu0 %v4463
      %v4519 = vpop.f32.mrf.mxu0
      %v4520 = vadd.f32 0.0, %v4519
      %v4521 = vpop.f32.mrf.mxu0
      %v4522 = vpop.f32.mrf.mxu0
      %v4523 = vadd.f32 0.0, %v4522
      %v4524 = vpop.f32.mrf.mxu0
      %4525 = vmatprep.mubr.bf16.mxu0 0
      %4526 = vmatmul.mubr.bf16.gmra.mxu0 %v4466
      %v4527 = vpop.f32.mrf.mxu0
      %v4528 = vadd.f32 0.0, %v4527
      %v4529 = vpop.f32.mrf.mxu0
      %v4530 = vpop.f32.mrf.mxu0
      %v4531 = vadd.f32 0.0, %v4530
      %v4532 = vpop.f32.mrf.mxu0
      %4533 = vmatprep.mubr.bf16.mxu0 0
      %4534 = vmatmul.mubr.bf16.gmra.mxu0 %v4469
      %v4535 = vpop.f32.mrf.mxu0
      %v4536 = vadd.f32 0.0, %v4535
      %v4537 = vpop.f32.mrf.mxu0
      %v4538 = vpop.f32.mrf.mxu0
      %v4539 = vadd.f32 0.0, %v4538
      %v4540 = vpop.f32.mrf.mxu0
      %4541 = vmatprep.mubr.bf16.mxu0 0
      %4542 = vmatmul.mubr.bf16.gmra.mxu0 %v4472
      %v4543 = vpop.f32.mrf.mxu0
      %v4544 = vadd.f32 0.0, %v4543
      %v4545 = vpop.f32.mrf.mxu0
      %v4546 = vpop.f32.mrf.mxu0
      %v4547 = vadd.f32 0.0, %v4546
      %v4548 = vpop.f32.mrf.mxu0
      %4549 = vmatprep.mubr.bf16.mxu0 0
      %4550 = vmatmul.mubr.bf16.gmra.mxu0 %v4475
      %v4551 = vpop.f32.mrf.mxu0
      %v4552 = vadd.f32 0.0, %v4551
      %v4553 = vpop.f32.mrf.mxu0
      %v4554 = vpop.f32.mrf.mxu0
      %v4555 = vpop.f32.mrf.mxu0
      %4556 = vdwg.mxu0
      %v4557 = vadd.f32 %v4414, %v4512
      %v4558 = vadd.f32 %v4415, %v4515
      %v4559 = vadd.f32 %v4416, %v4520
      %v4560 = vadd.f32 %v4417, %v4523
      %v4561 = vadd.f32 %v4418, %v4528
      %v4562 = vadd.f32 %v4419, %v4531
      %v4563 = vadd.f32 %v4420, %v4536
      %v4564 = vadd.f32 %v4421, %v4539
      %v4565 = vadd.f32 %v4422, %v4544
      %v4566 = vadd.f32 %v4423, %v4547
      %v4567 = vadd.f32 %v4424, %v4552
      %v4568 = vld [vmem:[#allocation2 + $0x11] sm:$0xff]
      %v4569 = vld [vmem:[#allocation2 + $0x19] sm:$0xff]
      %v4570 = vld [vmem:[#allocation2 + $0x21] sm:$0xff]
      %v4571 = vld [vmem:[#allocation2 + $0x29] sm:$0xff]
      %v4572 = vld [vmem:[#allocation2 + $0x31] sm:$0xff]
      %v4573 = vld [vmem:[#allocation2 + $0x39] sm:$0xff]
      %v4574 = vld [vmem:[#allocation2 + $0x41] sm:$0xff]
      %v4575 = vld [vmem:[#allocation2 + $0x49] sm:$0xff]
      %v4576 = vld [vmem:[#allocation2 + $0x51] sm:$0xff]
      %v4577 = vld [vmem:[#allocation2 + $0x59] sm:$0xff]
      %v4578 = vld [vmem:[#allocation2 + $0x61] sm:$0x1]
      %v4579 = vmul.f32 %v4568, %v777
      %v4580 = vmul.f32 %v4569, %v778
      %v4581 = vmul.f32 %v4570, %v779
      %v4582 = vmul.f32 %v4571, %v780
      %v4583 = vmul.f32 %v4572, %v781
      %v4584 = vmul.f32 %v4573, %v782
      %v4585 = vmul.f32 %v4574, %v783
      %v4586 = vmul.f32 %v4575, %v784
      %v4587 = vmul.f32 %v4576, %v785
      %v4588 = vmul.f32 %v4577, %v786
      %v4589 = vmul.f32 %v4578, %v787
      %v4590 = vpack.c.bf16 %v4580, %v4579
      %v4591 = vpack.c.bf16 %v4582, %v4581
      %v4592 = vpack.c.bf16 %v4584, %v4583
      %v4593 = vpack.c.bf16 %v4586, %v4585
      %v4594 = vpack.c.bf16 %v4588, %v4587
      %v4595 = vpack.c.bf16 %v4589, %v4589
      %s4596 = scalar_lea.vmem %s4, 224
      %v4597 = vld [vmem:[%s4596] sm:$0xf]
      %v4598 = vld [vmem:[%s4596 + $0x4] sm:$0xf]
      %v4599 = vld [vmem:[%s4596 + $0x8] sm:$0xf]
      %v4600 = vld [vmem:[%s4596 + $0xc] sm:$0xf]
      %v4605 = vunpack.c.l.b16 %v4597
      %v4606 = vunpack.c.l.b16 %v4598
      %v4607 = vunpack.c.l.b16 %v4599
      %v4608 = vunpack.c.l.b16 %v4600
      %v4609 = vpack.c.b16 %v4606, %v4605
      %v4610 = vpack.c.b16 %v4608, %v4607
      %v4614 = vsel %vm788, %v4590, 0
      %v4617 = vsel %vm788, %v4591, 0
      %v4620 = vsel %vm788, %v4592, 0
      %v4623 = vsel %vm788, %v4593, 0
      %v4626 = vsel %vm788, %v4594, 0
      %v4629 = vsel %vm788, %v4595, 0
      %4631 = vmatprep.subr.bf16.mxu0 0
      %4632 = vmatpush1.bf16.msra.mxu0 0
      %4633 = vmatprep.subr.bf16.mxu0 0
      %4634 = vmatpush1.bf16.msra.mxu0 0
      %4635 = vmatprep.subr.bf16.mxu0 0
      %4636 = vmatpush1.bf16.msra.mxu0 0
      %4637 = vmatprep.subr.bf16.mxu0 0
      %4638 = vmatpush1.bf16.msra.mxu0 0
      %4639 = vmatprep.subr.bf16.mxu0 0
      %4640 = vmatpush1.bf16.msra.mxu0 0
      %4641 = vmatprep.subr.bf16.mxu0 0
      %4642 = vmatpush1.bf16.msra.mxu0 0
      %4643 = vmatprep.subr.bf16.mxu0 0
      %4644 = vmatpush1.bf16.msra.mxu0 %v4610
      %4645 = vmatprep.subr.bf16.mxu0 0
      %4646 = vmatpush1.bf16.msra.mxu0 %v4609
      %4647 = vmatprep.subr.bf16.mxu0 0
      %4648 = vmatpush2.bf16.msra.mxu0 0
      %4649 = vmatprep.subr.bf16.mxu0 0
      %4650 = vmatpush2.bf16.msra.mxu0 0
      %4651 = vmatprep.subr.bf16.mxu0 0
      %4652 = vmatpush2.bf16.msra.mxu0 0
      %4653 = vmatprep.subr.bf16.mxu0 0
      %4654 = vmatpush2.bf16.msra.mxu0 0
      %4655 = vmatprep.subr.bf16.mxu0 0
      %4656 = vmatpush2.bf16.msra.mxu0 0
      %4657 = vmatprep.subr.bf16.mxu0 0
      %4658 = vmatpush2.bf16.msra.mxu0 0
      %4659 = vmatprep.subr.bf16.mxu0 0
      %4660 = vmatpush2.bf16.msra.mxu0 0
      %4661 = vmatprep.subr.bf16.mxu0 0
      %4662 = vmatpush2.bf16.msra.mxu0 0
      %4663 = vmatprep.mubr.bf16.mxu0 0
      %4664 = vmatmul.mubr.bf16.gmra.mxu0 %v4614
      %v4665 = vpop.f32.mrf.mxu0
      %v4666 = vadd.f32 0.0, %v4665
      %v4667 = vpop.f32.mrf.mxu0
      %v4668 = vpop.f32.mrf.mxu0
      %v4669 = vadd.f32 0.0, %v4668
      %v4670 = vpop.f32.mrf.mxu0
      %4671 = vmatprep.mubr.bf16.mxu0 0
      %4672 = vmatmul.mubr.bf16.gmra.mxu0 %v4617
      %v4673 = vpop.f32.mrf.mxu0
      %v4674 = vadd.f32 0.0, %v4673
      %v4675 = vpop.f32.mrf.mxu0
      %v4676 = vpop.f32.mrf.mxu0
      %v4677 = vadd.f32 0.0, %v4676
      %v4678 = vpop.f32.mrf.mxu0
      %4679 = vmatprep.mubr.bf16.mxu0 0
      %4680 = vmatmul.mubr.bf16.gmra.mxu0 %v4620
      %v4681 = vpop.f32.mrf.mxu0
      %v4682 = vadd.f32 0.0, %v4681
      %v4683 = vpop.f32.mrf.mxu0
      %v4684 = vpop.f32.mrf.mxu0
      %v4685 = vadd.f32 0.0, %v4684
      %v4686 = vpop.f32.mrf.mxu0
      %4687 = vmatprep.mubr.bf16.mxu0 0
      %4688 = vmatmul.mubr.bf16.gmra.mxu0 %v4623
      %v4689 = vpop.f32.mrf.mxu0
      %v4690 = vadd.f32 0.0, %v4689
      %v4691 = vpop.f32.mrf.mxu0
      %v4692 = vpop.f32.mrf.mxu0
      %v4693 = vadd.f32 0.0, %v4692
      %v4694 = vpop.f32.mrf.mxu0
      %4695 = vmatprep.mubr.bf16.mxu0 0
      %4696 = vmatmul.mubr.bf16.gmra.mxu0 %v4626
      %v4697 = vpop.f32.mrf.mxu0
      %v4698 = vadd.f32 0.0, %v4697
      %v4699 = vpop.f32.mrf.mxu0
      %v4700 = vpop.f32.mrf.mxu0
      %v4701 = vadd.f32 0.0, %v4700
      %v4702 = vpop.f32.mrf.mxu0
      %4703 = vmatprep.mubr.bf16.mxu0 0
      %4704 = vmatmul.mubr.bf16.gmra.mxu0 %v4629
      %v4705 = vpop.f32.mrf.mxu0
      %v4706 = vadd.f32 0.0, %v4705
      %v4707 = vpop.f32.mrf.mxu0
      %v4708 = vpop.f32.mrf.mxu0
      %v4709 = vpop.f32.mrf.mxu0
      %4710 = vdwg.mxu0
      %v4711 = vadd.f32 %v4557, %v4666
      %v4712 = vadd.f32 %v4558, %v4669
      %v4713 = vadd.f32 %v4559, %v4674
      %v4714 = vadd.f32 %v4560, %v4677
      %v4715 = vadd.f32 %v4561, %v4682
      %v4716 = vadd.f32 %v4562, %v4685
      %v4717 = vadd.f32 %v4563, %v4690
      %v4718 = vadd.f32 %v4564, %v4693
      %v4719 = vadd.f32 %v4565, %v4698
      %v4720 = vadd.f32 %v4566, %v4701
      %v4721 = vadd.f32 %v4567, %v4706
      %v4722 = vld [vmem:[#allocation2 + $0x18] sm:$0xff]
      %v4723 = vld [vmem:[#allocation2 + $0x20] sm:$0xff]
      %v4724 = vld [vmem:[#allocation2 + $0x28] sm:$0xff]
      %v4725 = vld [vmem:[#allocation2 + $0x30] sm:$0xff]
      %v4726 = vld [vmem:[#allocation2 + $0x38] sm:$0xff]
      %v4727 = vld [vmem:[#allocation2 + $0x40] sm:$0xff]
      %v4728 = vld [vmem:[#allocation2 + $0x48] sm:$0xff]
      %v4729 = vld [vmem:[#allocation2 + $0x50] sm:$0xff]
      %v4730 = vld [vmem:[#allocation2 + $0x58] sm:$0xff]
      %v4731 = vld [vmem:[#allocation2 + $0x60] sm:$0xff]
      %v4732 = vld [vmem:[#allocation2 + $0x68] sm:$0x1]
      %v4733 = vmul.f32 %v4722, %v744
      %v4734 = vmul.f32 %v4723, %v745
      %v4735 = vmul.f32 %v4724, %v746
      %v4736 = vmul.f32 %v4725, %v747
      %v4737 = vmul.f32 %v4726, %v748
      %v4738 = vmul.f32 %v4727, %v749
      %v4739 = vmul.f32 %v4728, %v750
      %v4740 = vmul.f32 %v4729, %v751
      %v4741 = vmul.f32 %v4730, %v752
      %v4742 = vmul.f32 %v4731, %v753
      %v4743 = vmul.f32 %v4732, %v754
      %v4744 = vpack.c.bf16 %v4734, %v4733
      %v4745 = vpack.c.bf16 %v4736, %v4735
      %v4746 = vpack.c.bf16 %v4738, %v4737
      %v4747 = vpack.c.bf16 %v4740, %v4739
      %v4748 = vpack.c.bf16 %v4742, %v4741
      %v4749 = vpack.c.bf16 %v4743, %v4743
      %s4750 = scalar_lea.vmem %s4, 240
      %v4751 = vld [vmem:[%s4750] sm:$0xf]
      %v4752 = vld [vmem:[%s4750 + $0x4] sm:$0xf]
      %v4753 = vld [vmem:[%s4750 + $0x8] sm:$0xf]
      %v4754 = vld [vmem:[%s4750 + $0xc] sm:$0xf]
      %v4759 = vunpack.c.l.b16 %v4751
      %v4760 = vunpack.c.l.b16 %v4752
      %v4761 = vunpack.c.l.b16 %v4753
      %v4762 = vunpack.c.l.b16 %v4754
      %v4763 = vpack.c.b16 %v4760, %v4759
      %v4764 = vpack.c.b16 %v4762, %v4761
      %v4768 = vsel %vm788, %v4744, 0
      %v4771 = vsel %vm788, %v4745, 0
      %v4774 = vsel %vm788, %v4746, 0
      %v4777 = vsel %vm788, %v4747, 0
      %v4780 = vsel %vm788, %v4748, 0
      %v4783 = vsel %vm788, %v4749, 0
      %4785 = vmatprep.subr.bf16.mxu0 0
      %4786 = vmatpush1.bf16.msra.mxu0 0
      %4787 = vmatprep.subr.bf16.mxu0 0
      %4788 = vmatpush1.bf16.msra.mxu0 0
      %4789 = vmatprep.subr.bf16.mxu0 0
      %4790 = vmatpush1.bf16.msra.mxu0 0
      %4791 = vmatprep.subr.bf16.mxu0 0
      %4792 = vmatpush1.bf16.msra.mxu0 0
      %4793 = vmatprep.subr.bf16.mxu0 0
      %4794 = vmatpush1.bf16.msra.mxu0 0
      %4795 = vmatprep.subr.bf16.mxu0 0
      %4796 = vmatpush1.bf16.msra.mxu0 0
      %4797 = vmatprep.subr.bf16.mxu0 0
      %4798 = vmatpush1.bf16.msra.mxu0 %v4764
      %4799 = vmatprep.subr.bf16.mxu0 0
      %4800 = vmatpush1.bf16.msra.mxu0 %v4763
      %4801 = vmatprep.subr.bf16.mxu0 0
      %4802 = vmatpush2.bf16.msra.mxu0 0
      %4803 = vmatprep.subr.bf16.mxu0 0
      %4804 = vmatpush2.bf16.msra.mxu0 0
      %4805 = vmatprep.subr.bf16.mxu0 0
      %4806 = vmatpush2.bf16.msra.mxu0 0
      %4807 = vmatprep.subr.bf16.mxu0 0
      %4808 = vmatpush2.bf16.msra.mxu0 0
      %4809 = vmatprep.subr.bf16.mxu0 0
      %4810 = vmatpush2.bf16.msra.mxu0 0
      %4811 = vmatprep.subr.bf16.mxu0 0
      %4812 = vmatpush2.bf16.msra.mxu0 0
      %4813 = vmatprep.subr.bf16.mxu0 0
      %4814 = vmatpush2.bf16.msra.mxu0 0
      %4815 = vmatprep.subr.bf16.mxu0 0
      %4816 = vmatpush2.bf16.msra.mxu0 0
      %4817 = vmatprep.mubr.bf16.mxu0 0
      %4818 = vmatmul.mubr.bf16.gmra.mxu0 %v4768
      %v4819 = vpop.f32.mrf.mxu0
      %v4820 = vadd.f32 0.0, %v4819
      %v4821 = vpop.f32.mrf.mxu0
      %v4822 = vpop.f32.mrf.mxu0
      %v4823 = vadd.f32 0.0, %v4822
      %v4824 = vpop.f32.mrf.mxu0
      %4825 = vmatprep.mubr.bf16.mxu0 0
      %4826 = vmatmul.mubr.bf16.gmra.mxu0 %v4771
      %v4827 = vpop.f32.mrf.mxu0
      %v4828 = vadd.f32 0.0, %v4827
      %v4829 = vpop.f32.mrf.mxu0
      %v4830 = vpop.f32.mrf.mxu0
      %v4831 = vadd.f32 0.0, %v4830
      %v4832 = vpop.f32.mrf.mxu0
      %4833 = vmatprep.mubr.bf16.mxu0 0
      %4834 = vmatmul.mubr.bf16.gmra.mxu0 %v4774
      %v4835 = vpop.f32.mrf.mxu0
      %v4836 = vadd.f32 0.0, %v4835
      %v4837 = vpop.f32.mrf.mxu0
      %v4838 = vpop.f32.mrf.mxu0
      %v4839 = vadd.f32 0.0, %v4838
      %v4840 = vpop.f32.mrf.mxu0
      %4841 = vmatprep.mubr.bf16.mxu0 0
      %4842 = vmatmul.mubr.bf16.gmra.mxu0 %v4777
      %v4843 = vpop.f32.mrf.mxu0
      %v4844 = vadd.f32 0.0, %v4843
      %v4845 = vpop.f32.mrf.mxu0
      %v4846 = vpop.f32.mrf.mxu0
      %v4847 = vadd.f32 0.0, %v4846
      %v4848 = vpop.f32.mrf.mxu0
      %4849 = vmatprep.mubr.bf16.mxu0 0
      %4850 = vmatmul.mubr.bf16.gmra.mxu0 %v4780
      %v4851 = vpop.f32.mrf.mxu0
      %v4852 = vadd.f32 0.0, %v4851
      %v4853 = vpop.f32.mrf.mxu0
      %v4854 = vpop.f32.mrf.mxu0
      %v4855 = vadd.f32 0.0, %v4854
      %v4856 = vpop.f32.mrf.mxu0
      %4857 = vmatprep.mubr.bf16.mxu0 0
      %4858 = vmatmul.mubr.bf16.gmra.mxu0 %v4783
      %v4859 = vpop.f32.mrf.mxu0
      %v4860 = vadd.f32 0.0, %v4859
      %v4861 = vpop.f32.mrf.mxu0
      %v4862 = vpop.f32.mrf.mxu0
      %v4863 = vpop.f32.mrf.mxu0
      %4864 = vdwg.mxu0
      %v4865 = vadd.f32 %v4711, %v4820
      %v4866 = vadd.f32 %v4712, %v4823
      %v4867 = vadd.f32 %v4713, %v4828
      %v4868 = vadd.f32 %v4714, %v4831
      %v4869 = vadd.f32 %v4715, %v4836
      %v4870 = vadd.f32 %v4716, %v4839
      %v4871 = vadd.f32 %v4717, %v4844
      %v4872 = vadd.f32 %v4718, %v4847
      %v4873 = vadd.f32 %v4719, %v4852
      %v4874 = vadd.f32 %v4720, %v4855
      %v4875 = vadd.f32 %v4721, %v4860
      %v4876 = vld [vmem:[#allocation2 + $0x19] sm:$0xff]
      %v4877 = vld [vmem:[#allocation2 + $0x21] sm:$0xff]
      %v4878 = vld [vmem:[#allocation2 + $0x29] sm:$0xff]
      %v4879 = vld [vmem:[#allocation2 + $0x31] sm:$0xff]
      %v4880 = vld [vmem:[#allocation2 + $0x39] sm:$0xff]
      %v4881 = vld [vmem:[#allocation2 + $0x41] sm:$0xff]
      %v4882 = vld [vmem:[#allocation2 + $0x49] sm:$0xff]
      %v4883 = vld [vmem:[#allocation2 + $0x51] sm:$0xff]
      %v4884 = vld [vmem:[#allocation2 + $0x59] sm:$0xff]
      %v4885 = vld [vmem:[#allocation2 + $0x61] sm:$0xff]
      %v4886 = vld [vmem:[#allocation2 + $0x69] sm:$0x1]
      %v4887 = vpack.c.bf16 %v4877, %v4876
      %v4888 = vpack.c.bf16 %v4879, %v4878
      %v4889 = vpack.c.bf16 %v4881, %v4880
      %v4890 = vpack.c.bf16 %v4883, %v4882
      %v4891 = vpack.c.bf16 %v4885, %v4884
      %v4892 = vpack.c.bf16 %v4886, %v4886
      %s4893 = scalar_lea.vmem %s4, 256
      %v4894 = vld [vmem:[%s4893] sm:$0xf]
      %v4895 = vld [vmem:[%s4893 + $0x4] sm:$0xf]
      %v4896 = vld [vmem:[%s4893 + $0x8] sm:$0xf]
      %v4897 = vld [vmem:[%s4893 + $0xc] sm:$0xf]
      %v4902 = vunpack.c.l.b16 %v4894
      %v4903 = vunpack.c.l.b16 %v4895
      %v4904 = vunpack.c.l.b16 %v4896
      %v4905 = vunpack.c.l.b16 %v4897
      %v4906 = vpack.c.b16 %v4903, %v4902
      %v4907 = vpack.c.b16 %v4905, %v4904
      %v4911 = vsel %vm788, %v4887, 0
      %v4914 = vsel %vm788, %v4888, 0
      %v4917 = vsel %vm788, %v4889, 0
      %v4920 = vsel %vm788, %v4890, 0
      %v4923 = vsel %vm788, %v4891, 0
      %v4926 = vsel %vm788, %v4892, 0
      %4928 = vmatprep.subr.bf16.mxu0 0
      %4929 = vmatpush1.bf16.msra.mxu0 0
      %4930 = vmatprep.subr.bf16.mxu0 0
      %4931 = vmatpush1.bf16.msra.mxu0 0
      %4932 = vmatprep.subr.bf16.mxu0 0
      %4933 = vmatpush1.bf16.msra.mxu0 0
      %4934 = vmatprep.subr.bf16.mxu0 0
      %4935 = vmatpush1.bf16.msra.mxu0 0
      %4936 = vmatprep.subr.bf16.mxu0 0
      %4937 = vmatpush1.bf16.msra.mxu0 0
      %4938 = vmatprep.subr.bf16.mxu0 0
      %4939 = vmatpush1.bf16.msra.mxu0 0
      %4940 = vmatprep.subr.bf16.mxu0 0
      %4941 = vmatpush1.bf16.msra.mxu0 %v4907
      %4942 = vmatprep.subr.bf16.mxu0 0
      %4943 = vmatpush1.bf16.msra.mxu0 %v4906
      %4944 = vmatprep.subr.bf16.mxu0 0
      %4945 = vmatpush2.bf16.msra.mxu0 0
      %4946 = vmatprep.subr.bf16.mxu0 0
      %4947 = vmatpush2.bf16.msra.mxu0 0
      %4948 = vmatprep.subr.bf16.mxu0 0
      %4949 = vmatpush2.bf16.msra.mxu0 0
      %4950 = vmatprep.subr.bf16.mxu0 0
      %4951 = vmatpush2.bf16.msra.mxu0 0
      %4952 = vmatprep.subr.bf16.mxu0 0
      %4953 = vmatpush2.bf16.msra.mxu0 0
      %4954 = vmatprep.subr.bf16.mxu0 0
      %4955 = vmatpush2.bf16.msra.mxu0 0
      %4956 = vmatprep.subr.bf16.mxu0 0
      %4957 = vmatpush2.bf16.msra.mxu0 0
      %4958 = vmatprep.subr.bf16.mxu0 0
      %4959 = vmatpush2.bf16.msra.mxu0 0
      %4960 = vmatprep.mubr.bf16.mxu0 0
      %4961 = vmatmul.mubr.bf16.gmra.mxu0 %v4911
      %v4962 = vpop.f32.mrf.mxu0
      %v4963 = vadd.f32 0.0, %v4962
      %v4964 = vpop.f32.mrf.mxu0
      %v4965 = vpop.f32.mrf.mxu0
      %v4966 = vadd.f32 0.0, %v4965
      %v4967 = vpop.f32.mrf.mxu0
      %4968 = vmatprep.mubr.bf16.mxu0 0
      %4969 = vmatmul.mubr.bf16.gmra.mxu0 %v4914
      %v4970 = vpop.f32.mrf.mxu0
      %v4971 = vadd.f32 0.0, %v4970
      %v4972 = vpop.f32.mrf.mxu0
      %v4973 = vpop.f32.mrf.mxu0
      %v4974 = vadd.f32 0.0, %v4973
      %v4975 = vpop.f32.mrf.mxu0
      %4976 = vmatprep.mubr.bf16.mxu0 0
      %4977 = vmatmul.mubr.bf16.gmra.mxu0 %v4917
      %v4978 = vpop.f32.mrf.mxu0
      %v4979 = vadd.f32 0.0, %v4978
      %v4980 = vpop.f32.mrf.mxu0
      %v4981 = vpop.f32.mrf.mxu0
      %v4982 = vadd.f32 0.0, %v4981
      %v4983 = vpop.f32.mrf.mxu0
      %4984 = vmatprep.mubr.bf16.mxu0 0
      %4985 = vmatmul.mubr.bf16.gmra.mxu0 %v4920
      %v4986 = vpop.f32.mrf.mxu0
      %v4987 = vadd.f32 0.0, %v4986
      %v4988 = vpop.f32.mrf.mxu0
      %v4989 = vpop.f32.mrf.mxu0
      %v4990 = vadd.f32 0.0, %v4989
      %v4991 = vpop.f32.mrf.mxu0
      %4992 = vmatprep.mubr.bf16.mxu0 0
      %4993 = vmatmul.mubr.bf16.gmra.mxu0 %v4923
      %v4994 = vpop.f32.mrf.mxu0
      %v4995 = vadd.f32 0.0, %v4994
      %v4996 = vpop.f32.mrf.mxu0
      %v4997 = vpop.f32.mrf.mxu0
      %v4998 = vadd.f32 0.0, %v4997
      %v4999 = vpop.f32.mrf.mxu0
      %5000 = vmatprep.mubr.bf16.mxu0 0
      %5001 = vmatmul.mubr.bf16.gmra.mxu0 %v4926
      %v5002 = vpop.f32.mrf.mxu0
      %v5003 = vadd.f32 0.0, %v5002
      %v5004 = vpop.f32.mrf.mxu0
      %v5005 = vpop.f32.mrf.mxu0
      %v5006 = vpop.f32.mrf.mxu0
      %5007 = vdwg.mxu0
      %v5008 = vadd.f32 %v4865, %v4963
      %v5009 = vadd.f32 %v4866, %v4966
      %v5010 = vadd.f32 %v4867, %v4971
      %v5011 = vadd.f32 %v4868, %v4974
      %v5012 = vadd.f32 %v4869, %v4979
      %v5013 = vadd.f32 %v4870, %v4982
      %v5014 = vadd.f32 %v4871, %v4987
      %v5015 = vadd.f32 %v4872, %v4990
      %v5016 = vadd.f32 %v4873, %v4995
      %v5017 = vadd.f32 %v4874, %v4998
      %v5018 = vadd.f32 %v4875, %v5003
      %v5019 = vld [vmem:[#allocation2 + $0x1a] sm:$0xff]
      %v5020 = vld [vmem:[#allocation2 + $0x22] sm:$0xff]
      %v5021 = vld [vmem:[#allocation2 + $0x2a] sm:$0xff]
      %v5022 = vld [vmem:[#allocation2 + $0x32] sm:$0xff]
      %v5023 = vld [vmem:[#allocation2 + $0x3a] sm:$0xff]
      %v5024 = vld [vmem:[#allocation2 + $0x42] sm:$0xff]
      %v5025 = vld [vmem:[#allocation2 + $0x4a] sm:$0xff]
      %v5026 = vld [vmem:[#allocation2 + $0x52] sm:$0xff]
      %v5027 = vld [vmem:[#allocation2 + $0x5a] sm:$0xff]
      %v5028 = vld [vmem:[#allocation2 + $0x62] sm:$0xff]
      %v5029 = vld [vmem:[#allocation2 + $0x6a] sm:$0x1]
      %v5030 = vmul.f32 %v5019, %v777
      %v5031 = vmul.f32 %v5020, %v778
      %v5032 = vmul.f32 %v5021, %v779
      %v5033 = vmul.f32 %v5022, %v780
      %v5034 = vmul.f32 %v5023, %v781
      %v5035 = vmul.f32 %v5024, %v782
      %v5036 = vmul.f32 %v5025, %v783
      %v5037 = vmul.f32 %v5026, %v784
      %v5038 = vmul.f32 %v5027, %v785
      %v5039 = vmul.f32 %v5028, %v786
      %v5040 = vmul.f32 %v5029, %v787
      %v5041 = vpack.c.bf16 %v5031, %v5030
      %v5042 = vpack.c.bf16 %v5033, %v5032
      %v5043 = vpack.c.bf16 %v5035, %v5034
      %v5044 = vpack.c.bf16 %v5037, %v5036
      %v5045 = vpack.c.bf16 %v5039, %v5038
      %v5046 = vpack.c.bf16 %v5040, %v5040
      %s5047 = scalar_lea.vmem %s4, 272
      %v5048 = vld [vmem:[%s5047] sm:$0xf]
      %v5049 = vld [vmem:[%s5047 + $0x4] sm:$0xf]
      %v5050 = vld [vmem:[%s5047 + $0x8] sm:$0xf]
      %v5051 = vld [vmem:[%s5047 + $0xc] sm:$0xf]
      %v5056 = vunpack.c.l.b16 %v5048
      %v5057 = vunpack.c.l.b16 %v5049
      %v5058 = vunpack.c.l.b16 %v5050
      %v5059 = vunpack.c.l.b16 %v5051
      %v5060 = vpack.c.b16 %v5057, %v5056
      %v5061 = vpack.c.b16 %v5059, %v5058
      %v5065 = vsel %vm788, %v5041, 0
      %v5068 = vsel %vm788, %v5042, 0
      %v5071 = vsel %vm788, %v5043, 0
      %v5074 = vsel %vm788, %v5044, 0
      %v5077 = vsel %vm788, %v5045, 0
      %v5080 = vsel %vm788, %v5046, 0
      %5082 = vmatprep.subr.bf16.mxu0 0
      %5083 = vmatpush1.bf16.msra.mxu0 0
      %5084 = vmatprep.subr.bf16.mxu0 0
      %5085 = vmatpush1.bf16.msra.mxu0 0
      %5086 = vmatprep.subr.bf16.mxu0 0
      %5087 = vmatpush1.bf16.msra.mxu0 0
      %5088 = vmatprep.subr.bf16.mxu0 0
      %5089 = vmatpush1.bf16.msra.mxu0 0
      %5090 = vmatprep.subr.bf16.mxu0 0
      %5091 = vmatpush1.bf16.msra.mxu0 0
      %5092 = vmatprep.subr.bf16.mxu0 0
      %5093 = vmatpush1.bf16.msra.mxu0 0
      %5094 = vmatprep.subr.bf16.mxu0 0
      %5095 = vmatpush1.bf16.msra.mxu0 %v5061
      %5096 = vmatprep.subr.bf16.mxu0 0
      %5097 = vmatpush1.bf16.msra.mxu0 %v5060
      %5098 = vmatprep.subr.bf16.mxu0 0
      %5099 = vmatpush2.bf16.msra.mxu0 0
      %5100 = vmatprep.subr.bf16.mxu0 0
      %5101 = vmatpush2.bf16.msra.mxu0 0
      %5102 = vmatprep.subr.bf16.mxu0 0
      %5103 = vmatpush2.bf16.msra.mxu0 0
      %5104 = vmatprep.subr.bf16.mxu0 0
      %5105 = vmatpush2.bf16.msra.mxu0 0
      %5106 = vmatprep.subr.bf16.mxu0 0
      %5107 = vmatpush2.bf16.msra.mxu0 0
      %5108 = vmatprep.subr.bf16.mxu0 0
      %5109 = vmatpush2.bf16.msra.mxu0 0
      %5110 = vmatprep.subr.bf16.mxu0 0
      %5111 = vmatpush2.bf16.msra.mxu0 0
      %5112 = vmatprep.subr.bf16.mxu0 0
      %5113 = vmatpush2.bf16.msra.mxu0 0
      %5114 = vmatprep.mubr.bf16.mxu0 0
      %5115 = vmatmul.mubr.bf16.gmra.mxu0 %v5065
      %v5116 = vpop.f32.mrf.mxu0
      %v5117 = vadd.f32 0.0, %v5116
      %v5118 = vpop.f32.mrf.mxu0
      %v5119 = vpop.f32.mrf.mxu0
      %v5120 = vadd.f32 0.0, %v5119
      %v5121 = vpop.f32.mrf.mxu0
      %5122 = vmatprep.mubr.bf16.mxu0 0
      %5123 = vmatmul.mubr.bf16.gmra.mxu0 %v5068
      %v5124 = vpop.f32.mrf.mxu0
      %v5125 = vadd.f32 0.0, %v5124
      %v5126 = vpop.f32.mrf.mxu0
      %v5127 = vpop.f32.mrf.mxu0
      %v5128 = vadd.f32 0.0, %v5127
      %v5129 = vpop.f32.mrf.mxu0
      %5130 = vmatprep.mubr.bf16.mxu0 0
      %5131 = vmatmul.mubr.bf16.gmra.mxu0 %v5071
      %v5132 = vpop.f32.mrf.mxu0
      %v5133 = vadd.f32 0.0, %v5132
      %v5134 = vpop.f32.mrf.mxu0
      %v5135 = vpop.f32.mrf.mxu0
      %v5136 = vadd.f32 0.0, %v5135
      %v5137 = vpop.f32.mrf.mxu0
      %5138 = vmatprep.mubr.bf16.mxu0 0
      %5139 = vmatmul.mubr.bf16.gmra.mxu0 %v5074
      %v5140 = vpop.f32.mrf.mxu0
      %v5141 = vadd.f32 0.0, %v5140
      %v5142 = vpop.f32.mrf.mxu0
      %v5143 = vpop.f32.mrf.mxu0
      %v5144 = vadd.f32 0.0, %v5143
      %v5145 = vpop.f32.mrf.mxu0
      %5146 = vmatprep.mubr.bf16.mxu0 0
      %5147 = vmatmul.mubr.bf16.gmra.mxu0 %v5077
      %v5148 = vpop.f32.mrf.mxu0
      %v5149 = vadd.f32 0.0, %v5148
      %v5150 = vpop.f32.mrf.mxu0
      %v5151 = vpop.f32.mrf.mxu0
      %v5152 = vadd.f32 0.0, %v5151
      %v5153 = vpop.f32.mrf.mxu0
      %5154 = vmatprep.mubr.bf16.mxu0 0
      %5155 = vmatmul.mubr.bf16.gmra.mxu0 %v5080
      %v5156 = vpop.f32.mrf.mxu0
      %v5157 = vadd.f32 0.0, %v5156
      %v5158 = vpop.f32.mrf.mxu0
      %v5159 = vpop.f32.mrf.mxu0
      %v5160 = vpop.f32.mrf.mxu0
      %5161 = vdwg.mxu0
      %v5162 = vadd.f32 %v5008, %v5117
      %v5163 = vadd.f32 %v5009, %v5120
      %v5164 = vadd.f32 %v5010, %v5125
      %v5165 = vadd.f32 %v5011, %v5128
      %v5166 = vadd.f32 %v5012, %v5133
      %v5167 = vadd.f32 %v5013, %v5136
      %v5168 = vadd.f32 %v5014, %v5141
      %v5169 = vadd.f32 %v5015, %v5144
      %v5170 = vadd.f32 %v5016, %v5149
      %v5171 = vadd.f32 %v5017, %v5152
      %v5172 = vadd.f32 %v5018, %v5157
      %v5173 = vsel %vm788, %v5162, 0.0
      %v5174 = vsel %vm788, %v5163, 0.0
      %v5175 = vadd.f32 %v5173, %v5174
      %v5176 = vsel %vm788, %v5164, 0.0
      %v5177 = vadd.f32 %v5175, %v5176
      %v5178 = vsel %vm788, %v5165, 0.0
      %v5179 = vadd.f32 %v5177, %v5178
      %v5180 = vsel %vm788, %v5166, 0.0
      %v5181 = vadd.f32 %v5179, %v5180
      %v5182 = vsel %vm788, %v5167, 0.0
      %v5183 = vadd.f32 %v5181, %v5182
      %v5184 = vsel %vm788, %v5168, 0.0
      %v5185 = vadd.f32 %v5183, %v5184
      %v5186 = vsel %vm788, %v5169, 0.0
      %v5187 = vadd.f32 %v5185, %v5186
      %v5188 = vsel %vm788, %v5170, 0.0
      %v5189 = vadd.f32 %v5187, %v5188
      %v5190 = vsel %vm788, %v5171, 0.0
      %v5191 = vadd.f32 %v5189, %v5190
      %v5192 = vsel %vm847, %v5172, 0.0
      %v5193 = vadd.f32 %v5191, %v5192
      %5194 = vadd.xlane.f32.xlu0 %v5193
      %v5195 = vpop.xlane.xlu0 %5194
      %v5196 = vrot.slane %v5195, 4
      %v5197 = vadd.f32 %v5195, %v5196
      %v5198 = vrot.slane %v5197, 2
      %v5199 = vadd.f32 %v5197, %v5198
      %v5200 = vrot.slane %v5199, 1
      %v5201 = vadd.f32 %v5199, %v5200
      %s5202 = vtos %v5201
      %v5203 = vstv %s5202
      %v5204 = vmul.f32 %v5203, %v2210
      %v5205 = vsub.f32 %v5162, %v5204
      %v5206 = vsub.f32 %v5163, %v5204
      %v5207 = vsub.f32 %v5164, %v5204
      %v5208 = vsub.f32 %v5165, %v5204
      %v5209 = vsub.f32 %v5166, %v5204
      %v5210 = vsub.f32 %v5167, %v5204
      %v5211 = vsub.f32 %v5168, %v5204
      %v5212 = vsub.f32 %v5169, %v5204
      %v5213 = vsub.f32 %v5170, %v5204
      %v5214 = vsub.f32 %v5171, %v5204
      %v5215 = vsub.f32 %v5172, %v5204
      %v5216 = vmul.f32 %v5205, %v5205
      %v5217 = vmul.f32 %v5206, %v5206
      %v5218 = vmul.f32 %v5207, %v5207
      %v5219 = vmul.f32 %v5208, %v5208
      %v5220 = vmul.f32 %v5209, %v5209
      %v5221 = vmul.f32 %v5210, %v5210
      %v5222 = vmul.f32 %v5211, %v5211
      %v5223 = vmul.f32 %v5212, %v5212
      %v5224 = vmul.f32 %v5213, %v5213
      %v5225 = vmul.f32 %v5214, %v5214
      %v5226 = vmul.f32 %v5215, %v5215
      %v5227 = vsel %vm788, %v5216, 0.0
      %v5228 = vsel %vm788, %v5217, 0.0
      %v5229 = vadd.f32 %v5227, %v5228
      %v5230 = vsel %vm788, %v5218, 0.0
      %v5231 = vadd.f32 %v5229, %v5230
      %v5232 = vsel %vm788, %v5219, 0.0
      %v5233 = vadd.f32 %v5231, %v5232
      %v5234 = vsel %vm788, %v5220, 0.0
      %v5235 = vadd.f32 %v5233, %v5234
      %v5236 = vsel %vm788, %v5221, 0.0
      %v5237 = vadd.f32 %v5235, %v5236
      %v5238 = vsel %vm788, %v5222, 0.0
      %v5239 = vadd.f32 %v5237, %v5238
      %v5240 = vsel %vm788, %v5223, 0.0
      %v5241 = vadd.f32 %v5239, %v5240
      %v5242 = vsel %vm788, %v5224, 0.0
      %v5243 = vadd.f32 %v5241, %v5242
      %v5244 = vsel %vm788, %v5225, 0.0
      %v5245 = vadd.f32 %v5243, %v5244
      %v5246 = vsel %vm847, %v5226, 0.0
      %v5247 = vadd.f32 %v5245, %v5246
      %5248 = vadd.xlane.f32.xlu0 %v5247
      %v5249 = vpop.xlane.xlu0 %5248
      %v5250 = vrot.slane %v5249, 4
      %v5251 = vadd.f32 %v5249, %v5250
      %v5252 = vrot.slane %v5251, 2
      %v5253 = vadd.f32 %v5251, %v5252
      %v5254 = vrot.slane %v5253, 1
      %v5255 = vadd.f32 %v5253, %v5254
      %s5256 = vtos %v5255
      %v5257 = vstv %s5256
      %v5258 = vmul.f32 %v5257, %v2210
      %v5259 = vadd.f32 %v5258, 1e-05
      %v5260 = vrsqrt.pop %v5259
      %v5261 = vmul.f32 %v5205, %v5260
      %v5262 = vmul.f32 %v5206, %v5260
      %v5263 = vmul.f32 %v5207, %v5260
      %v5264 = vmul.f32 %v5208, %v5260
      %v5265 = vmul.f32 %v5209, %v5260
      %v5266 = vmul.f32 %v5210, %v5260
      %v5267 = vmul.f32 %v5211, %v5260
      %v5268 = vmul.f32 %v5212, %v5260
      %v5269 = vmul.f32 %v5213, %v5260
      %v5270 = vmul.f32 %v5214, %v5260
      %v5271 = vmul.f32 %v5215, %v5260
      %v5272 = vmul.f32 %v5261, %v3808
      %v5273 = vmul.f32 %v5262, %v3809
      %v5274 = vmul.f32 %v5263, %v3810
      %v5275 = vmul.f32 %v5264, %v3811
      %v5276 = vmul.f32 %v5265, %v3812
      %v5277 = vmul.f32 %v5266, %v3813
      %v5278 = vmul.f32 %v5267, %v3814
      %v5279 = vmul.f32 %v5268, %v3815
      %v5280 = vmul.f32 %v5269, %v3816
      %v5281 = vmul.f32 %v5270, %v3817
      %v5282 = vmul.f32 %v5271, %v3818
      %v5283 = vadd.f32 %v5272, %v3820
      %v5284 = vadd.f32 %v5273, %v3821
      %v5285 = vadd.f32 %v5274, %v3822
      %v5286 = vadd.f32 %v5275, %v3823
      %v5287 = vadd.f32 %v5276, %v3824
      %v5288 = vadd.f32 %v5277, %v3825
      %v5289 = vadd.f32 %v5278, %v3826
      %v5290 = vadd.f32 %v5279, %v3827
      %v5291 = vadd.f32 %v5280, %v3828
      %v5292 = vadd.f32 %v5281, %v3829
      %v5293 = vadd.f32 %v5282, %v3830
      %v5294 = vsel %vm788, %v5283, 0.0
      %v5295 = vsel %vm788, %v5284, 0.0
      %v5296 = vadd.f32 %v5294, %v5295
      %v5297 = vsel %vm788, %v5285, 0.0
      %v5298 = vadd.f32 %v5296, %v5297
      %v5299 = vsel %vm788, %v5286, 0.0
      %v5300 = vadd.f32 %v5298, %v5299
      %v5301 = vsel %vm788, %v5287, 0.0
      %v5302 = vadd.f32 %v5300, %v5301
      %v5303 = vsel %vm788, %v5288, 0.0
      %v5304 = vadd.f32 %v5302, %v5303
      %v5305 = vsel %vm788, %v5289, 0.0
      %v5306 = vadd.f32 %v5304, %v5305
      %v5307 = vsel %vm788, %v5290, 0.0
      %v5308 = vadd.f32 %v5306, %v5307
      %v5309 = vsel %vm788, %v5291, 0.0
      %v5310 = vadd.f32 %v5308, %v5309
      %v5311 = vsel %vm788, %v5292, 0.0
      %v5312 = vadd.f32 %v5310, %v5311
      %v5313 = vsel %vm847, %v5293, 0.0
      %v5314 = vadd.f32 %v5312, %v5313
      %v5315 = vrot.slane %v5314, 4
      %v5316 = vadd.f32 %v5314, %v5315
      %v5317 = vrot.slane %v5316, 2
      %v5318 = vadd.f32 %v5316, %v5317
      %v5319 = vrot.slane %v5318, 1
      %v5320 = vadd.f32 %v5318, %v5319
      %v5321 = vrcp.pop 81.0
      %v5322 = vmul.f32 %v5320, %v5321
      %v5323 = vld [vmem:[%s7] sm:$0xff]
      %v5324 = vld [vmem:[%s7 + $0x8] sm:$0xff]
      %v5325 = vld [vmem:[%s7 + $0x10] sm:$0xff]
      %v5326 = vld [vmem:[%s7 + $0x18] sm:$0xff]
      %v5328 = vsel %vm788, %v5322, 0
      %5330 = vmatprep.subr.mxu0 0.0
      %5331 = vmatpush1.msra.mxu0 0.0
      %5332 = vmatprep.subr.mxu0 0.0
      %5333 = vmatpush1.msra.mxu0 0.0
      %5334 = vmatprep.subr.mxu0 0.0
      %5335 = vmatpush1.msra.mxu0 0.0
      %5336 = vmatprep.subr.mxu0 0.0
      %5337 = vmatpush1.msra.mxu0 0.0
      %5338 = vmatprep.subr.mxu0 0.0
      %5339 = vmatpush1.msra.mxu0 0.0
      %5340 = vmatprep.subr.mxu0 0.0
      %5341 = vmatpush1.msra.mxu0 0.0
      %5342 = vmatprep.subr.mxu0 0.0
      %5343 = vmatpush1.msra.mxu0 0.0
      %5344 = vmatprep.subr.mxu0 0.0
      %5345 = vmatpush1.msra.mxu0 0.0
      %5346 = vmatprep.subr.mxu0 0.0
      %5347 = vmatpush1.msra.mxu0 0.0
      %5348 = vmatprep.subr.mxu0 0.0
      %5349 = vmatpush1.msra.mxu0 0.0
      %5350 = vmatprep.subr.mxu0 0.0
      %5351 = vmatpush1.msra.mxu0 0.0
      %5352 = vmatprep.subr.mxu0 0.0
      %5353 = vmatpush1.msra.mxu0 0.0
      %5354 = vmatprep.subr.mxu0 0.0
      %5355 = vmatpush1.msra.mxu0 %v5326
      %5356 = vmatprep.subr.mxu0 0.0
      %5357 = vmatpush1.msra.mxu0 %v5325
      %5358 = vmatprep.subr.mxu0 0.0
      %5359 = vmatpush1.msra.mxu0 %v5324
      %5360 = vmatprep.subr.mxu0 0.0
      %5361 = vmatpush1.msra.mxu0 %v5323
      %5362 = vmatprep.subr.mxu0 0.0
      %5363 = vmatpush2.msra.mxu0 0.0
      %5364 = vmatprep.subr.mxu0 0.0
      %5365 = vmatpush2.msra.mxu0 0.0
      %5366 = vmatprep.subr.mxu0 0.0
      %5367 = vmatpush2.msra.mxu0 0.0
      %5368 = vmatprep.subr.mxu0 0.0
      %5369 = vmatpush2.msra.mxu0 0.0
      %5370 = vmatprep.subr.mxu0 0.0
      %5371 = vmatpush2.msra.mxu0 0.0
      %5372 = vmatprep.subr.mxu0 0.0
      %5373 = vmatpush2.msra.mxu0 0.0
      %5374 = vmatprep.subr.mxu0 0.0
      %5375 = vmatpush2.msra.mxu0 0.0
      %5376 = vmatprep.subr.mxu0 0.0
      %5377 = vmatpush2.msra.mxu0 0.0
      %5378 = vmatprep.subr.mxu0 0.0
      %5379 = vmatpush2.msra.mxu0 0.0
      %5380 = vmatprep.subr.mxu0 0.0
      %5381 = vmatpush2.msra.mxu0 0.0
      %5382 = vmatprep.subr.mxu0 0.0
      %5383 = vmatpush2.msra.mxu0 0.0
      %5384 = vmatprep.subr.mxu0 0.0
      %5385 = vmatpush2.msra.mxu0 0.0
      %5386 = vmatprep.subr.mxu0 0.0
      %5387 = vmatpush2.msra.mxu0 0.0
      %5388 = vmatprep.subr.mxu0 0.0
      %5389 = vmatpush2.msra.mxu0 0.0
      %5390 = vmatprep.subr.mxu0 0.0
      %5391 = vmatpush2.msra.mxu0 0.0
      %5392 = vmatprep.subr.mxu0 0.0
      %5393 = vmatpush2.msra.mxu0 0.0
      %5394 = vmatprep.mubr.f32.mxu0 0.0
      %5395 = vmatmul.mubr.f32.gmra.mxu0 %v5328
      %v5396 = vpop.f32.mrf.mxu0
      %v5397 = vadd.f32 0.0, %v5396
      %v5398 = vpop.f32.mrf.mxu0
      %5399 = vdwg.mxu0
      %v5400 = vmax.f32 %v5397, 0.0
      %v5401 = vld [vmem:[%s8] sm:$0xf]
      %vm5402 = vcmask 31744
      %v5404 = vsel %vm5402, %v5400, 0
      %vm5406 = vcmask 1043456
      %v5408 = vsel %vm5406, %v5401, 0
      %5410 = vmatprep.subr.mxu0 0.0
      %5411 = vmatpush1.msra.mxu0 0.0
      %5412 = vmatprep.subr.mxu0 0.0
      %5413 = vmatpush1.msra.mxu0 0.0
      %5414 = vmatprep.subr.mxu0 0.0
      %5415 = vmatpush1.msra.mxu0 0.0
      %5416 = vmatprep.subr.mxu0 0.0
      %5417 = vmatpush1.msra.mxu0 0.0
      %5418 = vmatprep.subr.mxu0 0.0
      %5419 = vmatpush1.msra.mxu0 0.0
      %5420 = vmatprep.subr.mxu0 0.0
      %5421 = vmatpush1.msra.mxu0 0.0
      %5422 = vmatprep.subr.mxu0 0.0
      %5423 = vmatpush1.msra.mxu0 0.0
      %5424 = vmatprep.subr.mxu0 0.0
      %5425 = vmatpush1.msra.mxu0 0.0
      %5426 = vmatprep.subr.mxu0 0.0
      %5427 = vmatpush1.msra.mxu0 0.0
      %5428 = vmatprep.subr.mxu0 0.0
      %5429 = vmatpush1.msra.mxu0 0.0
      %5430 = vmatprep.subr.mxu0 0.0
      %5431 = vmatpush1.msra.mxu0 0.0
      %5432 = vmatprep.subr.mxu0 0.0
      %5433 = vmatpush1.msra.mxu0 0.0
      %5434 = vmatprep.subr.mxu0 0.0
      %5435 = vmatpush1.msra.mxu0 0.0
      %5436 = vmatprep.subr.mxu0 0.0
      %5437 = vmatpush1.msra.mxu0 0.0
      %5438 = vmatprep.subr.mxu0 0.0
      %5439 = vmatpush1.msra.mxu0 0.0
      %5440 = vmatprep.subr.mxu0 0.0
      %5441 = vmatpush1.msra.mxu0 %v5408
      %5442 = vmatprep.subr.mxu0 0.0
      %5443 = vmatpush2.msra.mxu0 0.0
      %5444 = vmatprep.subr.mxu0 0.0
      %5445 = vmatpush2.msra.mxu0 0.0
      %5446 = vmatprep.subr.mxu0 0.0
      %5447 = vmatpush2.msra.mxu0 0.0
      %5448 = vmatprep.subr.mxu0 0.0
      %5449 = vmatpush2.msra.mxu0 0.0
      %5450 = vmatprep.subr.mxu0 0.0
      %5451 = vmatpush2.msra.mxu0 0.0
      %5452 = vmatprep.subr.mxu0 0.0
      %5453 = vmatpush2.msra.mxu0 0.0
      %5454 = vmatprep.subr.mxu0 0.0
      %5455 = vmatpush2.msra.mxu0 0.0
      %5456 = vmatprep.subr.mxu0 0.0
      %5457 = vmatpush2.msra.mxu0 0.0
      %5458 = vmatprep.subr.mxu0 0.0
      %5459 = vmatpush2.msra.mxu0 0.0
      %5460 = vmatprep.subr.mxu0 0.0
      %5461 = vmatpush2.msra.mxu0 0.0
      %5462 = vmatprep.subr.mxu0 0.0
      %5463 = vmatpush2.msra.mxu0 0.0
      %5464 = vmatprep.subr.mxu0 0.0
      %5465 = vmatpush2.msra.mxu0 0.0
      %5466 = vmatprep.subr.mxu0 0.0
      %5467 = vmatpush2.msra.mxu0 0.0
      %5468 = vmatprep.subr.mxu0 0.0
      %5469 = vmatpush2.msra.mxu0 0.0
      %5470 = vmatprep.subr.mxu0 0.0
      %5471 = vmatpush2.msra.mxu0 0.0
      %5472 = vmatprep.subr.mxu0 0.0
      %5473 = vmatpush2.msra.mxu0 0.0
      %5474 = vmatprep.mubr.f32.mxu0 0.0
      %5475 = vmatmul.mubr.f32.gmra.mxu0 %v5404
      %v5476 = vpop.f32.mrf.mxu0
      %v5477 = vadd.f32 0.0, %v5476
      %v5478 = vpop.f32.mrf.mxu0
      %5479 = vdwg.mxu0
      %v5480 = vxor.u32 %v5477, 2147483648
      %v5481 = vmul.f32 %v5480, 1.442695
      %v5482 = vpow.pop %v5481
      %v5483 = vadd.f32 %v5482, 1.0
      %v5484 = vrcp.pop %v5483
      %v5485 = vmul.f32 1.0, %v5484
      %v5486 = vlaneseq
      %v5487 = vshrl.u32 %v5486, 7
      %v5488 = vsub.s32 0, %v5487
      %v5489 = vrot.slane %v5485, %v5488
      %v5490 = vmul.f32 %v5283, %v5489
      %v5491 = vmul.f32 %v5284, %v5489
      %v5492 = vmul.f32 %v5285, %v5489
      %v5493 = vmul.f32 %v5286, %v5489
      %v5494 = vmul.f32 %v5287, %v5489
      %v5495 = vmul.f32 %v5288, %v5489
      %v5496 = vmul.f32 %v5289, %v5489
      %v5497 = vmul.f32 %v5290, %v5489
      %v5498 = vmul.f32 %v5291, %v5489
      %v5499 = vmul.f32 %v5292, %v5489
      %v5500 = vmul.f32 %v5293, %v5489
      %v5501 = vadd.f32 %v2301, %v5490
      %v5502 = vadd.f32 %v2302, %v5491
      %v5503 = vadd.f32 %v2303, %v5492
      %v5504 = vadd.f32 %v2304, %v5493
      %v5505 = vadd.f32 %v2305, %v5494
      %v5506 = vadd.f32 %v2306, %v5495
      %v5507 = vadd.f32 %v2307, %v5496
      %v5508 = vadd.f32 %v2308, %v5497
      %v5509 = vadd.f32 %v2309, %v5498
      %v5510 = vadd.f32 %v2310, %v5499
      %v5511 = vadd.f32 %v2311, %v5500
      %v5512 = vmax.f32 %v5501, 0.0
      %v5513 = vmax.f32 %v5502, 0.0
      %v5514 = vmax.f32 %v5503, 0.0
      %v5515 = vmax.f32 %v5504, 0.0
      %v5516 = vmax.f32 %v5505, 0.0
      %v5517 = vmax.f32 %v5506, 0.0
      %v5518 = vmax.f32 %v5507, 0.0
      %v5519 = vmax.f32 %v5508, 0.0
      %v5520 = vmax.f32 %v5509, 0.0
      %v5521 = vmax.f32 %v5510, 0.0
      %v5522 = vmax.f32 %v5511, 0.0
      %s5523 = scalar_lea.vmem %s5, 176
      %v5524 = vld [vmem:[%s5523] sm:$0xff]
      %v5525 = vld [vmem:[%s5523 + $0x8] sm:$0xff]
      %v5526 = vld [vmem:[%s5523 + $0x10] sm:$0xff]
      %v5527 = vld [vmem:[%s5523 + $0x18] sm:$0xff]
      %v5528 = vld [vmem:[%s5523 + $0x20] sm:$0xff]
      %v5529 = vld [vmem:[%s5523 + $0x28] sm:$0xff]
      %v5530 = vld [vmem:[%s5523 + $0x30] sm:$0xff]
      %v5531 = vld [vmem:[%s5523 + $0x38] sm:$0xff]
      %v5532 = vld [vmem:[%s5523 + $0x40] sm:$0xff]
      %v5533 = vld [vmem:[%s5523 + $0x48] sm:$0xff]
      %v5534 = vld [vmem:[%s5523 + $0x50] sm:$0x1]
      %s5535 = scalar_lea.vmem %s6, 176
      %v5536 = vld [vmem:[%s5535] sm:$0xff]
      %v5537 = vld [vmem:[%s5535 + $0x8] sm:$0xff]
      %v5538 = vld [vmem:[%s5535 + $0x10] sm:$0xff]
      %v5539 = vld [vmem:[%s5535 + $0x18] sm:$0xff]
      %v5540 = vld [vmem:[%s5535 + $0x20] sm:$0xff]
      %v5541 = vld [vmem:[%s5535 + $0x28] sm:$0xff]
      %v5542 = vld [vmem:[%s5535 + $0x30] sm:$0xff]
      %v5543 = vld [vmem:[%s5535 + $0x38] sm:$0xff]
      %v5544 = vld [vmem:[%s5535 + $0x40] sm:$0xff]
      %v5545 = vld [vmem:[%s5535 + $0x48] sm:$0xff]
      %v5546 = vld [vmem:[%s5535 + $0x50] sm:$0x1]
      %5547 = vst.msk [vmem:[#allocation2 + $0x10] sm:$0xff] %vm788, %v5512
      %5548 = vst.msk [vmem:[#allocation2 + $0x18] sm:$0xff] %vm788, %v5513
      %5549 = vst.msk [vmem:[#allocation2 + $0x20] sm:$0xff] %vm788, %v5514
      %5550 = vst.msk [vmem:[#allocation2 + $0x28] sm:$0xff] %vm788, %v5515
      %5551 = vst.msk [vmem:[#allocation2 + $0x30] sm:$0xff] %vm788, %v5516
      %5552 = vst.msk [vmem:[#allocation2 + $0x38] sm:$0xff] %vm788, %v5517
      %5553 = vst.msk [vmem:[#allocation2 + $0x40] sm:$0xff] %vm788, %v5518
      %5554 = vst.msk [vmem:[#allocation2 + $0x48] sm:$0xff] %vm788, %v5519
      %5555 = vst.msk [vmem:[#allocation2 + $0x50] sm:$0xff] %vm788, %v5520
      %5556 = vst.msk [vmem:[#allocation2 + $0x58] sm:$0xff] %vm788, %v5521
      %5557 = vst.msk [vmem:[#allocation2 + $0x60] sm:$0x1] %vm847, %v5522
      %v5558 = vld [vmem:[#allocation2 + $0x6] sm:$0xff]
      %v5559 = vld [vmem:[#allocation2 + $0xe] sm:$0xff]
      %v5560 = vld [vmem:[#allocation2 + $0x16] sm:$0xff]
      %v5561 = vld [vmem:[#allocation2 + $0x1e] sm:$0xff]
      %v5562 = vld [vmem:[#allocation2 + $0x26] sm:$0xff]
      %v5563 = vld [vmem:[#allocation2 + $0x2e] sm:$0xff]
      %v5564 = vld [vmem:[#allocation2 + $0x36] sm:$0xff]
      %v5565 = vld [vmem:[#allocation2 + $0x3e] sm:$0xff]
      %v5566 = vld [vmem:[#allocation2 + $0x46] sm:$0xff]
      %v5567 = vld [vmem:[#allocation2 + $0x4e] sm:$0xff]
      %v5568 = vld [vmem:[#allocation2 + $0x56] sm:$0x1]
      %v5569 = vmul.f32 %v5558, %v744
      %v5570 = vmul.f32 %v5559, %v745
      %v5571 = vmul.f32 %v5560, %v746
      %v5572 = vmul.f32 %v5561, %v747
      %v5573 = vmul.f32 %v5562, %v748
      %v5574 = vmul.f32 %v5563, %v749
      %v5575 = vmul.f32 %v5564, %v750
      %v5576 = vmul.f32 %v5565, %v751
      %v5577 = vmul.f32 %v5566, %v752
      %v5578 = vmul.f32 %v5567, %v753
      %v5579 = vmul.f32 %v5568, %v754
      %v5580 = vpack.c.bf16 %v5570, %v5569
      %v5581 = vpack.c.bf16 %v5572, %v5571
      %v5582 = vpack.c.bf16 %v5574, %v5573
      %v5583 = vpack.c.bf16 %v5576, %v5575
      %v5584 = vpack.c.bf16 %v5578, %v5577
      %v5585 = vpack.c.bf16 %v5579, %v5579
      %s5586 = scalar_lea.vmem %s4, 288
      %v5587 = vld [vmem:[%s5586] sm:$0xf]
      %v5588 = vld [vmem:[%s5586 + $0x4] sm:$0xf]
      %v5589 = vld [vmem:[%s5586 + $0x8] sm:$0xf]
      %v5590 = vld [vmem:[%s5586 + $0xc] sm:$0xf]
      %v5591 = vld [vmem:[#allocation2 + $0x7] sm:$0xff]
      %v5592 = vld [vmem:[#allocation2 + $0xf] sm:$0xff]
      %v5593 = vld [vmem:[#allocation2 + $0x17] sm:$0xff]
      %v5594 = vld [vmem:[#allocation2 + $0x1f] sm:$0xff]
      %v5595 = vld [vmem:[#allocation2 + $0x27] sm:$0xff]
      %v5596 = vld [vmem:[#allocation2 + $0x2f] sm:$0xff]
      %v5597 = vld [vmem:[#allocation2 + $0x37] sm:$0xff]
      %v5598 = vld [vmem:[#allocation2 + $0x3f] sm:$0xff]
      %v5599 = vld [vmem:[#allocation2 + $0x47] sm:$0xff]
      %v5600 = vld [vmem:[#allocation2 + $0x4f] sm:$0xff]
      %v5601 = vld [vmem:[#allocation2 + $0x57] sm:$0x1]
      %v5602 = vpack.c.bf16 %v5592, %v5591
      %v5603 = vpack.c.bf16 %v5594, %v5593
      %v5604 = vpack.c.bf16 %v5596, %v5595
      %v5605 = vpack.c.bf16 %v5598, %v5597
      %v5606 = vpack.c.bf16 %v5600, %v5599
      %v5607 = vpack.c.bf16 %v5601, %v5601
      %s5608 = scalar_lea.vmem %s4, 304
      %v5609 = vld [vmem:[%s5608] sm:$0xf]
      %v5610 = vld [vmem:[%s5608 + $0x4] sm:$0xf]
      %v5611 = vld [vmem:[%s5608 + $0x8] sm:$0xf]
      %v5612 = vld [vmem:[%s5608 + $0xc] sm:$0xf]
      %v5617 = vunpack.c.l.b16 %v5609
      %v5618 = vunpack.c.l.b16 %v5610
      %v5619 = vunpack.c.l.b16 %v5611
      %v5620 = vunpack.c.l.b16 %v5612
      %v5621 = vpack.c.b16 %v5618, %v5617
      %v5622 = vpack.c.b16 %v5620, %v5619
      %v5626 = vsel %vm788, %v5602, 0
      %v5629 = vsel %vm788, %v5603, 0
      %v5632 = vsel %vm788, %v5604, 0
      %v5635 = vsel %vm788, %v5605, 0
      %v5638 = vsel %vm788, %v5606, 0
      %v5641 = vsel %vm788, %v5607, 0
      %5643 = vmatprep.subr.bf16.mxu0 0
      %5644 = vmatpush1.bf16.msra.mxu0 0
      %5645 = vmatprep.subr.bf16.mxu0 0
      %5646 = vmatpush1.bf16.msra.mxu0 0
      %5647 = vmatprep.subr.bf16.mxu0 0
      %5648 = vmatpush1.bf16.msra.mxu0 0
      %5649 = vmatprep.subr.bf16.mxu0 0
      %5650 = vmatpush1.bf16.msra.mxu0 0
      %5651 = vmatprep.subr.bf16.mxu0 0
      %5652 = vmatpush1.bf16.msra.mxu0 0
      %5653 = vmatprep.subr.bf16.mxu0 0
      %5654 = vmatpush1.bf16.msra.mxu0 0
      %5655 = vmatprep.subr.bf16.mxu0 0
      %5656 = vmatpush1.bf16.msra.mxu0 %v5622
      %5657 = vmatprep.subr.bf16.mxu0 0
      %5658 = vmatpush1.bf16.msra.mxu0 %v5621
      %5659 = vmatprep.subr.bf16.mxu0 0
      %5660 = vmatpush2.bf16.msra.mxu0 0
      %5661 = vmatprep.subr.bf16.mxu0 0
      %5662 = vmatpush2.bf16.msra.mxu0 0
      %5663 = vmatprep.subr.bf16.mxu0 0
      %5664 = vmatpush2.bf16.msra.mxu0 0
      %5665 = vmatprep.subr.bf16.mxu0 0
      %5666 = vmatpush2.bf16.msra.mxu0 0
      %5667 = vmatprep.subr.bf16.mxu0 0
      %5668 = vmatpush2.bf16.msra.mxu0 0
      %5669 = vmatprep.subr.bf16.mxu0 0
      %5670 = vmatpush2.bf16.msra.mxu0 0
      %5671 = vmatprep.subr.bf16.mxu0 0
      %5672 = vmatpush2.bf16.msra.mxu0 0
      %5673 = vmatprep.subr.bf16.mxu0 0
      %5674 = vmatpush2.bf16.msra.mxu0 0
      %5675 = vmatprep.mubr.bf16.mxu0 0
      %5676 = vmatmul.mubr.bf16.gmra.mxu0 %v5626
      %v5677 = vpop.f32.mrf.mxu0
      %v5678 = vadd.f32 0.0, %v5677
      %v5679 = vpop.f32.mrf.mxu0
      %v5680 = vpop.f32.mrf.mxu0
      %v5681 = vadd.f32 0.0, %v5680
      %v5682 = vpop.f32.mrf.mxu0
      %5683 = vmatprep.mubr.bf16.mxu0 0
      %5684 = vmatmul.mubr.bf16.gmra.mxu0 %v5629
      %v5685 = vpop.f32.mrf.mxu0
      %v5686 = vadd.f32 0.0, %v5685
      %v5687 = vpop.f32.mrf.mxu0
      %v5688 = vpop.f32.mrf.mxu0
      %v5689 = vadd.f32 0.0, %v5688
      %v5690 = vpop.f32.mrf.mxu0
      %5691 = vmatprep.mubr.bf16.mxu0 0
      %5692 = vmatmul.mubr.bf16.gmra.mxu0 %v5632
      %v5693 = vpop.f32.mrf.mxu0
      %v5694 = vadd.f32 0.0, %v5693
      %v5695 = vpop.f32.mrf.mxu0
      %v5696 = vpop.f32.mrf.mxu0
      %v5697 = vadd.f32 0.0, %v5696
      %v5698 = vpop.f32.mrf.mxu0
      %5699 = vmatprep.mubr.bf16.mxu0 0
      %5700 = vmatmul.mubr.bf16.gmra.mxu0 %v5635
      %v5701 = vpop.f32.mrf.mxu0
      %v5702 = vadd.f32 0.0, %v5701
      %v5703 = vpop.f32.mrf.mxu0
      %v5704 = vpop.f32.mrf.mxu0
      %v5705 = vadd.f32 0.0, %v5704
      %v5706 = vpop.f32.mrf.mxu0
      %5707 = vmatprep.mubr.bf16.mxu0 0
      %5708 = vmatmul.mubr.bf16.gmra.mxu0 %v5638
      %v5709 = vpop.f32.mrf.mxu0
      %v5710 = vadd.f32 0.0, %v5709
      %v5711 = vpop.f32.mrf.mxu0
      %v5712 = vpop.f32.mrf.mxu0
      %v5713 = vadd.f32 0.0, %v5712
      %v5714 = vpop.f32.mrf.mxu0
      %5715 = vmatprep.mubr.bf16.mxu0 0
      %5716 = vmatmul.mubr.bf16.gmra.mxu0 %v5641
      %v5717 = vpop.f32.mrf.mxu0
      %v5718 = vadd.f32 0.0, %v5717
      %v5719 = vpop.f32.mrf.mxu0
      %v5720 = vpop.f32.mrf.mxu0
      %v5721 = vpop.f32.mrf.mxu0
      %5722 = vdwg.mxu0
      %v5727 = vunpack.c.l.b16 %v5587
      %v5728 = vunpack.c.l.b16 %v5588
      %v5729 = vunpack.c.l.b16 %v5589
      %v5730 = vunpack.c.l.b16 %v5590
      %v5731 = vpack.c.b16 %v5728, %v5727
      %v5732 = vpack.c.b16 %v5730, %v5729
      %v5736 = vsel %vm788, %v5580, 0
      %v5739 = vsel %vm788, %v5581, 0
      %v5742 = vsel %vm788, %v5582, 0
      %v5745 = vsel %vm788, %v5583, 0
      %v5748 = vsel %vm788, %v5584, 0
      %v5751 = vsel %vm788, %v5585, 0
      %5753 = vmatprep.subr.bf16.mxu0 0
      %5754 = vmatpush1.bf16.msra.mxu0 0
      %5755 = vmatprep.subr.bf16.mxu0 0
      %5756 = vmatpush1.bf16.msra.mxu0 0
      %5757 = vmatprep.subr.bf16.mxu0 0
      %5758 = vmatpush1.bf16.msra.mxu0 0
      %5759 = vmatprep.subr.bf16.mxu0 0
      %5760 = vmatpush1.bf16.msra.mxu0 0
      %5761 = vmatprep.subr.bf16.mxu0 0
      %5762 = vmatpush1.bf16.msra.mxu0 0
      %5763 = vmatprep.subr.bf16.mxu0 0
      %5764 = vmatpush1.bf16.msra.mxu0 0
      %5765 = vmatprep.subr.bf16.mxu0 0
      %5766 = vmatpush1.bf16.msra.mxu0 %v5732
      %5767 = vmatprep.subr.bf16.mxu0 0
      %5768 = vmatpush1.bf16.msra.mxu0 %v5731
      %5769 = vmatprep.subr.bf16.mxu0 0
      %5770 = vmatpush2.bf16.msra.mxu0 0
      %5771 = vmatprep.subr.bf16.mxu0 0
      %5772 = vmatpush2.bf16.msra.mxu0 0
      %5773 = vmatprep.subr.bf16.mxu0 0
      %5774 = vmatpush2.bf16.msra.mxu0 0
      %5775 = vmatprep.subr.bf16.mxu0 0
      %5776 = vmatpush2.bf16.msra.mxu0 0
      %5777 = vmatprep.subr.bf16.mxu0 0
      %5778 = vmatpush2.bf16.msra.mxu0 0
      %5779 = vmatprep.subr.bf16.mxu0 0
      %5780 = vmatpush2.bf16.msra.mxu0 0
      %5781 = vmatprep.subr.bf16.mxu0 0
      %5782 = vmatpush2.bf16.msra.mxu0 0
      %5783 = vmatprep.subr.bf16.mxu0 0
      %5784 = vmatpush2.bf16.msra.mxu0 0
      %5785 = vmatprep.mubr.bf16.mxu0 0
      %5786 = vmatmul.mubr.bf16.gmra.mxu0 %v5736
      %v5787 = vpop.f32.mrf.mxu0
      %v5788 = vadd.f32 %v5678, %v5787
      %v5789 = vpop.f32.mrf.mxu0
      %v5790 = vpop.f32.mrf.mxu0
      %v5791 = vadd.f32 %v5681, %v5790
      %v5792 = vpop.f32.mrf.mxu0
      %5793 = vmatprep.mubr.bf16.mxu0 0
      %5794 = vmatmul.mubr.bf16.gmra.mxu0 %v5739
      %v5795 = vpop.f32.mrf.mxu0
      %v5796 = vadd.f32 %v5686, %v5795
      %v5797 = vpop.f32.mrf.mxu0
      %v5798 = vpop.f32.mrf.mxu0
      %v5799 = vadd.f32 %v5689, %v5798
      %v5800 = vpop.f32.mrf.mxu0
      %5801 = vmatprep.mubr.bf16.mxu0 0
      %5802 = vmatmul.mubr.bf16.gmra.mxu0 %v5742
      %v5803 = vpop.f32.mrf.mxu0
      %v5804 = vadd.f32 %v5694, %v5803
      %v5805 = vpop.f32.mrf.mxu0
      %v5806 = vpop.f32.mrf.mxu0
      %v5807 = vadd.f32 %v5697, %v5806
      %v5808 = vpop.f32.mrf.mxu0
      %5809 = vmatprep.mubr.bf16.mxu0 0
      %5810 = vmatmul.mubr.bf16.gmra.mxu0 %v5745
      %v5811 = vpop.f32.mrf.mxu0
      %v5812 = vadd.f32 %v5702, %v5811
      %v5813 = vpop.f32.mrf.mxu0
      %v5814 = vpop.f32.mrf.mxu0
      %v5815 = vadd.f32 %v5705, %v5814
      %v5816 = vpop.f32.mrf.mxu0
      %5817 = vmatprep.mubr.bf16.mxu0 0
      %5818 = vmatmul.mubr.bf16.gmra.mxu0 %v5748
      %v5819 = vpop.f32.mrf.mxu0
      %v5820 = vadd.f32 %v5710, %v5819
      %v5821 = vpop.f32.mrf.mxu0
      %v5822 = vpop.f32.mrf.mxu0
      %v5823 = vadd.f32 %v5713, %v5822
      %v5824 = vpop.f32.mrf.mxu0
      %5825 = vmatprep.mubr.bf16.mxu0 0
      %5826 = vmatmul.mubr.bf16.gmra.mxu0 %v5751
      %v5827 = vpop.f32.mrf.mxu0
      %v5828 = vadd.f32 %v5718, %v5827
      %v5829 = vpop.f32.mrf.mxu0
      %v5830 = vpop.f32.mrf.mxu0
      %v5831 = vpop.f32.mrf.mxu0
      %5832 = vdwg.mxu0
      %v5833 = vld [vmem:[#allocation2 + $0x8] sm:$0xff]
      %v5834 = vld [vmem:[#allocation2 + $0x10] sm:$0xff]
      %v5835 = vld [vmem:[#allocation2 + $0x18] sm:$0xff]
      %v5836 = vld [vmem:[#allocation2 + $0x20] sm:$0xff]
      %v5837 = vld [vmem:[#allocation2 + $0x28] sm:$0xff]
      %v5838 = vld [vmem:[#allocation2 + $0x30] sm:$0xff]
      %v5839 = vld [vmem:[#allocation2 + $0x38] sm:$0xff]
      %v5840 = vld [vmem:[#allocation2 + $0x40] sm:$0xff]
      %v5841 = vld [vmem:[#allocation2 + $0x48] sm:$0xff]
      %v5842 = vld [vmem:[#allocation2 + $0x50] sm:$0xff]
      %v5843 = vld [vmem:[#allocation2 + $0x58] sm:$0x1]
      %v5844 = vmul.f32 %v5833, %v777
      %v5845 = vmul.f32 %v5834, %v778
      %v5846 = vmul.f32 %v5835, %v779
      %v5847 = vmul.f32 %v5836, %v780
      %v5848 = vmul.f32 %v5837, %v781
      %v5849 = vmul.f32 %v5838, %v782
      %v5850 = vmul.f32 %v5839, %v783
      %v5851 = vmul.f32 %v5840, %v784
      %v5852 = vmul.f32 %v5841, %v785
      %v5853 = vmul.f32 %v5842, %v786
      %v5854 = vmul.f32 %v5843, %v787
      %v5855 = vpack.c.bf16 %v5845, %v5844
      %v5856 = vpack.c.bf16 %v5847, %v5846
      %v5857 = vpack.c.bf16 %v5849, %v5848
      %v5858 = vpack.c.bf16 %v5851, %v5850
      %v5859 = vpack.c.bf16 %v5853, %v5852
      %v5860 = vpack.c.bf16 %v5854, %v5854
      %s5861 = scalar_lea.vmem %s4, 320
      %v5862 = vld [vmem:[%s5861] sm:$0xf]
      %v5863 = vld [vmem:[%s5861 + $0x4] sm:$0xf]
      %v5864 = vld [vmem:[%s5861 + $0x8] sm:$0xf]
      %v5865 = vld [vmem:[%s5861 + $0xc] sm:$0xf]
      %v5870 = vunpack.c.l.b16 %v5862
      %v5871 = vunpack.c.l.b16 %v5863
      %v5872 = vunpack.c.l.b16 %v5864
      %v5873 = vunpack.c.l.b16 %v5865
      %v5874 = vpack.c.b16 %v5871, %v5870
      %v5875 = vpack.c.b16 %v5873, %v5872
      %v5879 = vsel %vm788, %v5855, 0
      %v5882 = vsel %vm788, %v5856, 0
      %v5885 = vsel %vm788, %v5857, 0
      %v5888 = vsel %vm788, %v5858, 0
      %v5891 = vsel %vm788, %v5859, 0
      %v5894 = vsel %vm788, %v5860, 0
      %5896 = vmatprep.subr.bf16.mxu0 0
      %5897 = vmatpush1.bf16.msra.mxu0 0
      %5898 = vmatprep.subr.bf16.mxu0 0
      %5899 = vmatpush1.bf16.msra.mxu0 0
      %5900 = vmatprep.subr.bf16.mxu0 0
      %5901 = vmatpush1.bf16.msra.mxu0 0
      %5902 = vmatprep.subr.bf16.mxu0 0
      %5903 = vmatpush1.bf16.msra.mxu0 0
      %5904 = vmatprep.subr.bf16.mxu0 0
      %5905 = vmatpush1.bf16.msra.mxu0 0
      %5906 = vmatprep.subr.bf16.mxu0 0
      %5907 = vmatpush1.bf16.msra.mxu0 0
      %5908 = vmatprep.subr.bf16.mxu0 0
      %5909 = vmatpush1.bf16.msra.mxu0 %v5875
      %5910 = vmatprep.subr.bf16.mxu0 0
      %5911 = vmatpush1.bf16.msra.mxu0 %v5874
      %5912 = vmatprep.subr.bf16.mxu0 0
      %5913 = vmatpush2.bf16.msra.mxu0 0
      %5914 = vmatprep.subr.bf16.mxu0 0
      %5915 = vmatpush2.bf16.msra.mxu0 0
      %5916 = vmatprep.subr.bf16.mxu0 0
      %5917 = vmatpush2.bf16.msra.mxu0 0
      %5918 = vmatprep.subr.bf16.mxu0 0
      %5919 = vmatpush2.bf16.msra.mxu0 0
      %5920 = vmatprep.subr.bf16.mxu0 0
      %5921 = vmatpush2.bf16.msra.mxu0 0
      %5922 = vmatprep.subr.bf16.mxu0 0
      %5923 = vmatpush2.bf16.msra.mxu0 0
      %5924 = vmatprep.subr.bf16.mxu0 0
      %5925 = vmatpush2.bf16.msra.mxu0 0
      %5926 = vmatprep.subr.bf16.mxu0 0
      %5927 = vmatpush2.bf16.msra.mxu0 0
      %5928 = vmatprep.mubr.bf16.mxu0 0
      %5929 = vmatmul.mubr.bf16.gmra.mxu0 %v5879
      %v5930 = vpop.f32.mrf.mxu0
      %v5931 = vadd.f32 0.0, %v5930
      %v5932 = vpop.f32.mrf.mxu0
      %v5933 = vpop.f32.mrf.mxu0
      %v5934 = vadd.f32 0.0, %v5933
      %v5935 = vpop.f32.mrf.mxu0
      %5936 = vmatprep.mubr.bf16.mxu0 0
      %5937 = vmatmul.mubr.bf16.gmra.mxu0 %v5882
      %v5938 = vpop.f32.mrf.mxu0
      %v5939 = vadd.f32 0.0, %v5938
      %v5940 = vpop.f32.mrf.mxu0
      %v5941 = vpop.f32.mrf.mxu0
      %v5942 = vadd.f32 0.0, %v5941
      %v5943 = vpop.f32.mrf.mxu0
      %5944 = vmatprep.mubr.bf16.mxu0 0
      %5945 = vmatmul.mubr.bf16.gmra.mxu0 %v5885
      %v5946 = vpop.f32.mrf.mxu0
      %v5947 = vadd.f32 0.0, %v5946
      %v5948 = vpop.f32.mrf.mxu0
      %v5949 = vpop.f32.mrf.mxu0
      %v5950 = vadd.f32 0.0, %v5949
      %v5951 = vpop.f32.mrf.mxu0
      %5952 = vmatprep.mubr.bf16.mxu0 0
      %5953 = vmatmul.mubr.bf16.gmra.mxu0 %v5888
      %v5954 = vpop.f32.mrf.mxu0
      %v5955 = vadd.f32 0.0, %v5954
      %v5956 = vpop.f32.mrf.mxu0
      %v5957 = vpop.f32.mrf.mxu0
      %v5958 = vadd.f32 0.0, %v5957
      %v5959 = vpop.f32.mrf.mxu0
      %5960 = vmatprep.mubr.bf16.mxu0 0
      %5961 = vmatmul.mubr.bf16.gmra.mxu0 %v5891
      %v5962 = vpop.f32.mrf.mxu0
      %v5963 = vadd.f32 0.0, %v5962
      %v5964 = vpop.f32.mrf.mxu0
      %v5965 = vpop.f32.mrf.mxu0
      %v5966 = vadd.f32 0.0, %v5965
      %v5967 = vpop.f32.mrf.mxu0
      %5968 = vmatprep.mubr.bf16.mxu0 0
      %5969 = vmatmul.mubr.bf16.gmra.mxu0 %v5894
      %v5970 = vpop.f32.mrf.mxu0
      %v5971 = vadd.f32 0.0, %v5970
      %v5972 = vpop.f32.mrf.mxu0
      %v5973 = vpop.f32.mrf.mxu0
      %v5974 = vpop.f32.mrf.mxu0
      %5975 = vdwg.mxu0
      %v5976 = vadd.f32 %v5788, %v5931
      %v5977 = vadd.f32 %v5791, %v5934
      %v5978 = vadd.f32 %v5796, %v5939
      %v5979 = vadd.f32 %v5799, %v5942
      %v5980 = vadd.f32 %v5804, %v5947
      %v5981 = vadd.f32 %v5807, %v5950
      %v5982 = vadd.f32 %v5812, %v5955
      %v5983 = vadd.f32 %v5815, %v5958
      %v5984 = vadd.f32 %v5820, %v5963
      %v5985 = vadd.f32 %v5823, %v5966
      %v5986 = vadd.f32 %v5828, %v5971
      %v5987 = vld [vmem:[#allocation2 + $0xf] sm:$0xff]
      %v5988 = vld [vmem:[#allocation2 + $0x17] sm:$0xff]
      %v5989 = vld [vmem:[#allocation2 + $0x1f] sm:$0xff]
      %v5990 = vld [vmem:[#allocation2 + $0x27] sm:$0xff]
      %v5991 = vld [vmem:[#allocation2 + $0x2f] sm:$0xff]
      %v5992 = vld [vmem:[#allocation2 + $0x37] sm:$0xff]
      %v5993 = vld [vmem:[#allocation2 + $0x3f] sm:$0xff]
      %v5994 = vld [vmem:[#allocation2 + $0x47] sm:$0xff]
      %v5995 = vld [vmem:[#allocation2 + $0x4f] sm:$0xff]
      %v5996 = vld [vmem:[#allocation2 + $0x57] sm:$0xff]
      %v5997 = vld [vmem:[#allocation2 + $0x5f] sm:$0x1]
      %v5998 = vmul.f32 %v5987, %v744
      %v5999 = vmul.f32 %v5988, %v745
      %v6000 = vmul.f32 %v5989, %v746
      %v6001 = vmul.f32 %v5990, %v747
      %v6002 = vmul.f32 %v5991, %v748
      %v6003 = vmul.f32 %v5992, %v749
      %v6004 = vmul.f32 %v5993, %v750
      %v6005 = vmul.f32 %v5994, %v751
      %v6006 = vmul.f32 %v5995, %v752
      %v6007 = vmul.f32 %v5996, %v753
      %v6008 = vmul.f32 %v5997, %v754
      %v6009 = vpack.c.bf16 %v5999, %v5998
      %v6010 = vpack.c.bf16 %v6001, %v6000
      %v6011 = vpack.c.bf16 %v6003, %v6002
      %v6012 = vpack.c.bf16 %v6005, %v6004
      %v6013 = vpack.c.bf16 %v6007, %v6006
      %v6014 = vpack.c.bf16 %v6008, %v6008
      %s6015 = scalar_lea.vmem %s4, 336
      %v6016 = vld [vmem:[%s6015] sm:$0xf]
      %v6017 = vld [vmem:[%s6015 + $0x4] sm:$0xf]
      %v6018 = vld [vmem:[%s6015 + $0x8] sm:$0xf]
      %v6019 = vld [vmem:[%s6015 + $0xc] sm:$0xf]
      %v6024 = vunpack.c.l.b16 %v6016
      %v6025 = vunpack.c.l.b16 %v6017
      %v6026 = vunpack.c.l.b16 %v6018
      %v6027 = vunpack.c.l.b16 %v6019
      %v6028 = vpack.c.b16 %v6025, %v6024
      %v6029 = vpack.c.b16 %v6027, %v6026
      %v6033 = vsel %vm788, %v6009, 0
      %v6036 = vsel %vm788, %v6010, 0
      %v6039 = vsel %vm788, %v6011, 0
      %v6042 = vsel %vm788, %v6012, 0
      %v6045 = vsel %vm788, %v6013, 0
      %v6048 = vsel %vm788, %v6014, 0
      %6050 = vmatprep.subr.bf16.mxu0 0
      %6051 = vmatpush1.bf16.msra.mxu0 0
      %6052 = vmatprep.subr.bf16.mxu0 0
      %6053 = vmatpush1.bf16.msra.mxu0 0
      %6054 = vmatprep.subr.bf16.mxu0 0
      %6055 = vmatpush1.bf16.msra.mxu0 0
      %6056 = vmatprep.subr.bf16.mxu0 0
      %6057 = vmatpush1.bf16.msra.mxu0 0
      %6058 = vmatprep.subr.bf16.mxu0 0
      %6059 = vmatpush1.bf16.msra.mxu0 0
      %6060 = vmatprep.subr.bf16.mxu0 0
      %6061 = vmatpush1.bf16.msra.mxu0 0
      %6062 = vmatprep.subr.bf16.mxu0 0
      %6063 = vmatpush1.bf16.msra.mxu0 %v6029
      %6064 = vmatprep.subr.bf16.mxu0 0
      %6065 = vmatpush1.bf16.msra.mxu0 %v6028
      %6066 = vmatprep.subr.bf16.mxu0 0
      %6067 = vmatpush2.bf16.msra.mxu0 0
      %6068 = vmatprep.subr.bf16.mxu0 0
      %6069 = vmatpush2.bf16.msra.mxu0 0
      %6070 = vmatprep.subr.bf16.mxu0 0
      %6071 = vmatpush2.bf16.msra.mxu0 0
      %6072 = vmatprep.subr.bf16.mxu0 0
      %6073 = vmatpush2.bf16.msra.mxu0 0
      %6074 = vmatprep.subr.bf16.mxu0 0
      %6075 = vmatpush2.bf16.msra.mxu0 0
      %6076 = vmatprep.subr.bf16.mxu0 0
      %6077 = vmatpush2.bf16.msra.mxu0 0
      %6078 = vmatprep.subr.bf16.mxu0 0
      %6079 = vmatpush2.bf16.msra.mxu0 0
      %6080 = vmatprep.subr.bf16.mxu0 0
      %6081 = vmatpush2.bf16.msra.mxu0 0
      %6082 = vmatprep.mubr.bf16.mxu0 0
      %6083 = vmatmul.mubr.bf16.gmra.mxu0 %v6033
      %v6084 = vpop.f32.mrf.mxu0
      %v6085 = vadd.f32 0.0, %v6084
      %v6086 = vpop.f32.mrf.mxu0
      %v6087 = vpop.f32.mrf.mxu0
      %v6088 = vadd.f32 0.0, %v6087
      %v6089 = vpop.f32.mrf.mxu0
      %6090 = vmatprep.mubr.bf16.mxu0 0
      %6091 = vmatmul.mubr.bf16.gmra.mxu0 %v6036
      %v6092 = vpop.f32.mrf.mxu0
      %v6093 = vadd.f32 0.0, %v6092
      %v6094 = vpop.f32.mrf.mxu0
      %v6095 = vpop.f32.mrf.mxu0
      %v6096 = vadd.f32 0.0, %v6095
      %v6097 = vpop.f32.mrf.mxu0
      %6098 = vmatprep.mubr.bf16.mxu0 0
      %6099 = vmatmul.mubr.bf16.gmra.mxu0 %v6039
      %v6100 = vpop.f32.mrf.mxu0
      %v6101 = vadd.f32 0.0, %v6100
      %v6102 = vpop.f32.mrf.mxu0
      %v6103 = vpop.f32.mrf.mxu0
      %v6104 = vadd.f32 0.0, %v6103
      %v6105 = vpop.f32.mrf.mxu0
      %6106 = vmatprep.mubr.bf16.mxu0 0
      %6107 = vmatmul.mubr.bf16.gmra.mxu0 %v6042
      %v6108 = vpop.f32.mrf.mxu0
      %v6109 = vadd.f32 0.0, %v6108
      %v6110 = vpop.f32.mrf.mxu0
      %v6111 = vpop.f32.mrf.mxu0
      %v6112 = vadd.f32 0.0, %v6111
      %v6113 = vpop.f32.mrf.mxu0
      %6114 = vmatprep.mubr.bf16.mxu0 0
      %6115 = vmatmul.mubr.bf16.gmra.mxu0 %v6045
      %v6116 = vpop.f32.mrf.mxu0
      %v6117 = vadd.f32 0.0, %v6116
      %v6118 = vpop.f32.mrf.mxu0
      %v6119 = vpop.f32.mrf.mxu0
      %v6120 = vadd.f32 0.0, %v6119
      %v6121 = vpop.f32.mrf.mxu0
      %6122 = vmatprep.mubr.bf16.mxu0 0
      %6123 = vmatmul.mubr.bf16.gmra.mxu0 %v6048
      %v6124 = vpop.f32.mrf.mxu0
      %v6125 = vadd.f32 0.0, %v6124
      %v6126 = vpop.f32.mrf.mxu0
      %v6127 = vpop.f32.mrf.mxu0
      %v6128 = vpop.f32.mrf.mxu0
      %6129 = vdwg.mxu0
      %v6130 = vadd.f32 %v5976, %v6085
      %v6131 = vadd.f32 %v5977, %v6088
      %v6132 = vadd.f32 %v5978, %v6093
      %v6133 = vadd.f32 %v5979, %v6096
      %v6134 = vadd.f32 %v5980, %v6101
      %v6135 = vadd.f32 %v5981, %v6104
      %v6136 = vadd.f32 %v5982, %v6109
      %v6137 = vadd.f32 %v5983, %v6112
      %v6138 = vadd.f32 %v5984, %v6117
      %v6139 = vadd.f32 %v5985, %v6120
      %v6140 = vadd.f32 %v5986, %v6125
      %v6141 = vld [vmem:[#allocation2 + $0x10] sm:$0xff]
      %v6142 = vld [vmem:[#allocation2 + $0x18] sm:$0xff]
      %v6143 = vld [vmem:[#allocation2 + $0x20] sm:$0xff]
      %v6144 = vld [vmem:[#allocation2 + $0x28] sm:$0xff]
      %v6145 = vld [vmem:[#allocation2 + $0x30] sm:$0xff]
      %v6146 = vld [vmem:[#allocation2 + $0x38] sm:$0xff]
      %v6147 = vld [vmem:[#allocation2 + $0x40] sm:$0xff]
      %v6148 = vld [vmem:[#allocation2 + $0x48] sm:$0xff]
      %v6149 = vld [vmem:[#allocation2 + $0x50] sm:$0xff]
      %v6150 = vld [vmem:[#allocation2 + $0x58] sm:$0xff]
      %v6151 = vld [vmem:[#allocation2 + $0x60] sm:$0x1]
      %v6152 = vpack.c.bf16 %v6142, %v6141
      %v6153 = vpack.c.bf16 %v6144, %v6143
      %v6154 = vpack.c.bf16 %v6146, %v6145
      %v6155 = vpack.c.bf16 %v6148, %v6147
      %v6156 = vpack.c.bf16 %v6150, %v6149
      %v6157 = vpack.c.bf16 %v6151, %v6151
      %s6158 = scalar_lea.vmem %s4, 352
      %v6159 = vld [vmem:[%s6158] sm:$0xf]
      %v6160 = vld [vmem:[%s6158 + $0x4] sm:$0xf]
      %v6161 = vld [vmem:[%s6158 + $0x8] sm:$0xf]
      %v6162 = vld [vmem:[%s6158 + $0xc] sm:$0xf]
      %v6167 = vunpack.c.l.b16 %v6159
      %v6168 = vunpack.c.l.b16 %v6160
      %v6169 = vunpack.c.l.b16 %v6161
      %v6170 = vunpack.c.l.b16 %v6162
      %v6171 = vpack.c.b16 %v6168, %v6167
      %v6172 = vpack.c.b16 %v6170, %v6169
      %v6176 = vsel %vm788, %v6152, 0
      %v6179 = vsel %vm788, %v6153, 0
      %v6182 = vsel %vm788, %v6154, 0
      %v6185 = vsel %vm788, %v6155, 0
      %v6188 = vsel %vm788, %v6156, 0
      %v6191 = vsel %vm788, %v6157, 0
      %6193 = vmatprep.subr.bf16.mxu0 0
      %6194 = vmatpush1.bf16.msra.mxu0 0
      %6195 = vmatprep.subr.bf16.mxu0 0
      %6196 = vmatpush1.bf16.msra.mxu0 0
      %6197 = vmatprep.subr.bf16.mxu0 0
      %6198 = vmatpush1.bf16.msra.mxu0 0
      %6199 = vmatprep.subr.bf16.mxu0 0
      %6200 = vmatpush1.bf16.msra.mxu0 0
      %6201 = vmatprep.subr.bf16.mxu0 0
      %6202 = vmatpush1.bf16.msra.mxu0 0
      %6203 = vmatprep.subr.bf16.mxu0 0
      %6204 = vmatpush1.bf16.msra.mxu0 0
      %6205 = vmatprep.subr.bf16.mxu0 0
      %6206 = vmatpush1.bf16.msra.mxu0 %v6172
      %6207 = vmatprep.subr.bf16.mxu0 0
      %6208 = vmatpush1.bf16.msra.mxu0 %v6171
      %6209 = vmatprep.subr.bf16.mxu0 0
      %6210 = vmatpush2.bf16.msra.mxu0 0
      %6211 = vmatprep.subr.bf16.mxu0 0
      %6212 = vmatpush2.bf16.msra.mxu0 0
      %6213 = vmatprep.subr.bf16.mxu0 0
      %6214 = vmatpush2.bf16.msra.mxu0 0
      %6215 = vmatprep.subr.bf16.mxu0 0
      %6216 = vmatpush2.bf16.msra.mxu0 0
      %6217 = vmatprep.subr.bf16.mxu0 0
      %6218 = vmatpush2.bf16.msra.mxu0 0
      %6219 = vmatprep.subr.bf16.mxu0 0
      %6220 = vmatpush2.bf16.msra.mxu0 0
      %6221 = vmatprep.subr.bf16.mxu0 0
      %6222 = vmatpush2.bf16.msra.mxu0 0
      %6223 = vmatprep.subr.bf16.mxu0 0
      %6224 = vmatpush2.bf16.msra.mxu0 0
      %6225 = vmatprep.mubr.bf16.mxu0 0
      %6226 = vmatmul.mubr.bf16.gmra.mxu0 %v6176
      %v6227 = vpop.f32.mrf.mxu0
      %v6228 = vadd.f32 0.0, %v6227
      %v6229 = vpop.f32.mrf.mxu0
      %v6230 = vpop.f32.mrf.mxu0
      %v6231 = vadd.f32 0.0, %v6230
      %v6232 = vpop.f32.mrf.mxu0
      %6233 = vmatprep.mubr.bf16.mxu0 0
      %6234 = vmatmul.mubr.bf16.gmra.mxu0 %v6179
      %v6235 = vpop.f32.mrf.mxu0
      %v6236 = vadd.f32 0.0, %v6235
      %v6237 = vpop.f32.mrf.mxu0
      %v6238 = vpop.f32.mrf.mxu0
      %v6239 = vadd.f32 0.0, %v6238
      %v6240 = vpop.f32.mrf.mxu0
      %6241 = vmatprep.mubr.bf16.mxu0 0
      %6242 = vmatmul.mubr.bf16.gmra.mxu0 %v6182
      %v6243 = vpop.f32.mrf.mxu0
      %v6244 = vadd.f32 0.0, %v6243
      %v6245 = vpop.f32.mrf.mxu0
      %v6246 = vpop.f32.mrf.mxu0
      %v6247 = vadd.f32 0.0, %v6246
      %v6248 = vpop.f32.mrf.mxu0
      %6249 = vmatprep.mubr.bf16.mxu0 0
      %6250 = vmatmul.mubr.bf16.gmra.mxu0 %v6185
      %v6251 = vpop.f32.mrf.mxu0
      %v6252 = vadd.f32 0.0, %v6251
      %v6253 = vpop.f32.mrf.mxu0
      %v6254 = vpop.f32.mrf.mxu0
      %v6255 = vadd.f32 0.0, %v6254
      %v6256 = vpop.f32.mrf.mxu0
      %6257 = vmatprep.mubr.bf16.mxu0 0
      %6258 = vmatmul.mubr.bf16.gmra.mxu0 %v6188
      %v6259 = vpop.f32.mrf.mxu0
      %v6260 = vadd.f32 0.0, %v6259
      %v6261 = vpop.f32.mrf.mxu0
      %v6262 = vpop.f32.mrf.mxu0
      %v6263 = vadd.f32 0.0, %v6262
      %v6264 = vpop.f32.mrf.mxu0
      %6265 = vmatprep.mubr.bf16.mxu0 0
      %6266 = vmatmul.mubr.bf16.gmra.mxu0 %v6191
      %v6267 = vpop.f32.mrf.mxu0
      %v6268 = vadd.f32 0.0, %v6267
      %v6269 = vpop.f32.mrf.mxu0
      %v6270 = vpop.f32.mrf.mxu0
      %v6271 = vpop.f32.mrf.mxu0
      %6272 = vdwg.mxu0
      %v6273 = vadd.f32 %v6130, %v6228
      %v6274 = vadd.f32 %v6131, %v6231
      %v6275 = vadd.f32 %v6132, %v6236
      %v6276 = vadd.f32 %v6133, %v6239
      %v6277 = vadd.f32 %v6134, %v6244
      %v6278 = vadd.f32 %v6135, %v6247
      %v6279 = vadd.f32 %v6136, %v6252
      %v6280 = vadd.f32 %v6137, %v6255
      %v6281 = vadd.f32 %v6138, %v6260
      %v6282 = vadd.f32 %v6139, %v6263
      %v6283 = vadd.f32 %v6140, %v6268
      %v6284 = vld [vmem:[#allocation2 + $0x11] sm:$0xff]
      %v6285 = vld [vmem:[#allocation2 + $0x19] sm:$0xff]
      %v6286 = vld [vmem:[#allocation2 + $0x21] sm:$0xff]
      %v6287 = vld [vmem:[#allocation2 + $0x29] sm:$0xff]
      %v6288 = vld [vmem:[#allocation2 + $0x31] sm:$0xff]
      %v6289 = vld [vmem:[#allocation2 + $0x39] sm:$0xff]
      %v6290 = vld [vmem:[#allocation2 + $0x41] sm:$0xff]
      %v6291 = vld [vmem:[#allocation2 + $0x49] sm:$0xff]
      %v6292 = vld [vmem:[#allocation2 + $0x51] sm:$0xff]
      %v6293 = vld [vmem:[#allocation2 + $0x59] sm:$0xff]
      %v6294 = vld [vmem:[#allocation2 + $0x61] sm:$0x1]
      %v6295 = vmul.f32 %v6284, %v777
      %v6296 = vmul.f32 %v6285, %v778
      %v6297 = vmul.f32 %v6286, %v779
      %v6298 = vmul.f32 %v6287, %v780
      %v6299 = vmul.f32 %v6288, %v781
      %v6300 = vmul.f32 %v6289, %v782
      %v6301 = vmul.f32 %v6290, %v783
      %v6302 = vmul.f32 %v6291, %v784
      %v6303 = vmul.f32 %v6292, %v785
      %v6304 = vmul.f32 %v6293, %v786
      %v6305 = vmul.f32 %v6294, %v787
      %v6306 = vpack.c.bf16 %v6296, %v6295
      %v6307 = vpack.c.bf16 %v6298, %v6297
      %v6308 = vpack.c.bf16 %v6300, %v6299
      %v6309 = vpack.c.bf16 %v6302, %v6301
      %v6310 = vpack.c.bf16 %v6304, %v6303
      %v6311 = vpack.c.bf16 %v6305, %v6305
      %s6312 = scalar_lea.vmem %s4, 368
      %v6313 = vld [vmem:[%s6312] sm:$0xf]
      %v6314 = vld [vmem:[%s6312 + $0x4] sm:$0xf]
      %v6315 = vld [vmem:[%s6312 + $0x8] sm:$0xf]
      %v6316 = vld [vmem:[%s6312 + $0xc] sm:$0xf]
      %v6321 = vunpack.c.l.b16 %v6313
      %v6322 = vunpack.c.l.b16 %v6314
      %v6323 = vunpack.c.l.b16 %v6315
      %v6324 = vunpack.c.l.b16 %v6316
      %v6325 = vpack.c.b16 %v6322, %v6321
      %v6326 = vpack.c.b16 %v6324, %v6323
      %v6330 = vsel %vm788, %v6306, 0
      %v6333 = vsel %vm788, %v6307, 0
      %v6336 = vsel %vm788, %v6308, 0
      %v6339 = vsel %vm788, %v6309, 0
      %v6342 = vsel %vm788, %v6310, 0
      %v6345 = vsel %vm788, %v6311, 0
      %6347 = vmatprep.subr.bf16.mxu0 0
      %6348 = vmatpush1.bf16.msra.mxu0 0
      %6349 = vmatprep.subr.bf16.mxu0 0
      %6350 = vmatpush1.bf16.msra.mxu0 0
      %6351 = vmatprep.subr.bf16.mxu0 0
      %6352 = vmatpush1.bf16.msra.mxu0 0
      %6353 = vmatprep.subr.bf16.mxu0 0
      %6354 = vmatpush1.bf16.msra.mxu0 0
      %6355 = vmatprep.subr.bf16.mxu0 0
      %6356 = vmatpush1.bf16.msra.mxu0 0
      %6357 = vmatprep.subr.bf16.mxu0 0
      %6358 = vmatpush1.bf16.msra.mxu0 0
      %6359 = vmatprep.subr.bf16.mxu0 0
      %6360 = vmatpush1.bf16.msra.mxu0 %v6326
      %6361 = vmatprep.subr.bf16.mxu0 0
      %6362 = vmatpush1.bf16.msra.mxu0 %v6325
      %6363 = vmatprep.subr.bf16.mxu0 0
      %6364 = vmatpush2.bf16.msra.mxu0 0
      %6365 = vmatprep.subr.bf16.mxu0 0
      %6366 = vmatpush2.bf16.msra.mxu0 0
      %6367 = vmatprep.subr.bf16.mxu0 0
      %6368 = vmatpush2.bf16.msra.mxu0 0
      %6369 = vmatprep.subr.bf16.mxu0 0
      %6370 = vmatpush2.bf16.msra.mxu0 0
      %6371 = vmatprep.subr.bf16.mxu0 0
      %6372 = vmatpush2.bf16.msra.mxu0 0
      %6373 = vmatprep.subr.bf16.mxu0 0
      %6374 = vmatpush2.bf16.msra.mxu0 0
      %6375 = vmatprep.subr.bf16.mxu0 0
      %6376 = vmatpush2.bf16.msra.mxu0 0
      %6377 = vmatprep.subr.bf16.mxu0 0
      %6378 = vmatpush2.bf16.msra.mxu0 0
      %6379 = vmatprep.mubr.bf16.mxu0 0
      %6380 = vmatmul.mubr.bf16.gmra.mxu0 %v6330
      %v6381 = vpop.f32.mrf.mxu0
      %v6382 = vadd.f32 0.0, %v6381
      %v6383 = vpop.f32.mrf.mxu0
      %v6384 = vpop.f32.mrf.mxu0
      %v6385 = vadd.f32 0.0, %v6384
      %v6386 = vpop.f32.mrf.mxu0
      %6387 = vmatprep.mubr.bf16.mxu0 0
      %6388 = vmatmul.mubr.bf16.gmra.mxu0 %v6333
      %v6389 = vpop.f32.mrf.mxu0
      %v6390 = vadd.f32 0.0, %v6389
      %v6391 = vpop.f32.mrf.mxu0
      %v6392 = vpop.f32.mrf.mxu0
      %v6393 = vadd.f32 0.0, %v6392
      %v6394 = vpop.f32.mrf.mxu0
      %6395 = vmatprep.mubr.bf16.mxu0 0
      %6396 = vmatmul.mubr.bf16.gmra.mxu0 %v6336
      %v6397 = vpop.f32.mrf.mxu0
      %v6398 = vadd.f32 0.0, %v6397
      %v6399 = vpop.f32.mrf.mxu0
      %v6400 = vpop.f32.mrf.mxu0
      %v6401 = vadd.f32 0.0, %v6400
      %v6402 = vpop.f32.mrf.mxu0
      %6403 = vmatprep.mubr.bf16.mxu0 0
      %6404 = vmatmul.mubr.bf16.gmra.mxu0 %v6339
      %v6405 = vpop.f32.mrf.mxu0
      %v6406 = vadd.f32 0.0, %v6405
      %v6407 = vpop.f32.mrf.mxu0
      %v6408 = vpop.f32.mrf.mxu0
      %v6409 = vadd.f32 0.0, %v6408
      %v6410 = vpop.f32.mrf.mxu0
      %6411 = vmatprep.mubr.bf16.mxu0 0
      %6412 = vmatmul.mubr.bf16.gmra.mxu0 %v6342
      %v6413 = vpop.f32.mrf.mxu0
      %v6414 = vadd.f32 0.0, %v6413
      %v6415 = vpop.f32.mrf.mxu0
      %v6416 = vpop.f32.mrf.mxu0
      %v6417 = vadd.f32 0.0, %v6416
      %v6418 = vpop.f32.mrf.mxu0
      %6419 = vmatprep.mubr.bf16.mxu0 0
      %6420 = vmatmul.mubr.bf16.gmra.mxu0 %v6345
      %v6421 = vpop.f32.mrf.mxu0
      %v6422 = vadd.f32 0.0, %v6421
      %v6423 = vpop.f32.mrf.mxu0
      %v6424 = vpop.f32.mrf.mxu0
      %v6425 = vpop.f32.mrf.mxu0
      %6426 = vdwg.mxu0
      %v6427 = vadd.f32 %v6273, %v6382
      %v6428 = vadd.f32 %v6274, %v6385
      %v6429 = vadd.f32 %v6275, %v6390
      %v6430 = vadd.f32 %v6276, %v6393
      %v6431 = vadd.f32 %v6277, %v6398
      %v6432 = vadd.f32 %v6278, %v6401
      %v6433 = vadd.f32 %v6279, %v6406
      %v6434 = vadd.f32 %v6280, %v6409
      %v6435 = vadd.f32 %v6281, %v6414
      %v6436 = vadd.f32 %v6282, %v6417
      %v6437 = vadd.f32 %v6283, %v6422
      %v6438 = vld [vmem:[#allocation2 + $0x18] sm:$0xff]
      %v6439 = vld [vmem:[#allocation2 + $0x20] sm:$0xff]
      %v6440 = vld [vmem:[#allocation2 + $0x28] sm:$0xff]
      %v6441 = vld [vmem:[#allocation2 + $0x30] sm:$0xff]
      %v6442 = vld [vmem:[#allocation2 + $0x38] sm:$0xff]
      %v6443 = vld [vmem:[#allocation2 + $0x40] sm:$0xff]
      %v6444 = vld [vmem:[#allocation2 + $0x48] sm:$0xff]
      %v6445 = vld [vmem:[#allocation2 + $0x50] sm:$0xff]
      %v6446 = vld [vmem:[#allocation2 + $0x58] sm:$0xff]
      %v6447 = vld [vmem:[#allocation2 + $0x60] sm:$0xff]
      %v6448 = vld [vmem:[#allocation2 + $0x68] sm:$0x1]
      %v6449 = vmul.f32 %v6438, %v744
      %v6450 = vmul.f32 %v6439, %v745
      %v6451 = vmul.f32 %v6440, %v746
      %v6452 = vmul.f32 %v6441, %v747
      %v6453 = vmul.f32 %v6442, %v748
      %v6454 = vmul.f32 %v6443, %v749
      %v6455 = vmul.f32 %v6444, %v750
      %v6456 = vmul.f32 %v6445, %v751
      %v6457 = vmul.f32 %v6446, %v752
      %v6458 = vmul.f32 %v6447, %v753
      %v6459 = vmul.f32 %v6448, %v754
      %v6460 = vpack.c.bf16 %v6450, %v6449
      %v6461 = vpack.c.bf16 %v6452, %v6451
      %v6462 = vpack.c.bf16 %v6454, %v6453
      %v6463 = vpack.c.bf16 %v6456, %v6455
      %v6464 = vpack.c.bf16 %v6458, %v6457
      %v6465 = vpack.c.bf16 %v6459, %v6459
      %s6466 = scalar_lea.vmem %s4, 384
      %v6467 = vld [vmem:[%s6466] sm:$0xf]
      %v6468 = vld [vmem:[%s6466 + $0x4] sm:$0xf]
      %v6469 = vld [vmem:[%s6466 + $0x8] sm:$0xf]
      %v6470 = vld [vmem:[%s6466 + $0xc] sm:$0xf]
      %v6475 = vunpack.c.l.b16 %v6467
      %v6476 = vunpack.c.l.b16 %v6468
      %v6477 = vunpack.c.l.b16 %v6469
      %v6478 = vunpack.c.l.b16 %v6470
      %v6479 = vpack.c.b16 %v6476, %v6475
      %v6480 = vpack.c.b16 %v6478, %v6477
      %v6484 = vsel %vm788, %v6460, 0
      %v6487 = vsel %vm788, %v6461, 0
      %v6490 = vsel %vm788, %v6462, 0
      %v6493 = vsel %vm788, %v6463, 0
      %v6496 = vsel %vm788, %v6464, 0
      %v6499 = vsel %vm788, %v6465, 0
      %6501 = vmatprep.subr.bf16.mxu0 0
      %6502 = vmatpush1.bf16.msra.mxu0 0
      %6503 = vmatprep.subr.bf16.mxu0 0
      %6504 = vmatpush1.bf16.msra.mxu0 0
      %6505 = vmatprep.subr.bf16.mxu0 0
      %6506 = vmatpush1.bf16.msra.mxu0 0
      %6507 = vmatprep.subr.bf16.mxu0 0
      %6508 = vmatpush1.bf16.msra.mxu0 0
      %6509 = vmatprep.subr.bf16.mxu0 0
      %6510 = vmatpush1.bf16.msra.mxu0 0
      %6511 = vmatprep.subr.bf16.mxu0 0
      %6512 = vmatpush1.bf16.msra.mxu0 0
      %6513 = vmatprep.subr.bf16.mxu0 0
      %6514 = vmatpush1.bf16.msra.mxu0 %v6480
      %6515 = vmatprep.subr.bf16.mxu0 0
      %6516 = vmatpush1.bf16.msra.mxu0 %v6479
      %6517 = vmatprep.subr.bf16.mxu0 0
      %6518 = vmatpush2.bf16.msra.mxu0 0
      %6519 = vmatprep.subr.bf16.mxu0 0
      %6520 = vmatpush2.bf16.msra.mxu0 0
      %6521 = vmatprep.subr.bf16.mxu0 0
      %6522 = vmatpush2.bf16.msra.mxu0 0
      %6523 = vmatprep.subr.bf16.mxu0 0
      %6524 = vmatpush2.bf16.msra.mxu0 0
      %6525 = vmatprep.subr.bf16.mxu0 0
      %6526 = vmatpush2.bf16.msra.mxu0 0
      %6527 = vmatprep.subr.bf16.mxu0 0
      %6528 = vmatpush2.bf16.msra.mxu0 0
      %6529 = vmatprep.subr.bf16.mxu0 0
      %6530 = vmatpush2.bf16.msra.mxu0 0
      %6531 = vmatprep.subr.bf16.mxu0 0
      %6532 = vmatpush2.bf16.msra.mxu0 0
      %6533 = vmatprep.mubr.bf16.mxu0 0
      %6534 = vmatmul.mubr.bf16.gmra.mxu0 %v6484
      %v6535 = vpop.f32.mrf.mxu0
      %v6536 = vadd.f32 0.0, %v6535
      %v6537 = vpop.f32.mrf.mxu0
      %v6538 = vpop.f32.mrf.mxu0
      %v6539 = vadd.f32 0.0, %v6538
      %v6540 = vpop.f32.mrf.mxu0
      %6541 = vmatprep.mubr.bf16.mxu0 0
      %6542 = vmatmul.mubr.bf16.gmra.mxu0 %v6487
      %v6543 = vpop.f32.mrf.mxu0
      %v6544 = vadd.f32 0.0, %v6543
      %v6545 = vpop.f32.mrf.mxu0
      %v6546 = vpop.f32.mrf.mxu0
      %v6547 = vadd.f32 0.0, %v6546
      %v6548 = vpop.f32.mrf.mxu0
      %6549 = vmatprep.mubr.bf16.mxu0 0
      %6550 = vmatmul.mubr.bf16.gmra.mxu0 %v6490
      %v6551 = vpop.f32.mrf.mxu0
      %v6552 = vadd.f32 0.0, %v6551
      %v6553 = vpop.f32.mrf.mxu0
      %v6554 = vpop.f32.mrf.mxu0
      %v6555 = vadd.f32 0.0, %v6554
      %v6556 = vpop.f32.mrf.mxu0
      %6557 = vmatprep.mubr.bf16.mxu0 0
      %6558 = vmatmul.mubr.bf16.gmra.mxu0 %v6493
      %v6559 = vpop.f32.mrf.mxu0
      %v6560 = vadd.f32 0.0, %v6559
      %v6561 = vpop.f32.mrf.mxu0
      %v6562 = vpop.f32.mrf.mxu0
      %v6563 = vadd.f32 0.0, %v6562
      %v6564 = vpop.f32.mrf.mxu0
      %6565 = vmatprep.mubr.bf16.mxu0 0
      %6566 = vmatmul.mubr.bf16.gmra.mxu0 %v6496
      %v6567 = vpop.f32.mrf.mxu0
      %v6568 = vadd.f32 0.0, %v6567
      %v6569 = vpop.f32.mrf.mxu0
      %v6570 = vpop.f32.mrf.mxu0
      %v6571 = vadd.f32 0.0, %v6570
      %v6572 = vpop.f32.mrf.mxu0
      %6573 = vmatprep.mubr.bf16.mxu0 0
      %6574 = vmatmul.mubr.bf16.gmra.mxu0 %v6499
      %v6575 = vpop.f32.mrf.mxu0
      %v6576 = vadd.f32 0.0, %v6575
      %v6577 = vpop.f32.mrf.mxu0
      %v6578 = vpop.f32.mrf.mxu0
      %v6579 = vpop.f32.mrf.mxu0
      %6580 = vdwg.mxu0
      %v6581 = vadd.f32 %v6427, %v6536
      %v6582 = vadd.f32 %v6428, %v6539
      %v6583 = vadd.f32 %v6429, %v6544
      %v6584 = vadd.f32 %v6430, %v6547
      %v6585 = vadd.f32 %v6431, %v6552
      %v6586 = vadd.f32 %v6432, %v6555
      %v6587 = vadd.f32 %v6433, %v6560
      %v6588 = vadd.f32 %v6434, %v6563
      %v6589 = vadd.f32 %v6435, %v6568
      %v6590 = vadd.f32 %v6436, %v6571
      %v6591 = vadd.f32 %v6437, %v6576
      %v6592 = vld [vmem:[#allocation2 + $0x19] sm:$0xff]
      %v6593 = vld [vmem:[#allocation2 + $0x21] sm:$0xff]
      %v6594 = vld [vmem:[#allocation2 + $0x29] sm:$0xff]
      %v6595 = vld [vmem:[#allocation2 + $0x31] sm:$0xff]
      %v6596 = vld [vmem:[#allocation2 + $0x39] sm:$0xff]
      %v6597 = vld [vmem:[#allocation2 + $0x41] sm:$0xff]
      %v6598 = vld [vmem:[#allocation2 + $0x49] sm:$0xff]
      %v6599 = vld [vmem:[#allocation2 + $0x51] sm:$0xff]
      %v6600 = vld [vmem:[#allocation2 + $0x59] sm:$0xff]
      %v6601 = vld [vmem:[#allocation2 + $0x61] sm:$0xff]
      %v6602 = vld [vmem:[#allocation2 + $0x69] sm:$0x1]
      %v6603 = vpack.c.bf16 %v6593, %v6592
      %v6604 = vpack.c.bf16 %v6595, %v6594
      %v6605 = vpack.c.bf16 %v6597, %v6596
      %v6606 = vpack.c.bf16 %v6599, %v6598
      %v6607 = vpack.c.bf16 %v6601, %v6600
      %v6608 = vpack.c.bf16 %v6602, %v6602
      %s6609 = scalar_lea.vmem %s4, 400
      %v6610 = vld [vmem:[%s6609] sm:$0xf]
      %v6611 = vld [vmem:[%s6609 + $0x4] sm:$0xf]
      %v6612 = vld [vmem:[%s6609 + $0x8] sm:$0xf]
      %v6613 = vld [vmem:[%s6609 + $0xc] sm:$0xf]
      %v6618 = vunpack.c.l.b16 %v6610
      %v6619 = vunpack.c.l.b16 %v6611
      %v6620 = vunpack.c.l.b16 %v6612
      %v6621 = vunpack.c.l.b16 %v6613
      %v6622 = vpack.c.b16 %v6619, %v6618
      %v6623 = vpack.c.b16 %v6621, %v6620
      %v6627 = vsel %vm788, %v6603, 0
      %v6630 = vsel %vm788, %v6604, 0
      %v6633 = vsel %vm788, %v6605, 0
      %v6636 = vsel %vm788, %v6606, 0
      %v6639 = vsel %vm788, %v6607, 0
      %v6642 = vsel %vm788, %v6608, 0
      %6644 = vmatprep.subr.bf16.mxu0 0
      %6645 = vmatpush1.bf16.msra.mxu0 0
      %6646 = vmatprep.subr.bf16.mxu0 0
      %6647 = vmatpush1.bf16.msra.mxu0 0
      %6648 = vmatprep.subr.bf16.mxu0 0
      %6649 = vmatpush1.bf16.msra.mxu0 0
      %6650 = vmatprep.subr.bf16.mxu0 0
      %6651 = vmatpush1.bf16.msra.mxu0 0
      %6652 = vmatprep.subr.bf16.mxu0 0
      %6653 = vmatpush1.bf16.msra.mxu0 0
      %6654 = vmatprep.subr.bf16.mxu0 0
      %6655 = vmatpush1.bf16.msra.mxu0 0
      %6656 = vmatprep.subr.bf16.mxu0 0
      %6657 = vmatpush1.bf16.msra.mxu0 %v6623
      %6658 = vmatprep.subr.bf16.mxu0 0
      %6659 = vmatpush1.bf16.msra.mxu0 %v6622
      %6660 = vmatprep.subr.bf16.mxu0 0
      %6661 = vmatpush2.bf16.msra.mxu0 0
      %6662 = vmatprep.subr.bf16.mxu0 0
      %6663 = vmatpush2.bf16.msra.mxu0 0
      %6664 = vmatprep.subr.bf16.mxu0 0
      %6665 = vmatpush2.bf16.msra.mxu0 0
      %6666 = vmatprep.subr.bf16.mxu0 0
      %6667 = vmatpush2.bf16.msra.mxu0 0
      %6668 = vmatprep.subr.bf16.mxu0 0
      %6669 = vmatpush2.bf16.msra.mxu0 0
      %6670 = vmatprep.subr.bf16.mxu0 0
      %6671 = vmatpush2.bf16.msra.mxu0 0
      %6672 = vmatprep.subr.bf16.mxu0 0
      %6673 = vmatpush2.bf16.msra.mxu0 0
      %6674 = vmatprep.subr.bf16.mxu0 0
      %6675 = vmatpush2.bf16.msra.mxu0 0
      %6676 = vmatprep.mubr.bf16.mxu0 0
      %6677 = vmatmul.mubr.bf16.gmra.mxu0 %v6627
      %v6678 = vpop.f32.mrf.mxu0
      %v6679 = vadd.f32 0.0, %v6678
      %v6680 = vpop.f32.mrf.mxu0
      %v6681 = vpop.f32.mrf.mxu0
      %v6682 = vadd.f32 0.0, %v6681
      %v6683 = vpop.f32.mrf.mxu0
      %6684 = vmatprep.mubr.bf16.mxu0 0
      %6685 = vmatmul.mubr.bf16.gmra.mxu0 %v6630
      %v6686 = vpop.f32.mrf.mxu0
      %v6687 = vadd.f32 0.0, %v6686
      %v6688 = vpop.f32.mrf.mxu0
      %v6689 = vpop.f32.mrf.mxu0
      %v6690 = vadd.f32 0.0, %v6689
      %v6691 = vpop.f32.mrf.mxu0
      %6692 = vmatprep.mubr.bf16.mxu0 0
      %6693 = vmatmul.mubr.bf16.gmra.mxu0 %v6633
      %v6694 = vpop.f32.mrf.mxu0
      %v6695 = vadd.f32 0.0, %v6694
      %v6696 = vpop.f32.mrf.mxu0
      %v6697 = vpop.f32.mrf.mxu0
      %v6698 = vadd.f32 0.0, %v6697
      %v6699 = vpop.f32.mrf.mxu0
      %6700 = vmatprep.mubr.bf16.mxu0 0
      %6701 = vmatmul.mubr.bf16.gmra.mxu0 %v6636
      %v6702 = vpop.f32.mrf.mxu0
      %v6703 = vadd.f32 0.0, %v6702
      %v6704 = vpop.f32.mrf.mxu0
      %v6705 = vpop.f32.mrf.mxu0
      %v6706 = vadd.f32 0.0, %v6705
      %v6707 = vpop.f32.mrf.mxu0
      %6708 = vmatprep.mubr.bf16.mxu0 0
      %6709 = vmatmul.mubr.bf16.gmra.mxu0 %v6639
      %v6710 = vpop.f32.mrf.mxu0
      %v6711 = vadd.f32 0.0, %v6710
      %v6712 = vpop.f32.mrf.mxu0
      %v6713 = vpop.f32.mrf.mxu0
      %v6714 = vadd.f32 0.0, %v6713
      %v6715 = vpop.f32.mrf.mxu0
      %6716 = vmatprep.mubr.bf16.mxu0 0
      %6717 = vmatmul.mubr.bf16.gmra.mxu0 %v6642
      %v6718 = vpop.f32.mrf.mxu0
      %v6719 = vadd.f32 0.0, %v6718
      %v6720 = vpop.f32.mrf.mxu0
      %v6721 = vpop.f32.mrf.mxu0
      %v6722 = vpop.f32.mrf.mxu0
      %6723 = vdwg.mxu0
      %v6724 = vadd.f32 %v6581, %v6679
      %v6725 = vadd.f32 %v6582, %v6682
      %v6726 = vadd.f32 %v6583, %v6687
      %v6727 = vadd.f32 %v6584, %v6690
      %v6728 = vadd.f32 %v6585, %v6695
      %v6729 = vadd.f32 %v6586, %v6698
      %v6730 = vadd.f32 %v6587, %v6703
      %v6731 = vadd.f32 %v6588, %v6706
      %v6732 = vadd.f32 %v6589, %v6711
      %v6733 = vadd.f32 %v6590, %v6714
      %v6734 = vadd.f32 %v6591, %v6719
      %v6735 = vld [vmem:[#allocation2 + $0x1a] sm:$0xff]
      %v6736 = vld [vmem:[#allocation2 + $0x22] sm:$0xff]
      %v6737 = vld [vmem:[#allocation2 + $0x2a] sm:$0xff]
      %v6738 = vld [vmem:[#allocation2 + $0x32] sm:$0xff]
      %v6739 = vld [vmem:[#allocation2 + $0x3a] sm:$0xff]
      %v6740 = vld [vmem:[#allocation2 + $0x42] sm:$0xff]
      %v6741 = vld [vmem:[#allocation2 + $0x4a] sm:$0xff]
      %v6742 = vld [vmem:[#allocation2 + $0x52] sm:$0xff]
      %v6743 = vld [vmem:[#allocation2 + $0x5a] sm:$0xff]
      %v6744 = vld [vmem:[#allocation2 + $0x62] sm:$0xff]
      %v6745 = vld [vmem:[#allocation2 + $0x6a] sm:$0x1]
      %v6746 = vmul.f32 %v6735, %v777
      %v6747 = vmul.f32 %v6736, %v778
      %v6748 = vmul.f32 %v6737, %v779
      %v6749 = vmul.f32 %v6738, %v780
      %v6750 = vmul.f32 %v6739, %v781
      %v6751 = vmul.f32 %v6740, %v782
      %v6752 = vmul.f32 %v6741, %v783
      %v6753 = vmul.f32 %v6742, %v784
      %v6754 = vmul.f32 %v6743, %v785
      %v6755 = vmul.f32 %v6744, %v786
      %v6756 = vmul.f32 %v6745, %v787
      %v6757 = vpack.c.bf16 %v6747, %v6746
      %v6758 = vpack.c.bf16 %v6749, %v6748
      %v6759 = vpack.c.bf16 %v6751, %v6750
      %v6760 = vpack.c.bf16 %v6753, %v6752
      %v6761 = vpack.c.bf16 %v6755, %v6754
      %v6762 = vpack.c.bf16 %v6756, %v6756
      %s6763 = scalar_lea.vmem %s4, 416
      %v6764 = vld [vmem:[%s6763] sm:$0xf]
      %v6765 = vld [vmem:[%s6763 + $0x4] sm:$0xf]
      %v6766 = vld [vmem:[%s6763 + $0x8] sm:$0xf]
      %v6767 = vld [vmem:[%s6763 + $0xc] sm:$0xf]
      %v6772 = vunpack.c.l.b16 %v6764
      %v6773 = vunpack.c.l.b16 %v6765
      %v6774 = vunpack.c.l.b16 %v6766
      %v6775 = vunpack.c.l.b16 %v6767
      %v6776 = vpack.c.b16 %v6773, %v6772
      %v6777 = vpack.c.b16 %v6775, %v6774
      %v6781 = vsel %vm788, %v6757, 0
      %v6784 = vsel %vm788, %v6758, 0
      %v6787 = vsel %vm788, %v6759, 0
      %v6790 = vsel %vm788, %v6760, 0
      %v6793 = vsel %vm788, %v6761, 0
      %v6796 = vsel %vm788, %v6762, 0
      %6798 = vmatprep.subr.bf16.mxu0 0
      %6799 = vmatpush1.bf16.msra.mxu0 0
      %6800 = vmatprep.subr.bf16.mxu0 0
      %6801 = vmatpush1.bf16.msra.mxu0 0
      %6802 = vmatprep.subr.bf16.mxu0 0
      %6803 = vmatpush1.bf16.msra.mxu0 0
      %6804 = vmatprep.subr.bf16.mxu0 0
      %6805 = vmatpush1.bf16.msra.mxu0 0
      %6806 = vmatprep.subr.bf16.mxu0 0
      %6807 = vmatpush1.bf16.msra.mxu0 0
      %6808 = vmatprep.subr.bf16.mxu0 0
      %6809 = vmatpush1.bf16.msra.mxu0 0
      %6810 = vmatprep.subr.bf16.mxu0 0
      %6811 = vmatpush1.bf16.msra.mxu0 %v6777
      %6812 = vmatprep.subr.bf16.mxu0 0
      %6813 = vmatpush1.bf16.msra.mxu0 %v6776
      %6814 = vmatprep.subr.bf16.mxu0 0
      %6815 = vmatpush2.bf16.msra.mxu0 0
      %6816 = vmatprep.subr.bf16.mxu0 0
      %6817 = vmatpush2.bf16.msra.mxu0 0
      %6818 = vmatprep.subr.bf16.mxu0 0
      %6819 = vmatpush2.bf16.msra.mxu0 0
      %6820 = vmatprep.subr.bf16.mxu0 0
      %6821 = vmatpush2.bf16.msra.mxu0 0
      %6822 = vmatprep.subr.bf16.mxu0 0
      %6823 = vmatpush2.bf16.msra.mxu0 0
      %6824 = vmatprep.subr.bf16.mxu0 0
      %6825 = vmatpush2.bf16.msra.mxu0 0
      %6826 = vmatprep.subr.bf16.mxu0 0
      %6827 = vmatpush2.bf16.msra.mxu0 0
      %6828 = vmatprep.subr.bf16.mxu0 0
      %6829 = vmatpush2.bf16.msra.mxu0 0
      %6830 = vmatprep.mubr.bf16.mxu0 0
      %6831 = vmatmul.mubr.bf16.gmra.mxu0 %v6781
      %v6832 = vpop.f32.mrf.mxu0
      %v6833 = vadd.f32 0.0, %v6832
      %v6834 = vpop.f32.mrf.mxu0
      %v6835 = vpop.f32.mrf.mxu0
      %v6836 = vadd.f32 0.0, %v6835
      %v6837 = vpop.f32.mrf.mxu0
      %6838 = vmatprep.mubr.bf16.mxu0 0
      %6839 = vmatmul.mubr.bf16.gmra.mxu0 %v6784
      %v6840 = vpop.f32.mrf.mxu0
      %v6841 = vadd.f32 0.0, %v6840
      %v6842 = vpop.f32.mrf.mxu0
      %v6843 = vpop.f32.mrf.mxu0
      %v6844 = vadd.f32 0.0, %v6843
      %v6845 = vpop.f32.mrf.mxu0
      %6846 = vmatprep.mubr.bf16.mxu0 0
      %6847 = vmatmul.mubr.bf16.gmra.mxu0 %v6787
      %v6848 = vpop.f32.mrf.mxu0
      %v6849 = vadd.f32 0.0, %v6848
      %v6850 = vpop.f32.mrf.mxu0
      %v6851 = vpop.f32.mrf.mxu0
      %v6852 = vadd.f32 0.0, %v6851
      %v6853 = vpop.f32.mrf.mxu0
      %6854 = vmatprep.mubr.bf16.mxu0 0
      %6855 = vmatmul.mubr.bf16.gmra.mxu0 %v6790
      %v6856 = vpop.f32.mrf.mxu0
      %v6857 = vadd.f32 0.0, %v6856
      %v6858 = vpop.f32.mrf.mxu0
      %v6859 = vpop.f32.mrf.mxu0
      %v6860 = vadd.f32 0.0, %v6859
      %v6861 = vpop.f32.mrf.mxu0
      %6862 = vmatprep.mubr.bf16.mxu0 0
      %6863 = vmatmul.mubr.bf16.gmra.mxu0 %v6793
      %v6864 = vpop.f32.mrf.mxu0
      %v6865 = vadd.f32 0.0, %v6864
      %v6866 = vpop.f32.mrf.mxu0
      %v6867 = vpop.f32.mrf.mxu0
      %v6868 = vadd.f32 0.0, %v6867
      %v6869 = vpop.f32.mrf.mxu0
      %6870 = vmatprep.mubr.bf16.mxu0 0
      %6871 = vmatmul.mubr.bf16.gmra.mxu0 %v6796
      %v6872 = vpop.f32.mrf.mxu0
      %v6873 = vadd.f32 0.0, %v6872
      %v6874 = vpop.f32.mrf.mxu0
      %v6875 = vpop.f32.mrf.mxu0
      %v6876 = vpop.f32.mrf.mxu0
      %6877 = vdwg.mxu0
      %v6878 = vadd.f32 %v6724, %v6833
      %v6879 = vadd.f32 %v6725, %v6836
      %v6880 = vadd.f32 %v6726, %v6841
      %v6881 = vadd.f32 %v6727, %v6844
      %v6882 = vadd.f32 %v6728, %v6849
      %v6883 = vadd.f32 %v6729, %v6852
      %v6884 = vadd.f32 %v6730, %v6857
      %v6885 = vadd.f32 %v6731, %v6860
      %v6886 = vadd.f32 %v6732, %v6865
      %v6887 = vadd.f32 %v6733, %v6868
      %v6888 = vadd.f32 %v6734, %v6873
      %v6889 = vsel %vm788, %v6878, 0.0
      %v6890 = vsel %vm788, %v6879, 0.0
      %v6891 = vadd.f32 %v6889, %v6890
      %v6892 = vsel %vm788, %v6880, 0.0
      %v6893 = vadd.f32 %v6891, %v6892
      %v6894 = vsel %vm788, %v6881, 0.0
      %v6895 = vadd.f32 %v6893, %v6894
      %v6896 = vsel %vm788, %v6882, 0.0
      %v6897 = vadd.f32 %v6895, %v6896
      %v6898 = vsel %vm788, %v6883, 0.0
      %v6899 = vadd.f32 %v6897, %v6898
      %v6900 = vsel %vm788, %v6884, 0.0
      %v6901 = vadd.f32 %v6899, %v6900
      %v6902 = vsel %vm788, %v6885, 0.0
      %v6903 = vadd.f32 %v6901, %v6902
      %v6904 = vsel %vm788, %v6886, 0.0
      %v6905 = vadd.f32 %v6903, %v6904
      %v6906 = vsel %vm788, %v6887, 0.0
      %v6907 = vadd.f32 %v6905, %v6906
      %v6908 = vsel %vm847, %v6888, 0.0
      %v6909 = vadd.f32 %v6907, %v6908
      %6910 = vadd.xlane.f32.xlu0 %v6909
      %v6911 = vpop.xlane.xlu0 %6910
      %v6912 = vrot.slane %v6911, 4
      %v6913 = vadd.f32 %v6911, %v6912
      %v6914 = vrot.slane %v6913, 2
      %v6915 = vadd.f32 %v6913, %v6914
      %v6916 = vrot.slane %v6915, 1
      %v6917 = vadd.f32 %v6915, %v6916
      %s6918 = vtos %v6917
      %v6919 = vstv %s6918
      %v6920 = vmul.f32 %v6919, %v2210
      %v6921 = vsub.f32 %v6878, %v6920
      %v6922 = vsub.f32 %v6879, %v6920
      %v6923 = vsub.f32 %v6880, %v6920
      %v6924 = vsub.f32 %v6881, %v6920
      %v6925 = vsub.f32 %v6882, %v6920
      %v6926 = vsub.f32 %v6883, %v6920
      %v6927 = vsub.f32 %v6884, %v6920
      %v6928 = vsub.f32 %v6885, %v6920
      %v6929 = vsub.f32 %v6886, %v6920
      %v6930 = vsub.f32 %v6887, %v6920
      %v6931 = vsub.f32 %v6888, %v6920
      %v6932 = vmul.f32 %v6921, %v6921
      %v6933 = vmul.f32 %v6922, %v6922
      %v6934 = vmul.f32 %v6923, %v6923
      %v6935 = vmul.f32 %v6924, %v6924
      %v6936 = vmul.f32 %v6925, %v6925
      %v6937 = vmul.f32 %v6926, %v6926
      %v6938 = vmul.f32 %v6927, %v6927
      %v6939 = vmul.f32 %v6928, %v6928
      %v6940 = vmul.f32 %v6929, %v6929
      %v6941 = vmul.f32 %v6930, %v6930
      %v6942 = vmul.f32 %v6931, %v6931
      %v6943 = vsel %vm788, %v6932, 0.0
      %v6944 = vsel %vm788, %v6933, 0.0
      %v6945 = vadd.f32 %v6943, %v6944
      %v6946 = vsel %vm788, %v6934, 0.0
      %v6947 = vadd.f32 %v6945, %v6946
      %v6948 = vsel %vm788, %v6935, 0.0
      %v6949 = vadd.f32 %v6947, %v6948
      %v6950 = vsel %vm788, %v6936, 0.0
      %v6951 = vadd.f32 %v6949, %v6950
      %v6952 = vsel %vm788, %v6937, 0.0
      %v6953 = vadd.f32 %v6951, %v6952
      %v6954 = vsel %vm788, %v6938, 0.0
      %v6955 = vadd.f32 %v6953, %v6954
      %v6956 = vsel %vm788, %v6939, 0.0
      %v6957 = vadd.f32 %v6955, %v6956
      %v6958 = vsel %vm788, %v6940, 0.0
      %v6959 = vadd.f32 %v6957, %v6958
      %v6960 = vsel %vm788, %v6941, 0.0
      %v6961 = vadd.f32 %v6959, %v6960
      %v6962 = vsel %vm847, %v6942, 0.0
      %v6963 = vadd.f32 %v6961, %v6962
      %6964 = vadd.xlane.f32.xlu0 %v6963
      %v6965 = vpop.xlane.xlu0 %6964
      %v6966 = vrot.slane %v6965, 4
      %v6967 = vadd.f32 %v6965, %v6966
      %v6968 = vrot.slane %v6967, 2
      %v6969 = vadd.f32 %v6967, %v6968
      %v6970 = vrot.slane %v6969, 1
      %v6971 = vadd.f32 %v6969, %v6970
      %s6972 = vtos %v6971
      %v6973 = vstv %s6972
      %v6974 = vmul.f32 %v6973, %v2210
      %v6975 = vadd.f32 %v6974, 1e-05
      %v6976 = vrsqrt.pop %v6975
      %v6977 = vmul.f32 %v6921, %v6976
      %v6978 = vmul.f32 %v6922, %v6976
      %v6979 = vmul.f32 %v6923, %v6976
      %v6980 = vmul.f32 %v6924, %v6976
      %v6981 = vmul.f32 %v6925, %v6976
      %v6982 = vmul.f32 %v6926, %v6976
      %v6983 = vmul.f32 %v6927, %v6976
      %v6984 = vmul.f32 %v6928, %v6976
      %v6985 = vmul.f32 %v6929, %v6976
      %v6986 = vmul.f32 %v6930, %v6976
      %v6987 = vmul.f32 %v6931, %v6976
      %v6988 = vmul.f32 %v6977, %v5524
      %v6989 = vmul.f32 %v6978, %v5525
      %v6990 = vmul.f32 %v6979, %v5526
      %v6991 = vmul.f32 %v6980, %v5527
      %v6992 = vmul.f32 %v6981, %v5528
      %v6993 = vmul.f32 %v6982, %v5529
      %v6994 = vmul.f32 %v6983, %v5530
      %v6995 = vmul.f32 %v6984, %v5531
      %v6996 = vmul.f32 %v6985, %v5532
      %v6997 = vmul.f32 %v6986, %v5533
      %v6998 = vmul.f32 %v6987, %v5534
      %v6999 = vadd.f32 %v6988, %v5536
      %v7000 = vadd.f32 %v6989, %v5537
      %v7001 = vadd.f32 %v6990, %v5538
      %v7002 = vadd.f32 %v6991, %v5539
      %v7003 = vadd.f32 %v6992, %v5540
      %v7004 = vadd.f32 %v6993, %v5541
      %v7005 = vadd.f32 %v6994, %v5542
      %v7006 = vadd.f32 %v6995, %v5543
      %v7007 = vadd.f32 %v6996, %v5544
      %v7008 = vadd.f32 %v6997, %v5545
      %v7009 = vadd.f32 %v6998, %v5546
      %v7010 = vmax.f32 %v6999, 0.0
      %v7011 = vmax.f32 %v7000, 0.0
      %v7012 = vmax.f32 %v7001, 0.0
      %v7013 = vmax.f32 %v7002, 0.0
      %v7014 = vmax.f32 %v7003, 0.0
      %v7015 = vmax.f32 %v7004, 0.0
      %v7016 = vmax.f32 %v7005, 0.0
      %v7017 = vmax.f32 %v7006, 0.0
      %v7018 = vmax.f32 %v7007, 0.0
      %v7019 = vmax.f32 %v7008, 0.0
      %v7020 = vmax.f32 %v7009, 0.0
      %s7021 = scalar_lea.vmem %s5, 264
      %v7022 = vld [vmem:[%s7021] sm:$0xff]
      %v7023 = vld [vmem:[%s7021 + $0x8] sm:$0xff]
      %v7024 = vld [vmem:[%s7021 + $0x10] sm:$0xff]
      %v7025 = vld [vmem:[%s7021 + $0x18] sm:$0xff]
      %v7026 = vld [vmem:[%s7021 + $0x20] sm:$0xff]
      %v7027 = vld [vmem:[%s7021 + $0x28] sm:$0xff]
      %v7028 = vld [vmem:[%s7021 + $0x30] sm:$0xff]
      %v7029 = vld [vmem:[%s7021 + $0x38] sm:$0xff]
      %v7030 = vld [vmem:[%s7021 + $0x40] sm:$0xff]
      %v7031 = vld [vmem:[%s7021 + $0x48] sm:$0xff]
      %v7032 = vld [vmem:[%s7021 + $0x50] sm:$0x1]
      %s7033 = scalar_lea.vmem %s6, 264
      %v7034 = vld [vmem:[%s7033] sm:$0xff]
      %v7035 = vld [vmem:[%s7033 + $0x8] sm:$0xff]
      %v7036 = vld [vmem:[%s7033 + $0x10] sm:$0xff]
      %v7037 = vld [vmem:[%s7033 + $0x18] sm:$0xff]
      %v7038 = vld [vmem:[%s7033 + $0x20] sm:$0xff]
      %v7039 = vld [vmem:[%s7033 + $0x28] sm:$0xff]
      %v7040 = vld [vmem:[%s7033 + $0x30] sm:$0xff]
      %v7041 = vld [vmem:[%s7033 + $0x38] sm:$0xff]
      %v7042 = vld [vmem:[%s7033 + $0x40] sm:$0xff]
      %v7043 = vld [vmem:[%s7033 + $0x48] sm:$0xff]
      %v7044 = vld [vmem:[%s7033 + $0x50] sm:$0x1]
      %7045 = vst.msk [vmem:[#allocation2 + $0x10] sm:$0xff] %vm788, %v7010
      %7046 = vst.msk [vmem:[#allocation2 + $0x18] sm:$0xff] %vm788, %v7011
      %7047 = vst.msk [vmem:[#allocation2 + $0x20] sm:$0xff] %vm788, %v7012
      %7048 = vst.msk [vmem:[#allocation2 + $0x28] sm:$0xff] %vm788, %v7013
      %7049 = vst.msk [vmem:[#allocation2 + $0x30] sm:$0xff] %vm788, %v7014
      %7050 = vst.msk [vmem:[#allocation2 + $0x38] sm:$0xff] %vm788, %v7015
      %7051 = vst.msk [vmem:[#allocation2 + $0x40] sm:$0xff] %vm788, %v7016
      %7052 = vst.msk [vmem:[#allocation2 + $0x48] sm:$0xff] %vm788, %v7017
      %7053 = vst.msk [vmem:[#allocation2 + $0x50] sm:$0xff] %vm788, %v7018
      %7054 = vst.msk [vmem:[#allocation2 + $0x58] sm:$0xff] %vm788, %v7019
      %7055 = vst.msk [vmem:[#allocation2 + $0x60] sm:$0x1] %vm847, %v7020
      %v7056 = vld [vmem:[#allocation2 + $0x6] sm:$0xff]
      %v7057 = vld [vmem:[#allocation2 + $0xe] sm:$0xff]
      %v7058 = vld [vmem:[#allocation2 + $0x16] sm:$0xff]
      %v7059 = vld [vmem:[#allocation2 + $0x1e] sm:$0xff]
      %v7060 = vld [vmem:[#allocation2 + $0x26] sm:$0xff]
      %v7061 = vld [vmem:[#allocation2 + $0x2e] sm:$0xff]
      %v7062 = vld [vmem:[#allocation2 + $0x36] sm:$0xff]
      %v7063 = vld [vmem:[#allocation2 + $0x3e] sm:$0xff]
      %v7064 = vld [vmem:[#allocation2 + $0x46] sm:$0xff]
      %v7065 = vld [vmem:[#allocation2 + $0x4e] sm:$0xff]
      %v7066 = vld [vmem:[#allocation2 + $0x56] sm:$0x1]
      %v7067 = vmul.f32 %v7056, %v744
      %v7068 = vmul.f32 %v7057, %v745
      %v7069 = vmul.f32 %v7058, %v746
      %v7070 = vmul.f32 %v7059, %v747
      %v7071 = vmul.f32 %v7060, %v748
      %v7072 = vmul.f32 %v7061, %v749
      %v7073 = vmul.f32 %v7062, %v750
      %v7074 = vmul.f32 %v7063, %v751
      %v7075 = vmul.f32 %v7064, %v752
      %v7076 = vmul.f32 %v7065, %v753
      %v7077 = vmul.f32 %v7066, %v754
      %v7078 = vpack.c.bf16 %v7068, %v7067
      %v7079 = vpack.c.bf16 %v7070, %v7069
      %v7080 = vpack.c.bf16 %v7072, %v7071
      %v7081 = vpack.c.bf16 %v7074, %v7073
      %v7082 = vpack.c.bf16 %v7076, %v7075
      %v7083 = vpack.c.bf16 %v7077, %v7077
      %s7084 = scalar_lea.vmem %s4, 432
      %v7085 = vld [vmem:[%s7084] sm:$0xf]
      %v7086 = vld [vmem:[%s7084 + $0x4] sm:$0xf]
      %v7087 = vld [vmem:[%s7084 + $0x8] sm:$0xf]
      %v7088 = vld [vmem:[%s7084 + $0xc] sm:$0xf]
      %v7089 = vld [vmem:[#allocation2 + $0x7] sm:$0xff]
      %v7090 = vld [vmem:[#allocation2 + $0xf] sm:$0xff]
      %v7091 = vld [vmem:[#allocation2 + $0x17] sm:$0xff]
      %v7092 = vld [vmem:[#allocation2 + $0x1f] sm:$0xff]
      %v7093 = vld [vmem:[#allocation2 + $0x27] sm:$0xff]
      %v7094 = vld [vmem:[#allocation2 + $0x2f] sm:$0xff]
      %v7095 = vld [vmem:[#allocation2 + $0x37] sm:$0xff]
      %v7096 = vld [vmem:[#allocation2 + $0x3f] sm:$0xff]
      %v7097 = vld [vmem:[#allocation2 + $0x47] sm:$0xff]
      %v7098 = vld [vmem:[#allocation2 + $0x4f] sm:$0xff]
      %v7099 = vld [vmem:[#allocation2 + $0x57] sm:$0x1]
      %v7100 = vpack.c.bf16 %v7090, %v7089
      %v7101 = vpack.c.bf16 %v7092, %v7091
      %v7102 = vpack.c.bf16 %v7094, %v7093
      %v7103 = vpack.c.bf16 %v7096, %v7095
      %v7104 = vpack.c.bf16 %v7098, %v7097
      %v7105 = vpack.c.bf16 %v7099, %v7099
      %s7106 = scalar_lea.vmem %s4, 448
      %v7107 = vld [vmem:[%s7106] sm:$0xf]
      %v7108 = vld [vmem:[%s7106 + $0x4] sm:$0xf]
      %v7109 = vld [vmem:[%s7106 + $0x8] sm:$0xf]
      %v7110 = vld [vmem:[%s7106 + $0xc] sm:$0xf]
      %v7115 = vunpack.c.l.b16 %v7107
      %v7116 = vunpack.c.l.b16 %v7108
      %v7117 = vunpack.c.l.b16 %v7109
      %v7118 = vunpack.c.l.b16 %v7110
      %v7119 = vpack.c.b16 %v7116, %v7115
      %v7120 = vpack.c.b16 %v7118, %v7117
      %v7124 = vsel %vm788, %v7100, 0
      %v7127 = vsel %vm788, %v7101, 0
      %v7130 = vsel %vm788, %v7102, 0
      %v7133 = vsel %vm788, %v7103, 0
      %v7136 = vsel %vm788, %v7104, 0
      %v7139 = vsel %vm788, %v7105, 0
      %7141 = vmatprep.subr.bf16.mxu0 0
      %7142 = vmatpush1.bf16.msra.mxu0 0
      %7143 = vmatprep.subr.bf16.mxu0 0
      %7144 = vmatpush1.bf16.msra.mxu0 0
      %7145 = vmatprep.subr.bf16.mxu0 0
      %7146 = vmatpush1.bf16.msra.mxu0 0
      %7147 = vmatprep.subr.bf16.mxu0 0
      %7148 = vmatpush1.bf16.msra.mxu0 0
      %7149 = vmatprep.subr.bf16.mxu0 0
      %7150 = vmatpush1.bf16.msra.mxu0 0
      %7151 = vmatprep.subr.bf16.mxu0 0
      %7152 = vmatpush1.bf16.msra.mxu0 0
      %7153 = vmatprep.subr.bf16.mxu0 0
      %7154 = vmatpush1.bf16.msra.mxu0 %v7120
      %7155 = vmatprep.subr.bf16.mxu0 0
      %7156 = vmatpush1.bf16.msra.mxu0 %v7119
      %7157 = vmatprep.subr.bf16.mxu0 0
      %7158 = vmatpush2.bf16.msra.mxu0 0
      %7159 = vmatprep.subr.bf16.mxu0 0
      %7160 = vmatpush2.bf16.msra.mxu0 0
      %7161 = vmatprep.subr.bf16.mxu0 0
      %7162 = vmatpush2.bf16.msra.mxu0 0
      %7163 = vmatprep.subr.bf16.mxu0 0
      %7164 = vmatpush2.bf16.msra.mxu0 0
      %7165 = vmatprep.subr.bf16.mxu0 0
      %7166 = vmatpush2.bf16.msra.mxu0 0
      %7167 = vmatprep.subr.bf16.mxu0 0
      %7168 = vmatpush2.bf16.msra.mxu0 0
      %7169 = vmatprep.subr.bf16.mxu0 0
      %7170 = vmatpush2.bf16.msra.mxu0 0
      %7171 = vmatprep.subr.bf16.mxu0 0
      %7172 = vmatpush2.bf16.msra.mxu0 0
      %7173 = vmatprep.mubr.bf16.mxu0 0
      %7174 = vmatmul.mubr.bf16.gmra.mxu0 %v7124
      %v7175 = vpop.f32.mrf.mxu0
      %v7176 = vadd.f32 0.0, %v7175
      %v7177 = vpop.f32.mrf.mxu0
      %v7178 = vpop.f32.mrf.mxu0
      %v7179 = vadd.f32 0.0, %v7178
      %v7180 = vpop.f32.mrf.mxu0
      %7181 = vmatprep.mubr.bf16.mxu0 0
      %7182 = vmatmul.mubr.bf16.gmra.mxu0 %v7127
      %v7183 = vpop.f32.mrf.mxu0
      %v7184 = vadd.f32 0.0, %v7183
      %v7185 = vpop.f32.mrf.mxu0
      %v7186 = vpop.f32.mrf.mxu0
      %v7187 = vadd.f32 0.0, %v7186
      %v7188 = vpop.f32.mrf.mxu0
      %7189 = vmatprep.mubr.bf16.mxu0 0
      %7190 = vmatmul.mubr.bf16.gmra.mxu0 %v7130
      %v7191 = vpop.f32.mrf.mxu0
      %v7192 = vadd.f32 0.0, %v7191
      %v7193 = vpop.f32.mrf.mxu0
      %v7194 = vpop.f32.mrf.mxu0
      %v7195 = vadd.f32 0.0, %v7194
      %v7196 = vpop.f32.mrf.mxu0
      %7197 = vmatprep.mubr.bf16.mxu0 0
      %7198 = vmatmul.mubr.bf16.gmra.mxu0 %v7133
      %v7199 = vpop.f32.mrf.mxu0
      %v7200 = vadd.f32 0.0, %v7199
      %v7201 = vpop.f32.mrf.mxu0
      %v7202 = vpop.f32.mrf.mxu0
      %v7203 = vadd.f32 0.0, %v7202
      %v7204 = vpop.f32.mrf.mxu0
      %7205 = vmatprep.mubr.bf16.mxu0 0
      %7206 = vmatmul.mubr.bf16.gmra.mxu0 %v7136
      %v7207 = vpop.f32.mrf.mxu0
      %v7208 = vadd.f32 0.0, %v7207
      %v7209 = vpop.f32.mrf.mxu0
      %v7210 = vpop.f32.mrf.mxu0
      %v7211 = vadd.f32 0.0, %v7210
      %v7212 = vpop.f32.mrf.mxu0
      %7213 = vmatprep.mubr.bf16.mxu0 0
      %7214 = vmatmul.mubr.bf16.gmra.mxu0 %v7139
      %v7215 = vpop.f32.mrf.mxu0
      %v7216 = vadd.f32 0.0, %v7215
      %v7217 = vpop.f32.mrf.mxu0
      %v7218 = vpop.f32.mrf.mxu0
      %v7219 = vpop.f32.mrf.mxu0
      %7220 = vdwg.mxu0
      %v7225 = vunpack.c.l.b16 %v7085
      %v7226 = vunpack.c.l.b16 %v7086
      %v7227 = vunpack.c.l.b16 %v7087
      %v7228 = vunpack.c.l.b16 %v7088
      %v7229 = vpack.c.b16 %v7226, %v7225
      %v7230 = vpack.c.b16 %v7228, %v7227
      %v7234 = vsel %vm788, %v7078, 0
      %v7237 = vsel %vm788, %v7079, 0
      %v7240 = vsel %vm788, %v7080, 0
      %v7243 = vsel %vm788, %v7081, 0
      %v7246 = vsel %vm788, %v7082, 0
      %v7249 = vsel %vm788, %v7083, 0
      %7251 = vmatprep.subr.bf16.mxu0 0
      %7252 = vmatpush1.bf16.msra.mxu0 0
      %7253 = vmatprep.subr.bf16.mxu0 0
      %7254 = vmatpush1.bf16.msra.mxu0 0
      %7255 = vmatprep.subr.bf16.mxu0 0
      %7256 = vmatpush1.bf16.msra.mxu0 0
      %7257 = vmatprep.subr.bf16.mxu0 0
      %7258 = vmatpush1.bf16.msra.mxu0 0
      %7259 = vmatprep.subr.bf16.mxu0 0
      %7260 = vmatpush1.bf16.msra.mxu0 0
      %7261 = vmatprep.subr.bf16.mxu0 0
      %7262 = vmatpush1.bf16.msra.mxu0 0
      %7263 = vmatprep.subr.bf16.mxu0 0
      %7264 = vmatpush1.bf16.msra.mxu0 %v7230
      %7265 = vmatprep.subr.bf16.mxu0 0
      %7266 = vmatpush1.bf16.msra.mxu0 %v7229
      %7267 = vmatprep.subr.bf16.mxu0 0
      %7268 = vmatpush2.bf16.msra.mxu0 0
      %7269 = vmatprep.subr.bf16.mxu0 0
      %7270 = vmatpush2.bf16.msra.mxu0 0
      %7271 = vmatprep.subr.bf16.mxu0 0
      %7272 = vmatpush2.bf16.msra.mxu0 0
      %7273 = vmatprep.subr.bf16.mxu0 0
      %7274 = vmatpush2.bf16.msra.mxu0 0
      %7275 = vmatprep.subr.bf16.mxu0 0
      %7276 = vmatpush2.bf16.msra.mxu0 0
      %7277 = vmatprep.subr.bf16.mxu0 0
      %7278 = vmatpush2.bf16.msra.mxu0 0
      %7279 = vmatprep.subr.bf16.mxu0 0
      %7280 = vmatpush2.bf16.msra.mxu0 0
      %7281 = vmatprep.subr.bf16.mxu0 0
      %7282 = vmatpush2.bf16.msra.mxu0 0
      %7283 = vmatprep.mubr.bf16.mxu0 0
      %7284 = vmatmul.mubr.bf16.gmra.mxu0 %v7234
      %v7285 = vpop.f32.mrf.mxu0
      %v7286 = vadd.f32 %v7176, %v7285
      %v7287 = vpop.f32.mrf.mxu0
      %v7288 = vpop.f32.mrf.mxu0
      %v7289 = vadd.f32 %v7179, %v7288
      %v7290 = vpop.f32.mrf.mxu0
      %7291 = vmatprep.mubr.bf16.mxu0 0
      %7292 = vmatmul.mubr.bf16.gmra.mxu0 %v7237
      %v7293 = vpop.f32.mrf.mxu0
      %v7294 = vadd.f32 %v7184, %v7293
      %v7295 = vpop.f32.mrf.mxu0
      %v7296 = vpop.f32.mrf.mxu0
      %v7297 = vadd.f32 %v7187, %v7296
      %v7298 = vpop.f32.mrf.mxu0
      %7299 = vmatprep.mubr.bf16.mxu0 0
      %7300 = vmatmul.mubr.bf16.gmra.mxu0 %v7240
      %v7301 = vpop.f32.mrf.mxu0
      %v7302 = vadd.f32 %v7192, %v7301
      %v7303 = vpop.f32.mrf.mxu0
      %v7304 = vpop.f32.mrf.mxu0
      %v7305 = vadd.f32 %v7195, %v7304
      %v7306 = vpop.f32.mrf.mxu0
      %7307 = vmatprep.mubr.bf16.mxu0 0
      %7308 = vmatmul.mubr.bf16.gmra.mxu0 %v7243
      %v7309 = vpop.f32.mrf.mxu0
      %v7310 = vadd.f32 %v7200, %v7309
      %v7311 = vpop.f32.mrf.mxu0
      %v7312 = vpop.f32.mrf.mxu0
      %v7313 = vadd.f32 %v7203, %v7312
      %v7314 = vpop.f32.mrf.mxu0
      %7315 = vmatprep.mubr.bf16.mxu0 0
      %7316 = vmatmul.mubr.bf16.gmra.mxu0 %v7246
      %v7317 = vpop.f32.mrf.mxu0
      %v7318 = vadd.f32 %v7208, %v7317
      %v7319 = vpop.f32.mrf.mxu0
      %v7320 = vpop.f32.mrf.mxu0
      %v7321 = vadd.f32 %v7211, %v7320
      %v7322 = vpop.f32.mrf.mxu0
      %7323 = vmatprep.mubr.bf16.mxu0 0
      %7324 = vmatmul.mubr.bf16.gmra.mxu0 %v7249
      %v7325 = vpop.f32.mrf.mxu0
      %v7326 = vadd.f32 %v7216, %v7325
      %v7327 = vpop.f32.mrf.mxu0
      %v7328 = vpop.f32.mrf.mxu0
      %v7329 = vpop.f32.mrf.mxu0
      %7330 = vdwg.mxu0
      %v7331 = vld [vmem:[#allocation2 + $0x8] sm:$0xff]
      %v7332 = vld [vmem:[#allocation2 + $0x10] sm:$0xff]
      %v7333 = vld [vmem:[#allocation2 + $0x18] sm:$0xff]
      %v7334 = vld [vmem:[#allocation2 + $0x20] sm:$0xff]
      %v7335 = vld [vmem:[#allocation2 + $0x28] sm:$0xff]
      %v7336 = vld [vmem:[#allocation2 + $0x30] sm:$0xff]
      %v7337 = vld [vmem:[#allocation2 + $0x38] sm:$0xff]
      %v7338 = vld [vmem:[#allocation2 + $0x40] sm:$0xff]
      %v7339 = vld [vmem:[#allocation2 + $0x48] sm:$0xff]
      %v7340 = vld [vmem:[#allocation2 + $0x50] sm:$0xff]
      %v7341 = vld [vmem:[#allocation2 + $0x58] sm:$0x1]
      %v7342 = vmul.f32 %v7331, %v777
      %v7343 = vmul.f32 %v7332, %v778
      %v7344 = vmul.f32 %v7333, %v779
      %v7345 = vmul.f32 %v7334, %v780
      %v7346 = vmul.f32 %v7335, %v781
      %v7347 = vmul.f32 %v7336, %v782
      %v7348 = vmul.f32 %v7337, %v783
      %v7349 = vmul.f32 %v7338, %v784
      %v7350 = vmul.f32 %v7339, %v785
      %v7351 = vmul.f32 %v7340, %v786
      %v7352 = vmul.f32 %v7341, %v787
      %v7353 = vpack.c.bf16 %v7343, %v7342
      %v7354 = vpack.c.bf16 %v7345, %v7344
      %v7355 = vpack.c.bf16 %v7347, %v7346
      %v7356 = vpack.c.bf16 %v7349, %v7348
      %v7357 = vpack.c.bf16 %v7351, %v7350
      %v7358 = vpack.c.bf16 %v7352, %v7352
      %s7359 = scalar_lea.vmem %s4, 464
      %v7360 = vld [vmem:[%s7359] sm:$0xf]
      %v7361 = vld [vmem:[%s7359 + $0x4] sm:$0xf]
      %v7362 = vld [vmem:[%s7359 + $0x8] sm:$0xf]
      %v7363 = vld [vmem:[%s7359 + $0xc] sm:$0xf]
      %v7368 = vunpack.c.l.b16 %v7360
      %v7369 = vunpack.c.l.b16 %v7361
      %v7370 = vunpack.c.l.b16 %v7362
      %v7371 = vunpack.c.l.b16 %v7363
      %v7372 = vpack.c.b16 %v7369, %v7368
      %v7373 = vpack.c.b16 %v7371, %v7370
      %v7377 = vsel %vm788, %v7353, 0
      %v7380 = vsel %vm788, %v7354, 0
      %v7383 = vsel %vm788, %v7355, 0
      %v7386 = vsel %vm788, %v7356, 0
      %v7389 = vsel %vm788, %v7357, 0
      %v7392 = vsel %vm788, %v7358, 0
      %7394 = vmatprep.subr.bf16.mxu0 0
      %7395 = vmatpush1.bf16.msra.mxu0 0
      %7396 = vmatprep.subr.bf16.mxu0 0
      %7397 = vmatpush1.bf16.msra.mxu0 0
      %7398 = vmatprep.subr.bf16.mxu0 0
      %7399 = vmatpush1.bf16.msra.mxu0 0
      %7400 = vmatprep.subr.bf16.mxu0 0
      %7401 = vmatpush1.bf16.msra.mxu0 0
      %7402 = vmatprep.subr.bf16.mxu0 0
      %7403 = vmatpush1.bf16.msra.mxu0 0
      %7404 = vmatprep.subr.bf16.mxu0 0
      %7405 = vmatpush1.bf16.msra.mxu0 0
      %7406 = vmatprep.subr.bf16.mxu0 0
      %7407 = vmatpush1.bf16.msra.mxu0 %v7373
      %7408 = vmatprep.subr.bf16.mxu0 0
      %7409 = vmatpush1.bf16.msra.mxu0 %v7372
      %7410 = vmatprep.subr.bf16.mxu0 0
      %7411 = vmatpush2.bf16.msra.mxu0 0
      %7412 = vmatprep.subr.bf16.mxu0 0
      %7413 = vmatpush2.bf16.msra.mxu0 0
      %7414 = vmatprep.subr.bf16.mxu0 0
      %7415 = vmatpush2.bf16.msra.mxu0 0
      %7416 = vmatprep.subr.bf16.mxu0 0
      %7417 = vmatpush2.bf16.msra.mxu0 0
      %7418 = vmatprep.subr.bf16.mxu0 0
      %7419 = vmatpush2.bf16.msra.mxu0 0
      %7420 = vmatprep.subr.bf16.mxu0 0
      %7421 = vmatpush2.bf16.msra.mxu0 0
      %7422 = vmatprep.subr.bf16.mxu0 0
      %7423 = vmatpush2.bf16.msra.mxu0 0
      %7424 = vmatprep.subr.bf16.mxu0 0
      %7425 = vmatpush2.bf16.msra.mxu0 0
      %7426 = vmatprep.mubr.bf16.mxu0 0
      %7427 = vmatmul.mubr.bf16.gmra.mxu0 %v7377
      %v7428 = vpop.f32.mrf.mxu0
      %v7429 = vadd.f32 0.0, %v7428
      %v7430 = vpop.f32.mrf.mxu0
      %v7431 = vpop.f32.mrf.mxu0
      %v7432 = vadd.f32 0.0, %v7431
      %v7433 = vpop.f32.mrf.mxu0
      %7434 = vmatprep.mubr.bf16.mxu0 0
      %7435 = vmatmul.mubr.bf16.gmra.mxu0 %v7380
      %v7436 = vpop.f32.mrf.mxu0
      %v7437 = vadd.f32 0.0, %v7436
      %v7438 = vpop.f32.mrf.mxu0
      %v7439 = vpop.f32.mrf.mxu0
      %v7440 = vadd.f32 0.0, %v7439
      %v7441 = vpop.f32.mrf.mxu0
      %7442 = vmatprep.mubr.bf16.mxu0 0
      %7443 = vmatmul.mubr.bf16.gmra.mxu0 %v7383
      %v7444 = vpop.f32.mrf.mxu0
      %v7445 = vadd.f32 0.0, %v7444
      %v7446 = vpop.f32.mrf.mxu0
      %v7447 = vpop.f32.mrf.mxu0
      %v7448 = vadd.f32 0.0, %v7447
      %v7449 = vpop.f32.mrf.mxu0
      %7450 = vmatprep.mubr.bf16.mxu0 0
      %7451 = vmatmul.mubr.bf16.gmra.mxu0 %v7386
      %v7452 = vpop.f32.mrf.mxu0
      %v7453 = vadd.f32 0.0, %v7452
      %v7454 = vpop.f32.mrf.mxu0
      %v7455 = vpop.f32.mrf.mxu0
      %v7456 = vadd.f32 0.0, %v7455
      %v7457 = vpop.f32.mrf.mxu0
      %7458 = vmatprep.mubr.bf16.mxu0 0
      %7459 = vmatmul.mubr.bf16.gmra.mxu0 %v7389
      %v7460 = vpop.f32.mrf.mxu0
      %v7461 = vadd.f32 0.0, %v7460
      %v7462 = vpop.f32.mrf.mxu0
      %v7463 = vpop.f32.mrf.mxu0
      %v7464 = vadd.f32 0.0, %v7463
      %v7465 = vpop.f32.mrf.mxu0
      %7466 = vmatprep.mubr.bf16.mxu0 0
      %7467 = vmatmul.mubr.bf16.gmra.mxu0 %v7392
      %v7468 = vpop.f32.mrf.mxu0
      %v7469 = vadd.f32 0.0, %v7468
      %v7470 = vpop.f32.mrf.mxu0
      %v7471 = vpop.f32.mrf.mxu0
      %v7472 = vpop.f32.mrf.mxu0
      %7473 = vdwg.mxu0
      %v7474 = vadd.f32 %v7286, %v7429
      %v7475 = vadd.f32 %v7289, %v7432
      %v7476 = vadd.f32 %v7294, %v7437
      %v7477 = vadd.f32 %v7297, %v7440
      %v7478 = vadd.f32 %v7302, %v7445
      %v7479 = vadd.f32 %v7305, %v7448
      %v7480 = vadd.f32 %v7310, %v7453
      %v7481 = vadd.f32 %v7313, %v7456
      %v7482 = vadd.f32 %v7318, %v7461
      %v7483 = vadd.f32 %v7321, %v7464
      %v7484 = vadd.f32 %v7326, %v7469
      %v7485 = vld [vmem:[#allocation2 + $0xf] sm:$0xff]
      %v7486 = vld [vmem:[#allocation2 + $0x17] sm:$0xff]
      %v7487 = vld [vmem:[#allocation2 + $0x1f] sm:$0xff]
      %v7488 = vld [vmem:[#allocation2 + $0x27] sm:$0xff]
      %v7489 = vld [vmem:[#allocation2 + $0x2f] sm:$0xff]
      %v7490 = vld [vmem:[#allocation2 + $0x37] sm:$0xff]
      %v7491 = vld [vmem:[#allocation2 + $0x3f] sm:$0xff]
      %v7492 = vld [vmem:[#allocation2 + $0x47] sm:$0xff]
      %v7493 = vld [vmem:[#allocation2 + $0x4f] sm:$0xff]
      %v7494 = vld [vmem:[#allocation2 + $0x57] sm:$0xff]
      %v7495 = vld [vmem:[#allocation2 + $0x5f] sm:$0x1]
      %v7496 = vmul.f32 %v7485, %v744
      %v7497 = vmul.f32 %v7486, %v745
      %v7498 = vmul.f32 %v7487, %v746
      %v7499 = vmul.f32 %v7488, %v747
      %v7500 = vmul.f32 %v7489, %v748
      %v7501 = vmul.f32 %v7490, %v749
      %v7502 = vmul.f32 %v7491, %v750
      %v7503 = vmul.f32 %v7492, %v751
      %v7504 = vmul.f32 %v7493, %v752
      %v7505 = vmul.f32 %v7494, %v753
      %v7506 = vmul.f32 %v7495, %v754
      %v7507 = vpack.c.bf16 %v7497, %v7496
      %v7508 = vpack.c.bf16 %v7499, %v7498
      %v7509 = vpack.c.bf16 %v7501, %v7500
      %v7510 = vpack.c.bf16 %v7503, %v7502
      %v7511 = vpack.c.bf16 %v7505, %v7504
      %v7512 = vpack.c.bf16 %v7506, %v7506
      %s7513 = scalar_lea.vmem %s4, 480
      %v7514 = vld [vmem:[%s7513] sm:$0xf]
      %v7515 = vld [vmem:[%s7513 + $0x4] sm:$0xf]
      %v7516 = vld [vmem:[%s7513 + $0x8] sm:$0xf]
      %v7517 = vld [vmem:[%s7513 + $0xc] sm:$0xf]
      %v7522 = vunpack.c.l.b16 %v7514
      %v7523 = vunpack.c.l.b16 %v7515
      %v7524 = vunpack.c.l.b16 %v7516
      %v7525 = vunpack.c.l.b16 %v7517
      %v7526 = vpack.c.b16 %v7523, %v7522
      %v7527 = vpack.c.b16 %v7525, %v7524
      %v7531 = vsel %vm788, %v7507, 0
      %v7534 = vsel %vm788, %v7508, 0
      %v7537 = vsel %vm788, %v7509, 0
      %v7540 = vsel %vm788, %v7510, 0
      %v7543 = vsel %vm788, %v7511, 0
      %v7546 = vsel %vm788, %v7512, 0
      %7548 = vmatprep.subr.bf16.mxu0 0
      %7549 = vmatpush1.bf16.msra.mxu0 0
      %7550 = vmatprep.subr.bf16.mxu0 0
      %7551 = vmatpush1.bf16.msra.mxu0 0
      %7552 = vmatprep.subr.bf16.mxu0 0
      %7553 = vmatpush1.bf16.msra.mxu0 0
      %7554 = vmatprep.subr.bf16.mxu0 0
      %7555 = vmatpush1.bf16.msra.mxu0 0
      %7556 = vmatprep.subr.bf16.mxu0 0
      %7557 = vmatpush1.bf16.msra.mxu0 0
      %7558 = vmatprep.subr.bf16.mxu0 0
      %7559 = vmatpush1.bf16.msra.mxu0 0
      %7560 = vmatprep.subr.bf16.mxu0 0
      %7561 = vmatpush1.bf16.msra.mxu0 %v7527
      %7562 = vmatprep.subr.bf16.mxu0 0
      %7563 = vmatpush1.bf16.msra.mxu0 %v7526
      %7564 = vmatprep.subr.bf16.mxu0 0
      %7565 = vmatpush2.bf16.msra.mxu0 0
      %7566 = vmatprep.subr.bf16.mxu0 0
      %7567 = vmatpush2.bf16.msra.mxu0 0
      %7568 = vmatprep.subr.bf16.mxu0 0
      %7569 = vmatpush2.bf16.msra.mxu0 0
      %7570 = vmatprep.subr.bf16.mxu0 0
      %7571 = vmatpush2.bf16.msra.mxu0 0
      %7572 = vmatprep.subr.bf16.mxu0 0
      %7573 = vmatpush2.bf16.msra.mxu0 0
      %7574 = vmatprep.subr.bf16.mxu0 0
      %7575 = vmatpush2.bf16.msra.mxu0 0
      %7576 = vmatprep.subr.bf16.mxu0 0
      %7577 = vmatpush2.bf16.msra.mxu0 0
      %7578 = vmatprep.subr.bf16.mxu0 0
      %7579 = vmatpush2.bf16.msra.mxu0 0
      %7580 = vmatprep.mubr.bf16.mxu0 0
      %7581 = vmatmul.mubr.bf16.gmra.mxu0 %v7531
      %v7582 = vpop.f32.mrf.mxu0
      %v7583 = vadd.f32 0.0, %v7582
      %v7584 = vpop.f32.mrf.mxu0
      %v7585 = vpop.f32.mrf.mxu0
      %v7586 = vadd.f32 0.0, %v7585
      %v7587 = vpop.f32.mrf.mxu0
      %7588 = vmatprep.mubr.bf16.mxu0 0
      %7589 = vmatmul.mubr.bf16.gmra.mxu0 %v7534
      %v7590 = vpop.f32.mrf.mxu0
      %v7591 = vadd.f32 0.0, %v7590
      %v7592 = vpop.f32.mrf.mxu0
      %v7593 = vpop.f32.mrf.mxu0
      %v7594 = vadd.f32 0.0, %v7593
      %v7595 = vpop.f32.mrf.mxu0
      %7596 = vmatprep.mubr.bf16.mxu0 0
      %7597 = vmatmul.mubr.bf16.gmra.mxu0 %v7537
      %v7598 = vpop.f32.mrf.mxu0
      %v7599 = vadd.f32 0.0, %v7598
      %v7600 = vpop.f32.mrf.mxu0
      %v7601 = vpop.f32.mrf.mxu0
      %v7602 = vadd.f32 0.0, %v7601
      %v7603 = vpop.f32.mrf.mxu0
      %7604 = vmatprep.mubr.bf16.mxu0 0
      %7605 = vmatmul.mubr.bf16.gmra.mxu0 %v7540
      %v7606 = vpop.f32.mrf.mxu0
      %v7607 = vadd.f32 0.0, %v7606
      %v7608 = vpop.f32.mrf.mxu0
      %v7609 = vpop.f32.mrf.mxu0
      %v7610 = vadd.f32 0.0, %v7609
      %v7611 = vpop.f32.mrf.mxu0
      %7612 = vmatprep.mubr.bf16.mxu0 0
      %7613 = vmatmul.mubr.bf16.gmra.mxu0 %v7543
      %v7614 = vpop.f32.mrf.mxu0
      %v7615 = vadd.f32 0.0, %v7614
      %v7616 = vpop.f32.mrf.mxu0
      %v7617 = vpop.f32.mrf.mxu0
      %v7618 = vadd.f32 0.0, %v7617
      %v7619 = vpop.f32.mrf.mxu0
      %7620 = vmatprep.mubr.bf16.mxu0 0
      %7621 = vmatmul.mubr.bf16.gmra.mxu0 %v7546
      %v7622 = vpop.f32.mrf.mxu0
      %v7623 = vadd.f32 0.0, %v7622
      %v7624 = vpop.f32.mrf.mxu0
      %v7625 = vpop.f32.mrf.mxu0
      %v7626 = vpop.f32.mrf.mxu0
      %7627 = vdwg.mxu0
      %v7628 = vadd.f32 %v7474, %v7583
      %v7629 = vadd.f32 %v7475, %v7586
      %v7630 = vadd.f32 %v7476, %v7591
      %v7631 = vadd.f32 %v7477, %v7594
      %v7632 = vadd.f32 %v7478, %v7599
      %v7633 = vadd.f32 %v7479, %v7602
      %v7634 = vadd.f32 %v7480, %v7607
      %v7635 = vadd.f32 %v7481, %v7610
      %v7636 = vadd.f32 %v7482, %v7615
      %v7637 = vadd.f32 %v7483, %v7618
      %v7638 = vadd.f32 %v7484, %v7623
      %v7639 = vld [vmem:[#allocation2 + $0x10] sm:$0xff]
      %v7640 = vld [vmem:[#allocation2 + $0x18] sm:$0xff]
      %v7641 = vld [vmem:[#allocation2 + $0x20] sm:$0xff]
      %v7642 = vld [vmem:[#allocation2 + $0x28] sm:$0xff]
      %v7643 = vld [vmem:[#allocation2 + $0x30] sm:$0xff]
      %v7644 = vld [vmem:[#allocation2 + $0x38] sm:$0xff]
      %v7645 = vld [vmem:[#allocation2 + $0x40] sm:$0xff]
      %v7646 = vld [vmem:[#allocation2 + $0x48] sm:$0xff]
      %v7647 = vld [vmem:[#allocation2 + $0x50] sm:$0xff]
      %v7648 = vld [vmem:[#allocation2 + $0x58] sm:$0xff]
      %v7649 = vld [vmem:[#allocation2 + $0x60] sm:$0x1]
      %v7650 = vpack.c.bf16 %v7640, %v7639
      %v7651 = vpack.c.bf16 %v7642, %v7641
      %v7652 = vpack.c.bf16 %v7644, %v7643
      %v7653 = vpack.c.bf16 %v7646, %v7645
      %v7654 = vpack.c.bf16 %v7648, %v7647
      %v7655 = vpack.c.bf16 %v7649, %v7649
      %s7656 = scalar_lea.vmem %s4, 496
      %v7657 = vld [vmem:[%s7656] sm:$0xf]
      %v7658 = vld [vmem:[%s7656 + $0x4] sm:$0xf]
      %v7659 = vld [vmem:[%s7656 + $0x8] sm:$0xf]
      %v7660 = vld [vmem:[%s7656 + $0xc] sm:$0xf]
      %v7665 = vunpack.c.l.b16 %v7657
      %v7666 = vunpack.c.l.b16 %v7658
      %v7667 = vunpack.c.l.b16 %v7659
      %v7668 = vunpack.c.l.b16 %v7660
      %v7669 = vpack.c.b16 %v7666, %v7665
      %v7670 = vpack.c.b16 %v7668, %v7667
      %v7674 = vsel %vm788, %v7650, 0
      %v7677 = vsel %vm788, %v7651, 0
      %v7680 = vsel %vm788, %v7652, 0
      %v7683 = vsel %vm788, %v7653, 0
      %v7686 = vsel %vm788, %v7654, 0
      %v7689 = vsel %vm788, %v7655, 0
      %7691 = vmatprep.subr.bf16.mxu0 0
      %7692 = vmatpush1.bf16.msra.mxu0 0
      %7693 = vmatprep.subr.bf16.mxu0 0
      %7694 = vmatpush1.bf16.msra.mxu0 0
      %7695 = vmatprep.subr.bf16.mxu0 0
      %7696 = vmatpush1.bf16.msra.mxu0 0
      %7697 = vmatprep.subr.bf16.mxu0 0
      %7698 = vmatpush1.bf16.msra.mxu0 0
      %7699 = vmatprep.subr.bf16.mxu0 0
      %7700 = vmatpush1.bf16.msra.mxu0 0
      %7701 = vmatprep.subr.bf16.mxu0 0
      %7702 = vmatpush1.bf16.msra.mxu0 0
      %7703 = vmatprep.subr.bf16.mxu0 0
      %7704 = vmatpush1.bf16.msra.mxu0 %v7670
      %7705 = vmatprep.subr.bf16.mxu0 0
      %7706 = vmatpush1.bf16.msra.mxu0 %v7669
      %7707 = vmatprep.subr.bf16.mxu0 0
      %7708 = vmatpush2.bf16.msra.mxu0 0
      %7709 = vmatprep.subr.bf16.mxu0 0
      %7710 = vmatpush2.bf16.msra.mxu0 0
      %7711 = vmatprep.subr.bf16.mxu0 0
      %7712 = vmatpush2.bf16.msra.mxu0 0
      %7713 = vmatprep.subr.bf16.mxu0 0
      %7714 = vmatpush2.bf16.msra.mxu0 0
      %7715 = vmatprep.subr.bf16.mxu0 0
      %7716 = vmatpush2.bf16.msra.mxu0 0
      %7717 = vmatprep.subr.bf16.mxu0 0
      %7718 = vmatpush2.bf16.msra.mxu0 0
      %7719 = vmatprep.subr.bf16.mxu0 0
      %7720 = vmatpush2.bf16.msra.mxu0 0
      %7721 = vmatprep.subr.bf16.mxu0 0
      %7722 = vmatpush2.bf16.msra.mxu0 0
      %7723 = vmatprep.mubr.bf16.mxu0 0
      %7724 = vmatmul.mubr.bf16.gmra.mxu0 %v7674
      %v7725 = vpop.f32.mrf.mxu0
      %v7726 = vadd.f32 0.0, %v7725
      %v7727 = vpop.f32.mrf.mxu0
      %v7728 = vpop.f32.mrf.mxu0
      %v7729 = vadd.f32 0.0, %v7728
      %v7730 = vpop.f32.mrf.mxu0
      %7731 = vmatprep.mubr.bf16.mxu0 0
      %7732 = vmatmul.mubr.bf16.gmra.mxu0 %v7677
      %v7733 = vpop.f32.mrf.mxu0
      %v7734 = vadd.f32 0.0, %v7733
      %v7735 = vpop.f32.mrf.mxu0
      %v7736 = vpop.f32.mrf.mxu0
      %v7737 = vadd.f32 0.0, %v7736
      %v7738 = vpop.f32.mrf.mxu0
      %7739 = vmatprep.mubr.bf16.mxu0 0
      %7740 = vmatmul.mubr.bf16.gmra.mxu0 %v7680
      %v7741 = vpop.f32.mrf.mxu0
      %v7742 = vadd.f32 0.0, %v7741
      %v7743 = vpop.f32.mrf.mxu0
      %v7744 = vpop.f32.mrf.mxu0
      %v7745 = vadd.f32 0.0, %v7744
      %v7746 = vpop.f32.mrf.mxu0
      %7747 = vmatprep.mubr.bf16.mxu0 0
      %7748 = vmatmul.mubr.bf16.gmra.mxu0 %v7683
      %v7749 = vpop.f32.mrf.mxu0
      %v7750 = vadd.f32 0.0, %v7749
      %v7751 = vpop.f32.mrf.mxu0
      %v7752 = vpop.f32.mrf.mxu0
      %v7753 = vadd.f32 0.0, %v7752
      %v7754 = vpop.f32.mrf.mxu0
      %7755 = vmatprep.mubr.bf16.mxu0 0
      %7756 = vmatmul.mubr.bf16.gmra.mxu0 %v7686
      %v7757 = vpop.f32.mrf.mxu0
      %v7758 = vadd.f32 0.0, %v7757
      %v7759 = vpop.f32.mrf.mxu0
      %v7760 = vpop.f32.mrf.mxu0
      %v7761 = vadd.f32 0.0, %v7760
      %v7762 = vpop.f32.mrf.mxu0
      %7763 = vmatprep.mubr.bf16.mxu0 0
      %7764 = vmatmul.mubr.bf16.gmra.mxu0 %v7689
      %v7765 = vpop.f32.mrf.mxu0
      %v7766 = vadd.f32 0.0, %v7765
      %v7767 = vpop.f32.mrf.mxu0
      %v7768 = vpop.f32.mrf.mxu0
      %v7769 = vpop.f32.mrf.mxu0
      %7770 = vdwg.mxu0
      %v7771 = vadd.f32 %v7628, %v7726
      %v7772 = vadd.f32 %v7629, %v7729
      %v7773 = vadd.f32 %v7630, %v7734
      %v7774 = vadd.f32 %v7631, %v7737
      %v7775 = vadd.f32 %v7632, %v7742
      %v7776 = vadd.f32 %v7633, %v7745
      %v7777 = vadd.f32 %v7634, %v7750
      %v7778 = vadd.f32 %v7635, %v7753
      %v7779 = vadd.f32 %v7636, %v7758
      %v7780 = vadd.f32 %v7637, %v7761
      %v7781 = vadd.f32 %v7638, %v7766
      %v7782 = vld [vmem:[#allocation2 + $0x11] sm:$0xff]
      %v7783 = vld [vmem:[#allocation2 + $0x19] sm:$0xff]
      %v7784 = vld [vmem:[#allocation2 + $0x21] sm:$0xff]
      %v7785 = vld [vmem:[#allocation2 + $0x29] sm:$0xff]
      %v7786 = vld [vmem:[#allocation2 + $0x31] sm:$0xff]
      %v7787 = vld [vmem:[#allocation2 + $0x39] sm:$0xff]
      %v7788 = vld [vmem:[#allocation2 + $0x41] sm:$0xff]
      %v7789 = vld [vmem:[#allocation2 + $0x49] sm:$0xff]
      %v7790 = vld [vmem:[#allocation2 + $0x51] sm:$0xff]
      %v7791 = vld [vmem:[#allocation2 + $0x59] sm:$0xff]
      %v7792 = vld [vmem:[#allocation2 + $0x61] sm:$0x1]
      %v7793 = vmul.f32 %v7782, %v777
      %v7794 = vmul.f32 %v7783, %v778
      %v7795 = vmul.f32 %v7784, %v779
      %v7796 = vmul.f32 %v7785, %v780
      %v7797 = vmul.f32 %v7786, %v781
      %v7798 = vmul.f32 %v7787, %v782
      %v7799 = vmul.f32 %v7788, %v783
      %v7800 = vmul.f32 %v7789, %v784
      %v7801 = vmul.f32 %v7790, %v785
      %v7802 = vmul.f32 %v7791, %v786
      %v7803 = vmul.f32 %v7792, %v787
      %v7804 = vpack.c.bf16 %v7794, %v7793
      %v7805 = vpack.c.bf16 %v7796, %v7795
      %v7806 = vpack.c.bf16 %v7798, %v7797
      %v7807 = vpack.c.bf16 %v7800, %v7799
      %v7808 = vpack.c.bf16 %v7802, %v7801
      %v7809 = vpack.c.bf16 %v7803, %v7803
      %s7810 = scalar_lea.vmem %s4, 512
      %v7811 = vld [vmem:[%s7810] sm:$0xf]
      %v7812 = vld [vmem:[%s7810 + $0x4] sm:$0xf]
      %v7813 = vld [vmem:[%s7810 + $0x8] sm:$0xf]
      %v7814 = vld [vmem:[%s7810 + $0xc] sm:$0xf]
      %v7819 = vunpack.c.l.b16 %v7811
      %v7820 = vunpack.c.l.b16 %v7812
      %v7821 = vunpack.c.l.b16 %v7813
      %v7822 = vunpack.c.l.b16 %v7814
      %v7823 = vpack.c.b16 %v7820, %v7819
      %v7824 = vpack.c.b16 %v7822, %v7821
      %v7828 = vsel %vm788, %v7804, 0
      %v7831 = vsel %vm788, %v7805, 0
      %v7834 = vsel %vm788, %v7806, 0
      %v7837 = vsel %vm788, %v7807, 0
      %v7840 = vsel %vm788, %v7808, 0
      %v7843 = vsel %vm788, %v7809, 0
      %7845 = vmatprep.subr.bf16.mxu0 0
      %7846 = vmatpush1.bf16.msra.mxu0 0
      %7847 = vmatprep.subr.bf16.mxu0 0
      %7848 = vmatpush1.bf16.msra.mxu0 0
      %7849 = vmatprep.subr.bf16.mxu0 0
      %7850 = vmatpush1.bf16.msra.mxu0 0
      %7851 = vmatprep.subr.bf16.mxu0 0
      %7852 = vmatpush1.bf16.msra.mxu0 0
      %7853 = vmatprep.subr.bf16.mxu0 0
      %7854 = vmatpush1.bf16.msra.mxu0 0
      %7855 = vmatprep.subr.bf16.mxu0 0
      %7856 = vmatpush1.bf16.msra.mxu0 0
      %7857 = vmatprep.subr.bf16.mxu0 0
      %7858 = vmatpush1.bf16.msra.mxu0 %v7824
      %7859 = vmatprep.subr.bf16.mxu0 0
      %7860 = vmatpush1.bf16.msra.mxu0 %v7823
      %7861 = vmatprep.subr.bf16.mxu0 0
      %7862 = vmatpush2.bf16.msra.mxu0 0
      %7863 = vmatprep.subr.bf16.mxu0 0
      %7864 = vmatpush2.bf16.msra.mxu0 0
      %7865 = vmatprep.subr.bf16.mxu0 0
      %7866 = vmatpush2.bf16.msra.mxu0 0
      %7867 = vmatprep.subr.bf16.mxu0 0
      %7868 = vmatpush2.bf16.msra.mxu0 0
      %7869 = vmatprep.subr.bf16.mxu0 0
      %7870 = vmatpush2.bf16.msra.mxu0 0
      %7871 = vmatprep.subr.bf16.mxu0 0
      %7872 = vmatpush2.bf16.msra.mxu0 0
      %7873 = vmatprep.subr.bf16.mxu0 0
      %7874 = vmatpush2.bf16.msra.mxu0 0
      %7875 = vmatprep.subr.bf16.mxu0 0
      %7876 = vmatpush2.bf16.msra.mxu0 0
      %7877 = vmatprep.mubr.bf16.mxu0 0
      %7878 = vmatmul.mubr.bf16.gmra.mxu0 %v7828
      %v7879 = vpop.f32.mrf.mxu0
      %v7880 = vadd.f32 0.0, %v7879
      %v7881 = vpop.f32.mrf.mxu0
      %v7882 = vpop.f32.mrf.mxu0
      %v7883 = vadd.f32 0.0, %v7882
      %v7884 = vpop.f32.mrf.mxu0
      %7885 = vmatprep.mubr.bf16.mxu0 0
      %7886 = vmatmul.mubr.bf16.gmra.mxu0 %v7831
      %v7887 = vpop.f32.mrf.mxu0
      %v7888 = vadd.f32 0.0, %v7887
      %v7889 = vpop.f32.mrf.mxu0
      %v7890 = vpop.f32.mrf.mxu0
      %v7891 = vadd.f32 0.0, %v7890
      %v7892 = vpop.f32.mrf.mxu0
      %7893 = vmatprep.mubr.bf16.mxu0 0
      %7894 = vmatmul.mubr.bf16.gmra.mxu0 %v7834
      %v7895 = vpop.f32.mrf.mxu0
      %v7896 = vadd.f32 0.0, %v7895
      %v7897 = vpop.f32.mrf.mxu0
      %v7898 = vpop.f32.mrf.mxu0
      %v7899 = vadd.f32 0.0, %v7898
      %v7900 = vpop.f32.mrf.mxu0
      %7901 = vmatprep.mubr.bf16.mxu0 0
      %7902 = vmatmul.mubr.bf16.gmra.mxu0 %v7837
      %v7903 = vpop.f32.mrf.mxu0
      %v7904 = vadd.f32 0.0, %v7903
      %v7905 = vpop.f32.mrf.mxu0
      %v7906 = vpop.f32.mrf.mxu0
      %v7907 = vadd.f32 0.0, %v7906
      %v7908 = vpop.f32.mrf.mxu0
      %7909 = vmatprep.mubr.bf16.mxu0 0
      %7910 = vmatmul.mubr.bf16.gmra.mxu0 %v7840
      %v7911 = vpop.f32.mrf.mxu0
      %v7912 = vadd.f32 0.0, %v7911
      %v7913 = vpop.f32.mrf.mxu0
      %v7914 = vpop.f32.mrf.mxu0
      %v7915 = vadd.f32 0.0, %v7914
      %v7916 = vpop.f32.mrf.mxu0
      %7917 = vmatprep.mubr.bf16.mxu0 0
      %7918 = vmatmul.mubr.bf16.gmra.mxu0 %v7843
      %v7919 = vpop.f32.mrf.mxu0
      %v7920 = vadd.f32 0.0, %v7919
      %v7921 = vpop.f32.mrf.mxu0
      %v7922 = vpop.f32.mrf.mxu0
      %v7923 = vpop.f32.mrf.mxu0
      %7924 = vdwg.mxu0
      %v7925 = vadd.f32 %v7771, %v7880
      %v7926 = vadd.f32 %v7772, %v7883
      %v7927 = vadd.f32 %v7773, %v7888
      %v7928 = vadd.f32 %v7774, %v7891
      %v7929 = vadd.f32 %v7775, %v7896
      %v7930 = vadd.f32 %v7776, %v7899
      %v7931 = vadd.f32 %v7777, %v7904
      %v7932 = vadd.f32 %v7778, %v7907
      %v7933 = vadd.f32 %v7779, %v7912
      %v7934 = vadd.f32 %v7780, %v7915
      %v7935 = vadd.f32 %v7781, %v7920
      %v7936 = vld [vmem:[#allocation2 + $0x18] sm:$0xff]
      %v7937 = vld [vmem:[#allocation2 + $0x20] sm:$0xff]
      %v7938 = vld [vmem:[#allocation2 + $0x28] sm:$0xff]
      %v7939 = vld [vmem:[#allocation2 + $0x30] sm:$0xff]
      %v7940 = vld [vmem:[#allocation2 + $0x38] sm:$0xff]
      %v7941 = vld [vmem:[#allocation2 + $0x40] sm:$0xff]
      %v7942 = vld [vmem:[#allocation2 + $0x48] sm:$0xff]
      %v7943 = vld [vmem:[#allocation2 + $0x50] sm:$0xff]
      %v7944 = vld [vmem:[#allocation2 + $0x58] sm:$0xff]
      %v7945 = vld [vmem:[#allocation2 + $0x60] sm:$0xff]
      %v7946 = vld [vmem:[#allocation2 + $0x68] sm:$0x1]
      %v7947 = vmul.f32 %v7936, %v744
      %v7948 = vmul.f32 %v7937, %v745
      %v7949 = vmul.f32 %v7938, %v746
      %v7950 = vmul.f32 %v7939, %v747
      %v7951 = vmul.f32 %v7940, %v748
      %v7952 = vmul.f32 %v7941, %v749
      %v7953 = vmul.f32 %v7942, %v750
      %v7954 = vmul.f32 %v7943, %v751
      %v7955 = vmul.f32 %v7944, %v752
      %v7956 = vmul.f32 %v7945, %v753
      %v7957 = vmul.f32 %v7946, %v754
      %v7958 = vpack.c.bf16 %v7948, %v7947
      %v7959 = vpack.c.bf16 %v7950, %v7949
      %v7960 = vpack.c.bf16 %v7952, %v7951
      %v7961 = vpack.c.bf16 %v7954, %v7953
      %v7962 = vpack.c.bf16 %v7956, %v7955
      %v7963 = vpack.c.bf16 %v7957, %v7957
      %s7964 = scalar_lea.vmem %s4, 528
      %v7965 = vld [vmem:[%s7964] sm:$0xf]
      %v7966 = vld [vmem:[%s7964 + $0x4] sm:$0xf]
      %v7967 = vld [vmem:[%s7964 + $0x8] sm:$0xf]
      %v7968 = vld [vmem:[%s7964 + $0xc] sm:$0xf]
      %v7973 = vunpack.c.l.b16 %v7965
      %v7974 = vunpack.c.l.b16 %v7966
      %v7975 = vunpack.c.l.b16 %v7967
      %v7976 = vunpack.c.l.b16 %v7968
      %v7977 = vpack.c.b16 %v7974, %v7973
      %v7978 = vpack.c.b16 %v7976, %v7975
      %v7982 = vsel %vm788, %v7958, 0
      %v7985 = vsel %vm788, %v7959, 0
      %v7988 = vsel %vm788, %v7960, 0
      %v7991 = vsel %vm788, %v7961, 0
      %v7994 = vsel %vm788, %v7962, 0
      %v7997 = vsel %vm788, %v7963, 0
      %7999 = vmatprep.subr.bf16.mxu0 0
      %8000 = vmatpush1.bf16.msra.mxu0 0
      %8001 = vmatprep.subr.bf16.mxu0 0
      %8002 = vmatpush1.bf16.msra.mxu0 0
      %8003 = vmatprep.subr.bf16.mxu0 0
      %8004 = vmatpush1.bf16.msra.mxu0 0
      %8005 = vmatprep.subr.bf16.mxu0 0
      %8006 = vmatpush1.bf16.msra.mxu0 0
      %8007 = vmatprep.subr.bf16.mxu0 0
      %8008 = vmatpush1.bf16.msra.mxu0 0
      %8009 = vmatprep.subr.bf16.mxu0 0
      %8010 = vmatpush1.bf16.msra.mxu0 0
      %8011 = vmatprep.subr.bf16.mxu0 0
      %8012 = vmatpush1.bf16.msra.mxu0 %v7978
      %8013 = vmatprep.subr.bf16.mxu0 0
      %8014 = vmatpush1.bf16.msra.mxu0 %v7977
      %8015 = vmatprep.subr.bf16.mxu0 0
      %8016 = vmatpush2.bf16.msra.mxu0 0
      %8017 = vmatprep.subr.bf16.mxu0 0
      %8018 = vmatpush2.bf16.msra.mxu0 0
      %8019 = vmatprep.subr.bf16.mxu0 0
      %8020 = vmatpush2.bf16.msra.mxu0 0
      %8021 = vmatprep.subr.bf16.mxu0 0
      %8022 = vmatpush2.bf16.msra.mxu0 0
      %8023 = vmatprep.subr.bf16.mxu0 0
      %8024 = vmatpush2.bf16.msra.mxu0 0
      %8025 = vmatprep.subr.bf16.mxu0 0
      %8026 = vmatpush2.bf16.msra.mxu0 0
      %8027 = vmatprep.subr.bf16.mxu0 0
      %8028 = vmatpush2.bf16.msra.mxu0 0
      %8029 = vmatprep.subr.bf16.mxu0 0
      %8030 = vmatpush2.bf16.msra.mxu0 0
      %8031 = vmatprep.mubr.bf16.mxu0 0
      %8032 = vmatmul.mubr.bf16.gmra.mxu0 %v7982
      %v8033 = vpop.f32.mrf.mxu0
      %v8034 = vadd.f32 0.0, %v8033
      %v8035 = vpop.f32.mrf.mxu0
      %v8036 = vpop.f32.mrf.mxu0
      %v8037 = vadd.f32 0.0, %v8036
      %v8038 = vpop.f32.mrf.mxu0
      %8039 = vmatprep.mubr.bf16.mxu0 0
      %8040 = vmatmul.mubr.bf16.gmra.mxu0 %v7985
      %v8041 = vpop.f32.mrf.mxu0
      %v8042 = vadd.f32 0.0, %v8041
      %v8043 = vpop.f32.mrf.mxu0
      %v8044 = vpop.f32.mrf.mxu0
      %v8045 = vadd.f32 0.0, %v8044
      %v8046 = vpop.f32.mrf.mxu0
      %8047 = vmatprep.mubr.bf16.mxu0 0
      %8048 = vmatmul.mubr.bf16.gmra.mxu0 %v7988
      %v8049 = vpop.f32.mrf.mxu0
      %v8050 = vadd.f32 0.0, %v8049
      %v8051 = vpop.f32.mrf.mxu0
      %v8052 = vpop.f32.mrf.mxu0
      %v8053 = vadd.f32 0.0, %v8052
      %v8054 = vpop.f32.mrf.mxu0
      %8055 = vmatprep.mubr.bf16.mxu0 0
      %8056 = vmatmul.mubr.bf16.gmra.mxu0 %v7991
      %v8057 = vpop.f32.mrf.mxu0
      %v8058 = vadd.f32 0.0, %v8057
      %v8059 = vpop.f32.mrf.mxu0
      %v8060 = vpop.f32.mrf.mxu0
      %v8061 = vadd.f32 0.0, %v8060
      %v8062 = vpop.f32.mrf.mxu0
      %8063 = vmatprep.mubr.bf16.mxu0 0
      %8064 = vmatmul.mubr.bf16.gmra.mxu0 %v7994
      %v8065 = vpop.f32.mrf.mxu0
      %v8066 = vadd.f32 0.0, %v8065
      %v8067 = vpop.f32.mrf.mxu0
      %v8068 = vpop.f32.mrf.mxu0
      %v8069 = vadd.f32 0.0, %v8068
      %v8070 = vpop.f32.mrf.mxu0
      %8071 = vmatprep.mubr.bf16.mxu0 0
      %8072 = vmatmul.mubr.bf16.gmra.mxu0 %v7997
      %v8073 = vpop.f32.mrf.mxu0
      %v8074 = vadd.f32 0.0, %v8073
      %v8075 = vpop.f32.mrf.mxu0
      %v8076 = vpop.f32.mrf.mxu0
      %v8077 = vpop.f32.mrf.mxu0
      %8078 = vdwg.mxu0
      %v8079 = vadd.f32 %v7925, %v8034
      %v8080 = vadd.f32 %v7926, %v8037
      %v8081 = vadd.f32 %v7927, %v8042
      %v8082 = vadd.f32 %v7928, %v8045
      %v8083 = vadd.f32 %v7929, %v8050
      %v8084 = vadd.f32 %v7930, %v8053
      %v8085 = vadd.f32 %v7931, %v8058
      %v8086 = vadd.f32 %v7932, %v8061
      %v8087 = vadd.f32 %v7933, %v8066
      %v8088 = vadd.f32 %v7934, %v8069
      %v8089 = vadd.f32 %v7935, %v8074
      %v8090 = vld [vmem:[#allocation2 + $0x19] sm:$0xff]
      %v8091 = vld [vmem:[#allocation2 + $0x21] sm:$0xff]
      %v8092 = vld [vmem:[#allocation2 + $0x29] sm:$0xff]
      %v8093 = vld [vmem:[#allocation2 + $0x31] sm:$0xff]
      %v8094 = vld [vmem:[#allocation2 + $0x39] sm:$0xff]
      %v8095 = vld [vmem:[#allocation2 + $0x41] sm:$0xff]
      %v8096 = vld [vmem:[#allocation2 + $0x49] sm:$0xff]
      %v8097 = vld [vmem:[#allocation2 + $0x51] sm:$0xff]
      %v8098 = vld [vmem:[#allocation2 + $0x59] sm:$0xff]
      %v8099 = vld [vmem:[#allocation2 + $0x61] sm:$0xff]
      %v8100 = vld [vmem:[#allocation2 + $0x69] sm:$0x1]
      %v8101 = vpack.c.bf16 %v8091, %v8090
      %v8102 = vpack.c.bf16 %v8093, %v8092
      %v8103 = vpack.c.bf16 %v8095, %v8094
      %v8104 = vpack.c.bf16 %v8097, %v8096
      %v8105 = vpack.c.bf16 %v8099, %v8098
      %v8106 = vpack.c.bf16 %v8100, %v8100
      %s8107 = scalar_lea.vmem %s4, 544
      %v8108 = vld [vmem:[%s8107] sm:$0xf]
      %v8109 = vld [vmem:[%s8107 + $0x4] sm:$0xf]
      %v8110 = vld [vmem:[%s8107 + $0x8] sm:$0xf]
      %v8111 = vld [vmem:[%s8107 + $0xc] sm:$0xf]
      %v8116 = vunpack.c.l.b16 %v8108
      %v8117 = vunpack.c.l.b16 %v8109
      %v8118 = vunpack.c.l.b16 %v8110
      %v8119 = vunpack.c.l.b16 %v8111
      %v8120 = vpack.c.b16 %v8117, %v8116
      %v8121 = vpack.c.b16 %v8119, %v8118
      %v8125 = vsel %vm788, %v8101, 0
      %v8128 = vsel %vm788, %v8102, 0
      %v8131 = vsel %vm788, %v8103, 0
      %v8134 = vsel %vm788, %v8104, 0
      %v8137 = vsel %vm788, %v8105, 0
      %v8140 = vsel %vm788, %v8106, 0
      %8142 = vmatprep.subr.bf16.mxu0 0
      %8143 = vmatpush1.bf16.msra.mxu0 0
      %8144 = vmatprep.subr.bf16.mxu0 0
      %8145 = vmatpush1.bf16.msra.mxu0 0
      %8146 = vmatprep.subr.bf16.mxu0 0
      %8147 = vmatpush1.bf16.msra.mxu0 0
      %8148 = vmatprep.subr.bf16.mxu0 0
      %8149 = vmatpush1.bf16.msra.mxu0 0
      %8150 = vmatprep.subr.bf16.mxu0 0
      %8151 = vmatpush1.bf16.msra.mxu0 0
      %8152 = vmatprep.subr.bf16.mxu0 0
      %8153 = vmatpush1.bf16.msra.mxu0 0
      %8154 = vmatprep.subr.bf16.mxu0 0
      %8155 = vmatpush1.bf16.msra.mxu0 %v8121
      %8156 = vmatprep.subr.bf16.mxu0 0
      %8157 = vmatpush1.bf16.msra.mxu0 %v8120
      %8158 = vmatprep.subr.bf16.mxu0 0
      %8159 = vmatpush2.bf16.msra.mxu0 0
      %8160 = vmatprep.subr.bf16.mxu0 0
      %8161 = vmatpush2.bf16.msra.mxu0 0
      %8162 = vmatprep.subr.bf16.mxu0 0
      %8163 = vmatpush2.bf16.msra.mxu0 0
      %8164 = vmatprep.subr.bf16.mxu0 0
      %8165 = vmatpush2.bf16.msra.mxu0 0
      %8166 = vmatprep.subr.bf16.mxu0 0
      %8167 = vmatpush2.bf16.msra.mxu0 0
      %8168 = vmatprep.subr.bf16.mxu0 0
      %8169 = vmatpush2.bf16.msra.mxu0 0
      %8170 = vmatprep.subr.bf16.mxu0 0
      %8171 = vmatpush2.bf16.msra.mxu0 0
      %8172 = vmatprep.subr.bf16.mxu0 0
      %8173 = vmatpush2.bf16.msra.mxu0 0
      %8174 = vmatprep.mubr.bf16.mxu0 0
      %8175 = vmatmul.mubr.bf16.gmra.mxu0 %v8125
      %v8176 = vpop.f32.mrf.mxu0
      %v8177 = vadd.f32 0.0, %v8176
      %v8178 = vpop.f32.mrf.mxu0
      %v8179 = vpop.f32.mrf.mxu0
      %v8180 = vadd.f32 0.0, %v8179
      %v8181 = vpop.f32.mrf.mxu0
      %8182 = vmatprep.mubr.bf16.mxu0 0
      %8183 = vmatmul.mubr.bf16.gmra.mxu0 %v8128
      %v8184 = vpop.f32.mrf.mxu0
      %v8185 = vadd.f32 0.0, %v8184
      %v8186 = vpop.f32.mrf.mxu0
      %v8187 = vpop.f32.mrf.mxu0
      %v8188 = vadd.f32 0.0, %v8187
      %v8189 = vpop.f32.mrf.mxu0
      %8190 = vmatprep.mubr.bf16.mxu0 0
      %8191 = vmatmul.mubr.bf16.gmra.mxu0 %v8131
      %v8192 = vpop.f32.mrf.mxu0
      %v8193 = vadd.f32 0.0, %v8192
      %v8194 = vpop.f32.mrf.mxu0
      %v8195 = vpop.f32.mrf.mxu0
      %v8196 = vadd.f32 0.0, %v8195
      %v8197 = vpop.f32.mrf.mxu0
      %8198 = vmatprep.mubr.bf16.mxu0 0
      %8199 = vmatmul.mubr.bf16.gmra.mxu0 %v8134
      %v8200 = vpop.f32.mrf.mxu0
      %v8201 = vadd.f32 0.0, %v8200
      %v8202 = vpop.f32.mrf.mxu0
      %v8203 = vpop.f32.mrf.mxu0
      %v8204 = vadd.f32 0.0, %v8203
      %v8205 = vpop.f32.mrf.mxu0
      %8206 = vmatprep.mubr.bf16.mxu0 0
      %8207 = vmatmul.mubr.bf16.gmra.mxu0 %v8137
      %v8208 = vpop.f32.mrf.mxu0
      %v8209 = vadd.f32 0.0, %v8208
      %v8210 = vpop.f32.mrf.mxu0
      %v8211 = vpop.f32.mrf.mxu0
      %v8212 = vadd.f32 0.0, %v8211
      %v8213 = vpop.f32.mrf.mxu0
      %8214 = vmatprep.mubr.bf16.mxu0 0
      %8215 = vmatmul.mubr.bf16.gmra.mxu0 %v8140
      %v8216 = vpop.f32.mrf.mxu0
      %v8217 = vadd.f32 0.0, %v8216
      %v8218 = vpop.f32.mrf.mxu0
      %v8219 = vpop.f32.mrf.mxu0
      %v8220 = vpop.f32.mrf.mxu0
      %8221 = vdwg.mxu0
      %v8222 = vadd.f32 %v8079, %v8177
      %v8223 = vadd.f32 %v8080, %v8180
      %v8224 = vadd.f32 %v8081, %v8185
      %v8225 = vadd.f32 %v8082, %v8188
      %v8226 = vadd.f32 %v8083, %v8193
      %v8227 = vadd.f32 %v8084, %v8196
      %v8228 = vadd.f32 %v8085, %v8201
      %v8229 = vadd.f32 %v8086, %v8204
      %v8230 = vadd.f32 %v8087, %v8209
      %v8231 = vadd.f32 %v8088, %v8212
      %v8232 = vadd.f32 %v8089, %v8217
      %v8233 = vld [vmem:[#allocation2 + $0x1a] sm:$0xff]
      %v8234 = vld [vmem:[#allocation2 + $0x22] sm:$0xff]
      %v8235 = vld [vmem:[#allocation2 + $0x2a] sm:$0xff]
      %v8236 = vld [vmem:[#allocation2 + $0x32] sm:$0xff]
      %v8237 = vld [vmem:[#allocation2 + $0x3a] sm:$0xff]
      %v8238 = vld [vmem:[#allocation2 + $0x42] sm:$0xff]
      %v8239 = vld [vmem:[#allocation2 + $0x4a] sm:$0xff]
      %v8240 = vld [vmem:[#allocation2 + $0x52] sm:$0xff]
      %v8241 = vld [vmem:[#allocation2 + $0x5a] sm:$0xff]
      %v8242 = vld [vmem:[#allocation2 + $0x62] sm:$0xff]
      %v8243 = vld [vmem:[#allocation2 + $0x6a] sm:$0x1]
      %v8244 = vmul.f32 %v8233, %v777
      %v8245 = vmul.f32 %v8234, %v778
      %v8246 = vmul.f32 %v8235, %v779
      %v8247 = vmul.f32 %v8236, %v780
      %v8248 = vmul.f32 %v8237, %v781
      %v8249 = vmul.f32 %v8238, %v782
      %v8250 = vmul.f32 %v8239, %v783
      %v8251 = vmul.f32 %v8240, %v784
      %v8252 = vmul.f32 %v8241, %v785
      %v8253 = vmul.f32 %v8242, %v786
      %v8254 = vmul.f32 %v8243, %v787
      %v8255 = vpack.c.bf16 %v8245, %v8244
      %v8256 = vpack.c.bf16 %v8247, %v8246
      %v8257 = vpack.c.bf16 %v8249, %v8248
      %v8258 = vpack.c.bf16 %v8251, %v8250
      %v8259 = vpack.c.bf16 %v8253, %v8252
      %v8260 = vpack.c.bf16 %v8254, %v8254
      %s8261 = scalar_lea.vmem %s4, 560
      %v8262 = vld [vmem:[%s8261] sm:$0xf]
      %v8263 = vld [vmem:[%s8261 + $0x4] sm:$0xf]
      %v8264 = vld [vmem:[%s8261 + $0x8] sm:$0xf]
      %v8265 = vld [vmem:[%s8261 + $0xc] sm:$0xf]
      %v8270 = vunpack.c.l.b16 %v8262
      %v8271 = vunpack.c.l.b16 %v8263
      %v8272 = vunpack.c.l.b16 %v8264
      %v8273 = vunpack.c.l.b16 %v8265
      %v8274 = vpack.c.b16 %v8271, %v8270
      %v8275 = vpack.c.b16 %v8273, %v8272
      %v8279 = vsel %vm788, %v8255, 0
      %v8282 = vsel %vm788, %v8256, 0
      %v8285 = vsel %vm788, %v8257, 0
      %v8288 = vsel %vm788, %v8258, 0
      %v8291 = vsel %vm788, %v8259, 0
      %v8294 = vsel %vm788, %v8260, 0
      %8296 = vmatprep.subr.bf16.mxu0 0
      %8297 = vmatpush1.bf16.msra.mxu0 0
      %8298 = vmatprep.subr.bf16.mxu0 0
      %8299 = vmatpush1.bf16.msra.mxu0 0
      %8300 = vmatprep.subr.bf16.mxu0 0
      %8301 = vmatpush1.bf16.msra.mxu0 0
      %8302 = vmatprep.subr.bf16.mxu0 0
      %8303 = vmatpush1.bf16.msra.mxu0 0
      %8304 = vmatprep.subr.bf16.mxu0 0
      %8305 = vmatpush1.bf16.msra.mxu0 0
      %8306 = vmatprep.subr.bf16.mxu0 0
      %8307 = vmatpush1.bf16.msra.mxu0 0
      %8308 = vmatprep.subr.bf16.mxu0 0
      %8309 = vmatpush1.bf16.msra.mxu0 %v8275
      %8310 = vmatprep.subr.bf16.mxu0 0
      %8311 = vmatpush1.bf16.msra.mxu0 %v8274
      %8312 = vmatprep.subr.bf16.mxu0 0
      %8313 = vmatpush2.bf16.msra.mxu0 0
      %8314 = vmatprep.subr.bf16.mxu0 0
      %8315 = vmatpush2.bf16.msra.mxu0 0
      %8316 = vmatprep.subr.bf16.mxu0 0
      %8317 = vmatpush2.bf16.msra.mxu0 0
      %8318 = vmatprep.subr.bf16.mxu0 0
      %8319 = vmatpush2.bf16.msra.mxu0 0
      %8320 = vmatprep.subr.bf16.mxu0 0
      %8321 = vmatpush2.bf16.msra.mxu0 0
      %8322 = vmatprep.subr.bf16.mxu0 0
      %8323 = vmatpush2.bf16.msra.mxu0 0
      %8324 = vmatprep.subr.bf16.mxu0 0
      %8325 = vmatpush2.bf16.msra.mxu0 0
      %8326 = vmatprep.subr.bf16.mxu0 0
      %8327 = vmatpush2.bf16.msra.mxu0 0
      %8328 = vmatprep.mubr.bf16.mxu0 0
      %8329 = vmatmul.mubr.bf16.gmra.mxu0 %v8279
      %v8330 = vpop.f32.mrf.mxu0
      %v8331 = vadd.f32 0.0, %v8330
      %v8332 = vpop.f32.mrf.mxu0
      %v8333 = vpop.f32.mrf.mxu0
      %v8334 = vadd.f32 0.0, %v8333
      %v8335 = vpop.f32.mrf.mxu0
      %8336 = vmatprep.mubr.bf16.mxu0 0
      %8337 = vmatmul.mubr.bf16.gmra.mxu0 %v8282
      %v8338 = vpop.f32.mrf.mxu0
      %v8339 = vadd.f32 0.0, %v8338
      %v8340 = vpop.f32.mrf.mxu0
      %v8341 = vpop.f32.mrf.mxu0
      %v8342 = vadd.f32 0.0, %v8341
      %v8343 = vpop.f32.mrf.mxu0
      %8344 = vmatprep.mubr.bf16.mxu0 0
      %8345 = vmatmul.mubr.bf16.gmra.mxu0 %v8285
      %v8346 = vpop.f32.mrf.mxu0
      %v8347 = vadd.f32 0.0, %v8346
      %v8348 = vpop.f32.mrf.mxu0
      %v8349 = vpop.f32.mrf.mxu0
      %v8350 = vadd.f32 0.0, %v8349
      %v8351 = vpop.f32.mrf.mxu0
      %8352 = vmatprep.mubr.bf16.mxu0 0
      %8353 = vmatmul.mubr.bf16.gmra.mxu0 %v8288
      %v8354 = vpop.f32.mrf.mxu0
      %v8355 = vadd.f32 0.0, %v8354
      %v8356 = vpop.f32.mrf.mxu0
      %v8357 = vpop.f32.mrf.mxu0
      %v8358 = vadd.f32 0.0, %v8357
      %v8359 = vpop.f32.mrf.mxu0
      %8360 = vmatprep.mubr.bf16.mxu0 0
      %8361 = vmatmul.mubr.bf16.gmra.mxu0 %v8291
      %v8362 = vpop.f32.mrf.mxu0
      %v8363 = vadd.f32 0.0, %v8362
      %v8364 = vpop.f32.mrf.mxu0
      %v8365 = vpop.f32.mrf.mxu0
      %v8366 = vadd.f32 0.0, %v8365
      %v8367 = vpop.f32.mrf.mxu0
      %8368 = vmatprep.mubr.bf16.mxu0 0
      %8369 = vmatmul.mubr.bf16.gmra.mxu0 %v8294
      %v8370 = vpop.f32.mrf.mxu0
      %v8371 = vadd.f32 0.0, %v8370
      %v8372 = vpop.f32.mrf.mxu0
      %v8373 = vpop.f32.mrf.mxu0
      %v8374 = vpop.f32.mrf.mxu0
      %8375 = vdwg.mxu0
      %v8376 = vadd.f32 %v8222, %v8331
      %v8377 = vadd.f32 %v8223, %v8334
      %v8378 = vadd.f32 %v8224, %v8339
      %v8379 = vadd.f32 %v8225, %v8342
      %v8380 = vadd.f32 %v8226, %v8347
      %v8381 = vadd.f32 %v8227, %v8350
      %v8382 = vadd.f32 %v8228, %v8355
      %v8383 = vadd.f32 %v8229, %v8358
      %v8384 = vadd.f32 %v8230, %v8363
      %v8385 = vadd.f32 %v8231, %v8366
      %v8386 = vadd.f32 %v8232, %v8371
      %v8387 = vsel %vm788, %v8376, 0.0
      %v8388 = vsel %vm788, %v8377, 0.0
      %v8389 = vadd.f32 %v8387, %v8388
      %v8390 = vsel %vm788, %v8378, 0.0
      %v8391 = vadd.f32 %v8389, %v8390
      %v8392 = vsel %vm788, %v8379, 0.0
      %v8393 = vadd.f32 %v8391, %v8392
      %v8394 = vsel %vm788, %v8380, 0.0
      %v8395 = vadd.f32 %v8393, %v8394
      %v8396 = vsel %vm788, %v8381, 0.0
      %v8397 = vadd.f32 %v8395, %v8396
      %v8398 = vsel %vm788, %v8382, 0.0
      %v8399 = vadd.f32 %v8397, %v8398
      %v8400 = vsel %vm788, %v8383, 0.0
      %v8401 = vadd.f32 %v8399, %v8400
      %v8402 = vsel %vm788, %v8384, 0.0
      %v8403 = vadd.f32 %v8401, %v8402
      %v8404 = vsel %vm788, %v8385, 0.0
      %v8405 = vadd.f32 %v8403, %v8404
      %v8406 = vsel %vm847, %v8386, 0.0
      %v8407 = vadd.f32 %v8405, %v8406
      %8408 = vadd.xlane.f32.xlu0 %v8407
      %v8409 = vpop.xlane.xlu0 %8408
      %v8410 = vrot.slane %v8409, 4
      %v8411 = vadd.f32 %v8409, %v8410
      %v8412 = vrot.slane %v8411, 2
      %v8413 = vadd.f32 %v8411, %v8412
      %v8414 = vrot.slane %v8413, 1
      %v8415 = vadd.f32 %v8413, %v8414
      %s8416 = vtos %v8415
      %v8417 = vstv %s8416
      %v8418 = vmul.f32 %v8417, %v2210
      %v8419 = vsub.f32 %v8376, %v8418
      %v8420 = vsub.f32 %v8377, %v8418
      %v8421 = vsub.f32 %v8378, %v8418
      %v8422 = vsub.f32 %v8379, %v8418
      %v8423 = vsub.f32 %v8380, %v8418
      %v8424 = vsub.f32 %v8381, %v8418
      %v8425 = vsub.f32 %v8382, %v8418
      %v8426 = vsub.f32 %v8383, %v8418
      %v8427 = vsub.f32 %v8384, %v8418
      %v8428 = vsub.f32 %v8385, %v8418
      %v8429 = vsub.f32 %v8386, %v8418
      %v8430 = vmul.f32 %v8419, %v8419
      %v8431 = vmul.f32 %v8420, %v8420
      %v8432 = vmul.f32 %v8421, %v8421
      %v8433 = vmul.f32 %v8422, %v8422
      %v8434 = vmul.f32 %v8423, %v8423
      %v8435 = vmul.f32 %v8424, %v8424
      %v8436 = vmul.f32 %v8425, %v8425
      %v8437 = vmul.f32 %v8426, %v8426
      %v8438 = vmul.f32 %v8427, %v8427
      %v8439 = vmul.f32 %v8428, %v8428
      %v8440 = vmul.f32 %v8429, %v8429
      %v8441 = vsel %vm788, %v8430, 0.0
      %v8442 = vsel %vm788, %v8431, 0.0
      %v8443 = vadd.f32 %v8441, %v8442
      %v8444 = vsel %vm788, %v8432, 0.0
      %v8445 = vadd.f32 %v8443, %v8444
      %v8446 = vsel %vm788, %v8433, 0.0
      %v8447 = vadd.f32 %v8445, %v8446
      %v8448 = vsel %vm788, %v8434, 0.0
      %v8449 = vadd.f32 %v8447, %v8448
      %v8450 = vsel %vm788, %v8435, 0.0
      %v8451 = vadd.f32 %v8449, %v8450
      %v8452 = vsel %vm788, %v8436, 0.0
      %v8453 = vadd.f32 %v8451, %v8452
      %v8454 = vsel %vm788, %v8437, 0.0
      %v8455 = vadd.f32 %v8453, %v8454
      %v8456 = vsel %vm788, %v8438, 0.0
      %v8457 = vadd.f32 %v8455, %v8456
      %v8458 = vsel %vm788, %v8439, 0.0
      %v8459 = vadd.f32 %v8457, %v8458
      %v8460 = vsel %vm847, %v8440, 0.0
      %v8461 = vadd.f32 %v8459, %v8460
      %8462 = vadd.xlane.f32.xlu0 %v8461
      %v8463 = vpop.xlane.xlu0 %8462
      %v8464 = vrot.slane %v8463, 4
      %v8465 = vadd.f32 %v8463, %v8464
      %v8466 = vrot.slane %v8465, 2
      %v8467 = vadd.f32 %v8465, %v8466
      %v8468 = vrot.slane %v8467, 1
      %v8469 = vadd.f32 %v8467, %v8468
      %s8470 = vtos %v8469
      %v8471 = vstv %s8470
      %v8472 = vmul.f32 %v8471, %v2210
      %v8473 = vadd.f32 %v8472, 1e-05
      %v8474 = vrsqrt.pop %v8473
      %v8475 = vmul.f32 %v8419, %v8474
      %v8476 = vmul.f32 %v8420, %v8474
      %v8477 = vmul.f32 %v8421, %v8474
      %v8478 = vmul.f32 %v8422, %v8474
      %v8479 = vmul.f32 %v8423, %v8474
      %v8480 = vmul.f32 %v8424, %v8474
      %v8481 = vmul.f32 %v8425, %v8474
      %v8482 = vmul.f32 %v8426, %v8474
      %v8483 = vmul.f32 %v8427, %v8474
      %v8484 = vmul.f32 %v8428, %v8474
      %v8485 = vmul.f32 %v8429, %v8474
      %v8486 = vmul.f32 %v8475, %v7022
      %v8487 = vmul.f32 %v8476, %v7023
      %v8488 = vmul.f32 %v8477, %v7024
      %v8489 = vmul.f32 %v8478, %v7025
      %v8490 = vmul.f32 %v8479, %v7026
      %v8491 = vmul.f32 %v8480, %v7027
      %v8492 = vmul.f32 %v8481, %v7028
      %v8493 = vmul.f32 %v8482, %v7029
      %v8494 = vmul.f32 %v8483, %v7030
      %v8495 = vmul.f32 %v8484, %v7031
      %v8496 = vmul.f32 %v8485, %v7032
      %v8497 = vadd.f32 %v8486, %v7034
      %v8498 = vadd.f32 %v8487, %v7035
      %v8499 = vadd.f32 %v8488, %v7036
      %v8500 = vadd.f32 %v8489, %v7037
      %v8501 = vadd.f32 %v8490, %v7038
      %v8502 = vadd.f32 %v8491, %v7039
      %v8503 = vadd.f32 %v8492, %v7040
      %v8504 = vadd.f32 %v8493, %v7041
      %v8505 = vadd.f32 %v8494, %v7042
      %v8506 = vadd.f32 %v8495, %v7043
      %v8507 = vadd.f32 %v8496, %v7044
      %v8508 = vsel %vm788, %v8497, 0.0
      %v8509 = vsel %vm788, %v8498, 0.0
      %v8510 = vadd.f32 %v8508, %v8509
      %v8511 = vsel %vm788, %v8499, 0.0
      %v8512 = vadd.f32 %v8510, %v8511
      %v8513 = vsel %vm788, %v8500, 0.0
      %v8514 = vadd.f32 %v8512, %v8513
      %v8515 = vsel %vm788, %v8501, 0.0
      %v8516 = vadd.f32 %v8514, %v8515
      %v8517 = vsel %vm788, %v8502, 0.0
      %v8518 = vadd.f32 %v8516, %v8517
      %v8519 = vsel %vm788, %v8503, 0.0
      %v8520 = vadd.f32 %v8518, %v8519
      %v8521 = vsel %vm788, %v8504, 0.0
      %v8522 = vadd.f32 %v8520, %v8521
      %v8523 = vsel %vm788, %v8505, 0.0
      %v8524 = vadd.f32 %v8522, %v8523
      %v8525 = vsel %vm788, %v8506, 0.0
      %v8526 = vadd.f32 %v8524, %v8525
      %v8527 = vsel %vm847, %v8507, 0.0
      %v8528 = vadd.f32 %v8526, %v8527
      %v8529 = vrot.slane %v8528, 4
      %v8530 = vadd.f32 %v8528, %v8529
      %v8531 = vrot.slane %v8530, 2
      %v8532 = vadd.f32 %v8530, %v8531
      %v8533 = vrot.slane %v8532, 1
      %v8534 = vadd.f32 %v8532, %v8533
      %v8535 = vmul.f32 %v8534, %v5321
      %s8536 = scalar_lea.vmem %s7, 32
      %v8537 = vld [vmem:[%s8536] sm:$0xff]
      %v8538 = vld [vmem:[%s8536 + $0x8] sm:$0xff]
      %v8539 = vld [vmem:[%s8536 + $0x10] sm:$0xff]
      %v8540 = vld [vmem:[%s8536 + $0x18] sm:$0xff]
      %v8542 = vsel %vm788, %v8535, 0
      %8544 = vmatprep.subr.mxu0 0.0
      %8545 = vmatpush1.msra.mxu0 0.0
      %8546 = vmatprep.subr.mxu0 0.0
      %8547 = vmatpush1.msra.mxu0 0.0
      %8548 = vmatprep.subr.mxu0 0.0
      %8549 = vmatpush1.msra.mxu0 0.0
      %8550 = vmatprep.subr.mxu0 0.0
      %8551 = vmatpush1.msra.mxu0 0.0
      %8552 = vmatprep.subr.mxu0 0.0
      %8553 = vmatpush1.msra.mxu0 0.0
      %8554 = vmatprep.subr.mxu0 0.0
      %8555 = vmatpush1.msra.mxu0 0.0
      %8556 = vmatprep.subr.mxu0 0.0
      %8557 = vmatpush1.msra.mxu0 0.0
      %8558 = vmatprep.subr.mxu0 0.0
      %8559 = vmatpush1.msra.mxu0 0.0
      %8560 = vmatprep.subr.mxu0 0.0
      %8561 = vmatpush1.msra.mxu0 0.0
      %8562 = vmatprep.subr.mxu0 0.0
      %8563 = vmatpush1.msra.mxu0 0.0
      %8564 = vmatprep.subr.mxu0 0.0
      %8565 = vmatpush1.msra.mxu0 0.0
      %8566 = vmatprep.subr.mxu0 0.0
      %8567 = vmatpush1.msra.mxu0 0.0
      %8568 = vmatprep.subr.mxu0 0.0
      %8569 = vmatpush1.msra.mxu0 %v8540
      %8570 = vmatprep.subr.mxu0 0.0
      %8571 = vmatpush1.msra.mxu0 %v8539
      %8572 = vmatprep.subr.mxu0 0.0
      %8573 = vmatpush1.msra.mxu0 %v8538
      %8574 = vmatprep.subr.mxu0 0.0
      %8575 = vmatpush1.msra.mxu0 %v8537
      %8576 = vmatprep.subr.mxu0 0.0
      %8577 = vmatpush2.msra.mxu0 0.0
      %8578 = vmatprep.subr.mxu0 0.0
      %8579 = vmatpush2.msra.mxu0 0.0
      %8580 = vmatprep.subr.mxu0 0.0
      %8581 = vmatpush2.msra.mxu0 0.0
      %8582 = vmatprep.subr.mxu0 0.0
      %8583 = vmatpush2.msra.mxu0 0.0
      %8584 = vmatprep.subr.mxu0 0.0
      %8585 = vmatpush2.msra.mxu0 0.0
      %8586 = vmatprep.subr.mxu0 0.0
      %8587 = vmatpush2.msra.mxu0 0.0
      %8588 = vmatprep.subr.mxu0 0.0
      %8589 = vmatpush2.msra.mxu0 0.0
      %8590 = vmatprep.subr.mxu0 0.0
      %8591 = vmatpush2.msra.mxu0 0.0
      %8592 = vmatprep.subr.mxu0 0.0
      %8593 = vmatpush2.msra.mxu0 0.0
      %8594 = vmatprep.subr.mxu0 0.0
      %8595 = vmatpush2.msra.mxu0 0.0
      %8596 = vmatprep.subr.mxu0 0.0
      %8597 = vmatpush2.msra.mxu0 0.0
      %8598 = vmatprep.subr.mxu0 0.0
      %8599 = vmatpush2.msra.mxu0 0.0
      %8600 = vmatprep.subr.mxu0 0.0
      %8601 = vmatpush2.msra.mxu0 0.0
      %8602 = vmatprep.subr.mxu0 0.0
      %8603 = vmatpush2.msra.mxu0 0.0
      %8604 = vmatprep.subr.mxu0 0.0
      %8605 = vmatpush2.msra.mxu0 0.0
      %8606 = vmatprep.subr.mxu0 0.0
      %8607 = vmatpush2.msra.mxu0 0.0
      %8608 = vmatprep.mubr.f32.mxu0 0.0
      %8609 = vmatmul.mubr.f32.gmra.mxu0 %v8542
      %v8610 = vpop.f32.mrf.mxu0
      %v8611 = vadd.f32 0.0, %v8610
      %v8612 = vpop.f32.mrf.mxu0
      %8613 = vdwg.mxu0
      %v8614 = vmax.f32 %v8611, 0.0
      %s8615 = scalar_lea.vmem %s8, 4
      %v8616 = vld [vmem:[%s8615] sm:$0xf]
      %v8618 = vsel %vm5402, %v8614, 0
      %v8621 = vsel %vm5406, %v8616, 0
      %8623 = vmatprep.subr.mxu0 0.0
      %8624 = vmatpush1.msra.mxu0 0.0
      %8625 = vmatprep.subr.mxu0 0.0
      %8626 = vmatpush1.msra.mxu0 0.0
      %8627 = vmatprep.subr.mxu0 0.0
      %8628 = vmatpush1.msra.mxu0 0.0
      %8629 = vmatprep.subr.mxu0 0.0
      %8630 = vmatpush1.msra.mxu0 0.0
      %8631 = vmatprep.subr.mxu0 0.0
      %8632 = vmatpush1.msra.mxu0 0.0
      %8633 = vmatprep.subr.mxu0 0.0
      %8634 = vmatpush1.msra.mxu0 0.0
      %8635 = vmatprep.subr.mxu0 0.0
      %8636 = vmatpush1.msra.mxu0 0.0
      %8637 = vmatprep.subr.mxu0 0.0
      %8638 = vmatpush1.msra.mxu0 0.0
      %8639 = vmatprep.subr.mxu0 0.0
      %8640 = vmatpush1.msra.mxu0 0.0
      %8641 = vmatprep.subr.mxu0 0.0
      %8642 = vmatpush1.msra.mxu0 0.0
      %8643 = vmatprep.subr.mxu0 0.0
      %8644 = vmatpush1.msra.mxu0 0.0
      %8645 = vmatprep.subr.mxu0 0.0
      %8646 = vmatpush1.msra.mxu0 0.0
      %8647 = vmatprep.subr.mxu0 0.0
      %8648 = vmatpush1.msra.mxu0 0.0
      %8649 = vmatprep.subr.mxu0 0.0
      %8650 = vmatpush1.msra.mxu0 0.0
      %8651 = vmatprep.subr.mxu0 0.0
      %8652 = vmatpush1.msra.mxu0 0.0
      %8653 = vmatprep.subr.mxu0 0.0
      %8654 = vmatpush1.msra.mxu0 %v8621
      %8655 = vmatprep.subr.mxu0 0.0
      %8656 = vmatpush2.msra.mxu0 0.0
      %8657 = vmatprep.subr.mxu0 0.0
      %8658 = vmatpush2.msra.mxu0 0.0
      %8659 = vmatprep.subr.mxu0 0.0
      %8660 = vmatpush2.msra.mxu0 0.0
      %8661 = vmatprep.subr.mxu0 0.0
      %8662 = vmatpush2.msra.mxu0 0.0
      %8663 = vmatprep.subr.mxu0 0.0
      %8664 = vmatpush2.msra.mxu0 0.0
      %8665 = vmatprep.subr.mxu0 0.0
      %8666 = vmatpush2.msra.mxu0 0.0
      %8667 = vmatprep.subr.mxu0 0.0
      %8668 = vmatpush2.msra.mxu0 0.0
      %8669 = vmatprep.subr.mxu0 0.0
      %8670 = vmatpush2.msra.mxu0 0.0
      %8671 = vmatprep.subr.mxu0 0.0
      %8672 = vmatpush2.msra.mxu0 0.0
      %8673 = vmatprep.subr.mxu0 0.0
      %8674 = vmatpush2.msra.mxu0 0.0
      %8675 = vmatprep.subr.mxu0 0.0
      %8676 = vmatpush2.msra.mxu0 0.0
      %8677 = vmatprep.subr.mxu0 0.0
      %8678 = vmatpush2.msra.mxu0 0.0
      %8679 = vmatprep.subr.mxu0 0.0
      %8680 = vmatpush2.msra.mxu0 0.0
      %8681 = vmatprep.subr.mxu0 0.0
      %8682 = vmatpush2.msra.mxu0 0.0
      %8683 = vmatprep.subr.mxu0 0.0
      %8684 = vmatpush2.msra.mxu0 0.0
      %8685 = vmatprep.subr.mxu0 0.0
      %8686 = vmatpush2.msra.mxu0 0.0
      %8687 = vmatprep.mubr.f32.mxu0 0.0
      %8688 = vmatmul.mubr.f32.gmra.mxu0 %v8618
      %v8689 = vpop.f32.mrf.mxu0
      %v8690 = vadd.f32 0.0, %v8689
      %v8691 = vpop.f32.mrf.mxu0
      %8692 = vdwg.mxu0
      %v8693 = vxor.u32 %v8690, 2147483648
      %v8694 = vmul.f32 %v8693, 1.442695
      %v8695 = vpow.pop %v8694
      %v8696 = vadd.f32 %v8695, 1.0
      %v8697 = vrcp.pop %v8696
      %v8698 = vmul.f32 1.0, %v8697
      %v8699 = vlaneseq
      %v8700 = vshrl.u32 %v8699, 7
      %v8701 = vsub.s32 0, %v8700
      %v8702 = vrot.slane %v8698, %v8701
      %v8703 = vmul.f32 %v8497, %v8702
      %v8704 = vmul.f32 %v8498, %v8702
      %v8705 = vmul.f32 %v8499, %v8702
      %v8706 = vmul.f32 %v8500, %v8702
      %v8707 = vmul.f32 %v8501, %v8702
      %v8708 = vmul.f32 %v8502, %v8702
      %v8709 = vmul.f32 %v8503, %v8702
      %v8710 = vmul.f32 %v8504, %v8702
      %v8711 = vmul.f32 %v8505, %v8702
      %v8712 = vmul.f32 %v8506, %v8702
      %v8713 = vmul.f32 %v8507, %v8702
      %v8714 = vadd.f32 %v5512, %v8703
      %v8715 = vadd.f32 %v5513, %v8704
      %v8716 = vadd.f32 %v5514, %v8705
      %v8717 = vadd.f32 %v5515, %v8706
      %v8718 = vadd.f32 %v5516, %v8707
      %v8719 = vadd.f32 %v5517, %v8708
      %v8720 = vadd.f32 %v5518, %v8709
      %v8721 = vadd.f32 %v5519, %v8710
      %v8722 = vadd.f32 %v5520, %v8711
      %v8723 = vadd.f32 %v5521, %v8712
      %v8724 = vadd.f32 %v5522, %v8713
      %v8725 = vmax.f32 %v8714, 0.0
      %v8726 = vmax.f32 %v8715, 0.0
      %v8727 = vmax.f32 %v8716, 0.0
      %v8728 = vmax.f32 %v8717, 0.0
      %v8729 = vmax.f32 %v8718, 0.0
      %v8730 = vmax.f32 %v8719, 0.0
      %v8731 = vmax.f32 %v8720, 0.0
      %v8732 = vmax.f32 %v8721, 0.0
      %v8733 = vmax.f32 %v8722, 0.0
      %v8734 = vmax.f32 %v8723, 0.0
      %v8735 = vmax.f32 %v8724, 0.0
      %v8736 = vld [vmem:[%s9] sm:$0xff]
      %v8737 = vld [vmem:[%s9 + $0x8] sm:$0xff]
      %v8738 = vld [vmem:[%s9 + $0x10] sm:$0xff]
      %v8739 = vld [vmem:[%s9 + $0x18] sm:$0xff]
      %v8740 = vld [vmem:[%s10] sm:$0x1]
      %v8742 = vlaneseq
      %v8743 = vshrl.u32 %v8742, 7
      %v8744 = vsub.s32 0, %v8743
      %v8745 = vrot.slane %v8740, %v8744
      %v8748 = vsel %vm788, %v8725, 0
      %v8751 = vsel %vm788, %v8726, 0
      %v8754 = vsel %vm788, %v8727, 0
      %v8757 = vsel %vm788, %v8728, 0
      %v8760 = vsel %vm788, %v8729, 0
      %v8763 = vsel %vm788, %v8730, 0
      %v8766 = vsel %vm788, %v8731, 0
      %v8769 = vsel %vm788, %v8732, 0
      %v8772 = vsel %vm788, %v8733, 0
      %v8775 = vsel %vm788, %v8734, 0
      %v8778 = vsel %vm788, %v8735, 0
      %8780 = vmatprep.subr.mxu0 0.0
      %8781 = vmatpush1.msra.mxu0 0.0
      %8782 = vmatprep.subr.mxu0 0.0
      %8783 = vmatpush1.msra.mxu0 0.0
      %8784 = vmatprep.subr.mxu0 0.0
      %8785 = vmatpush1.msra.mxu0 0.0
      %8786 = vmatprep.subr.mxu0 0.0
      %8787 = vmatpush1.msra.mxu0 0.0
      %8788 = vmatprep.subr.mxu0 0.0
      %8789 = vmatpush1.msra.mxu0 0.0
      %8790 = vmatprep.subr.mxu0 0.0
      %8791 = vmatpush1.msra.mxu0 0.0
      %8792 = vmatprep.subr.mxu0 0.0
      %8793 = vmatpush1.msra.mxu0 0.0
      %8794 = vmatprep.subr.mxu0 0.0
      %8795 = vmatpush1.msra.mxu0 0.0
      %8796 = vmatprep.subr.mxu0 0.0
      %8797 = vmatpush1.msra.mxu0 0.0
      %8798 = vmatprep.subr.mxu0 0.0
      %8799 = vmatpush1.msra.mxu0 0.0
      %8800 = vmatprep.subr.mxu0 0.0
      %8801 = vmatpush1.msra.mxu0 0.0
      %8802 = vmatprep.subr.mxu0 0.0
      %8803 = vmatpush1.msra.mxu0 0.0
      %8804 = vmatprep.subr.mxu0 0.0
      %8805 = vmatpush1.msra.mxu0 %v8739
      %8806 = vmatprep.subr.mxu0 0.0
      %8807 = vmatpush1.msra.mxu0 %v8738
      %8808 = vmatprep.subr.mxu0 0.0
      %8809 = vmatpush1.msra.mxu0 %v8737
      %8810 = vmatprep.subr.mxu0 0.0
      %8811 = vmatpush1.msra.mxu0 %v8736
      %8812 = vmatprep.subr.mxu0 0.0
      %8813 = vmatpush2.msra.mxu0 0.0
      %8814 = vmatprep.subr.mxu0 0.0
      %8815 = vmatpush2.msra.mxu0 0.0
      %8816 = vmatprep.subr.mxu0 0.0
      %8817 = vmatpush2.msra.mxu0 0.0
      %8818 = vmatprep.subr.mxu0 0.0
      %8819 = vmatpush2.msra.mxu0 0.0
      %8820 = vmatprep.subr.mxu0 0.0
      %8821 = vmatpush2.msra.mxu0 0.0
      %8822 = vmatprep.subr.mxu0 0.0
      %8823 = vmatpush2.msra.mxu0 0.0
      %8824 = vmatprep.subr.mxu0 0.0
      %8825 = vmatpush2.msra.mxu0 0.0
      %8826 = vmatprep.subr.mxu0 0.0
      %8827 = vmatpush2.msra.mxu0 0.0
      %8828 = vmatprep.subr.mxu0 0.0
      %8829 = vmatpush2.msra.mxu0 0.0
      %8830 = vmatprep.subr.mxu0 0.0
      %8831 = vmatpush2.msra.mxu0 0.0
      %8832 = vmatprep.subr.mxu0 0.0
      %8833 = vmatpush2.msra.mxu0 0.0
      %8834 = vmatprep.subr.mxu0 0.0
      %8835 = vmatpush2.msra.mxu0 0.0
      %8836 = vmatprep.subr.mxu0 0.0
      %8837 = vmatpush2.msra.mxu0 0.0
      %8838 = vmatprep.subr.mxu0 0.0
      %8839 = vmatpush2.msra.mxu0 0.0
      %8840 = vmatprep.subr.mxu0 0.0
      %8841 = vmatpush2.msra.mxu0 0.0
      %8842 = vmatprep.subr.mxu0 0.0
      %8843 = vmatpush2.msra.mxu0 0.0
      %8844 = vmatprep.mubr.f32.mxu0 0.0
      %8845 = vmatmul.mubr.f32.gmra.mxu0 %v8748
      %v8846 = vpop.f32.mrf.mxu0
      %v8847 = vadd.f32 %v8745, %v8846
      %v8848 = vpop.f32.mrf.mxu0
      %8849 = vmatprep.mubr.f32.mxu0 0.0
      %8850 = vmatmul.mubr.f32.gmra.mxu0 %v8751
      %v8851 = vpop.f32.mrf.mxu0
      %v8852 = vadd.f32 %v8745, %v8851
      %v8853 = vpop.f32.mrf.mxu0
      %8854 = vmatprep.mubr.f32.mxu0 0.0
      %8855 = vmatmul.mubr.f32.gmra.mxu0 %v8754
      %v8856 = vpop.f32.mrf.mxu0
      %v8857 = vadd.f32 %v8745, %v8856
      %v8858 = vpop.f32.mrf.mxu0
      %8859 = vmatprep.mubr.f32.mxu0 0.0
      %8860 = vmatmul.mubr.f32.gmra.mxu0 %v8757
      %v8861 = vpop.f32.mrf.mxu0
      %v8862 = vadd.f32 %v8745, %v8861
      %v8863 = vpop.f32.mrf.mxu0
      %8864 = vmatprep.mubr.f32.mxu0 0.0
      %8865 = vmatmul.mubr.f32.gmra.mxu0 %v8760
      %v8866 = vpop.f32.mrf.mxu0
      %v8867 = vadd.f32 %v8745, %v8866
      %v8868 = vpop.f32.mrf.mxu0
      %8869 = vmatprep.mubr.f32.mxu0 0.0
      %8870 = vmatmul.mubr.f32.gmra.mxu0 %v8763
      %v8871 = vpop.f32.mrf.mxu0
      %v8872 = vadd.f32 %v8745, %v8871
      %v8873 = vpop.f32.mrf.mxu0
      %8874 = vmatprep.mubr.f32.mxu0 0.0
      %8875 = vmatmul.mubr.f32.gmra.mxu0 %v8766
      %v8876 = vpop.f32.mrf.mxu0
      %v8877 = vadd.f32 %v8745, %v8876
      %v8878 = vpop.f32.mrf.mxu0
      %8879 = vmatprep.mubr.f32.mxu0 0.0
      %8880 = vmatmul.mubr.f32.gmra.mxu0 %v8769
      %v8881 = vpop.f32.mrf.mxu0
      %v8882 = vadd.f32 %v8745, %v8881
      %v8883 = vpop.f32.mrf.mxu0
      %8884 = vmatprep.mubr.f32.mxu0 0.0
      %8885 = vmatmul.mubr.f32.gmra.mxu0 %v8772
      %v8886 = vpop.f32.mrf.mxu0
      %v8887 = vadd.f32 %v8745, %v8886
      %v8888 = vpop.f32.mrf.mxu0
      %8889 = vmatprep.mubr.f32.mxu0 0.0
      %8890 = vmatmul.mubr.f32.gmra.mxu0 %v8775
      %v8891 = vpop.f32.mrf.mxu0
      %v8892 = vadd.f32 %v8745, %v8891
      %v8893 = vpop.f32.mrf.mxu0
      %8894 = vmatprep.mubr.f32.mxu0 0.0
      %8895 = vmatmul.mubr.f32.gmra.mxu0 %v8778
      %v8896 = vpop.f32.mrf.mxu0
      %v8897 = vadd.f32 %v8745, %v8896
      %v8898 = vpop.f32.mrf.mxu0
      %8899 = vdwg.mxu0
      %vm8900 = vcmask 64512
      %8901 = vst.msk [vmem:[%s529] sm:$0xff] %vm8900, %v8847
      %8902 = vst.msk [vmem:[%s529 + $0x8] sm:$0xff] %vm8900, %v8852
      %8903 = vst.msk [vmem:[%s529 + $0x10] sm:$0xff] %vm8900, %v8857
      %8904 = vst.msk [vmem:[%s529 + $0x18] sm:$0xff] %vm8900, %v8862
      %8905 = vst.msk [vmem:[%s529 + $0x20] sm:$0xff] %vm8900, %v8867
      %8906 = vst.msk [vmem:[%s529 + $0x28] sm:$0xff] %vm8900, %v8872
      %8907 = vst.msk [vmem:[%s529 + $0x30] sm:$0xff] %vm8900, %v8877
      %8908 = vst.msk [vmem:[%s529 + $0x38] sm:$0xff] %vm8900, %v8882
      %8909 = vst.msk [vmem:[%s529 + $0x40] sm:$0xff] %vm8900, %v8887
      %8910 = vst.msk [vmem:[%s529 + $0x48] sm:$0xff] %vm8900, %v8892
      %vm8911 = vcmask 57344
      %8912 = vst.msk [vmem:[%s529 + $0x50] sm:$0x1] %vm8911, %v8897
      %v8913 = vsel %vm788, %v8725, 0.0
      %v8914 = vsel %vm788, %v8726, 0.0
      %v8915 = vadd.f32 %v8913, %v8914
      %v8916 = vsel %vm788, %v8727, 0.0
      %v8917 = vadd.f32 %v8915, %v8916
      %v8918 = vsel %vm788, %v8728, 0.0
      %v8919 = vadd.f32 %v8917, %v8918
      %v8920 = vsel %vm788, %v8729, 0.0
      %v8921 = vadd.f32 %v8919, %v8920
      %v8922 = vsel %vm788, %v8730, 0.0
      %v8923 = vadd.f32 %v8921, %v8922
      %v8924 = vsel %vm788, %v8731, 0.0
      %v8925 = vadd.f32 %v8923, %v8924
      %v8926 = vsel %vm788, %v8732, 0.0
      %v8927 = vadd.f32 %v8925, %v8926
      %v8928 = vsel %vm788, %v8733, 0.0
      %v8929 = vadd.f32 %v8927, %v8928
      %v8930 = vsel %vm788, %v8734, 0.0
      %v8931 = vadd.f32 %v8929, %v8930
      %v8932 = vsel %vm847, %v8735, 0.0
      %v8933 = vadd.f32 %v8931, %v8932
      %v8934 = vrot.slane %v8933, 4
      %v8935 = vadd.f32 %v8933, %v8934
      %v8936 = vrot.slane %v8935, 2
      %v8937 = vadd.f32 %v8935, %v8936
      %v8938 = vrot.slane %v8937, 1
      %v8939 = vadd.f32 %v8937, %v8938
      %v8940 = vmul.f32 %v8939, %v5321
      %v8941 = vld [vmem:[%s11] sm:$0xff]
      %v8942 = vld [vmem:[%s11 + $0x8] sm:$0xff]
      %v8943 = vld [vmem:[%s11 + $0x10] sm:$0xff]
      %v8944 = vld [vmem:[%s11 + $0x18] sm:$0xff]
      %v8945 = vld [vmem:[%s12] sm:$0x1]
      %v8947 = vsel %vm788, %v8940, 0
      %8949 = vmatprep.subr.mxu0 0.0
      %8950 = vmatpush1.msra.mxu0 0.0
      %8951 = vmatprep.subr.mxu0 0.0
      %8952 = vmatpush1.msra.mxu0 0.0
      %8953 = vmatprep.subr.mxu0 0.0
      %8954 = vmatpush1.msra.mxu0 0.0
      %8955 = vmatprep.subr.mxu0 0.0
      %8956 = vmatpush1.msra.mxu0 0.0
      %8957 = vmatprep.subr.mxu0 0.0
      %8958 = vmatpush1.msra.mxu0 0.0
      %8959 = vmatprep.subr.mxu0 0.0
      %8960 = vmatpush1.msra.mxu0 0.0
      %8961 = vmatprep.subr.mxu0 0.0
      %8962 = vmatpush1.msra.mxu0 0.0
      %8963 = vmatprep.subr.mxu0 0.0
      %8964 = vmatpush1.msra.mxu0 0.0
      %8965 = vmatprep.subr.mxu0 0.0
      %8966 = vmatpush1.msra.mxu0 0.0
      %8967 = vmatprep.subr.mxu0 0.0
      %8968 = vmatpush1.msra.mxu0 0.0
      %8969 = vmatprep.subr.mxu0 0.0
      %8970 = vmatpush1.msra.mxu0 0.0
      %8971 = vmatprep.subr.mxu0 0.0
      %8972 = vmatpush1.msra.mxu0 0.0
      %8973 = vmatprep.subr.mxu0 0.0
      %8974 = vmatpush1.msra.mxu0 %v8944
      %8975 = vmatprep.subr.mxu0 0.0
      %8976 = vmatpush1.msra.mxu0 %v8943
      %8977 = vmatprep.subr.mxu0 0.0
      %8978 = vmatpush1.msra.mxu0 %v8942
      %8979 = vmatprep.subr.mxu0 0.0
      %8980 = vmatpush1.msra.mxu0 %v8941
      %8981 = vmatprep.subr.mxu0 0.0
      %8982 = vmatpush2.msra.mxu0 0.0
      %8983 = vmatprep.subr.mxu0 0.0
      %8984 = vmatpush2.msra.mxu0 0.0
      %8985 = vmatprep.subr.mxu0 0.0
      %8986 = vmatpush2.msra.mxu0 0.0
      %8987 = vmatprep.subr.mxu0 0.0
      %8988 = vmatpush2.msra.mxu0 0.0
      %8989 = vmatprep.subr.mxu0 0.0
      %8990 = vmatpush2.msra.mxu0 0.0
      %8991 = vmatprep.subr.mxu0 0.0
      %8992 = vmatpush2.msra.mxu0 0.0
      %8993 = vmatprep.subr.mxu0 0.0
      %8994 = vmatpush2.msra.mxu0 0.0
      %8995 = vmatprep.subr.mxu0 0.0
      %8996 = vmatpush2.msra.mxu0 0.0
      %8997 = vmatprep.subr.mxu0 0.0
      %8998 = vmatpush2.msra.mxu0 0.0
      %8999 = vmatprep.subr.mxu0 0.0
      %9000 = vmatpush2.msra.mxu0 0.0
      %9001 = vmatprep.subr.mxu0 0.0
      %9002 = vmatpush2.msra.mxu0 0.0
      %9003 = vmatprep.subr.mxu0 0.0
      %9004 = vmatpush2.msra.mxu0 0.0
      %9005 = vmatprep.subr.mxu0 0.0
      %9006 = vmatpush2.msra.mxu0 0.0
      %9007 = vmatprep.subr.mxu0 0.0
      %9008 = vmatpush2.msra.mxu0 0.0
      %9009 = vmatprep.subr.mxu0 0.0
      %9010 = vmatpush2.msra.mxu0 0.0
      %9011 = vmatprep.subr.mxu0 0.0
      %9012 = vmatpush2.msra.mxu0 0.0
      %9013 = vmatprep.mubr.f32.mxu0 0.0
      %9014 = vmatmul.mubr.f32.gmra.mxu0 %v8947
      %v9015 = vpop.f32.mrf.mxu0
      %v9016 = vadd.f32 %v8945, %v9015
      %v9017 = vpop.f32.mrf.mxu0
      %9018 = vdwg.mxu0
      %v9019 = vmax.f32 %v9016, 0.0
      %v9020 = vld [vmem:[%s13] sm:$0x1]
      %v9021 = vmul.f32 %v9019, %v9020
      %v9022 = vsel %vm847, %v9021, 0.0
      %9023 = vadd.xlane.f32.xlu0 %v9022
      %v9024 = vpop.xlane.xlu0 %9023
      %v9025 = vld [vmem:[#allocation3] sm:$0x1]
      %v9026 = vadd.f32 %v9024, %v9025
      %v9027 = vtanh.pop %v9026
      %vm9028 = vcmask 0
      %9029 = vst.msk [vmem:[%s532] sm:$0x1] %vm9028, %v9027
      %p9030 = scmp.lt.s32.totalorder %s30, 1
      %s9031 = scalar_select %p9030, %s30, 1
      %s9032 = smul.addr %s9031, 11
      %s9033 = smul.addr %s9032, 8
      %s9034 = scalar_lea.vmem %s15, %s9033
      %p9035 = scmp.lt.s32.totalorder %s30, 1
      %s9036 = scalar_select %p9035, %s30, 1
      %s9037 = scalar_lea.vmem %s16, %s9036
      // Predicated region
      $region81: #{scalar_network_forward.1} parent=79 // pred_check
        %p9038 = pneg %p368
      $region82: #{scalar_network_forward.1} parent=79 // pred_check_branch
        %9040 = sbr.rel (%p9038) target = $region84
      $region83: #{scalar_network_forward.1} parent=79 // pred_region
        _
      $region84: #{scalar_network_forward.1} parent=79 // pred_fallthru
        _
      // Predicated region
      $region85: #{scalar_network_forward.1} parent=79 // pred_check
        %p9041 = pneg %p394
      $region86: #{scalar_network_forward.1} parent=79 // pred_check_branch
        %9043 = sbr.rel (%p9041) target = $region88
      $region87: #{scalar_network_forward.1} parent=79 // pred_region
        _
      $region88: #{scalar_network_forward.1} parent=79 // pred_fallthru
        _
    $region80: #{scalar_network_forward.1} parent=5 // pred_fallthru
      _
    %p9044 = scmp.le.s32.totalorder 2, %s25
    // Predicated region
    $region89: #{scalar_network_forward.1} parent=5 // pred_check
      %p9045 = pneg %p9044
    $region90: #{scalar_network_forward.1} parent=5 // pred_check_branch
      %9047 = sbr.rel (%p9045) target = $region92
    $region91: #{scalar_network_forward.1} parent=5 // pred_region
      %s9048 = ssub.s32 %s25, 2
      // Predicated region
      $region93: #{scalar_network_forward.1} parent=91 // pred_check
        %p9049 = pneg %p374
      $region94: #{scalar_network_forward.1} parent=91 // pred_check_branch
        %9051 = sbr.rel (%p9049) target = $region96
      $region95: #{scalar_network_forward.1} parent=91 // pred_region
        %p9052 = scmp.lt.s32.totalorder %s31, 1
        %s9053 = scalar_select %p9052, %s31, 1
        %s9054 = smul.addr %s9053, 11
        %s9055 = smul.addr %s9054, 8
        %s9056 = scalar_lea.vmem %s15, %s9055
      $region96: #{scalar_network_forward.1} parent=91 // pred_fallthru
        _
      // Predicated region
      $region97: #{scalar_network_forward.1} parent=91 // pred_check
        %p9057 = pneg %p400
      $region98: #{scalar_network_forward.1} parent=91 // pred_check_branch
        %9059 = sbr.rel (%p9057) target = $region100
      $region99: #{scalar_network_forward.1} parent=91 // pred_region
        %p9060 = scmp.lt.s32.totalorder %s31, 1
        %s9061 = scalar_select %p9060, %s31, 1
        %s9062 = scalar_lea.vmem %s16, %s9061
      $region100: #{scalar_network_forward.1} parent=91 // pred_fallthru
        _
    $region92: #{scalar_network_forward.1} parent=5 // pred_fallthru
      _
  $region6: #{scalar_network_forward.1} parent=0 // loop_footer
    %s29 = sadd.s32 1, %s25
  $region7: #{scalar_network_forward.1} parent=0 // loop_footer_branch
    %24 = sbr.rel target = $region3
  $region8: #{scalar_network_forward.1} parent=0 // loop_exit
    _

</llo_original>
